<compile_context>
chip_gen: v6e
topology: v6e:2x2x1
jax: 0.10.0
libtpu: 0.0.40
codegen_flags: <defaults>
</compile_context>

<pallas_src>
import functools
import math

import jax
import jax.numpy as jnp
from jax.experimental import pallas as pl
from jax.experimental.pallas import tpu as pltpu


# ------------------------------- helpers --------------------------------------
def _round_up(x, m):
    return (x + m - 1) // m * m


def _pick(dim, align, cap):
    """Pad `dim` to `align`; tile = full padded dim if <= cap, else `cap`."""
    d = _round_up(dim, align)
    if d <= cap:
        return d, d
    return _round_up(dim, cap), cap


# ---------------------- Pallas matmul + bias + LeakyReLU -----------------------
def _mm_kernel(a_ref, b_ref, bias_ref, o_ref, *acc, act, nk):
    def epilogue(y):
        y = y + bias_ref[...]
        if act == "lrelu":
            y = jnp.where(y >= 0.0, y, 0.2 * y)
        return y.astype(o_ref.dtype)

    if nk == 1:
        # single K step: no accumulator scratch, write the tile directly.
        y = jnp.dot(a_ref[...], b_ref[...], preferred_element_type=jnp.float32)
        o_ref[...] = epilogue(y)
    else:
        acc_ref = acc[0]
        k = pl.program_id(2)

        @pl.when(k == 0)
        def _():
            acc_ref[...] = jnp.zeros_like(acc_ref)

        acc_ref[...] += jnp.dot(a_ref[...], b_ref[...],
                                preferred_element_type=jnp.float32)

        @pl.when(k == nk - 1)
        def _():
            o_ref[...] = epilogue(acc_ref[...])


def pallas_matmul_bias(a, b, bias, act="none", out_dtype=jnp.bfloat16):
    """a: (M, K), b: (K, N), bias: (N,) -> (M, N).

    bf16 MXU inputs, f32 accumulation, fused bias + optional LeakyReLU(0.2)."""
    M, K = a.shape
    K2, N = b.shape
    assert K == K2
    Mp, tm = _pick(M, 8, 512)
    Kp, tk = _pick(K, 128, 512)
    Np, tn = _pick(N, 128, 256)
    nk = Kp // tk

    a_p = a.astype(jnp.bfloat16)
    if (Mp, Kp) != (M, K):
        a_p = jnp.pad(a_p, ((0, Mp - M), (0, Kp - K)))
    b_p = b.astype(jnp.bfloat16)
    if (Kp, Np) != (K, N):
        b_p = jnp.pad(b_p, ((0, Kp - K), (0, Np - N)))
    bias_p = bias.astype(jnp.float32)
    if Np != N:
        bias_p = jnp.pad(bias_p, (0, Np - N))
    bias_p = bias_p.reshape(1, Np)

    scratch = [] if nk == 1 else [pltpu.VMEM((tm, tn), jnp.float32)]
    out = pl.pallas_call(
        functools.partial(_mm_kernel, act=act, nk=nk),
        out_shape=jax.ShapeDtypeStruct((Mp, Np), out_dtype),
        grid_spec=pltpu.PrefetchScalarGridSpec(
            num_scalar_prefetch=0,
            grid=(Mp // tm, Np // tn, nk),
            in_specs=[
                pl.BlockSpec((tm, tk), lambda i, j, k: (i, k)),
                pl.BlockSpec((tk, tn), lambda i, j, k: (k, j)),
                pl.BlockSpec((1, tn), lambda i, j, k: (0, j)),
            ],
            out_specs=pl.BlockSpec((tm, tn), lambda i, j, k: (i, j)),
            scratch_shapes=scratch,
        ),
        compiler_params=pltpu.CompilerParams(
            dimension_semantics=("parallel", "parallel", "arbitrary")),
    )(a_p, b_p, bias_p)
    return out[:M, :N]


# -------------------- Pallas BatchNorm (train mode) + LeakyReLU ----------------
def _bn_stats_kernel(x_ref, sum_ref, sq_ref):
    @pl.when(pl.program_id(0) == 0)
    def _():
        sum_ref[...] = jnp.zeros_like(sum_ref)
        sq_ref[...] = jnp.zeros_like(sq_ref)

    x = x_ref[...].astype(jnp.float32)
    sum_ref[...] += jnp.sum(x, axis=0, keepdims=True)
    sq_ref[...] += jnp.sum(x * x, axis=0, keepdims=True)


def _bn_apply_kernel(x_ref, scale_ref, shift_ref, o_ref):
    y = x_ref[...].astype(jnp.float32) * scale_ref[...] + shift_ref[...]
    o_ref[...] = jnp.where(y >= 0.0, y, 0.2 * y).astype(o_ref.dtype)


def batch_norm_lrelu(y, gamma, beta, eps=1e-5):
    """Training-mode nn.BatchNorm2d (batch statistics, biased variance, affine)
    followed by LeakyReLU(0.2), on channel-last (M, C) data with M = N*H*W.
    Running-stat buffer updates (a training-time side effect) are not modeled."""
    M, C = y.shape
    Mp, tm = _pick(M, 8, 512)
    Cp = _round_up(C, 128)
    y_p = y
    if (Mp, Cp) != (M, C):
        y_p = jnp.pad(y, ((0, Mp - M), (0, Cp - C)))   # zero rows/cols: stats-safe

    s, ss = pl.pallas_call(
        _bn_stats_kernel,
        out_shape=(jax.ShapeDtypeStruct((1, Cp), jnp.float32),
                   jax.ShapeDtypeStruct((1, Cp), jnp.float32)),
        grid_spec=pltpu.PrefetchScalarGridSpec(
            num_scalar_prefetch=0,
            grid=(Mp // tm,),
            in_specs=[pl.BlockSpec((tm, Cp), lambda i: (i, 0))],
            out_specs=(pl.BlockSpec((1, Cp), lambda i: (0, 0)),
                       pl.BlockSpec((1, Cp), lambda i: (0, 0))),
        ),
        compiler_params=pltpu.CompilerParams(dimension_semantics=("arbitrary",)),
    )(y_p)

    cnt = jnp.float32(M)
    mean = s[0] / cnt
    var = jnp.maximum(ss[0] / cnt - mean * mean, 0.0)
    g = jnp.pad(gamma.astype(jnp.float32), (0, Cp - C))
    b = jnp.pad(beta.astype(jnp.float32), (0, Cp - C))
    scale = (g * jax.lax.rsqrt(var + eps)).reshape(1, Cp)
    shift = (b - mean * scale[0]).reshape(1, Cp)

    out = pl.pallas_call(
        _bn_apply_kernel,
        out_shape=jax.ShapeDtypeStruct((Mp, Cp), jnp.bfloat16),
        grid_spec=pltpu.PrefetchScalarGridSpec(
            num_scalar_prefetch=0,
            grid=(Mp // tm,),
            in_specs=[pl.BlockSpec((tm, Cp), lambda i: (i, 0)),
                      pl.BlockSpec((1, Cp), lambda i: (0, 0)),
                      pl.BlockSpec((1, Cp), lambda i: (0, 0))],
            out_specs=pl.BlockSpec((tm, Cp), lambda i: (i, 0)),
        ),
        compiler_params=pltpu.CompilerParams(dimension_semantics=("parallel",)),
    )(y_p, scale, shift)
    return out[:M, :C]


# ------------------------------ im2col glue ------------------------------------
def im2col_nhwc(x, k=4, stride=2, pad=1):
    """x: (N,H,W,C) -> patch matrix (N*Ho*Wo, k*k*C), K ordered (kh*kw major, C minor)."""
    N, H, W, C = x.shape
    xp = jnp.pad(x, ((0, 0), (pad, pad), (pad, pad), (0, 0)))
    Ho = (H + 2 * pad - k) // stride + 1
    Wo = (W + 2 * pad - k) // stride + 1
    cols = []
    for i in range(k):
        for j in range(k):
            cols.append(xp[:, i:i + stride * Ho:stride, j:j + stride * Wo:stride, :])
    p = jnp.stack(cols, axis=3)                      # (N, Ho, Wo, k*k, C)
    return p.reshape(N * Ho * Wo, k * k * C), Ho, Wo


def im2col_nhwc_T(x, k=4, stride=2, pad=1):
    """Transposed im2col: (k*k*C, N*Ho*Wo) — spatial on the lane axis."""
    N, H, W, C = x.shape
    xp = jnp.pad(x, ((0, 0), (pad, pad), (pad, pad), (0, 0)))
    Ho = (H + 2 * pad - k) // stride + 1
    Wo = (W + 2 * pad - k) // stride + 1
    cols = []
    for i in range(k):
        for j in range(k):
            cols.append(xp[:, i:i + stride * Ho:stride, j:j + stride * Wo:stride, :])
    p = jnp.stack(cols, axis=0)                      # (k*k, N, Ho, Wo, C)
    p = p.transpose(0, 4, 1, 2, 3)                   # (k*k, C, N, Ho, Wo)
    return p.reshape(k * k * C, N * Ho * Wo), Ho, Wo


# ------------------------------- forward pass ----------------------------------
def nlayer_discriminator(params, x):
    """NLayerDiscriminator.forward (getIntermFeat=False, use_sigmoid=False)."""
    h = jnp.transpose(x, (0, 2, 3, 1)).astype(jnp.bfloat16)     # NCHW -> NHWC bf16

    for p in params["layers"][:-1]:
        Nb = h.shape[0]
        a, Ho, Wo = im2col_nhwc(h, 4, 2, 1)
        cout = p["b"].shape[0]
        if p["bn"] is None:
            # Conv + LeakyReLU fused in the matmul epilogue.
            y = pallas_matmul_bias(a, p["w"], p["b"], act="lrelu")
        else:
            # Conv bias cancels exactly under train-mode BatchNorm -> drop it.
            y = pallas_matmul_bias(a, p["w"], jnp.zeros((cout,), jnp.float32),
                                   act="none")
            y = batch_norm_lrelu(y, p["bn"]["gamma"], p["bn"]["beta"])
        h = y.reshape(Nb, Ho, Wo, cout)

    # Final Cout=1 conv, computed transposed so stores are lane-dense.
    pf = params["layers"][-1]
    Nb = h.shape[0]
    aT, Ho, Wo = im2col_nhwc_T(h, 4, 2, 1)
    Msp = Nb * Ho * Wo
    bias_row = jnp.broadcast_to(pf["b"].astype(jnp.float32), (Msp,))   # Cout == 1
    outT = pallas_matmul_bias(pf["w"].T, aT, bias_row, act="none",
                              out_dtype=jnp.float32)                   # (1, Msp)
    return outT[0].reshape(Nb, 1, Ho, Wo)


# ------------------------------ parameter init ---------------------------------
def init_params(key, input_nc=3, ndf=64, n_layers=3):
    """Parameters for NLayerDiscriminator(input_nc, ndf, n_layers,
    norm_layer=BatchNorm2d).  Weights are pre-reshaped to (K=16*Cin, Cout) and
    pre-cast to bf16 once here (fed straight to the MXU matmul)."""
    specs = []
    nf = ndf
    specs.append((input_nc, ndf, False))            # conv0 + LeakyReLU
    for _ in range(1, n_layers):
        nf_prev, nf = nf, min(nf * 2, 512)
        specs.append((nf_prev, nf, True))           # conv + BN + LeakyReLU
    nf_prev, nf = nf, min(nf * 2, 512)
    specs.append((nf_prev, nf, True))               # conv + BN + LeakyReLU
    specs.append((nf, 1, False))                    # final conv (no activation)

    layers = []
    for cin, cout, has_bn in specs:
        key, kw_, kb_ = jax.random.split(key, 3)
        fan_in = cin * 16
        bound = 1.0 / math.sqrt(fan_in)
        w = jax.random.uniform(kw_, (cout, cin, 4, 4), jnp.float32, -bound, bound)
        b = jax.random.uniform(kb_, (cout,), jnp.float32, -bound, bound)
        # (Cout,Cin,kh,kw) -> (kh,kw,Cin,Cout) -> (16*Cin, Cout): matches im2col K order.
        wmat = w.transpose(2, 3, 1, 0).reshape(16 * cin, cout).astype(jnp.bfloat16)
        layers.append({
            "w": wmat,
            "b": b,
            "bn": ({"gamma": jnp.ones((cout,), jnp.float32),
                    "beta": jnp.zeros((cout,), jnp.float32)} if has_bn else None),
        })
    return {"layers": layers}


# ----------------------------------- main ---------------------------------------
if __name__ == "__main__":
    key = jax.random.PRNGKey(0)
    pkey, xkey = jax.random.split(key)
    params = init_params(pkey, input_nc=3, ndf=64, n_layers=3)

    # 5 stride-2 4x4 convs => spatial must be >= 32 for a non-empty output.
    x = jax.random.normal(xkey, (2, 3, 32, 32), jnp.float32)

    fwd = jax.jit(nlayer_discriminator)
    out = fwd(params, x)
    jax.block_until_ready(out)

    assert out.shape == (2, 1, 1, 1), out.shape
    assert bool(jnp.all(jnp.isfinite(out)))
    print("KERNEL_OK")
</pallas_src>

<mosaic_0001>
module attributes {stable_mosaic.version = 11 : i64} {
  func.func @_mm_kernel(%arg0: i32, %arg1: i32, %arg2: i32, %arg3: memref<512x128xbf16, #tpu.memory_space<vmem>>, %arg4: memref<128x128xbf16, #tpu.memory_space<vmem>>, %arg5: memref<1x128xf32, #tpu.memory_space<vmem>>, %arg6: memref<512x128xbf16, #tpu.memory_space<vmem>>) attributes {dimension_semantics = [#tpu.dimension_semantics<parallel>, #tpu.dimension_semantics<parallel>, #tpu.dimension_semantics<arbitrary>], iteration_bounds = array<i64: 1, 1, 1>, scalar_prefetch = 0 : i64, scratch_operands = 0 : i64, tpu.core_type = #tpu.core_type<tc>, window_params = [{transform_indices = @transform_0, window_bounds = array<i64: 512, 128>}, {transform_indices = @transform_1, window_bounds = array<i64: 128, 128>}, {transform_indices = @transform_2, window_bounds = array<i64: 1, 128>}, {transform_indices = @transform_3, window_bounds = array<i64: 512, 128>}]} {
    %c0 = arith.constant 0 : index
    %c0_0 = arith.constant 0 : index
    %0 = vector.load %arg3[%c0, %c0_0] : memref<512x128xbf16, #tpu.memory_space<vmem>>, vector<512x128xbf16>
    %c0_1 = arith.constant 0 : index
    %c0_2 = arith.constant 0 : index
    %1 = vector.load %arg4[%c0_1, %c0_2] : memref<128x128xbf16, #tpu.memory_space<vmem>>, vector<128x128xbf16>
    %cst = arith.constant dense<0.000000e+00> : vector<512x128xf32>
    %2 = tpu.matmul %0, %1, %cst {dimension_numbers = #tpu.dot_dimension_numbers<[1], [0], [0], [1], [0, 0, 1, 1], [], []>} : vector<512x128xbf16>, vector<128x128xbf16>, vector<512x128xf32> -> vector<512x128xf32>
    %c0_3 = arith.constant 0 : index
    %c0_4 = arith.constant 0 : index
    %3 = vector.load %arg5[%c0_3, %c0_4] : memref<1x128xf32, #tpu.memory_space<vmem>>, vector<1x128xf32>
    %4 = vector.broadcast %3 : vector<1x128xf32> to vector<512x128xf32>
    %5 = arith.addf %2, %4 : vector<512x128xf32>
    %cst_5 = arith.constant 0.000000e+00 : f32
    %6 = vector.broadcast %cst_5 : f32 to vector<512x128xf32>
    %7 = arith.cmpf oge, %5, %6 : vector<512x128xf32>
    %cst_6 = arith.constant 2.000000e-01 : f32
    %8 = vector.broadcast %cst_6 : f32 to vector<512x128xf32>
    %9 = arith.mulf %8, %5 : vector<512x128xf32>
    %10 = arith.select %7, %5, %9 : vector<512x128xi1>, vector<512x128xf32>
    %11 = arith.truncf %10 : vector<512x128xf32> to vector<512x128xbf16>
    %c0_7 = arith.constant 0 : index
    %c0_8 = arith.constant 0 : index
    %12 = vector.load %arg6[%c0_7, %c0_8] : memref<512x128xbf16, #tpu.memory_space<vmem>>, vector<512x128xbf16>
    tpu.vector_store %arg6[%c0_7, %c0_8], %11 {strides = array<i32>} : memref<512x128xbf16, #tpu.memory_space<vmem>>, vector<512x128xbf16>,
    return
  }
  func.func @transform_0(%arg0: i32, %arg1: i32, %arg2: i32) -> (i32, i32) {
    %c0_i32 = arith.constant 0 : i32
    return %arg0, %arg2 : i32, i32
  }
  func.func @transform_1(%arg0: i32, %arg1: i32, %arg2: i32) -> (i32, i32) {
    %c0_i32 = arith.constant 0 : i32
    return %arg2, %arg1 : i32, i32
  }
  func.func @transform_2(%arg0: i32, %arg1: i32, %arg2: i32) -> (i32, i32) {
    %c0_i32 = arith.constant 0 : i32
    %c0_i32_0 = arith.constant 0 : i32
    return %c0_i32, %arg1 : i32, i32
  }
  func.func @transform_3(%arg0: i32, %arg1: i32, %arg2: i32) -> (i32, i32) {
    %c0_i32 = arith.constant 0 : i32
    return %arg0, %arg1 : i32, i32
  }
}

module attributes {stable_mosaic.version = 11 : i64} {
  func.func @_mm_kernel(%arg0: i32, %arg1: i32, %arg2: i32, %arg3: memref<128x512xbf16, #tpu.memory_space<vmem>>, %arg4: memref<512x128xbf16, #tpu.memory_space<vmem>>, %arg5: memref<1x128xf32, #tpu.memory_space<vmem>>, %arg6: memref<128x128xbf16, #tpu.memory_space<vmem>>, %arg7: memref<128x128xf32, #tpu.memory_space<vmem>>) attributes {dimension_semantics = [#tpu.dimension_semantics<parallel>, #tpu.dimension_semantics<parallel>, #tpu.dimension_semantics<arbitrary>], iteration_bounds = array<i64: 1, 1, 2>, scalar_prefetch = 0 : i64, scratch_operands = 1 : i64, tpu.core_type = #tpu.core_type<tc>, window_params = [{transform_indices = @transform_0, window_bounds = array<i64: 128, 512>}, {transform_indices = @transform_1, window_bounds = array<i64: 512, 128>}, {transform_indices = @transform_2, window_bounds = array<i64: 1, 128>}, {transform_indices = @transform_3, window_bounds = array<i64: 128, 128>}]} {
    %c0_i32 = arith.constant 0 : i32
    %0 = arith.cmpi eq, %arg2, %c0_i32 : i32
    %1 = arith.extui %0 : i1 to i32
    %c0_i32_0 = arith.constant 0 : i32
    %2 = arith.cmpi ne, %1, %c0_i32_0 : i32
    scf.if %2 {
      %cst_9 = arith.constant 0.000000e+00 : f32
      %12 = vector.broadcast %cst_9 : f32 to vector<128x128xf32>
      %c0_10 = arith.constant 0 : index
      %c0_11 = arith.constant 0 : index
      %13 = vector.load %arg7[%c0_10, %c0_11] : memref<128x128xf32, #tpu.memory_space<vmem>>, vector<128x128xf32>
      tpu.vector_store %arg7[%c0_10, %c0_11], %12 {strides = array<i32>} : memref<128x128xf32, #tpu.memory_space<vmem>>, vector<128x128xf32>,
    } else {
    }
    %c0 = arith.constant 0 : index
    %c0_1 = arith.constant 0 : index
    %3 = vector.load %arg7[%c0, %c0_1] : memref<128x128xf32, #tpu.memory_space<vmem>>, vector<128x128xf32>
    %c0_2 = arith.constant 0 : index
    %c0_3 = arith.constant 0 : index
    %4 = vector.load %arg3[%c0_2, %c0_3] : memref<128x512xbf16, #tpu.memory_space<vmem>>, vector<128x512xbf16>
    %c0_4 = arith.constant 0 : index
    %c0_5 = arith.constant 0 : index
    %5 = vector.load %arg4[%c0_4, %c0_5] : memref<512x128xbf16, #tpu.memory_space<vmem>>, vector<512x128xbf16>
    %cst = arith.constant dense<0.000000e+00> : vector<128x128xf32>
    %6 = tpu.matmul %4, %5, %cst {dimension_numbers = #tpu.dot_dimension_numbers<[1], [0], [0], [1], [0, 0, 1, 1], [], []>} : vector<128x512xbf16>, vector<512x128xbf16>, vector<128x128xf32> -> vector<128x128xf32>
    %7 = arith.addf %3, %6 : vector<128x128xf32>
    %c0_6 = arith.constant 0 : index
    %c0_7 = arith.constant 0 : index
    %8 = vector.load %arg7[%c0_6, %c0_7] : memref<128x128xf32, #tpu.memory_space<vmem>>, vector<128x128xf32>
    tpu.vector_store %arg7[%c0_6, %c0_7], %7 {strides = array<i32>} : memref<128x128xf32, #tpu.memory_space<vmem>>, vector<128x128xf32>,
    %c1_i32 = arith.constant 1 : i32
    %9 = arith.cmpi eq, %arg2, %c1_i32 : i32
    %10 = arith.extui %9 : i1 to i32
    %c0_i32_8 = arith.constant 0 : i32
    %11 = arith.cmpi ne, %10, %c0_i32_8 : i32
    scf.if %11 {
      %c0_9 = arith.constant 0 : index
      %c0_10 = arith.constant 0 : index
      %12 = vector.load %arg7[%c0_9, %c0_10] : memref<128x128xf32, #tpu.memory_space<vmem>>, vector<128x128xf32>
      %c0_11 = arith.constant 0 : index
      %c0_12 = arith.constant 0 : index
      %13 = vector.load %arg5[%c0_11, %c0_12] : memref<1x128xf32, #tpu.memory_space<vmem>>, vector<1x128xf32>
      %14 = vector.broadcast %13 : vector<1x128xf32> to vector<128x128xf32>
      %15 = arith.addf %12, %14 : vector<128x128xf32>
      %16 = arith.truncf %15 : vector<128x128xf32> to vector<128x128xbf16>
      %c0_13 = arith.constant 0 : index
      %c0_14 = arith.constant 0 : index
      %17 = vector.load %arg6[%c0_13, %c0_14] : memref<128x128xbf16, #tpu.memory_space<vmem>>, vector<128x128xbf16>
      tpu.vector_store %arg6[%c0_13, %c0_14], %16 {strides = array<i32>} : memref<128x128xbf16, #tpu.memory_space<vmem>>, vector<128x128xbf16>,
    } else {
    }
    return
  }
  func.func @transform_0(%arg0: i32, %arg1: i32, %arg2: i32) -> (i32, i32) {
    %c0_i32 = arith.constant 0 : i32
    return %arg0, %arg2 : i32, i32
  }
  func.func @transform_1(%arg0: i32, %arg1: i32, %arg2: i32) -> (i32, i32) {
    %c0_i32 = arith.constant 0 : i32
    return %arg2, %arg1 : i32, i32
  }
  func.func @transform_2(%arg0: i32, %arg1: i32, %arg2: i32) -> (i32, i32) {
    %c0_i32 = arith.constant 0 : i32
    %c0_i32_0 = arith.constant 0 : i32
    return %c0_i32, %arg1 : i32, i32
  }
  func.func @transform_3(%arg0: i32, %arg1: i32, %arg2: i32) -> (i32, i32) {
    %c0_i32 = arith.constant 0 : i32
    return %arg0, %arg1 : i32, i32
  }
}

module attributes {stable_mosaic.version = 11 : i64} {
  func.func @_bn_stats_kernel(%arg0: i32, %arg1: memref<128x128xbf16, #tpu.memory_space<vmem>>, %arg2: memref<1x128xf32, #tpu.memory_space<vmem>>, %arg3: memref<1x128xf32, #tpu.memory_space<vmem>>) attributes {dimension_semantics = [#tpu.dimension_semantics<arbitrary>], iteration_bounds = array<i64: 1>, scalar_prefetch = 0 : i64, scratch_operands = 0 : i64, tpu.core_type = #tpu.core_type<tc>, window_params = [{transform_indices = @transform_0, window_bounds = array<i64: 128, 128>}, {pipeline_mode = #tpu.pipeline_mode<synchronous>, transform_indices = @transform_1, window_bounds = array<i64: 1, 128>}, {pipeline_mode = #tpu.pipeline_mode<synchronous>, transform_indices = @transform_2, window_bounds = array<i64: 1, 128>}]} {
    %c0_i32 = arith.constant 0 : i32
    %0 = arith.cmpi eq, %arg0, %c0_i32 : i32
    %1 = arith.extui %0 : i1 to i32
    %c0_i32_0 = arith.constant 0 : i32
    %2 = arith.cmpi ne, %1, %c0_i32_0 : i32
    scf.if %2 {
      %cst_11 = arith.constant 0.000000e+00 : f32
      %16 = vector.broadcast %cst_11 : f32 to vector<1x128xf32>
      %c0_12 = arith.constant 0 : index
      %c0_13 = arith.constant 0 : index
      %17 = vector.load %arg2[%c0_12, %c0_13] : memref<1x128xf32, #tpu.memory_space<vmem>>, vector<1x128xf32>
      tpu.vector_store %arg2[%c0_12, %c0_13], %16 {strides = array<i32>} : memref<1x128xf32, #tpu.memory_space<vmem>>, vector<1x128xf32>,
      %cst_14 = arith.constant 0.000000e+00 : f32
      %18 = vector.broadcast %cst_14 : f32 to vector<1x128xf32>
      %c0_15 = arith.constant 0 : index
      %c0_16 = arith.constant 0 : index
      %19 = vector.load %arg3[%c0_15, %c0_16] : memref<1x128xf32, #tpu.memory_space<vmem>>, vector<1x128xf32>
      tpu.vector_store %arg3[%c0_15, %c0_16], %18 {strides = array<i32>} : memref<1x128xf32, #tpu.memory_space<vmem>>, vector<1x128xf32>,
    } else {
    }
    %c0 = arith.constant 0 : index
    %c0_1 = arith.constant 0 : index
    %3 = vector.load %arg1[%c0, %c0_1] : memref<128x128xbf16, #tpu.memory_space<vmem>>, vector<128x128xbf16>
    %4 = arith.extf %3 : vector<128x128xbf16> to vector<128x128xf32>
    %c0_2 = arith.constant 0 : index
    %c0_3 = arith.constant 0 : index
    %5 = vector.load %arg2[%c0_2, %c0_3] : memref<1x128xf32, #tpu.memory_space<vmem>>, vector<1x128xf32>
    %cst = arith.constant dense<0.000000e+00> : vector<128xf32>
    %6 = vector.multi_reduction <add>, %4, %cst [0] : vector<128x128xf32> to vector<128xf32>
    %7 = vector.shape_cast %6 : vector<128xf32> to vector<1x128xf32>
    %8 = arith.addf %5, %7 : vector<1x128xf32>
    %c0_4 = arith.constant 0 : index
    %c0_5 = arith.constant 0 : index
    %9 = vector.load %arg2[%c0_4, %c0_5] : memref<1x128xf32, #tpu.memory_space<vmem>>, vector<1x128xf32>
    tpu.vector_store %arg2[%c0_4, %c0_5], %8 {strides = array<i32>} : memref<1x128xf32, #tpu.memory_space<vmem>>, vector<1x128xf32>,
    %c0_6 = arith.constant 0 : index
    %c0_7 = arith.constant 0 : index
    %10 = vector.load %arg3[%c0_6, %c0_7] : memref<1x128xf32, #tpu.memory_space<vmem>>, vector<1x128xf32>
    %11 = arith.mulf %4, %4 : vector<128x128xf32>
    %cst_8 = arith.constant dense<0.000000e+00> : vector<128xf32>
    %12 = vector.multi_reduction <add>, %11, %cst_8 [0] : vector<128x128xf32> to vector<128xf32>
    %13 = vector.shape_cast %12 : vector<128xf32> to vector<1x128xf32>
    %14 = arith.addf %10, %13 : vector<1x128xf32>
    %c0_9 = arith.constant 0 : index
    %c0_10 = arith.constant 0 : index
    %15 = vector.load %arg3[%c0_9, %c0_10] : memref<1x128xf32, #tpu.memory_space<vmem>>, vector<1x128xf32>
    tpu.vector_store %arg3[%c0_9, %c0_10], %14 {strides = array<i32>} : memref<1x128xf32, #tpu.memory_space<vmem>>, vector<1x128xf32>,
    return
  }
  func.func @transform_0(%arg0: i32) -> (i32, i32) {
    %c0_i32 = arith.constant 0 : i32
    %c0_i32_0 = arith.constant 0 : i32
    return %arg0, %c0_i32 : i32, i32
  }
  func.func @transform_1(%arg0: i32) -> (i32, i32) {
    %c0_i32 = arith.constant 0 : i32
    %c0_i32_0 = arith.constant 0 : i32
    %c0_i32_1 = arith.constant 0 : i32
    return %c0_i32, %c0_i32_0 : i32, i32
  }
  func.func @transform_2(%arg0: i32) -> (i32, i32) {
    %c0_i32 = arith.constant 0 : i32
    %c0_i32_0 = arith.constant 0 : i32
    %c0_i32_1 = arith.constant 0 : i32
    return %c0_i32, %c0_i32_0 : i32, i32
  }
}

module attributes {stable_mosaic.version = 11 : i64} {
  func.func @_bn_apply_kernel(%arg0: i32, %arg1: memref<128x128xbf16, #tpu.memory_space<vmem>>, %arg2: memref<1x128xf32, #tpu.memory_space<vmem>>, %arg3: memref<1x128xf32, #tpu.memory_space<vmem>>, %arg4: memref<128x128xbf16, #tpu.memory_space<vmem>>) attributes {dimension_semantics = [#tpu.dimension_semantics<parallel>], iteration_bounds = array<i64: 1>, scalar_prefetch = 0 : i64, scratch_operands = 0 : i64, tpu.core_type = #tpu.core_type<tc>, window_params = [{transform_indices = @transform_0, window_bounds = array<i64: 128, 128>}, {pipeline_mode = #tpu.pipeline_mode<synchronous>, transform_indices = @transform_1, window_bounds = array<i64: 1, 128>}, {pipeline_mode = #tpu.pipeline_mode<synchronous>, transform_indices = @transform_2, window_bounds = array<i64: 1, 128>}, {transform_indices = @transform_3, window_bounds = array<i64: 128, 128>}]} {
    %c0 = arith.constant 0 : index
    %c0_0 = arith.constant 0 : index
    %0 = vector.load %arg1[%c0, %c0_0] : memref<128x128xbf16, #tpu.memory_space<vmem>>, vector<128x128xbf16>
    %1 = arith.extf %0 : vector<128x128xbf16> to vector<128x128xf32>
    %c0_1 = arith.constant 0 : index
    %c0_2 = arith.constant 0 : index
    %2 = vector.load %arg2[%c0_1, %c0_2] : memref<1x128xf32, #tpu.memory_space<vmem>>, vector<1x128xf32>
    %3 = vector.broadcast %2 : vector<1x128xf32> to vector<128x128xf32>
    %4 = arith.mulf %1, %3 : vector<128x128xf32>
    %c0_3 = arith.constant 0 : index
    %c0_4 = arith.constant 0 : index
    %5 = vector.load %arg3[%c0_3, %c0_4] : memref<1x128xf32, #tpu.memory_space<vmem>>, vector<1x128xf32>
    %6 = vector.broadcast %5 : vector<1x128xf32> to vector<128x128xf32>
    %7 = arith.addf %4, %6 : vector<128x128xf32>
    %cst = arith.constant 0.000000e+00 : f32
    %8 = vector.broadcast %cst : f32 to vector<128x128xf32>
    %9 = arith.cmpf oge, %7, %8 : vector<128x128xf32>
    %cst_5 = arith.constant 2.000000e-01 : f32
    %10 = vector.broadcast %cst_5 : f32 to vector<128x128xf32>
    %11 = arith.mulf %10, %7 : vector<128x128xf32>
    %12 = arith.select %9, %7, %11 : vector<128x128xi1>, vector<128x128xf32>
    %13 = arith.truncf %12 : vector<128x128xf32> to vector<128x128xbf16>
    %c0_6 = arith.constant 0 : index
    %c0_7 = arith.constant 0 : index
    %14 = vector.load %arg4[%c0_6, %c0_7] : memref<128x128xbf16, #tpu.memory_space<vmem>>, vector<128x128xbf16>
    tpu.vector_store %arg4[%c0_6, %c0_7], %13 {strides = array<i32>} : memref<128x128xbf16, #tpu.memory_space<vmem>>, vector<128x128xbf16>,
    return
  }
  func.func @transform_0(%arg0: i32) -> (i32, i32) {
    %c0_i32 = arith.constant 0 : i32
    %c0_i32_0 = arith.constant 0 : i32
    return %arg0, %c0_i32 : i32, i32
  }
  func.func @transform_1(%arg0: i32) -> (i32, i32) {
    %c0_i32 = arith.constant 0 : i32
    %c0_i32_0 = arith.constant 0 : i32
    %c0_i32_1 = arith.constant 0 : i32
    return %c0_i32, %c0_i32_0 : i32, i32
  }
  func.func @transform_2(%arg0: i32) -> (i32, i32) {
    %c0_i32 = arith.constant 0 : i32
    %c0_i32_0 = arith.constant 0 : i32
    %c0_i32_1 = arith.constant 0 : i32
    return %c0_i32, %c0_i32_0 : i32, i32
  }
  func.func @transform_3(%arg0: i32) -> (i32, i32) {
    %c0_i32 = arith.constant 0 : i32
    %c0_i32_0 = arith.constant 0 : i32
    return %arg0, %c0_i32 : i32, i32
  }
}

module attributes {stable_mosaic.version = 11 : i64} {
  func.func @_mm_kernel(%arg0: i32, %arg1: i32, %arg2: i32, %arg3: memref<32x512xbf16, #tpu.memory_space<vmem>>, %arg4: memref<512x256xbf16, #tpu.memory_space<vmem>>, %arg5: memref<1x256xf32, #tpu.memory_space<vmem>>, %arg6: memref<32x256xbf16, #tpu.memory_space<vmem>>, %arg7: memref<32x256xf32, #tpu.memory_space<vmem>>) attributes {dimension_semantics = [#tpu.dimension_semantics<parallel>, #tpu.dimension_semantics<parallel>, #tpu.dimension_semantics<arbitrary>], iteration_bounds = array<i64: 1, 1, 4>, scalar_prefetch = 0 : i64, scratch_operands = 1 : i64, tpu.core_type = #tpu.core_type<tc>, window_params = [{transform_indices = @transform_0, window_bounds = array<i64: 32, 512>}, {transform_indices = @transform_1, window_bounds = array<i64: 512, 256>}, {transform_indices = @transform_2, window_bounds = array<i64: 1, 256>}, {transform_indices = @transform_3, window_bounds = array<i64: 32, 256>}]} {
    %c0_i32 = arith.constant 0 : i32
    %0 = arith.cmpi eq, %arg2, %c0_i32 : i32
    %1 = arith.extui %0 : i1 to i32
    %c0_i32_0 = arith.constant 0 : i32
    %2 = arith.cmpi ne, %1, %c0_i32_0 : i32
    scf.if %2 {
      %cst_9 = arith.constant 0.000000e+00 : f32
      %12 = vector.broadcast %cst_9 : f32 to vector<32x256xf32>
      %c0_10 = arith.constant 0 : index
      %c0_11 = arith.constant 0 : index
      %13 = vector.load %arg7[%c0_10, %c0_11] : memref<32x256xf32, #tpu.memory_space<vmem>>, vector<32x256xf32>
      tpu.vector_store %arg7[%c0_10, %c0_11], %12 {strides = array<i32>} : memref<32x256xf32, #tpu.memory_space<vmem>>, vector<32x256xf32>,
    } else {
    }
    %c0 = arith.constant 0 : index
    %c0_1 = arith.constant 0 : index
    %3 = vector.load %arg7[%c0, %c0_1] : memref<32x256xf32, #tpu.memory_space<vmem>>, vector<32x256xf32>
    %c0_2 = arith.constant 0 : index
    %c0_3 = arith.constant 0 : index
    %4 = vector.load %arg3[%c0_2, %c0_3] : memref<32x512xbf16, #tpu.memory_space<vmem>>, vector<32x512xbf16>
    %c0_4 = arith.constant 0 : index
    %c0_5 = arith.constant 0 : index
    %5 = vector.load %arg4[%c0_4, %c0_5] : memref<512x256xbf16, #tpu.memory_space<vmem>>, vector<512x256xbf16>
    %cst = arith.constant dense<0.000000e+00> : vector<32x256xf32>
    %6 = tpu.matmul %4, %5, %cst {dimension_numbers = #tpu.dot_dimension_numbers<[1], [0], [0], [1], [0, 0, 1, 1], [], []>} : vector<32x512xbf16>, vector<512x256xbf16>, vector<32x256xf32> -> vector<32x256xf32>
    %7 = arith.addf %3, %6 : vector<32x256xf32>
    %c0_6 = arith.constant 0 : index
    %c0_7 = arith.constant 0 : index
    %8 = vector.load %arg7[%c0_6, %c0_7] : memref<32x256xf32, #tpu.memory_space<vmem>>, vector<32x256xf32>
    tpu.vector_store %arg7[%c0_6, %c0_7], %7 {strides = array<i32>} : memref<32x256xf32, #tpu.memory_space<vmem>>, vector<32x256xf32>,
    %c3_i32 = arith.constant 3 : i32
    %9 = arith.cmpi eq, %arg2, %c3_i32 : i32
    %10 = arith.extui %9 : i1 to i32
    %c0_i32_8 = arith.constant 0 : i32
    %11 = arith.cmpi ne, %10, %c0_i32_8 : i32
    scf.if %11 {
      %c0_9 = arith.constant 0 : index
      %c0_10 = arith.constant 0 : index
      %12 = vector.load %arg7[%c0_9, %c0_10] : memref<32x256xf32, #tpu.memory_space<vmem>>, vector<32x256xf32>
      %c0_11 = arith.constant 0 : index
      %c0_12 = arith.constant 0 : index
      %13 = vector.load %arg5[%c0_11, %c0_12] : memref<1x256xf32, #tpu.memory_space<vmem>>, vector<1x256xf32>
      %14 = vector.broadcast %13 : vector<1x256xf32> to vector<32x256xf32>
      %15 = arith.addf %12, %14 : vector<32x256xf32>
      %16 = arith.truncf %15 : vector<32x256xf32> to vector<32x256xbf16>
      %c0_13 = arith.constant 0 : index
      %c0_14 = arith.constant 0 : index
      %17 = vector.load %arg6[%c0_13, %c0_14] : memref<32x256xbf16, #tpu.memory_space<vmem>>, vector<32x256xbf16>
      tpu.vector_store %arg6[%c0_13, %c0_14], %16 {strides = array<i32>} : memref<32x256xbf16, #tpu.memory_space<vmem>>, vector<32x256xbf16>,
    } else {
    }
    return
  }
  func.func @transform_0(%arg0: i32, %arg1: i32, %arg2: i32) -> (i32, i32) {
    %c0_i32 = arith.constant 0 : i32
    return %arg0, %arg2 : i32, i32
  }
  func.func @transform_1(%arg0: i32, %arg1: i32, %arg2: i32) -> (i32, i32) {
    %c0_i32 = arith.constant 0 : i32
    return %arg2, %arg1 : i32, i32
  }
  func.func @transform_2(%arg0: i32, %arg1: i32, %arg2: i32) -> (i32, i32) {
    %c0_i32 = arith.constant 0 : i32
    %c0_i32_0 = arith.constant 0 : i32
    return %c0_i32, %arg1 : i32, i32
  }
  func.func @transform_3(%arg0: i32, %arg1: i32, %arg2: i32) -> (i32, i32) {
    %c0_i32 = arith.constant 0 : i32
    return %arg0, %arg1 : i32, i32
  }
}

module attributes {stable_mosaic.version = 11 : i64} {
  func.func @_bn_stats_kernel(%arg0: i32, %arg1: memref<32x256xbf16, #tpu.memory_space<vmem>>, %arg2: memref<1x256xf32, #tpu.memory_space<vmem>>, %arg3: memref<1x256xf32, #tpu.memory_space<vmem>>) attributes {dimension_semantics = [#tpu.dimension_semantics<arbitrary>], iteration_bounds = array<i64: 1>, scalar_prefetch = 0 : i64, scratch_operands = 0 : i64, tpu.core_type = #tpu.core_type<tc>, window_params = [{transform_indices = @transform_0, window_bounds = array<i64: 32, 256>}, {pipeline_mode = #tpu.pipeline_mode<synchronous>, transform_indices = @transform_1, window_bounds = array<i64: 1, 256>}, {pipeline_mode = #tpu.pipeline_mode<synchronous>, transform_indices = @transform_2, window_bounds = array<i64: 1, 256>}]} {
    %c0_i32 = arith.constant 0 : i32
    %0 = arith.cmpi eq, %arg0, %c0_i32 : i32
    %1 = arith.extui %0 : i1 to i32
    %c0_i32_0 = arith.constant 0 : i32
    %2 = arith.cmpi ne, %1, %c0_i32_0 : i32
    scf.if %2 {
      %cst_11 = arith.constant 0.000000e+00 : f32
      %16 = vector.broadcast %cst_11 : f32 to vector<1x256xf32>
      %c0_12 = arith.constant 0 : index
      %c0_13 = arith.constant 0 : index
      %17 = vector.load %arg2[%c0_12, %c0_13] : memref<1x256xf32, #tpu.memory_space<vmem>>, vector<1x256xf32>
      tpu.vector_store %arg2[%c0_12, %c0_13], %16 {strides = array<i32>} : memref<1x256xf32, #tpu.memory_space<vmem>>, vector<1x256xf32>,
      %cst_14 = arith.constant 0.000000e+00 : f32
      %18 = vector.broadcast %cst_14 : f32 to vector<1x256xf32>
      %c0_15 = arith.constant 0 : index
      %c0_16 = arith.constant 0 : index
      %19 = vector.load %arg3[%c0_15, %c0_16] : memref<1x256xf32, #tpu.memory_space<vmem>>, vector<1x256xf32>
      tpu.vector_store %arg3[%c0_15, %c0_16], %18 {strides = array<i32>} : memref<1x256xf32, #tpu.memory_space<vmem>>, vector<1x256xf32>,
    } else {
    }
    %c0 = arith.constant 0 : index
    %c0_1 = arith.constant 0 : index
    %3 = vector.load %arg1[%c0, %c0_1] : memref<32x256xbf16, #tpu.memory_space<vmem>>, vector<32x256xbf16>
    %4 = arith.extf %3 : vector<32x256xbf16> to vector<32x256xf32>
    %c0_2 = arith.constant 0 : index
    %c0_3 = arith.constant 0 : index
    %5 = vector.load %arg2[%c0_2, %c0_3] : memref<1x256xf32, #tpu.memory_space<vmem>>, vector<1x256xf32>
    %cst = arith.constant dense<0.000000e+00> : vector<256xf32>
    %6 = vector.multi_reduction <add>, %4, %cst [0] : vector<32x256xf32> to vector<256xf32>
    %7 = vector.shape_cast %6 : vector<256xf32> to vector<1x256xf32>
    %8 = arith.addf %5, %7 : vector<1x256xf32>
    %c0_4 = arith.constant 0 : index
    %c0_5 = arith.constant 0 : index
    %9 = vector.load %arg2[%c0_4, %c0_5] : memref<1x256xf32, #tpu.memory_space<vmem>>, vector<1x256xf32>
    tpu.vector_store %arg2[%c0_4, %c0_5], %8 {strides = array<i32>} : memref<1x256xf32, #tpu.memory_space<vmem>>, vector<1x256xf32>,
    %c0_6 = arith.constant 0 : index
    %c0_7 = arith.constant 0 : index
    %10 = vector.load %arg3[%c0_6, %c0_7] : memref<1x256xf32, #tpu.memory_space<vmem>>, vector<1x256xf32>
    %11 = arith.mulf %4, %4 : vector<32x256xf32>
    %cst_8 = arith.constant dense<0.000000e+00> : vector<256xf32>
    %12 = vector.multi_reduction <add>, %11, %cst_8 [0] : vector<32x256xf32> to vector<256xf32>
    %13 = vector.shape_cast %12 : vector<256xf32> to vector<1x256xf32>
    %14 = arith.addf %10, %13 : vector<1x256xf32>
    %c0_9 = arith.constant 0 : index
    %c0_10 = arith.constant 0 : index
    %15 = vector.load %arg3[%c0_9, %c0_10] : memref<1x256xf32, #tpu.memory_space<vmem>>, vector<1x256xf32>
    tpu.vector_store %arg3[%c0_9, %c0_10], %14 {strides = array<i32>} : memref<1x256xf32, #tpu.memory_space<vmem>>, vector<1x256xf32>,
    return
  }
  func.func @transform_0(%arg0: i32) -> (i32, i32) {
    %c0_i32 = arith.constant 0 : i32
    %c0_i32_0 = arith.constant 0 : i32
    return %arg0, %c0_i32 : i32, i32
  }
  func.func @transform_1(%arg0: i32) -> (i32, i32) {
    %c0_i32 = arith.constant 0 : i32
    %c0_i32_0 = arith.constant 0 : i32
    %c0_i32_1 = arith.constant 0 : i32
    return %c0_i32, %c0_i32_0 : i32, i32
  }
  func.func @transform_2(%arg0: i32) -> (i32, i32) {
    %c0_i32 = arith.constant 0 : i32
    %c0_i32_0 = arith.constant 0 : i32
    %c0_i32_1 = arith.constant 0 : i32
    return %c0_i32, %c0_i32_0 : i32, i32
  }
}

module attributes {stable_mosaic.version = 11 : i64} {
  func.func @_bn_apply_kernel(%arg0: i32, %arg1: memref<32x256xbf16, #tpu.memory_space<vmem>>, %arg2: memref<1x256xf32, #tpu.memory_space<vmem>>, %arg3: memref<1x256xf32, #tpu.memory_space<vmem>>, %arg4: memref<32x256xbf16, #tpu.memory_space<vmem>>) attributes {dimension_semantics = [#tpu.dimension_semantics<parallel>], iteration_bounds = array<i64: 1>, scalar_prefetch = 0 : i64, scratch_operands = 0 : i64, tpu.core_type = #tpu.core_type<tc>, window_params = [{transform_indices = @transform_0, window_bounds = array<i64: 32, 256>}, {pipeline_mode = #tpu.pipeline_mode<synchronous>, transform_indices = @transform_1, window_bounds = array<i64: 1, 256>}, {pipeline_mode = #tpu.pipeline_mode<synchronous>, transform_indices = @transform_2, window_bounds = array<i64: 1, 256>}, {transform_indices = @transform_3, window_bounds = array<i64: 32, 256>}]} {
    %c0 = arith.constant 0 : index
    %c0_0 = arith.constant 0 : index
    %0 = vector.load %arg1[%c0, %c0_0] : memref<32x256xbf16, #tpu.memory_space<vmem>>, vector<32x256xbf16>
    %1 = arith.extf %0 : vector<32x256xbf16> to vector<32x256xf32>
    %c0_1 = arith.constant 0 : index
    %c0_2 = arith.constant 0 : index
    %2 = vector.load %arg2[%c0_1, %c0_2] : memref<1x256xf32, #tpu.memory_space<vmem>>, vector<1x256xf32>
    %3 = vector.broadcast %2 : vector<1x256xf32> to vector<32x256xf32>
    %4 = arith.mulf %1, %3 : vector<32x256xf32>
    %c0_3 = arith.constant 0 : index
    %c0_4 = arith.constant 0 : index
    %5 = vector.load %arg3[%c0_3, %c0_4] : memref<1x256xf32, #tpu.memory_space<vmem>>, vector<1x256xf32>
    %6 = vector.broadcast %5 : vector<1x256xf32> to vector<32x256xf32>
    %7 = arith.addf %4, %6 : vector<32x256xf32>
    %cst = arith.constant 0.000000e+00 : f32
    %8 = vector.broadcast %cst : f32 to vector<32x256xf32>
    %9 = arith.cmpf oge, %7, %8 : vector<32x256xf32>
    %cst_5 = arith.constant 2.000000e-01 : f32
    %10 = vector.broadcast %cst_5 : f32 to vector<32x256xf32>
    %11 = arith.mulf %10, %7 : vector<32x256xf32>
    %12 = arith.select %9, %7, %11 : vector<32x256xi1>, vector<32x256xf32>
    %13 = arith.truncf %12 : vector<32x256xf32> to vector<32x256xbf16>
    %c0_6 = arith.constant 0 : index
    %c0_7 = arith.constant 0 : index
    %14 = vector.load %arg4[%c0_6, %c0_7] : memref<32x256xbf16, #tpu.memory_space<vmem>>, vector<32x256xbf16>
    tpu.vector_store %arg4[%c0_6, %c0_7], %13 {strides = array<i32>} : memref<32x256xbf16, #tpu.memory_space<vmem>>, vector<32x256xbf16>,
    return
  }
  func.func @transform_0(%arg0: i32) -> (i32, i32) {
    %c0_i32 = arith.constant 0 : i32
    %c0_i32_0 = arith.constant 0 : i32
    return %arg0, %c0_i32 : i32, i32
  }
  func.func @transform_1(%arg0: i32) -> (i32, i32) {
    %c0_i32 = arith.constant 0 : i32
    %c0_i32_0 = arith.constant 0 : i32
    %c0_i32_1 = arith.constant 0 : i32
    return %c0_i32, %c0_i32_0 : i32, i32
  }
  func.func @transform_2(%arg0: i32) -> (i32, i32) {
    %c0_i32 = arith.constant 0 : i32
    %c0_i32_0 = arith.constant 0 : i32
    %c0_i32_1 = arith.constant 0 : i32
    return %c0_i32, %c0_i32_0 : i32, i32
  }
  func.func @transform_3(%arg0: i32) -> (i32, i32) {
    %c0_i32 = arith.constant 0 : i32
    %c0_i32_0 = arith.constant 0 : i32
    return %arg0, %c0_i32 : i32, i32
  }
}

module attributes {stable_mosaic.version = 11 : i64} {
  func.func @_bn_stats_kernel(%arg0: i32, %arg1: memref<8x512xbf16, #tpu.memory_space<vmem>>, %arg2: memref<1x512xf32, #tpu.memory_space<vmem>>, %arg3: memref<1x512xf32, #tpu.memory_space<vmem>>) attributes {dimension_semantics = [#tpu.dimension_semantics<arbitrary>], iteration_bounds = array<i64: 1>, scalar_prefetch = 0 : i64, scratch_operands = 0 : i64, tpu.core_type = #tpu.core_type<tc>, window_params = [{transform_indices = @transform_0, window_bounds = array<i64: 8, 512>}, {pipeline_mode = #tpu.pipeline_mode<synchronous>, transform_indices = @transform_1, window_bounds = array<i64: 1, 512>}, {pipeline_mode = #tpu.pipeline_mode<synchronous>, transform_indices = @transform_2, window_bounds = array<i64: 1, 512>}]} {
    %c0_i32 = arith.constant 0 : i32
    %0 = arith.cmpi eq, %arg0, %c0_i32 : i32
    %1 = arith.extui %0 : i1 to i32
    %c0_i32_0 = arith.constant 0 : i32
    %2 = arith.cmpi ne, %1, %c0_i32_0 : i32
    scf.if %2 {
      %cst_11 = arith.constant 0.000000e+00 : f32
      %16 = vector.broadcast %cst_11 : f32 to vector<1x512xf32>
      %c0_12 = arith.constant 0 : index
      %c0_13 = arith.constant 0 : index
      %17 = vector.load %arg2[%c0_12, %c0_13] : memref<1x512xf32, #tpu.memory_space<vmem>>, vector<1x512xf32>
      tpu.vector_store %arg2[%c0_12, %c0_13], %16 {strides = array<i32>} : memref<1x512xf32, #tpu.memory_space<vmem>>, vector<1x512xf32>,
      %cst_14 = arith.constant 0.000000e+00 : f32
      %18 = vector.broadcast %cst_14 : f32 to vector<1x512xf32>
      %c0_15 = arith.constant 0 : index
      %c0_16 = arith.constant 0 : index
      %19 = vector.load %arg3[%c0_15, %c0_16] : memref<1x512xf32, #tpu.memory_space<vmem>>, vector<1x512xf32>
      tpu.vector_store %arg3[%c0_15, %c0_16], %18 {strides = array<i32>} : memref<1x512xf32, #tpu.memory_space<vmem>>, vector<1x512xf32>,
    } else {
    }
    %c0 = arith.constant 0 : index
    %c0_1 = arith.constant 0 : index
    %3 = vector.load %arg1[%c0, %c0_1] : memref<8x512xbf16, #tpu.memory_space<vmem>>, vector<8x512xbf16>
    %4 = arith.extf %3 : vector<8x512xbf16> to vector<8x512xf32>
    %c0_2 = arith.constant 0 : index
    %c0_3 = arith.constant 0 : index
    %5 = vector.load %arg2[%c0_2, %c0_3] : memref<1x512xf32, #tpu.memory_space<vmem>>, vector<1x512xf32>
    %cst = arith.constant dense<0.000000e+00> : vector<512xf32>
    %6 = vector.multi_reduction <add>, %4, %cst [0] : vector<8x512xf32> to vector<512xf32>
    %7 = vector.shape_cast %6 : vector<512xf32> to vector<1x512xf32>
    %8 = arith.addf %5, %7 : vector<1x512xf32>
    %c0_4 = arith.constant 0 : index
    %c0_5 = arith.constant 0 : index
    %9 = vector.load %arg2[%c0_4, %c0_5] : memref<1x512xf32, #tpu.memory_space<vmem>>, vector<1x512xf32>
    tpu.vector_store %arg2[%c0_4, %c0_5], %8 {strides = array<i32>} : memref<1x512xf32, #tpu.memory_space<vmem>>, vector<1x512xf32>,
    %c0_6 = arith.constant 0 : index
    %c0_7 = arith.constant 0 : index
    %10 = vector.load %arg3[%c0_6, %c0_7] : memref<1x512xf32, #tpu.memory_space<vmem>>, vector<1x512xf32>
    %11 = arith.mulf %4, %4 : vector<8x512xf32>
    %cst_8 = arith.constant dense<0.000000e+00> : vector<512xf32>
    %12 = vector.multi_reduction <add>, %11, %cst_8 [0] : vector<8x512xf32> to vector<512xf32>
    %13 = vector.shape_cast %12 : vector<512xf32> to vector<1x512xf32>
    %14 = arith.addf %10, %13 : vector<1x512xf32>
    %c0_9 = arith.constant 0 : index
    %c0_10 = arith.constant 0 : index
    %15 = vector.load %arg3[%c0_9, %c0_10] : memref<1x512xf32, #tpu.memory_space<vmem>>, vector<1x512xf32>
    tpu.vector_store %arg3[%c0_9, %c0_10], %14 {strides = array<i32>} : memref<1x512xf32, #tpu.memory_space<vmem>>, vector<1x512xf32>,
    return
  }
  func.func @transform_0(%arg0: i32) -> (i32, i32) {
    %c0_i32 = arith.constant 0 : i32
    %c0_i32_0 = arith.constant 0 : i32
    return %arg0, %c0_i32 : i32, i32
  }
  func.func @transform_1(%arg0: i32) -> (i32, i32) {
    %c0_i32 = arith.constant 0 : i32
    %c0_i32_0 = arith.constant 0 : i32
    %c0_i32_1 = arith.constant 0 : i32
    return %c0_i32, %c0_i32_0 : i32, i32
  }
  func.func @transform_2(%arg0: i32) -> (i32, i32) {
    %c0_i32 = arith.constant 0 : i32
    %c0_i32_0 = arith.constant 0 : i32
    %c0_i32_1 = arith.constant 0 : i32
    return %c0_i32, %c0_i32_0 : i32, i32
  }
}

module attributes {stable_mosaic.version = 11 : i64} {
  func.func @_mm_kernel(%arg0: i32, %arg1: i32, %arg2: i32, %arg3: memref<8x512xbf16, #tpu.memory_space<vmem>>, %arg4: memref<512x256xbf16, #tpu.memory_space<vmem>>, %arg5: memref<1x256xf32, #tpu.memory_space<vmem>>, %arg6: memref<8x256xbf16, #tpu.memory_space<vmem>>, %arg7: memref<8x256xf32, #tpu.memory_space<vmem>>) attributes {dimension_semantics = [#tpu.dimension_semantics<parallel>, #tpu.dimension_semantics<parallel>, #tpu.dimension_semantics<arbitrary>], iteration_bounds = array<i64: 1, 2, 8>, scalar_prefetch = 0 : i64, scratch_operands = 1 : i64, tpu.core_type = #tpu.core_type<tc>, window_params = [{transform_indices = @transform_0, window_bounds = array<i64: 8, 512>}, {transform_indices = @transform_1, window_bounds = array<i64: 512, 256>}, {transform_indices = @transform_2, window_bounds = array<i64: 1, 256>}, {transform_indices = @transform_3, window_bounds = array<i64: 8, 256>}]} {
    %c0_i32 = arith.constant 0 : i32
    %0 = arith.cmpi eq, %arg2, %c0_i32 : i32
    %1 = arith.extui %0 : i1 to i32
    %c0_i32_0 = arith.constant 0 : i32
    %2 = arith.cmpi ne, %1, %c0_i32_0 : i32
    scf.if %2 {
      %cst_9 = arith.constant 0.000000e+00 : f32
      %12 = vector.broadcast %cst_9 : f32 to vector<8x256xf32>
      %c0_10 = arith.constant 0 : index
      %c0_11 = arith.constant 0 : index
      %13 = vector.load %arg7[%c0_10, %c0_11] : memref<8x256xf32, #tpu.memory_space<vmem>>, vector<8x256xf32>
      tpu.vector_store %arg7[%c0_10, %c0_11], %12 {strides = array<i32>} : memref<8x256xf32, #tpu.memory_space<vmem>>, vector<8x256xf32>,
    } else {
    }
    %c0 = arith.constant 0 : index
    %c0_1 = arith.constant 0 : index
    %3 = vector.load %arg7[%c0, %c0_1] : memref<8x256xf32, #tpu.memory_space<vmem>>, vector<8x256xf32>
    %c0_2 = arith.constant 0 : index
    %c0_3 = arith.constant 0 : index
    %4 = vector.load %arg3[%c0_2, %c0_3] : memref<8x512xbf16, #tpu.memory_space<vmem>>, vector<8x512xbf16>
    %c0_4 = arith.constant 0 : index
    %c0_5 = arith.constant 0 : index
    %5 = vector.load %arg4[%c0_4, %c0_5] : memref<512x256xbf16, #tpu.memory_space<vmem>>, vector<512x256xbf16>
    %cst = arith.constant dense<0.000000e+00> : vector<8x256xf32>
    %6 = tpu.matmul %4, %5, %cst {dimension_numbers = #tpu.dot_dimension_numbers<[1], [0], [0], [1], [0, 0, 1, 1], [], []>} : vector<8x512xbf16>, vector<512x256xbf16>, vector<8x256xf32> -> vector<8x256xf32>
    %7 = arith.addf %3, %6 : vector<8x256xf32>
    %c0_6 = arith.constant 0 : index
    %c0_7 = arith.constant 0 : index
    %8 = vector.load %arg7[%c0_6, %c0_7] : memref<8x256xf32, #tpu.memory_space<vmem>>, vector<8x256xf32>
    tpu.vector_store %arg7[%c0_6, %c0_7], %7 {strides = array<i32>} : memref<8x256xf32, #tpu.memory_space<vmem>>, vector<8x256xf32>,
    %c7_i32 = arith.constant 7 : i32
    %9 = arith.cmpi eq, %arg2, %c7_i32 : i32
    %10 = arith.extui %9 : i1 to i32
    %c0_i32_8 = arith.constant 0 : i32
    %11 = arith.cmpi ne, %10, %c0_i32_8 : i32
    scf.if %11 {
      %c0_9 = arith.constant 0 : index
      %c0_10 = arith.constant 0 : index
      %12 = vector.load %arg7[%c0_9, %c0_10] : memref<8x256xf32, #tpu.memory_space<vmem>>, vector<8x256xf32>
      %c0_11 = arith.constant 0 : index
      %c0_12 = arith.constant 0 : index
      %13 = vector.load %arg5[%c0_11, %c0_12] : memref<1x256xf32, #tpu.memory_space<vmem>>, vector<1x256xf32>
      %14 = vector.broadcast %13 : vector<1x256xf32> to vector<8x256xf32>
      %15 = arith.addf %12, %14 : vector<8x256xf32>
      %16 = arith.truncf %15 : vector<8x256xf32> to vector<8x256xbf16>
      %c0_13 = arith.constant 0 : index
      %c0_14 = arith.constant 0 : index
      %17 = vector.load %arg6[%c0_13, %c0_14] : memref<8x256xbf16, #tpu.memory_space<vmem>>, vector<8x256xbf16>
      tpu.vector_store %arg6[%c0_13, %c0_14], %16 {strides = array<i32>} : memref<8x256xbf16, #tpu.memory_space<vmem>>, vector<8x256xbf16>,
    } else {
    }
    return
  }
  func.func @transform_0(%arg0: i32, %arg1: i32, %arg2: i32) -> (i32, i32) {
    %c0_i32 = arith.constant 0 : i32
    return %arg0, %arg2 : i32, i32
  }
  func.func @transform_1(%arg0: i32, %arg1: i32, %arg2: i32) -> (i32, i32) {
    %c0_i32 = arith.constant 0 : i32
    return %arg2, %arg1 : i32, i32
  }
  func.func @transform_2(%arg0: i32, %arg1: i32, %arg2: i32) -> (i32, i32) {
    %c0_i32 = arith.constant 0 : i32
    %c0_i32_0 = arith.constant 0 : i32
    return %c0_i32, %arg1 : i32, i32
  }
  func.func @transform_3(%arg0: i32, %arg1: i32, %arg2: i32) -> (i32, i32) {
    %c0_i32 = arith.constant 0 : i32
    return %arg0, %arg1 : i32, i32
  }
}

module attributes {stable_mosaic.version = 11 : i64} {
  func.func @_bn_apply_kernel(%arg0: i32, %arg1: memref<8x512xbf16, #tpu.memory_space<vmem>>, %arg2: memref<1x512xf32, #tpu.memory_space<vmem>>, %arg3: memref<1x512xf32, #tpu.memory_space<vmem>>, %arg4: memref<8x512xbf16, #tpu.memory_space<vmem>>) attributes {dimension_semantics = [#tpu.dimension_semantics<parallel>], iteration_bounds = array<i64: 1>, scalar_prefetch = 0 : i64, scratch_operands = 0 : i64, tpu.core_type = #tpu.core_type<tc>, window_params = [{transform_indices = @transform_0, window_bounds = array<i64: 8, 512>}, {pipeline_mode = #tpu.pipeline_mode<synchronous>, transform_indices = @transform_1, window_bounds = array<i64: 1, 512>}, {pipeline_mode = #tpu.pipeline_mode<synchronous>, transform_indices = @transform_2, window_bounds = array<i64: 1, 512>}, {transform_indices = @transform_3, window_bounds = array<i64: 8, 512>}]} {
    %c0 = arith.constant 0 : index
    %c0_0 = arith.constant 0 : index
    %0 = vector.load %arg1[%c0, %c0_0] : memref<8x512xbf16, #tpu.memory_space<vmem>>, vector<8x512xbf16>
    %1 = arith.extf %0 : vector<8x512xbf16> to vector<8x512xf32>
    %c0_1 = arith.constant 0 : index
    %c0_2 = arith.constant 0 : index
    %2 = vector.load %arg2[%c0_1, %c0_2] : memref<1x512xf32, #tpu.memory_space<vmem>>, vector<1x512xf32>
    %3 = vector.broadcast %2 : vector<1x512xf32> to vector<8x512xf32>
    %4 = arith.mulf %1, %3 : vector<8x512xf32>
    %c0_3 = arith.constant 0 : index
    %c0_4 = arith.constant 0 : index
    %5 = vector.load %arg3[%c0_3, %c0_4] : memref<1x512xf32, #tpu.memory_space<vmem>>, vector<1x512xf32>
    %6 = vector.broadcast %5 : vector<1x512xf32> to vector<8x512xf32>
    %7 = arith.addf %4, %6 : vector<8x512xf32>
    %cst = arith.constant 0.000000e+00 : f32
    %8 = vector.broadcast %cst : f32 to vector<8x512xf32>
    %9 = arith.cmpf oge, %7, %8 : vector<8x512xf32>
    %cst_5 = arith.constant 2.000000e-01 : f32
    %10 = vector.broadcast %cst_5 : f32 to vector<8x512xf32>
    %11 = arith.mulf %10, %7 : vector<8x512xf32>
    %12 = arith.select %9, %7, %11 : vector<8x512xi1>, vector<8x512xf32>
    %13 = arith.truncf %12 : vector<8x512xf32> to vector<8x512xbf16>
    %c0_6 = arith.constant 0 : index
    %c0_7 = arith.constant 0 : index
    %14 = vector.load %arg4[%c0_6, %c0_7] : memref<8x512xbf16, #tpu.memory_space<vmem>>, vector<8x512xbf16>
    tpu.vector_store %arg4[%c0_6, %c0_7], %13 {strides = array<i32>} : memref<8x512xbf16, #tpu.memory_space<vmem>>, vector<8x512xbf16>,
    return
  }
  func.func @transform_0(%arg0: i32) -> (i32, i32) {
    %c0_i32 = arith.constant 0 : i32
    %c0_i32_0 = arith.constant 0 : i32
    return %arg0, %c0_i32 : i32, i32
  }
  func.func @transform_1(%arg0: i32) -> (i32, i32) {
    %c0_i32 = arith.constant 0 : i32
    %c0_i32_0 = arith.constant 0 : i32
    %c0_i32_1 = arith.constant 0 : i32
    return %c0_i32, %c0_i32_0 : i32, i32
  }
  func.func @transform_2(%arg0: i32) -> (i32, i32) {
    %c0_i32 = arith.constant 0 : i32
    %c0_i32_0 = arith.constant 0 : i32
    %c0_i32_1 = arith.constant 0 : i32
    return %c0_i32, %c0_i32_0 : i32, i32
  }
  func.func @transform_3(%arg0: i32) -> (i32, i32) {
    %c0_i32 = arith.constant 0 : i32
    %c0_i32_0 = arith.constant 0 : i32
    return %arg0, %c0_i32 : i32, i32
  }
}

module attributes {stable_mosaic.version = 11 : i64} {
  func.func @_mm_kernel(%arg0: i32, %arg1: i32, %arg2: i32, %arg3: memref<8x512xbf16, #tpu.memory_space<vmem>>, %arg4: memref<512x128xbf16, #tpu.memory_space<vmem>>, %arg5: memref<1x128xf32, #tpu.memory_space<vmem>>, %arg6: memref<8x128xf32, #tpu.memory_space<vmem>>, %arg7: memref<8x128xf32, #tpu.memory_space<vmem>>) attributes {dimension_semantics = [#tpu.dimension_semantics<parallel>, #tpu.dimension_semantics<parallel>, #tpu.dimension_semantics<arbitrary>], iteration_bounds = array<i64: 1, 1, 16>, scalar_prefetch = 0 : i64, scratch_operands = 1 : i64, tpu.core_type = #tpu.core_type<tc>, window_params = [{transform_indices = @transform_0, window_bounds = array<i64: 8, 512>}, {transform_indices = @transform_1, window_bounds = array<i64: 512, 128>}, {transform_indices = @transform_2, window_bounds = array<i64: 1, 128>}, {transform_indices = @transform_3, window_bounds = array<i64: 8, 128>}]} {
    %c0_i32 = arith.constant 0 : i32
    %0 = arith.cmpi eq, %arg2, %c0_i32 : i32
    %1 = arith.extui %0 : i1 to i32
    %c0_i32_0 = arith.constant 0 : i32
    %2 = arith.cmpi ne, %1, %c0_i32_0 : i32
    scf.if %2 {
      %cst_9 = arith.constant 0.000000e+00 : f32
      %12 = vector.broadcast %cst_9 : f32 to vector<8x128xf32>
      %c0_10 = arith.constant 0 : index
      %c0_11 = arith.constant 0 : index
      %13 = vector.load %arg7[%c0_10, %c0_11] : memref<8x128xf32, #tpu.memory_space<vmem>>, vector<8x128xf32>
      tpu.vector_store %arg7[%c0_10, %c0_11], %12 {strides = array<i32>} : memref<8x128xf32, #tpu.memory_space<vmem>>, vector<8x128xf32>,
    } else {
    }
    %c0 = arith.constant 0 : index
    %c0_1 = arith.constant 0 : index
    %3 = vector.load %arg7[%c0, %c0_1] : memref<8x128xf32, #tpu.memory_space<vmem>>, vector<8x128xf32>
    %c0_2 = arith.constant 0 : index
    %c0_3 = arith.constant 0 : index
    %4 = vector.load %arg3[%c0_2, %c0_3] : memref<8x512xbf16, #tpu.memory_space<vmem>>, vector<8x512xbf16>
    %c0_4 = arith.constant 0 : index
    %c0_5 = arith.constant 0 : index
    %5 = vector.load %arg4[%c0_4, %c0_5] : memref<512x128xbf16, #tpu.memory_space<vmem>>, vector<512x128xbf16>
    %cst = arith.constant dense<0.000000e+00> : vector<8x128xf32>
    %6 = tpu.matmul %4, %5, %cst {dimension_numbers = #tpu.dot_dimension_numbers<[1], [0], [0], [1], [0, 0, 1, 1], [], []>} : vector<8x512xbf16>, vector<512x128xbf16>, vector<8x128xf32> -> vector<8x128xf32>
    %7 = arith.addf %3, %6 : vector<8x128xf32>
    %c0_6 = arith.constant 0 : index
    %c0_7 = arith.constant 0 : index
    %8 = vector.load %arg7[%c0_6, %c0_7] : memref<8x128xf32, #tpu.memory_space<vmem>>, vector<8x128xf32>
    tpu.vector_store %arg7[%c0_6, %c0_7], %7 {strides = array<i32>} : memref<8x128xf32, #tpu.memory_space<vmem>>, vector<8x128xf32>,
    %c15_i32 = arith.constant 15 : i32
    %9 = arith.cmpi eq, %arg2, %c15_i32 : i32
    %10 = arith.extui %9 : i1 to i32
    %c0_i32_8 = arith.constant 0 : i32
    %11 = arith.cmpi ne, %10, %c0_i32_8 : i32
    scf.if %11 {
      %c0_9 = arith.constant 0 : index
      %c0_10 = arith.constant 0 : index
      %12 = vector.load %arg7[%c0_9, %c0_10] : memref<8x128xf32, #tpu.memory_space<vmem>>, vector<8x128xf32>
      %c0_11 = arith.constant 0 : index
      %c0_12 = arith.constant 0 : index
      %13 = vector.load %arg5[%c0_11, %c0_12] : memref<1x128xf32, #tpu.memory_space<vmem>>, vector<1x128xf32>
      %14 = vector.broadcast %13 : vector<1x128xf32> to vector<8x128xf32>
      %15 = arith.addf %12, %14 : vector<8x128xf32>
      %c0_13 = arith.constant 0 : index
      %c0_14 = arith.constant 0 : index
      %16 = vector.load %arg6[%c0_13, %c0_14] : memref<8x128xf32, #tpu.memory_space<vmem>>, vector<8x128xf32>
      tpu.vector_store %arg6[%c0_13, %c0_14], %15 {strides = array<i32>} : memref<8x128xf32, #tpu.memory_space<vmem>>, vector<8x128xf32>,
    } else {
    }
    return
  }
  func.func @transform_0(%arg0: i32, %arg1: i32, %arg2: i32) -> (i32, i32) {
    %c0_i32 = arith.constant 0 : i32
    return %arg0, %arg2 : i32, i32
  }
  func.func @transform_1(%arg0: i32, %arg1: i32, %arg2: i32) -> (i32, i32) {
    %c0_i32 = arith.constant 0 : i32
    return %arg2, %arg1 : i32, i32
  }
  func.func @transform_2(%arg0: i32, %arg1: i32, %arg2: i32) -> (i32, i32) {
    %c0_i32 = arith.constant 0 : i32
    %c0_i32_0 = arith.constant 0 : i32
    return %c0_i32, %arg1 : i32, i32
  }
  func.func @transform_3(%arg0: i32, %arg1: i32, %arg2: i32) -> (i32, i32) {
    %c0_i32 = arith.constant 0 : i32
    return %arg0, %arg1 : i32, i32
  }
}

</mosaic_0001>

<llo_original>
// kernel: nlayer_discriminator.11
$region0: #{nlayer_discriminator.11}
  #allocation0 [shape = 'u32[]', space=smem, size = 0x4, offset = 0x4, fixed_abs, tag = 'smem constant byte address 0x4 - core index']
  #allocation1 [shape = 'u32[144,128]{1,0:T(1,128)}', space=vmem, size = 0x12000, scoped, tag = 'internal scratch']
  %s0 = inlined_call_operand.vmem [shape: bf16[512,128], index: 0, kind: input, shape index: {}]
  %s1 = inlined_call_operand.vmem [shape: bf16[128,128], index: 1, kind: input, shape index: {}]
  %s2 = inlined_call_operand.vmem [shape: f32[1,128], index: 2, kind: input, shape index: {}]
  %s3 = inlined_call_operand.vmem [shape: bf16[512,128], index: 3, kind: output, shape index: {}]
  %s4 = sld [smem:[#allocation0]]
  $region22: #{nlayer_discriminator.11} parent=0
    _
  %s6 = ssub.s32 1, %s4
  %s7 = scalar_select 0, %s6, %s4
  // Predicated region
  $region2: #{nlayer_discriminator.11} parent=0 // pred_check
    _
  $region3: #{nlayer_discriminator.11} parent=0 // pred_check_branch
    %9 = sbr.rel (0) target = $region5
  $region4: #{nlayer_discriminator.11} parent=0 // pred_region
    _
  $region5: #{nlayer_discriminator.11} parent=0 // pred_fallthru
    _
  // Predicated region
  $region6: #{nlayer_discriminator.11} parent=0 // pred_check
    _
  $region7: #{nlayer_discriminator.11} parent=0 // pred_check_branch
    %11 = sbr.rel (0) target = $region9
  $region8: #{nlayer_discriminator.11} parent=0 // pred_region
    _
  $region9: #{nlayer_discriminator.11} parent=0 // pred_fallthru
    _
  // Predicated region
  $region10: #{nlayer_discriminator.11} parent=0 // pred_check
    _
  $region11: #{nlayer_discriminator.11} parent=0 // pred_check_branch
    %13 = sbr.rel (0) target = $region13
  $region12: #{nlayer_discriminator.11} parent=0 // pred_region
    _
  $region13: #{nlayer_discriminator.11} parent=0 // pred_fallthru
    _
  %v15 = vld [vmem:[%s0] sm:$0xf]
  %v16 = vld [vmem:[%s0 + $0x4] sm:$0xf]
  %v17 = vld [vmem:[%s0 + $0x8] sm:$0xf]
  %v18 = vld [vmem:[%s0 + $0xc] sm:$0xf]
  %v19 = vld [vmem:[%s0 + $0x10] sm:$0xf]
  %v20 = vld [vmem:[%s0 + $0x14] sm:$0xf]
  %v21 = vld [vmem:[%s0 + $0x18] sm:$0xf]
  %v22 = vld [vmem:[%s0 + $0x1c] sm:$0xf]
  %v23 = vld [vmem:[%s0 + $0x20] sm:$0xf]
  %v24 = vld [vmem:[%s0 + $0x24] sm:$0xf]
  %v25 = vld [vmem:[%s0 + $0x28] sm:$0xf]
  %v26 = vld [vmem:[%s0 + $0x2c] sm:$0xf]
  %v27 = vld [vmem:[%s0 + $0x30] sm:$0xf]
  %v28 = vld [vmem:[%s0 + $0x34] sm:$0xf]
  %v29 = vld [vmem:[%s0 + $0x38] sm:$0xf]
  %v30 = vld [vmem:[%s0 + $0x3c] sm:$0xf]
  %v31 = vld [vmem:[%s0 + $0x40] sm:$0xf]
  %v32 = vld [vmem:[%s0 + $0x44] sm:$0xf]
  %v33 = vld [vmem:[%s0 + $0x48] sm:$0xf]
  %v34 = vld [vmem:[%s0 + $0x4c] sm:$0xf]
  %v35 = vld [vmem:[%s0 + $0x50] sm:$0xf]
  %v36 = vld [vmem:[%s0 + $0x54] sm:$0xf]
  %v37 = vld [vmem:[%s0 + $0x58] sm:$0xf]
  %v38 = vld [vmem:[%s0 + $0x5c] sm:$0xf]
  %v39 = vld [vmem:[%s0 + $0x60] sm:$0xf]
  %v40 = vld [vmem:[%s0 + $0x64] sm:$0xf]
  %v41 = vld [vmem:[%s0 + $0x68] sm:$0xf]
  %v42 = vld [vmem:[%s0 + $0x6c] sm:$0xf]
  %v43 = vld [vmem:[%s0 + $0x70] sm:$0xf]
  %v44 = vld [vmem:[%s0 + $0x74] sm:$0xf]
  %v45 = vld [vmem:[%s0 + $0x78] sm:$0xf]
  %v46 = vld [vmem:[%s0 + $0x7c] sm:$0xf]
  %v47 = vld [vmem:[%s0 + $0x80] sm:$0xf]
  %v48 = vld [vmem:[%s0 + $0x84] sm:$0xf]
  %v49 = vld [vmem:[%s0 + $0x88] sm:$0xf]
  %v50 = vld [vmem:[%s0 + $0x8c] sm:$0xf]
  %v51 = vld [vmem:[%s0 + $0x90] sm:$0xf]
  %v52 = vld [vmem:[%s0 + $0x94] sm:$0xf]
  %v53 = vld [vmem:[%s0 + $0x98] sm:$0xf]
  %v54 = vld [vmem:[%s0 + $0x9c] sm:$0xf]
  %v55 = vld [vmem:[%s0 + $0xa0] sm:$0xf]
  %v56 = vld [vmem:[%s0 + $0xa4] sm:$0xf]
  %v57 = vld [vmem:[%s0 + $0xa8] sm:$0xf]
  %v58 = vld [vmem:[%s0 + $0xac] sm:$0xf]
  %v59 = vld [vmem:[%s0 + $0xb0] sm:$0xf]
  %v60 = vld [vmem:[%s0 + $0xb4] sm:$0xf]
  %v61 = vld [vmem:[%s0 + $0xb8] sm:$0xf]
  %v62 = vld [vmem:[%s0 + $0xbc] sm:$0xf]
  %v63 = vld [vmem:[%s0 + $0xc0] sm:$0xf]
  %v64 = vld [vmem:[%s0 + $0xc4] sm:$0xf]
  %v65 = vld [vmem:[%s0 + $0xc8] sm:$0xf]
  %v66 = vld [vmem:[%s0 + $0xcc] sm:$0xf]
  %v67 = vld [vmem:[%s0 + $0xd0] sm:$0xf]
  %v68 = vld [vmem:[%s0 + $0xd4] sm:$0xf]
  %v69 = vld [vmem:[%s0 + $0xd8] sm:$0xf]
  %v70 = vld [vmem:[%s0 + $0xdc] sm:$0xf]
  %v71 = vld [vmem:[%s0 + $0xe0] sm:$0xf]
  %v72 = vld [vmem:[%s0 + $0xe4] sm:$0xf]
  %v73 = vld [vmem:[%s0 + $0xe8] sm:$0xf]
  %v74 = vld [vmem:[%s0 + $0xec] sm:$0xf]
  %v75 = vld [vmem:[%s0 + $0xf0] sm:$0xf]
  %v76 = vld [vmem:[%s0 + $0xf4] sm:$0xf]
  %v77 = vld [vmem:[%s0 + $0xf8] sm:$0xf]
  %v78 = vld [vmem:[%s0 + $0xfc] sm:$0xf]
  %v79 = vld [vmem:[%s1] sm:$0xf]
  %v80 = vld [vmem:[%s1 + $0x4] sm:$0xf]
  %v81 = vld [vmem:[%s1 + $0x8] sm:$0xf]
  %v82 = vld [vmem:[%s1 + $0xc] sm:$0xf]
  %v83 = vld [vmem:[%s1 + $0x10] sm:$0xf]
  %v84 = vld [vmem:[%s1 + $0x14] sm:$0xf]
  %v85 = vld [vmem:[%s1 + $0x18] sm:$0xf]
  %v86 = vld [vmem:[%s1 + $0x1c] sm:$0xf]
  %v87 = vld [vmem:[%s1 + $0x20] sm:$0xf]
  %v88 = vld [vmem:[%s1 + $0x24] sm:$0xf]
  %v89 = vld [vmem:[%s1 + $0x28] sm:$0xf]
  %v90 = vld [vmem:[%s1 + $0x2c] sm:$0xf]
  %v91 = vld [vmem:[%s1 + $0x30] sm:$0xf]
  %v92 = vld [vmem:[%s1 + $0x34] sm:$0xf]
  %v93 = vld [vmem:[%s1 + $0x38] sm:$0xf]
  %v94 = vld [vmem:[%s1 + $0x3c] sm:$0xf]
  %v95 = vld [vmem:[%s2] sm:$0x1]
  %v97 = vlaneseq
  %v98 = vshrl.u32 %v97, 7
  %v99 = vsub.s32 0, %v98
  %v100 = vrot.slane %v95, %v99
  %v166 = vunpack.c.l.b16 %v15
  %v167 = vunpack.c.l.b16 %v16
  %v168 = vunpack.c.l.b16 %v17
  %v169 = vunpack.c.l.b16 %v18
  %v170 = vunpack.c.l.b16 %v19
  %v171 = vunpack.c.l.b16 %v20
  %v172 = vunpack.c.l.b16 %v21
  %v173 = vunpack.c.l.b16 %v22
  %v174 = vunpack.c.l.b16 %v23
  %v175 = vunpack.c.l.b16 %v24
  %v176 = vunpack.c.l.b16 %v25
  %v177 = vunpack.c.l.b16 %v26
  %v178 = vunpack.c.l.b16 %v27
  %v179 = vunpack.c.l.b16 %v28
  %v180 = vunpack.c.l.b16 %v29
  %v181 = vunpack.c.l.b16 %v30
  %v182 = vunpack.c.l.b16 %v31
  %v183 = vunpack.c.l.b16 %v32
  %v184 = vunpack.c.l.b16 %v33
  %v185 = vunpack.c.l.b16 %v34
  %v186 = vunpack.c.l.b16 %v35
  %v187 = vunpack.c.l.b16 %v36
  %v188 = vunpack.c.l.b16 %v37
  %v189 = vunpack.c.l.b16 %v38
  %v190 = vunpack.c.l.b16 %v39
  %v191 = vunpack.c.l.b16 %v40
  %v192 = vunpack.c.l.b16 %v41
  %v193 = vunpack.c.l.b16 %v42
  %v194 = vunpack.c.l.b16 %v43
  %v195 = vunpack.c.l.b16 %v44
  %v196 = vunpack.c.l.b16 %v45
  %v197 = vunpack.c.l.b16 %v46
  %v198 = vunpack.c.l.b16 %v47
  %v199 = vunpack.c.l.b16 %v48
  %v200 = vunpack.c.l.b16 %v49
  %v201 = vunpack.c.l.b16 %v50
  %v202 = vunpack.c.l.b16 %v51
  %v203 = vunpack.c.l.b16 %v52
  %v204 = vunpack.c.l.b16 %v53
  %v205 = vunpack.c.l.b16 %v54
  %v206 = vunpack.c.l.b16 %v55
  %v207 = vunpack.c.l.b16 %v56
  %v208 = vunpack.c.l.b16 %v57
  %v209 = vunpack.c.l.b16 %v58
  %v210 = vunpack.c.l.b16 %v59
  %v211 = vunpack.c.l.b16 %v60
  %v212 = vunpack.c.l.b16 %v61
  %v213 = vunpack.c.l.b16 %v62
  %v214 = vunpack.c.l.b16 %v63
  %v215 = vunpack.c.l.b16 %v64
  %v216 = vunpack.c.l.b16 %v65
  %v217 = vunpack.c.l.b16 %v66
  %v218 = vunpack.c.l.b16 %v67
  %v219 = vunpack.c.l.b16 %v68
  %v220 = vunpack.c.l.b16 %v69
  %v221 = vunpack.c.l.b16 %v70
  %v222 = vunpack.c.l.b16 %v71
  %v223 = vunpack.c.l.b16 %v72
  %v224 = vunpack.c.l.b16 %v73
  %v225 = vunpack.c.l.b16 %v74
  %v226 = vunpack.c.l.b16 %v75
  %v227 = vunpack.c.l.b16 %v76
  %v228 = vunpack.c.l.b16 %v77
  %v229 = vunpack.c.l.b16 %v78
  %v230 = vpack.c.b16 %v167, %v166
  %v231 = vpack.c.b16 %v169, %v168
  %v232 = vpack.c.b16 %v171, %v170
  %v233 = vpack.c.b16 %v173, %v172
  %v234 = vpack.c.b16 %v175, %v174
  %v235 = vpack.c.b16 %v177, %v176
  %v236 = vpack.c.b16 %v179, %v178
  %v237 = vpack.c.b16 %v181, %v180
  %v238 = vpack.c.b16 %v183, %v182
  %v239 = vpack.c.b16 %v185, %v184
  %v240 = vpack.c.b16 %v187, %v186
  %v241 = vpack.c.b16 %v189, %v188
  %v242 = vpack.c.b16 %v191, %v190
  %v243 = vpack.c.b16 %v193, %v192
  %v244 = vpack.c.b16 %v195, %v194
  %v245 = vpack.c.b16 %v197, %v196
  %v246 = vpack.c.b16 %v199, %v198
  %v247 = vpack.c.b16 %v201, %v200
  %v248 = vpack.c.b16 %v203, %v202
  %v249 = vpack.c.b16 %v205, %v204
  %v250 = vpack.c.b16 %v207, %v206
  %v251 = vpack.c.b16 %v209, %v208
  %v252 = vpack.c.b16 %v211, %v210
  %v253 = vpack.c.b16 %v213, %v212
  %v254 = vpack.c.b16 %v215, %v214
  %v255 = vpack.c.b16 %v217, %v216
  %v256 = vpack.c.b16 %v219, %v218
  %v257 = vpack.c.b16 %v221, %v220
  %v258 = vpack.c.b16 %v223, %v222
  %v259 = vpack.c.b16 %v225, %v224
  %v260 = vpack.c.b16 %v227, %v226
  %v261 = vpack.c.b16 %v229, %v228
  %v310 = vunpack.c.l.b16 %v79
  %v311 = vunpack.c.l.b16 %v80
  %v312 = vunpack.c.l.b16 %v81
  %v313 = vunpack.c.l.b16 %v82
  %v314 = vunpack.c.l.b16 %v83
  %v315 = vunpack.c.l.b16 %v84
  %v316 = vunpack.c.l.b16 %v85
  %v317 = vunpack.c.l.b16 %v86
  %v318 = vunpack.c.l.b16 %v87
  %v319 = vunpack.c.l.b16 %v88
  %v320 = vunpack.c.l.b16 %v89
  %v321 = vunpack.c.l.b16 %v90
  %v322 = vunpack.c.l.b16 %v91
  %v323 = vunpack.c.l.b16 %v92
  %v324 = vunpack.c.l.b16 %v93
  %v325 = vunpack.c.l.b16 %v94
  %v326 = vpack.c.b16 %v311, %v310
  %v327 = vpack.c.b16 %v313, %v312
  %v328 = vpack.c.b16 %v315, %v314
  %v329 = vpack.c.b16 %v317, %v316
  %v330 = vpack.c.b16 %v319, %v318
  %v331 = vpack.c.b16 %v321, %v320
  %v332 = vpack.c.b16 %v323, %v322
  %v333 = vpack.c.b16 %v325, %v324
  %342 = vmatprep.subr.bf16.mxu0 0
  %343 = vmatpush1.bf16.msra.mxu0 %v333
  %344 = vmatprep.subr.bf16.mxu0 0
  %345 = vmatpush1.bf16.msra.mxu0 %v332
  %346 = vmatprep.subr.bf16.mxu0 0
  %347 = vmatpush1.bf16.msra.mxu0 %v331
  %348 = vmatprep.subr.bf16.mxu0 0
  %349 = vmatpush1.bf16.msra.mxu0 %v330
  %350 = vmatprep.subr.bf16.mxu0 0
  %351 = vmatpush1.bf16.msra.mxu0 %v329
  %352 = vmatprep.subr.bf16.mxu0 0
  %353 = vmatpush1.bf16.msra.mxu0 %v328
  %354 = vmatprep.subr.bf16.mxu0 0
  %355 = vmatpush1.bf16.msra.mxu0 %v327
  %356 = vmatprep.subr.bf16.mxu0 0
  %357 = vmatpush1.bf16.msra.mxu0 %v326
  %358 = vmatprep.subr.bf16.mxu0 0
  %359 = vmatpush2.bf16.msra.mxu0 0
  %360 = vmatprep.subr.bf16.mxu0 0
  %361 = vmatpush2.bf16.msra.mxu0 0
  %362 = vmatprep.subr.bf16.mxu0 0
  %363 = vmatpush2.bf16.msra.mxu0 0
  %364 = vmatprep.subr.bf16.mxu0 0
  %365 = vmatpush2.bf16.msra.mxu0 0
  %366 = vmatprep.subr.bf16.mxu0 0
  %367 = vmatpush2.bf16.msra.mxu0 0
  %368 = vmatprep.subr.bf16.mxu0 0
  %369 = vmatpush2.bf16.msra.mxu0 0
  %370 = vmatprep.subr.bf16.mxu0 0
  %371 = vmatpush2.bf16.msra.mxu0 0
  %372 = vmatprep.subr.bf16.mxu0 0
  %373 = vmatpush2.bf16.msra.mxu0 0
  %374 = vmatprep.mubr.bf16.mxu0 0
  %375 = vmatmul.mubr.bf16.gmra.mxu0 %v230
  %v376 = vpop.f32.mrf.mxu0
  %v377 = vadd.f32 %v100, %v376
  %v378 = vpop.f32.mrf.mxu0
  %v379 = vpop.f32.mrf.mxu0
  %v380 = vadd.f32 %v100, %v379
  %v381 = vpop.f32.mrf.mxu0
  %382 = vmatprep.mubr.bf16.mxu0 0
  %383 = vmatmul.mubr.bf16.gmra.mxu0 %v231
  %v384 = vpop.f32.mrf.mxu0
  %v385 = vadd.f32 %v100, %v384
  %v386 = vpop.f32.mrf.mxu0
  %v387 = vpop.f32.mrf.mxu0
  %v388 = vadd.f32 %v100, %v387
  %v389 = vpop.f32.mrf.mxu0
  %390 = vmatprep.mubr.bf16.mxu0 0
  %391 = vmatmul.mubr.bf16.gmra.mxu0 %v232
  %v392 = vpop.f32.mrf.mxu0
  %v393 = vadd.f32 %v100, %v392
  %v394 = vpop.f32.mrf.mxu0
  %v395 = vpop.f32.mrf.mxu0
  %v396 = vadd.f32 %v100, %v395
  %v397 = vpop.f32.mrf.mxu0
  %398 = vmatprep.mubr.bf16.mxu0 0
  %399 = vmatmul.mubr.bf16.gmra.mxu0 %v233
  %v400 = vpop.f32.mrf.mxu0
  %v401 = vadd.f32 %v100, %v400
  %v402 = vpop.f32.mrf.mxu0
  %v403 = vpop.f32.mrf.mxu0
  %v404 = vadd.f32 %v100, %v403
  %v405 = vpop.f32.mrf.mxu0
  %406 = vmatprep.mubr.bf16.mxu0 0
  %407 = vmatmul.mubr.bf16.gmra.mxu0 %v234
  %v408 = vpop.f32.mrf.mxu0
  %v409 = vadd.f32 %v100, %v408
  %v410 = vpop.f32.mrf.mxu0
  %v411 = vpop.f32.mrf.mxu0
  %v412 = vadd.f32 %v100, %v411
  %v413 = vpop.f32.mrf.mxu0
  %414 = vmatprep.mubr.bf16.mxu0 0
  %415 = vmatmul.mubr.bf16.gmra.mxu0 %v235
  %v416 = vpop.f32.mrf.mxu0
  %v417 = vadd.f32 %v100, %v416
  %v418 = vpop.f32.mrf.mxu0
  %v419 = vpop.f32.mrf.mxu0
  %v420 = vadd.f32 %v100, %v419
  %v421 = vpop.f32.mrf.mxu0
  %422 = vmatprep.mubr.bf16.mxu0 0
  %423 = vmatmul.mubr.bf16.gmra.mxu0 %v236
  %v424 = vpop.f32.mrf.mxu0
  %v425 = vadd.f32 %v100, %v424
  %v426 = vpop.f32.mrf.mxu0
  %v427 = vpop.f32.mrf.mxu0
  %v428 = vadd.f32 %v100, %v427
  %v429 = vpop.f32.mrf.mxu0
  %430 = vmatprep.mubr.bf16.mxu0 0
  %431 = vmatmul.mubr.bf16.gmra.mxu0 %v237
  %v432 = vpop.f32.mrf.mxu0
  %v433 = vadd.f32 %v100, %v432
  %v434 = vpop.f32.mrf.mxu0
  %v435 = vpop.f32.mrf.mxu0
  %v436 = vadd.f32 %v100, %v435
  %v437 = vpop.f32.mrf.mxu0
  %438 = vmatprep.mubr.bf16.mxu0 0
  %439 = vmatmul.mubr.bf16.gmra.mxu0 %v238
  %v440 = vpop.f32.mrf.mxu0
  %v441 = vadd.f32 %v100, %v440
  %v442 = vpop.f32.mrf.mxu0
  %v443 = vpop.f32.mrf.mxu0
  %v444 = vadd.f32 %v100, %v443
  %v445 = vpop.f32.mrf.mxu0
  %446 = vmatprep.mubr.bf16.mxu0 0
  %447 = vmatmul.mubr.bf16.gmra.mxu0 %v239
  %v448 = vpop.f32.mrf.mxu0
  %v449 = vadd.f32 %v100, %v448
  %v450 = vpop.f32.mrf.mxu0
  %v451 = vpop.f32.mrf.mxu0
  %v452 = vadd.f32 %v100, %v451
  %v453 = vpop.f32.mrf.mxu0
  %454 = vmatprep.mubr.bf16.mxu0 0
  %455 = vmatmul.mubr.bf16.gmra.mxu0 %v240
  %v456 = vpop.f32.mrf.mxu0
  %v457 = vadd.f32 %v100, %v456
  %v458 = vpop.f32.mrf.mxu0
  %v459 = vpop.f32.mrf.mxu0
  %v460 = vadd.f32 %v100, %v459
  %v461 = vpop.f32.mrf.mxu0
  %462 = vmatprep.mubr.bf16.mxu0 0
  %463 = vmatmul.mubr.bf16.gmra.mxu0 %v241
  %v464 = vpop.f32.mrf.mxu0
  %v465 = vadd.f32 %v100, %v464
  %v466 = vpop.f32.mrf.mxu0
  %v467 = vpop.f32.mrf.mxu0
  %v468 = vadd.f32 %v100, %v467
  %v469 = vpop.f32.mrf.mxu0
  %470 = vmatprep.mubr.bf16.mxu0 0
  %471 = vmatmul.mubr.bf16.gmra.mxu0 %v242
  %v472 = vpop.f32.mrf.mxu0
  %v473 = vadd.f32 %v100, %v472
  %v474 = vpop.f32.mrf.mxu0
  %v475 = vpop.f32.mrf.mxu0
  %v476 = vadd.f32 %v100, %v475
  %v477 = vpop.f32.mrf.mxu0
  %478 = vmatprep.mubr.bf16.mxu0 0
  %479 = vmatmul.mubr.bf16.gmra.mxu0 %v243
  %v480 = vpop.f32.mrf.mxu0
  %v481 = vadd.f32 %v100, %v480
  %v482 = vpop.f32.mrf.mxu0
  %v483 = vpop.f32.mrf.mxu0
  %v484 = vadd.f32 %v100, %v483
  %v485 = vpop.f32.mrf.mxu0
  %486 = vmatprep.mubr.bf16.mxu0 0
  %487 = vmatmul.mubr.bf16.gmra.mxu0 %v244
  %v488 = vpop.f32.mrf.mxu0
  %v489 = vadd.f32 %v100, %v488
  %v490 = vpop.f32.mrf.mxu0
  %v491 = vpop.f32.mrf.mxu0
  %v492 = vadd.f32 %v100, %v491
  %v493 = vpop.f32.mrf.mxu0
  %494 = vmatprep.mubr.bf16.mxu0 0
  %495 = vmatmul.mubr.bf16.gmra.mxu0 %v245
  %v496 = vpop.f32.mrf.mxu0
  %v497 = vadd.f32 %v100, %v496
  %v498 = vpop.f32.mrf.mxu0
  %v499 = vpop.f32.mrf.mxu0
  %v500 = vadd.f32 %v100, %v499
  %v501 = vpop.f32.mrf.mxu0
  %502 = vmatprep.mubr.bf16.mxu0 0
  %503 = vmatmul.mubr.bf16.gmra.mxu0 %v246
  %v504 = vpop.f32.mrf.mxu0
  %v505 = vadd.f32 %v100, %v504
  %v506 = vpop.f32.mrf.mxu0
  %v507 = vpop.f32.mrf.mxu0
  %v508 = vadd.f32 %v100, %v507
  %v509 = vpop.f32.mrf.mxu0
  %510 = vmatprep.mubr.bf16.mxu0 0
  %511 = vmatmul.mubr.bf16.gmra.mxu0 %v247
  %v512 = vpop.f32.mrf.mxu0
  %v513 = vadd.f32 %v100, %v512
  %v514 = vpop.f32.mrf.mxu0
  %v515 = vpop.f32.mrf.mxu0
  %v516 = vadd.f32 %v100, %v515
  %v517 = vpop.f32.mrf.mxu0
  %518 = vmatprep.mubr.bf16.mxu0 0
  %519 = vmatmul.mubr.bf16.gmra.mxu0 %v248
  %v520 = vpop.f32.mrf.mxu0
  %v521 = vadd.f32 %v100, %v520
  %v522 = vpop.f32.mrf.mxu0
  %v523 = vpop.f32.mrf.mxu0
  %v524 = vadd.f32 %v100, %v523
  %v525 = vpop.f32.mrf.mxu0
  %526 = vmatprep.mubr.bf16.mxu0 0
  %527 = vmatmul.mubr.bf16.gmra.mxu0 %v249
  %v528 = vpop.f32.mrf.mxu0
  %v529 = vadd.f32 %v100, %v528
  %v530 = vpop.f32.mrf.mxu0
  %v531 = vpop.f32.mrf.mxu0
  %v532 = vadd.f32 %v100, %v531
  %v533 = vpop.f32.mrf.mxu0
  %534 = vmatprep.mubr.bf16.mxu0 0
  %535 = vmatmul.mubr.bf16.gmra.mxu0 %v250
  %v536 = vpop.f32.mrf.mxu0
  %v537 = vadd.f32 %v100, %v536
  %v538 = vpop.f32.mrf.mxu0
  %v539 = vpop.f32.mrf.mxu0
  %v540 = vadd.f32 %v100, %v539
  %v541 = vpop.f32.mrf.mxu0
  %542 = vmatprep.mubr.bf16.mxu0 0
  %543 = vmatmul.mubr.bf16.gmra.mxu0 %v251
  %v544 = vpop.f32.mrf.mxu0
  %v545 = vadd.f32 %v100, %v544
  %v546 = vpop.f32.mrf.mxu0
  %v547 = vpop.f32.mrf.mxu0
  %v548 = vadd.f32 %v100, %v547
  %v549 = vpop.f32.mrf.mxu0
  %550 = vmatprep.mubr.bf16.mxu0 0
  %551 = vmatmul.mubr.bf16.gmra.mxu0 %v252
  %v552 = vpop.f32.mrf.mxu0
  %v553 = vadd.f32 %v100, %v552
  %v554 = vpop.f32.mrf.mxu0
  %v555 = vpop.f32.mrf.mxu0
  %v556 = vadd.f32 %v100, %v555
  %v557 = vpop.f32.mrf.mxu0
  %558 = vmatprep.mubr.bf16.mxu0 0
  %559 = vmatmul.mubr.bf16.gmra.mxu0 %v253
  %v560 = vpop.f32.mrf.mxu0
  %v561 = vadd.f32 %v100, %v560
  %v562 = vpop.f32.mrf.mxu0
  %v563 = vpop.f32.mrf.mxu0
  %v564 = vadd.f32 %v100, %v563
  %v565 = vpop.f32.mrf.mxu0
  %566 = vmatprep.mubr.bf16.mxu0 0
  %567 = vmatmul.mubr.bf16.gmra.mxu0 %v254
  %v568 = vpop.f32.mrf.mxu0
  %v569 = vadd.f32 %v100, %v568
  %v570 = vpop.f32.mrf.mxu0
  %v571 = vpop.f32.mrf.mxu0
  %v572 = vadd.f32 %v100, %v571
  %v573 = vpop.f32.mrf.mxu0
  %574 = vmatprep.mubr.bf16.mxu0 0
  %575 = vmatmul.mubr.bf16.gmra.mxu0 %v255
  %v576 = vpop.f32.mrf.mxu0
  %v577 = vadd.f32 %v100, %v576
  %v578 = vpop.f32.mrf.mxu0
  %v579 = vpop.f32.mrf.mxu0
  %v580 = vadd.f32 %v100, %v579
  %v581 = vpop.f32.mrf.mxu0
  %582 = vmatprep.mubr.bf16.mxu0 0
  %583 = vmatmul.mubr.bf16.gmra.mxu0 %v256
  %v584 = vpop.f32.mrf.mxu0
  %v585 = vadd.f32 %v100, %v584
  %v586 = vpop.f32.mrf.mxu0
  %v587 = vpop.f32.mrf.mxu0
  %v588 = vadd.f32 %v100, %v587
  %v589 = vpop.f32.mrf.mxu0
  %590 = vmatprep.mubr.bf16.mxu0 0
  %591 = vmatmul.mubr.bf16.gmra.mxu0 %v257
  %v592 = vpop.f32.mrf.mxu0
  %v593 = vadd.f32 %v100, %v592
  %v594 = vpop.f32.mrf.mxu0
  %v595 = vpop.f32.mrf.mxu0
  %v596 = vadd.f32 %v100, %v595
  %v597 = vpop.f32.mrf.mxu0
  %598 = vmatprep.mubr.bf16.mxu0 0
  %599 = vmatmul.mubr.bf16.gmra.mxu0 %v258
  %v600 = vpop.f32.mrf.mxu0
  %v601 = vadd.f32 %v100, %v600
  %v602 = vpop.f32.mrf.mxu0
  %v603 = vpop.f32.mrf.mxu0
  %v604 = vadd.f32 %v100, %v603
  %v605 = vpop.f32.mrf.mxu0
  %606 = vmatprep.mubr.bf16.mxu0 0
  %607 = vmatmul.mubr.bf16.gmra.mxu0 %v259
  %v608 = vpop.f32.mrf.mxu0
  %v609 = vadd.f32 %v100, %v608
  %v610 = vpop.f32.mrf.mxu0
  %v611 = vpop.f32.mrf.mxu0
  %v612 = vadd.f32 %v100, %v611
  %v613 = vpop.f32.mrf.mxu0
  %614 = vmatprep.mubr.bf16.mxu0 0
  %615 = vmatmul.mubr.bf16.gmra.mxu0 %v260
  %v616 = vpop.f32.mrf.mxu0
  %v617 = vadd.f32 %v100, %v616
  %v618 = vpop.f32.mrf.mxu0
  %v619 = vpop.f32.mrf.mxu0
  %v620 = vadd.f32 %v100, %v619
  %v621 = vpop.f32.mrf.mxu0
  %622 = vmatprep.mubr.bf16.mxu0 0
  %623 = vmatmul.mubr.bf16.gmra.mxu0 %v261
  %v624 = vpop.f32.mrf.mxu0
  %v625 = vadd.f32 %v100, %v624
  %v626 = vpop.f32.mrf.mxu0
  %v627 = vpop.f32.mrf.mxu0
  %v628 = vadd.f32 %v100, %v627
  %v629 = vpop.f32.mrf.mxu0
  %630 = vdwg.mxu0
  %vm631 = vcmp.ge.f32.partialorder %v377, 0.0
  %vm632 = vcmp.ge.f32.partialorder %v380, 0.0
  %vm633 = vcmp.ge.f32.partialorder %v385, 0.0
  %vm634 = vcmp.ge.f32.partialorder %v388, 0.0
  %vm635 = vcmp.ge.f32.partialorder %v393, 0.0
  %vm636 = vcmp.ge.f32.partialorder %v396, 0.0
  %vm637 = vcmp.ge.f32.partialorder %v401, 0.0
  %vm638 = vcmp.ge.f32.partialorder %v404, 0.0
  %vm639 = vcmp.ge.f32.partialorder %v409, 0.0
  %vm640 = vcmp.ge.f32.partialorder %v412, 0.0
  %vm641 = vcmp.ge.f32.partialorder %v417, 0.0
  %vm642 = vcmp.ge.f32.partialorder %v420, 0.0
  %vm643 = vcmp.ge.f32.partialorder %v425, 0.0
  %vm644 = vcmp.ge.f32.partialorder %v428, 0.0
  %vm645 = vcmp.ge.f32.partialorder %v433, 0.0
  %vm646 = vcmp.ge.f32.partialorder %v436, 0.0
  %vm647 = vcmp.ge.f32.partialorder %v441, 0.0
  %vm648 = vcmp.ge.f32.partialorder %v444, 0.0
  %vm649 = vcmp.ge.f32.partialorder %v449, 0.0
  %vm650 = vcmp.ge.f32.partialorder %v452, 0.0
  %vm651 = vcmp.ge.f32.partialorder %v457, 0.0
  %vm652 = vcmp.ge.f32.partialorder %v460, 0.0
  %vm653 = vcmp.ge.f32.partialorder %v465, 0.0
  %vm654 = vcmp.ge.f32.partialorder %v468, 0.0
  %vm655 = vcmp.ge.f32.partialorder %v473, 0.0
  %vm656 = vcmp.ge.f32.partialorder %v476, 0.0
  %vm657 = vcmp.ge.f32.partialorder %v481, 0.0
  %vm658 = vcmp.ge.f32.partialorder %v484, 0.0
  %vm659 = vcmp.ge.f32.partialorder %v489, 0.0
  %vm660 = vcmp.ge.f32.partialorder %v492, 0.0
  %vm661 = vcmp.ge.f32.partialorder %v497, 0.0
  %vm662 = vcmp.ge.f32.partialorder %v500, 0.0
  %vm663 = vcmp.ge.f32.partialorder %v505, 0.0
  %vm664 = vcmp.ge.f32.partialorder %v508, 0.0
  %vm665 = vcmp.ge.f32.partialorder %v513, 0.0
  %vm666 = vcmp.ge.f32.partialorder %v516, 0.0
  %vm667 = vcmp.ge.f32.partialorder %v521, 0.0
  %vm668 = vcmp.ge.f32.partialorder %v524, 0.0
  %vm669 = vcmp.ge.f32.partialorder %v529, 0.0
  %vm670 = vcmp.ge.f32.partialorder %v532, 0.0
  %vm671 = vcmp.ge.f32.partialorder %v537, 0.0
  %vm672 = vcmp.ge.f32.partialorder %v540, 0.0
  %vm673 = vcmp.ge.f32.partialorder %v545, 0.0
  %vm674 = vcmp.ge.f32.partialorder %v548, 0.0
  %vm675 = vcmp.ge.f32.partialorder %v553, 0.0
  %vm676 = vcmp.ge.f32.partialorder %v556, 0.0
  %vm677 = vcmp.ge.f32.partialorder %v561, 0.0
  %vm678 = vcmp.ge.f32.partialorder %v564, 0.0
  %vm679 = vcmp.ge.f32.partialorder %v569, 0.0
  %vm680 = vcmp.ge.f32.partialorder %v572, 0.0
  %vm681 = vcmp.ge.f32.partialorder %v577, 0.0
  %vm682 = vcmp.ge.f32.partialorder %v580, 0.0
  %vm683 = vcmp.ge.f32.partialorder %v585, 0.0
  %vm684 = vcmp.ge.f32.partialorder %v588, 0.0
  %vm685 = vcmp.ge.f32.partialorder %v593, 0.0
  %vm686 = vcmp.ge.f32.partialorder %v596, 0.0
  %vm687 = vcmp.ge.f32.partialorder %v601, 0.0
  %vm688 = vcmp.ge.f32.partialorder %v604, 0.0
  %vm689 = vcmp.ge.f32.partialorder %v609, 0.0
  %vm690 = vcmp.ge.f32.partialorder %v612, 0.0
  %vm691 = vcmp.ge.f32.partialorder %v617, 0.0
  %vm692 = vcmp.ge.f32.partialorder %v620, 0.0
  %vm693 = vcmp.ge.f32.partialorder %v625, 0.0
  %vm694 = vcmp.ge.f32.partialorder %v628, 0.0
  %v695 = vmul.f32 %v377, 0.2
  %v696 = vmul.f32 %v380, 0.2
  %v697 = vmul.f32 %v385, 0.2
  %v698 = vmul.f32 %v388, 0.2
  %v699 = vmul.f32 %v393, 0.2
  %v700 = vmul.f32 %v396, 0.2
  %v701 = vmul.f32 %v401, 0.2
  %v702 = vmul.f32 %v404, 0.2
  %v703 = vmul.f32 %v409, 0.2
  %v704 = vmul.f32 %v412, 0.2
  %v705 = vmul.f32 %v417, 0.2
  %v706 = vmul.f32 %v420, 0.2
  %v707 = vmul.f32 %v425, 0.2
  %v708 = vmul.f32 %v428, 0.2
  %v709 = vmul.f32 %v433, 0.2
  %v710 = vmul.f32 %v436, 0.2
  %v711 = vmul.f32 %v441, 0.2
  %v712 = vmul.f32 %v444, 0.2
  %v713 = vmul.f32 %v449, 0.2
  %v714 = vmul.f32 %v452, 0.2
  %v715 = vmul.f32 %v457, 0.2
  %v716 = vmul.f32 %v460, 0.2
  %v717 = vmul.f32 %v465, 0.2
  %v718 = vmul.f32 %v468, 0.2
  %v719 = vmul.f32 %v473, 0.2
  %v720 = vmul.f32 %v476, 0.2
  %v721 = vmul.f32 %v481, 0.2
  %v722 = vmul.f32 %v484, 0.2
  %v723 = vmul.f32 %v489, 0.2
  %v724 = vmul.f32 %v492, 0.2
  %v725 = vmul.f32 %v497, 0.2
  %v726 = vmul.f32 %v500, 0.2
  %v727 = vmul.f32 %v505, 0.2
  %v728 = vmul.f32 %v508, 0.2
  %v729 = vmul.f32 %v513, 0.2
  %v730 = vmul.f32 %v516, 0.2
  %v731 = vmul.f32 %v521, 0.2
  %v732 = vmul.f32 %v524, 0.2
  %v733 = vmul.f32 %v529, 0.2
  %v734 = vmul.f32 %v532, 0.2
  %v735 = vmul.f32 %v537, 0.2
  %v736 = vmul.f32 %v540, 0.2
  %v737 = vmul.f32 %v545, 0.2
  %v738 = vmul.f32 %v548, 0.2
  %v739 = vmul.f32 %v553, 0.2
  %v740 = vmul.f32 %v556, 0.2
  %v741 = vmul.f32 %v561, 0.2
  %v742 = vmul.f32 %v564, 0.2
  %v743 = vmul.f32 %v569, 0.2
  %v744 = vmul.f32 %v572, 0.2
  %v745 = vmul.f32 %v577, 0.2
  %v746 = vmul.f32 %v580, 0.2
  %v747 = vmul.f32 %v585, 0.2
  %v748 = vmul.f32 %v588, 0.2
  %v749 = vmul.f32 %v593, 0.2
  %v750 = vmul.f32 %v596, 0.2
  %v751 = vmul.f32 %v601, 0.2
  %v752 = vmul.f32 %v604, 0.2
  %v753 = vmul.f32 %v609, 0.2
  %v754 = vmul.f32 %v612, 0.2
  %v755 = vmul.f32 %v617, 0.2
  %v756 = vmul.f32 %v620, 0.2
  %v757 = vmul.f32 %v625, 0.2
  %v758 = vmul.f32 %v628, 0.2
  %v759 = vsel %vm631, %v377, %v695
  %v760 = vsel %vm632, %v380, %v696
  %v761 = vsel %vm633, %v385, %v697
  %v762 = vsel %vm634, %v388, %v698
  %v763 = vsel %vm635, %v393, %v699
  %v764 = vsel %vm636, %v396, %v700
  %v765 = vsel %vm637, %v401, %v701
  %v766 = vsel %vm638, %v404, %v702
  %v767 = vsel %vm639, %v409, %v703
  %v768 = vsel %vm640, %v412, %v704
  %v769 = vsel %vm641, %v417, %v705
  %v770 = vsel %vm642, %v420, %v706
  %v771 = vsel %vm643, %v425, %v707
  %v772 = vsel %vm644, %v428, %v708
  %v773 = vsel %vm645, %v433, %v709
  %v774 = vsel %vm646, %v436, %v710
  %v775 = vsel %vm647, %v441, %v711
  %v776 = vsel %vm648, %v444, %v712
  %v777 = vsel %vm649, %v449, %v713
  %v778 = vsel %vm650, %v452, %v714
  %v779 = vsel %vm651, %v457, %v715
  %v780 = vsel %vm652, %v460, %v716
  %v781 = vsel %vm653, %v465, %v717
  %v782 = vsel %vm654, %v468, %v718
  %v783 = vsel %vm655, %v473, %v719
  %v784 = vsel %vm656, %v476, %v720
  %v785 = vsel %vm657, %v481, %v721
  %v786 = vsel %vm658, %v484, %v722
  %v787 = vsel %vm659, %v489, %v723
  %v788 = vsel %vm660, %v492, %v724
  %v789 = vsel %vm661, %v497, %v725
  %v790 = vsel %vm662, %v500, %v726
  %v791 = vsel %vm663, %v505, %v727
  %v792 = vsel %vm664, %v508, %v728
  %v793 = vsel %vm665, %v513, %v729
  %v794 = vsel %vm666, %v516, %v730
  %v795 = vsel %vm667, %v521, %v731
  %v796 = vsel %vm668, %v524, %v732
  %v797 = vsel %vm669, %v529, %v733
  %v798 = vsel %vm670, %v532, %v734
  %v799 = vsel %vm671, %v537, %v735
  %v800 = vsel %vm672, %v540, %v736
  %v801 = vsel %vm673, %v545, %v737
  %v802 = vsel %vm674, %v548, %v738
  %v803 = vsel %vm675, %v553, %v739
  %v804 = vsel %vm676, %v556, %v740
  %v805 = vsel %vm677, %v561, %v741
  %v806 = vsel %vm678, %v564, %v742
  %v807 = vsel %vm679, %v569, %v743
  %v808 = vsel %vm680, %v572, %v744
  %v809 = vsel %vm681, %v577, %v745
  %v810 = vsel %vm682, %v580, %v746
  %v811 = vsel %vm683, %v585, %v747
  %v812 = vsel %vm684, %v588, %v748
  %v813 = vsel %vm685, %v593, %v749
  %v814 = vsel %vm686, %v596, %v750
  %v815 = vsel %vm687, %v601, %v751
  %v816 = vsel %vm688, %v604, %v752
  %v817 = vsel %vm689, %v609, %v753
  %v818 = vsel %vm690, %v612, %v754
  %v819 = vsel %vm691, %v617, %v755
  %v820 = vsel %vm692, %v620, %v756
  %v821 = vsel %vm693, %v625, %v757
  %v822 = vsel %vm694, %v628, %v758
  %v823 = vpack.c.bf16 %v760, %v759
  %v824 = vpack.c.bf16 %v762, %v761
  %v825 = vpack.c.bf16 %v764, %v763
  %v826 = vpack.c.bf16 %v766, %v765
  %v827 = vpack.c.bf16 %v768, %v767
  %v828 = vpack.c.bf16 %v770, %v769
  %v829 = vpack.c.bf16 %v772, %v771
  %v830 = vpack.c.bf16 %v774, %v773
  %v831 = vpack.c.bf16 %v776, %v775
  %v832 = vpack.c.bf16 %v778, %v777
  %v833 = vpack.c.bf16 %v780, %v779
  %v834 = vpack.c.bf16 %v782, %v781
  %v835 = vpack.c.bf16 %v784, %v783
  %v836 = vpack.c.bf16 %v786, %v785
  %v837 = vpack.c.bf16 %v788, %v787
  %v838 = vpack.c.bf16 %v790, %v789
  %v839 = vpack.c.bf16 %v792, %v791
  %v840 = vpack.c.bf16 %v794, %v793
  %v841 = vpack.c.bf16 %v796, %v795
  %v842 = vpack.c.bf16 %v798, %v797
  %v843 = vpack.c.bf16 %v800, %v799
  %v844 = vpack.c.bf16 %v802, %v801
  %v845 = vpack.c.bf16 %v804, %v803
  %v846 = vpack.c.bf16 %v806, %v805
  %v847 = vpack.c.bf16 %v808, %v807
  %v848 = vpack.c.bf16 %v810, %v809
  %v849 = vpack.c.bf16 %v812, %v811
  %v850 = vpack.c.bf16 %v814, %v813
  %v851 = vpack.c.bf16 %v816, %v815
  %v852 = vpack.c.bf16 %v818, %v817
  %v853 = vpack.c.bf16 %v820, %v819
  %v854 = vpack.c.bf16 %v822, %v821
  %v887 = vunpack.c.l.b16 %v823
  %v888 = vunpack.c.h.b16 %v823
  %v889 = vunpack.c.l.b16 %v824
  %v890 = vunpack.c.h.b16 %v824
  %v891 = vunpack.c.l.b16 %v825
  %v892 = vunpack.c.h.b16 %v825
  %v893 = vunpack.c.l.b16 %v826
  %v894 = vunpack.c.h.b16 %v826
  %v895 = vunpack.c.l.b16 %v827
  %v896 = vunpack.c.h.b16 %v827
  %v897 = vunpack.c.l.b16 %v828
  %v898 = vunpack.c.h.b16 %v828
  %v899 = vunpack.c.l.b16 %v829
  %v900 = vunpack.c.h.b16 %v829
  %v901 = vunpack.c.l.b16 %v830
  %v902 = vunpack.c.h.b16 %v830
  %v903 = vunpack.c.l.b16 %v831
  %v904 = vunpack.c.h.b16 %v831
  %v905 = vunpack.c.l.b16 %v832
  %v906 = vunpack.c.h.b16 %v832
  %v907 = vunpack.c.l.b16 %v833
  %v908 = vunpack.c.h.b16 %v833
  %v909 = vunpack.c.l.b16 %v834
  %v910 = vunpack.c.h.b16 %v834
  %v911 = vunpack.c.l.b16 %v835
  %v912 = vunpack.c.h.b16 %v835
  %v913 = vunpack.c.l.b16 %v836
  %v914 = vunpack.c.h.b16 %v836
  %v915 = vunpack.c.l.b16 %v837
  %v916 = vunpack.c.h.b16 %v837
  %v917 = vunpack.c.l.b16 %v838
  %v918 = vunpack.c.h.b16 %v838
  %v919 = vunpack.c.l.b16 %v839
  %v920 = vunpack.c.h.b16 %v839
  %v921 = vunpack.c.l.b16 %v840
  %v922 = vunpack.c.h.b16 %v840
  %v923 = vunpack.c.l.b16 %v841
  %v924 = vunpack.c.h.b16 %v841
  %v925 = vunpack.c.l.b16 %v842
  %v926 = vunpack.c.h.b16 %v842
  %v927 = vunpack.c.l.b16 %v843
  %v928 = vunpack.c.h.b16 %v843
  %v929 = vunpack.c.l.b16 %v844
  %v930 = vunpack.c.h.b16 %v844
  %v931 = vunpack.c.l.b16 %v845
  %v932 = vunpack.c.h.b16 %v845
  %v933 = vunpack.c.l.b16 %v846
  %v934 = vunpack.c.h.b16 %v846
  %v935 = vunpack.c.l.b16 %v847
  %v936 = vunpack.c.h.b16 %v847
  %v937 = vunpack.c.l.b16 %v848
  %v938 = vunpack.c.h.b16 %v848
  %v939 = vunpack.c.l.b16 %v849
  %v940 = vunpack.c.h.b16 %v849
  %v941 = vunpack.c.l.b16 %v850
  %v942 = vunpack.c.h.b16 %v850
  %v943 = vunpack.c.l.b16 %v851
  %v944 = vunpack.c.h.b16 %v851
  %v945 = vunpack.c.l.b16 %v852
  %v946 = vunpack.c.h.b16 %v852
  %v947 = vunpack.c.l.b16 %v853
  %v948 = vunpack.c.h.b16 %v853
  %v949 = vunpack.c.l.b16 %v854
  %v950 = vunpack.c.h.b16 %v854
  %v951 = vpack.c.b16 %v887, %v887
  %v952 = vpack.c.b16 %v888, %v888
  %v953 = vpack.c.b16 %v889, %v889
  %v954 = vpack.c.b16 %v890, %v890
  %v955 = vpack.c.b16 %v891, %v891
  %v956 = vpack.c.b16 %v892, %v892
  %v957 = vpack.c.b16 %v893, %v893
  %v958 = vpack.c.b16 %v894, %v894
  %v959 = vpack.c.b16 %v895, %v895
  %v960 = vpack.c.b16 %v896, %v896
  %v961 = vpack.c.b16 %v897, %v897
  %v962 = vpack.c.b16 %v898, %v898
  %v963 = vpack.c.b16 %v899, %v899
  %v964 = vpack.c.b16 %v900, %v900
  %v965 = vpack.c.b16 %v901, %v901
  %v966 = vpack.c.b16 %v902, %v902
  %v967 = vpack.c.b16 %v903, %v903
  %v968 = vpack.c.b16 %v904, %v904
  %v969 = vpack.c.b16 %v905, %v905
  %v970 = vpack.c.b16 %v906, %v906
  %v971 = vpack.c.b16 %v907, %v907
  %v972 = vpack.c.b16 %v908, %v908
  %v973 = vpack.c.b16 %v909, %v909
  %v974 = vpack.c.b16 %v910, %v910
  %v975 = vpack.c.b16 %v911, %v911
  %v976 = vpack.c.b16 %v912, %v912
  %v977 = vpack.c.b16 %v913, %v913
  %v978 = vpack.c.b16 %v914, %v914
  %v979 = vpack.c.b16 %v915, %v915
  %v980 = vpack.c.b16 %v916, %v916
  %v981 = vpack.c.b16 %v917, %v917
  %v982 = vpack.c.b16 %v918, %v918
  %v983 = vpack.c.b16 %v919, %v919
  %v984 = vpack.c.b16 %v920, %v920
  %v985 = vpack.c.b16 %v921, %v921
  %v986 = vpack.c.b16 %v922, %v922
  %v987 = vpack.c.b16 %v923, %v923
  %v988 = vpack.c.b16 %v924, %v924
  %v989 = vpack.c.b16 %v925, %v925
  %v990 = vpack.c.b16 %v926, %v926
  %v991 = vpack.c.b16 %v927, %v927
  %v992 = vpack.c.b16 %v928, %v928
  %v993 = vpack.c.b16 %v929, %v929
  %v994 = vpack.c.b16 %v930, %v930
  %v995 = vpack.c.b16 %v931, %v931
  %v996 = vpack.c.b16 %v932, %v932
  %v997 = vpack.c.b16 %v933, %v933
  %v998 = vpack.c.b16 %v934, %v934
  %v999 = vpack.c.b16 %v935, %v935
  %v1000 = vpack.c.b16 %v936, %v936
  %v1001 = vpack.c.b16 %v937, %v937
  %v1002 = vpack.c.b16 %v938, %v938
  %v1003 = vpack.c.b16 %v939, %v939
  %v1004 = vpack.c.b16 %v940, %v940
  %v1005 = vpack.c.b16 %v941, %v941
  %v1006 = vpack.c.b16 %v942, %v942
  %v1007 = vpack.c.b16 %v943, %v943
  %v1008 = vpack.c.b16 %v944, %v944
  %v1009 = vpack.c.b16 %v945, %v945
  %v1010 = vpack.c.b16 %v946, %v946
  %v1011 = vpack.c.b16 %v947, %v947
  %v1012 = vpack.c.b16 %v948, %v948
  %v1013 = vpack.c.b16 %v949, %v949
  %v1014 = vpack.c.b16 %v950, %v950
  %1079 = vst [vmem:[%s3] sm:$0xf] %v951
  %1080 = vst [vmem:[%s3 + $0x4] sm:$0xf] %v952
  %1081 = vst [vmem:[%s3 + $0x8] sm:$0xf] %v953
  %1082 = vst [vmem:[%s3 + $0xc] sm:$0xf] %v954
  %1083 = vst [vmem:[%s3 + $0x10] sm:$0xf] %v955
  %1084 = vst [vmem:[%s3 + $0x14] sm:$0xf] %v956
  %1085 = vst [vmem:[%s3 + $0x18] sm:$0xf] %v957
  %1086 = vst [vmem:[%s3 + $0x1c] sm:$0xf] %v958
  %1087 = vst [vmem:[%s3 + $0x20] sm:$0xf] %v959
  %1088 = vst [vmem:[%s3 + $0x24] sm:$0xf] %v960
  %1089 = vst [vmem:[%s3 + $0x28] sm:$0xf] %v961
  %1090 = vst [vmem:[%s3 + $0x2c] sm:$0xf] %v962
  %1091 = vst [vmem:[%s3 + $0x30] sm:$0xf] %v963
  %1092 = vst [vmem:[%s3 + $0x34] sm:$0xf] %v964
  %1093 = vst [vmem:[%s3 + $0x38] sm:$0xf] %v965
  %1094 = vst [vmem:[%s3 + $0x3c] sm:$0xf] %v966
  %1095 = vst [vmem:[%s3 + $0x40] sm:$0xf] %v967
  %1096 = vst [vmem:[%s3 + $0x44] sm:$0xf] %v968
  %1097 = vst [vmem:[%s3 + $0x48] sm:$0xf] %v969
  %1098 = vst [vmem:[%s3 + $0x4c] sm:$0xf] %v970
  %1099 = vst [vmem:[%s3 + $0x50] sm:$0xf] %v971
  %1100 = vst [vmem:[%s3 + $0x54] sm:$0xf] %v972
  %1101 = vst [vmem:[%s3 + $0x58] sm:$0xf] %v973
  %1102 = vst [vmem:[%s3 + $0x5c] sm:$0xf] %v974
  %1103 = vst [vmem:[%s3 + $0x60] sm:$0xf] %v975
  %1104 = vst [vmem:[%s3 + $0x64] sm:$0xf] %v976
  %1105 = vst [vmem:[%s3 + $0x68] sm:$0xf] %v977
  %1106 = vst [vmem:[%s3 + $0x6c] sm:$0xf] %v978
  %1107 = vst [vmem:[%s3 + $0x70] sm:$0xf] %v979
  %1108 = vst [vmem:[%s3 + $0x74] sm:$0xf] %v980
  %1109 = vst [vmem:[%s3 + $0x78] sm:$0xf] %v981
  %1110 = vst [vmem:[%s3 + $0x7c] sm:$0xf] %v982
  %1111 = vst [vmem:[%s3 + $0x80] sm:$0xf] %v983
  %1112 = vst [vmem:[%s3 + $0x84] sm:$0xf] %v984
  %1113 = vst [vmem:[%s3 + $0x88] sm:$0xf] %v985
  %1114 = vst [vmem:[%s3 + $0x8c] sm:$0xf] %v986
  %1115 = vst [vmem:[%s3 + $0x90] sm:$0xf] %v987
  %1116 = vst [vmem:[%s3 + $0x94] sm:$0xf] %v988
  %1117 = vst [vmem:[%s3 + $0x98] sm:$0xf] %v989
  %1118 = vst [vmem:[%s3 + $0x9c] sm:$0xf] %v990
  %1119 = vst [vmem:[%s3 + $0xa0] sm:$0xf] %v991
  %1120 = vst [vmem:[%s3 + $0xa4] sm:$0xf] %v992
  %1121 = vst [vmem:[%s3 + $0xa8] sm:$0xf] %v993
  %1122 = vst [vmem:[%s3 + $0xac] sm:$0xf] %v994
  %1123 = vst [vmem:[%s3 + $0xb0] sm:$0xf] %v995
  %1124 = vst [vmem:[%s3 + $0xb4] sm:$0xf] %v996
  %1125 = vst [vmem:[%s3 + $0xb8] sm:$0xf] %v997
  %1126 = vst [vmem:[%s3 + $0xbc] sm:$0xf] %v998
  %1127 = vst [vmem:[%s3 + $0xc0] sm:$0xf] %v999
  %1128 = vst [vmem:[%s3 + $0xc4] sm:$0xf] %v1000
  %1129 = vst [vmem:[%s3 + $0xc8] sm:$0xf] %v1001
  %1130 = vst [vmem:[%s3 + $0xcc] sm:$0xf] %v1002
  %1131 = vst [vmem:[%s3 + $0xd0] sm:$0xf] %v1003
  %1132 = vst [vmem:[%s3 + $0xd4] sm:$0xf] %v1004
  %1133 = vst [vmem:[%s3 + $0xd8] sm:$0xf] %v1005
  %1134 = vst [vmem:[%s3 + $0xdc] sm:$0xf] %v1006
  %1135 = vst [vmem:[%s3 + $0xe0] sm:$0xf] %v1007
  %1136 = vst [vmem:[%s3 + $0xe4] sm:$0xf] %v1008
  %1137 = vst [vmem:[%s3 + $0xe8] sm:$0xf] %v1009
  %1138 = vst [vmem:[%s3 + $0xec] sm:$0xf] %v1010
  %1139 = vst [vmem:[%s3 + $0xf0] sm:$0xf] %v1011
  %1140 = vst [vmem:[%s3 + $0xf4] sm:$0xf] %v1012
  %1141 = vst [vmem:[%s3 + $0xf8] sm:$0xf] %v1013
  %1142 = vst [vmem:[%s3 + $0xfc] sm:$0xf] %v1014
  // Predicated region
  $region14: #{nlayer_discriminator.11} parent=0 // pred_check
    _
  $region15: #{nlayer_discriminator.11} parent=0 // pred_check_branch
    %1144 = sbr.rel (0) target = $region17
  $region16: #{nlayer_discriminator.11} parent=0 // pred_region
    _
  $region17: #{nlayer_discriminator.11} parent=0 // pred_fallthru
    _
  // Predicated region
  $region18: #{nlayer_discriminator.11} parent=0 // pred_check
    _
  $region19: #{nlayer_discriminator.11} parent=0 // pred_check_branch
    %1146 = sbr.rel (0) target = $region21
  $region20: #{nlayer_discriminator.11} parent=0 // pred_region
    _
  $region21: #{nlayer_discriminator.11} parent=0 // pred_fallthru
    _

// kernel: nlayer_discriminator.12
$region0: #{nlayer_discriminator.12}
  #allocation0 [shape = 'u32[]', space=smem, size = 0x4, offset = 0x4, fixed_abs, tag = 'smem constant byte address 0x4 - core index']
  #allocation1 [shape = 'u32[144,128]{1,0:T(1,128)}', space=vmem, size = 0x12000, scoped, tag = 'internal scratch']
  #allocation2 [shape = 'f32[128,128]{1,0:T(8,128)}', space=vmem, size = 0x10000, scoped, tag = 'scratch operand']
  %s0 = inlined_call_operand.vmem [shape: bf16[128,1024], index: 0, kind: input, shape index: {}]
  %s1 = inlined_call_operand.vmem [shape: bf16[1024,128], index: 1, kind: input, shape index: {}]
  %s2 = inlined_call_operand.vmem [shape: f32[1,128], index: 2, kind: input, shape index: {}]
  %s3 = inlined_call_operand.vmem [shape: bf16[128,128], index: 3, kind: output, shape index: {}]
  %s4 = sld [smem:[#allocation0]]
  $region76: #{nlayer_discriminator.12} parent=0
    _
  %s6 = ssub.s32 1, %s4
  %s7 = scalar_select 0, %s6, %s4
  $region1: #{nlayer_discriminator.12} parent=0
    #allocation3 [shape = 'u8[262144]{0}', space=vmem, size = 0x40000, scoped, tag = 'input window, operand 0']
    loop: start=0, step=1, limit=4
    $region2: #{nlayer_discriminator.12} parent=1 // loop_pre_header
      _
    $region3: #{nlayer_discriminator.12} parent=1 // loop_header
      %s9 = sphi 0, %s13
      %p10 = scmp.ge.s32.totalorder %s9, 4
      %s16 = sphi 0, %s35
      %s17 = sphi 0, %s31
      %s18 = sphi 0, %s27
      %s19 = sphi 0, %s16
      %s20 = sphi 0, %s17
      %s21 = sphi 0, %s18
      %s22 = sphi 0, %s19
      %s23 = sphi 0, %s20
      %s24 = sphi 0, %s21
      %s40 = sphi 0, %s42
      %s43 = sphi 0, %s40
      %s44 = sphi 0, %s43
      %s60 = sphi 0, %s44
      %s68 = sphi 0, %s70
      %s71 = sphi 0, %s68
      %s72 = sphi 0, %s71
      %s88 = sphi 0, %s72
      %s94 = sphi 0, %s96
      %s97 = sphi 0, %s94
      %s98 = sphi 0, %s97
      %s114 = sphi 0, %s98
      %s122 = sphi 0, %s124
      %s125 = sphi 0, %s122
      %s126 = sphi 0, %s125
      %s142 = sphi 0, %s126
    $region4: #{nlayer_discriminator.12} parent=1 // loop_header_branch
      %12 = sbr.rel (%p10) target = $region8
    $region5: #{nlayer_discriminator.12} parent=1 // loop_body
      %s14 = ssub.s32 %s9, 1
      %s15 = ssub.s32 %s9, 2
      %s25 = sadd.s32 1, %s18
      %p26 = scmp.ge.s32.totalorder %s25, 2
      %s27 = scalar_select %p26, 0, %s25
      %s28 = sadd.s32 1, %s17
      %s29 = scalar_select %p26, %s28, %s17
      %p30 = scmp.ge.s32.totalorder %s29, 1
      %s31 = scalar_select %p30, 0, %s29
      %s32 = sadd.s32 1, %s16
      %s33 = scalar_select %p30, %s32, %s16
      %p34 = scmp.ge.s32.totalorder %s33, 1
      %s35 = scalar_select %p34, 0, %s33
      %s36 = ssub.s32 %s16, %s35
      %s37 = ssub.s32 %s18, %s27
      %s38 = sor.u32 %s36, %s37
      %p39 = scmp.eq.s32.totalorder %s38, 0
      %s41 = sadd.s32 %s40, 1
      %s42 = scalar_select %p39, %s40, %s41
      %p45 = pneg %p39
      %p46 = scmp.eq.s32.totalorder %s9, 1
      %p47 = por %p45, %p46
      %p48 = scmp.ne.s32.totalorder %s40, %s43
      %p49 = scmp.eq.s32.totalorder %s9, 0
      %p50 = por %p48, %p49
      %p51 = scmp.ne.s32.totalorder %s40, %s43
      %p52 = scmp.eq.s32.totalorder %s14, 1
      %p53 = por %p51, %p52
      %p54 = scmp.ne.s32.totalorder %s43, %s44
      %p55 = scmp.eq.s32.totalorder %s14, 0
      %p56 = por %p54, %p55
      %p57 = scmp.ne.s32.totalorder %s43, %s44
      %p58 = scmp.eq.s32.totalorder %s15, 1
      %p59 = por %p57, %p58
      %p61 = scmp.ne.s32.totalorder %s44, %s60
      %p62 = scmp.eq.s32.totalorder %s15, 0
      %p63 = por %p61, %p62
      %s64 = ssub.s32 %s18, %s27
      %s65 = ssub.s32 %s17, %s31
      %s66 = sor.u32 %s64, %s65
      %p67 = scmp.eq.s32.totalorder %s66, 0
      %s69 = sadd.s32 %s68, 1
      %s70 = scalar_select %p67, %s68, %s69
      %p73 = pneg %p67
      %p74 = scmp.eq.s32.totalorder %s9, 1
      %p75 = por %p73, %p74
      %p76 = scmp.ne.s32.totalorder %s68, %s71
      %p77 = scmp.eq.s32.totalorder %s9, 0
      %p78 = por %p76, %p77
      %p79 = scmp.ne.s32.totalorder %s68, %s71
      %p80 = scmp.eq.s32.totalorder %s14, 1
      %p81 = por %p79, %p80
      %p82 = scmp.ne.s32.totalorder %s71, %s72
      %p83 = scmp.eq.s32.totalorder %s14, 0
      %p84 = por %p82, %p83
      %p85 = scmp.ne.s32.totalorder %s71, %s72
      %p86 = scmp.eq.s32.totalorder %s15, 1
      %p87 = por %p85, %p86
      %p89 = scmp.ne.s32.totalorder %s72, %s88
      %p90 = scmp.eq.s32.totalorder %s15, 0
      %p91 = por %p89, %p90
      %s92 = ssub.s32 %s17, %s31
      %p93 = scmp.eq.s32.totalorder %s92, 0
      %s95 = sadd.s32 %s94, 1
      %s96 = scalar_select %p93, %s94, %s95
      %p99 = pneg %p93
      %p100 = scmp.eq.s32.totalorder %s9, 1
      %p101 = por %p99, %p100
      %p102 = scmp.ne.s32.totalorder %s94, %s97
      %p103 = scmp.eq.s32.totalorder %s9, 0
      %p104 = por %p102, %p103
      %p105 = scmp.ne.s32.totalorder %s94, %s97
      %p106 = scmp.eq.s32.totalorder %s14, 1
      %p107 = por %p105, %p106
      %p108 = scmp.ne.s32.totalorder %s97, %s98
      %p109 = scmp.eq.s32.totalorder %s14, 0
      %p110 = por %p108, %p109
      %p111 = scmp.ne.s32.totalorder %s97, %s98
      %p112 = scmp.eq.s32.totalorder %s15, 1
      %p113 = por %p111, %p112
      %p115 = scmp.ne.s32.totalorder %s98, %s114
      %p116 = scmp.eq.s32.totalorder %s15, 0
      %p117 = por %p115, %p116
      %s118 = ssub.s32 %s16, %s35
      %s119 = ssub.s32 %s17, %s31
      %s120 = sor.u32 %s118, %s119
      %p121 = scmp.eq.s32.totalorder %s120, 0
      %s123 = sadd.s32 %s122, 1
      %s124 = scalar_select %p121, %s122, %s123
      %p127 = pneg %p121
      %p128 = scmp.eq.s32.totalorder %s9, 1
      %p129 = por %p127, %p128
      %p130 = scmp.ne.s32.totalorder %s122, %s125
      %p131 = scmp.eq.s32.totalorder %s9, 0
      %p132 = por %p130, %p131
      %p133 = scmp.ne.s32.totalorder %s122, %s125
      %p134 = scmp.eq.s32.totalorder %s14, 1
      %p135 = por %p133, %p134
      %p136 = scmp.ne.s32.totalorder %s125, %s126
      %p137 = scmp.eq.s32.totalorder %s14, 0
      %p138 = por %p136, %p137
      %p139 = scmp.ne.s32.totalorder %s125, %s126
      %p140 = scmp.eq.s32.totalorder %s15, 1
      %p141 = por %p139, %p140
      %p143 = scmp.ne.s32.totalorder %s126, %s142
      %p144 = scmp.eq.s32.totalorder %s15, 0
      %p145 = por %p143, %p144
      %p146 = scmp.le.s32.totalorder 1, %s9
      %p147 = scmp.lt.s32.totalorder %s9, 3
      %p148 = pnand %p146, %p147
      %p149 = pneg %p148
      // Predicated region
      $region9: #{nlayer_discriminator.12} parent=5 // pred_check
        _
      $region10: #{nlayer_discriminator.12} parent=5 // pred_check_branch
        %151 = sbr.rel (%p148) target = $region12
      $region11: #{nlayer_discriminator.12} parent=5 // pred_region
        %s152 = ssub.s32 %s9, 1
        // Predicated region
        $region13: #{nlayer_discriminator.12} parent=11 // pred_check
          %p153 = pneg %p110
        $region14: #{nlayer_discriminator.12} parent=11 // pred_check_branch
          %155 = sbr.rel (%p153) target = $region16
        $region15: #{nlayer_discriminator.12} parent=11 // pred_region
          %p156 = scmp.lt.s32.totalorder %s20, 0
          %s157 = scalar_select %p156, %s20, 0
          %s158 = scalar_lea.vmem %s2, %s157
        $region16: #{nlayer_discriminator.12} parent=11 // pred_fallthru
          _
      $region12: #{nlayer_discriminator.12} parent=5 // pred_fallthru
        _
      %p159 = scmp.lt.s32.totalorder %s9, 2
      // Predicated region
      $region17: #{nlayer_discriminator.12} parent=5 // pred_check
        %p160 = pneg %p159
      $region18: #{nlayer_discriminator.12} parent=5 // pred_check_branch
        %162 = sbr.rel (%p160) target = $region20
      $region19: #{nlayer_discriminator.12} parent=5 // pred_region
        // Predicated region
        $region21: #{nlayer_discriminator.12} parent=19 // pred_check
          %p163 = pneg %p50
        $region22: #{nlayer_discriminator.12} parent=19 // pred_check_branch
          %165 = sbr.rel (%p163) target = $region24
        $region23: #{nlayer_discriminator.12} parent=19 // pred_region
          %s166 = sand.u32 %s40, 1
          %s167 = sand.u32 %s40, 1
          %s168 = smul.addr %s167, 256
          %s169 = scalar_lea.vmem [#allocation3], %s168
          %s170 = smul.u32 16, %s16
          %s171 = smul.u32 4, %s18
          %s172 = smul.addr %s170, 8
          %s173 = sadd.s32 %s171, %s172
          %s174 = smul.addr %s173, 4
          %s175 = scalar_lea.vmem %s0, %s174
          // Predicated region
          $region25: #{nlayer_discriminator.12} parent=23 // pred_check
            _
          $region26: #{nlayer_discriminator.12} parent=23 // pred_check_branch
            %177 = sbr.rel (0) target = $region28
          $region27: #{nlayer_discriminator.12} parent=23 // pred_region
            // Predicated region
            $region29: #{nlayer_discriminator.12} parent=27 // pred_check
              _
            $region30: #{nlayer_discriminator.12} parent=27 // pred_check_branch
              %179 = sbr.rel (0) target = $region32
            $region31: #{nlayer_discriminator.12} parent=27 // pred_region
              loop: start=0, step=1, limit=1
              $region33: #{nlayer_discriminator.12} parent=31 // loop_pre_header
                _
              $region34: #{nlayer_discriminator.12} parent=31 // loop_header
                %s181 = sphi 0, %s185
                %p182 = scmp.ge.s32.totalorder %s181, 1
                %s186 = sphi %s175, %s175
                %s187 = sphi %s169, %s169
              $region35: #{nlayer_discriminator.12} parent=31 // loop_header_branch
                %184 = sbr.rel (%p182) target = $region39
              $region36: #{nlayer_discriminator.12} parent=31 // loop_body
                %v188 = vld [vmem:[%s186] sm:$0xff]
                %189 = vst [vmem:[%s187] sm:$0xff] %v188
                %v190 = vld [vmem:[%s186 + $0x8] sm:$0xff]
                %191 = vst [vmem:[%s187 + $0x8] sm:$0xff] %v190
                %v192 = vld [vmem:[%s186 + $0x20] sm:$0xff]
                %193 = vst [vmem:[%s187 + $0x10] sm:$0xff] %v192
                %v194 = vld [vmem:[%s186 + $0x28] sm:$0xff]
                %195 = vst [vmem:[%s187 + $0x18] sm:$0xff] %v194
                %v196 = vld [vmem:[%s186 + $0x40] sm:$0xff]
                %197 = vst [vmem:[%s187 + $0x20] sm:$0xff] %v196
                %v198 = vld [vmem:[%s186 + $0x48] sm:$0xff]
                %199 = vst [vmem:[%s187 + $0x28] sm:$0xff] %v198
                %v200 = vld [vmem:[%s186 + $0x60] sm:$0xff]
                %201 = vst [vmem:[%s187 + $0x30] sm:$0xff] %v200
                %v202 = vld [vmem:[%s186 + $0x68] sm:$0xff]
                %203 = vst [vmem:[%s187 + $0x38] sm:$0xff] %v202
                %v204 = vld [vmem:[%s186 + $0x80] sm:$0xff]
                %205 = vst [vmem:[%s187 + $0x40] sm:$0xff] %v204
                %v206 = vld [vmem:[%s186 + $0x88] sm:$0xff]
                %207 = vst [vmem:[%s187 + $0x48] sm:$0xff] %v206
                %v208 = vld [vmem:[%s186 + $0xa0] sm:$0xff]
                %209 = vst [vmem:[%s187 + $0x50] sm:$0xff] %v208
                %v210 = vld [vmem:[%s186 + $0xa8] sm:$0xff]
                %211 = vst [vmem:[%s187 + $0x58] sm:$0xff] %v210
                %v212 = vld [vmem:[%s186 + $0xc0] sm:$0xff]
                %213 = vst [vmem:[%s187 + $0x60] sm:$0xff] %v212
                %v214 = vld [vmem:[%s186 + $0xc8] sm:$0xff]
                %215 = vst [vmem:[%s187 + $0x68] sm:$0xff] %v214
                %v216 = vld [vmem:[%s186 + $0xe0] sm:$0xff]
                %217 = vst [vmem:[%s187 + $0x70] sm:$0xff] %v216
                %v218 = vld [vmem:[%s186 + $0xe8] sm:$0xff]
                %219 = vst [vmem:[%s187 + $0x78] sm:$0xff] %v218
                %v220 = vld [vmem:[%s186 + $0x100] sm:$0xff]
                %221 = vst [vmem:[%s187 + $0x80] sm:$0xff] %v220
                %v222 = vld [vmem:[%s186 + $0x108] sm:$0xff]
                %223 = vst [vmem:[%s187 + $0x88] sm:$0xff] %v222
                %v224 = vld [vmem:[%s186 + $0x120] sm:$0xff]
                %225 = vst [vmem:[%s187 + $0x90] sm:$0xff] %v224
                %v226 = vld [vmem:[%s186 + $0x128] sm:$0xff]
                %227 = vst [vmem:[%s187 + $0x98] sm:$0xff] %v226
                %v228 = vld [vmem:[%s186 + $0x140] sm:$0xff]
                %229 = vst [vmem:[%s187 + $0xa0] sm:$0xff] %v228
                %v230 = vld [vmem:[%s186 + $0x148] sm:$0xff]
                %231 = vst [vmem:[%s187 + $0xa8] sm:$0xff] %v230
                %v232 = vld [vmem:[%s186 + $0x160] sm:$0xff]
                %233 = vst [vmem:[%s187 + $0xb0] sm:$0xff] %v232
                %v234 = vld [vmem:[%s186 + $0x168] sm:$0xff]
                %235 = vst [vmem:[%s187 + $0xb8] sm:$0xff] %v234
                %v236 = vld [vmem:[%s186 + $0x180] sm:$0xff]
                %237 = vst [vmem:[%s187 + $0xc0] sm:$0xff] %v236
                %v238 = vld [vmem:[%s186 + $0x188] sm:$0xff]
                %239 = vst [vmem:[%s187 + $0xc8] sm:$0xff] %v238
                %v240 = vld [vmem:[%s186 + $0x1a0] sm:$0xff]
                %241 = vst [vmem:[%s187 + $0xd0] sm:$0xff] %v240
                %v242 = vld [vmem:[%s186 + $0x1a8] sm:$0xff]
                %243 = vst [vmem:[%s187 + $0xd8] sm:$0xff] %v242
                %v244 = vld [vmem:[%s186 + $0x1c0] sm:$0xff]
                %245 = vst [vmem:[%s187 + $0xe0] sm:$0xff] %v244
                %v246 = vld [vmem:[%s186 + $0x1c8] sm:$0xff]
                %247 = vst [vmem:[%s187 + $0xe8] sm:$0xff] %v246
                %v248 = vld [vmem:[%s186 + $0x1e0] sm:$0xff]
                %249 = vst [vmem:[%s187 + $0xf0] sm:$0xff] %v248
                %v250 = vld [vmem:[%s186 + $0x1e8] sm:$0xff]
                %251 = vst [vmem:[%s187 + $0xf8] sm:$0xff] %v250
              $region37: #{nlayer_discriminator.12} parent=31 // loop_footer
                %s185 = sadd.s32 1, %s181
              $region38: #{nlayer_discriminator.12} parent=31 // loop_footer_branch
                %180 = sbr.rel target = $region34
              $region39: #{nlayer_discriminator.12} parent=31 // loop_exit
                _
            $region32: #{nlayer_discriminator.12} parent=27 // pred_fallthru
              _
            // Predicated region
            $region40: #{nlayer_discriminator.12} parent=27 // pred_check
              _
            $region41: #{nlayer_discriminator.12} parent=27 // pred_check_branch
              %253 = sbr.rel target = $region43
            $region42: #{nlayer_discriminator.12} parent=27 // pred_region
              _
            $region43: #{nlayer_discriminator.12} parent=27 // pred_fallthru
              _
          $region28: #{nlayer_discriminator.12} parent=23 // pred_fallthru
            _
          %254 = vnop
        $region24: #{nlayer_discriminator.12} parent=19 // pred_fallthru
          _
        // Predicated region
        $region44: #{nlayer_discriminator.12} parent=19 // pred_check
          %p255 = pneg %p78
        $region45: #{nlayer_discriminator.12} parent=19 // pred_check_branch
          %257 = sbr.rel (%p255) target = $region47
        $region46: #{nlayer_discriminator.12} parent=19 // pred_region
          %s258 = smul.u32 64, %s18
          %p259 = scmp.lt.s32.totalorder %s258, 127
          %s260 = scalar_select %p259, %s258, 127
          %p261 = scmp.lt.s32.totalorder %s17, 0
          %s262 = scalar_select %p261, %s17, 0
          %s263 = sadd.s32 %s262, %s260
          %s264 = smul.addr %s263, 4
          %s265 = scalar_lea.vmem %s1, %s264
          %s266 = smul.u32 64, %s18
        $region47: #{nlayer_discriminator.12} parent=19 // pred_fallthru
          _
      $region20: #{nlayer_discriminator.12} parent=5 // pred_fallthru
        _
      %p267 = scmp.le.s32.totalorder 1, %s9
      %p268 = scmp.lt.s32.totalorder %s9, 3
      %p269 = pnand %p267, %p268
      %p270 = pneg %p269
      // Predicated region
      $region48: #{nlayer_discriminator.12} parent=5 // pred_check
        _
      $region49: #{nlayer_discriminator.12} parent=5 // pred_check_branch
        %272 = sbr.rel (%p269) target = $region51
      $region50: #{nlayer_discriminator.12} parent=5 // pred_region
        %s273 = ssub.s32 %s9, 1
        %s274 = sand.u32 %s43, 1
        %s275 = sand.u32 %s43, 1
        %s276 = smul.addr %s275, 256
        %s277 = scalar_lea.vmem [#allocation3], %s276
        // Predicated region
        $region52: #{nlayer_discriminator.12} parent=50 // pred_check
          %p278 = pneg %p56
        $region53: #{nlayer_discriminator.12} parent=50 // pred_check_branch
          %280 = sbr.rel (%p278) target = $region55
        $region54: #{nlayer_discriminator.12} parent=50 // pred_region
          _
        $region55: #{nlayer_discriminator.12} parent=50 // pred_fallthru
          _
        %s281 = sand.u32 %s43, 1
        %s282 = sand.u32 %s43, 1
        %s283 = smul.addr %s282, 256
        %s284 = scalar_lea.vmem [#allocation3], %s283
        %p285 = pneg %p56
        %p286 = pneg %p53
        %s287 = smul.u32 64, %s21
        %p288 = scmp.lt.s32.totalorder %s287, 127
        %s289 = scalar_select %p288, %s287, 127
        %p290 = scmp.lt.s32.totalorder %s20, 0
        %s291 = scalar_select %p290, %s20, 0
        %s292 = sadd.s32 %s291, %s289
        %s293 = smul.addr %s292, 4
        %s294 = scalar_lea.vmem %s1, %s293
        %p295 = pneg %p84
        %p296 = pneg %p81
        %p297 = scmp.lt.s32.totalorder %s20, 0
        %s298 = scalar_select %p297, %s20, 0
        %s299 = scalar_lea.vmem %s2, %s298
        %p300 = pneg %p110
        %p301 = pneg %p107
        %p302 = pneg %p138
        %p303 = pneg %p135
        %s304 = smul.u32 16, %s19
        %p305 = scmp.lt.s32.totalorder %s304, 15
        %s306 = scalar_select %p305, %s304, 15
        %p307 = scmp.lt.s32.totalorder %s20, 0
        %s308 = scalar_select %p307, %s20, 0
        %s309 = sadd.s32 %s308, %s306
        %s310 = smul.addr %s309, 4
        %s311 = scalar_lea.vmem %s3, %s310
        %s312 = smul.u32 16, %s19
        %s313 = smul.u32 4, %s21
        %s314 = smul.u32 64, %s21
        %p315 = scmp.lt.s32.totalorder %s314, 127
        %s316 = scalar_select %p315, %s314, 127
        %p317 = scmp.lt.s32.totalorder %s20, 0
        %s318 = scalar_select %p317, %s20, 0
        %s319 = sadd.s32 %s318, %s316
        %s320 = smul.addr %s319, 4
        %s321 = scalar_lea.vmem %s1, %s320
        %s322 = smul.u32 64, %s21
        %p323 = scmp.lt.s32.totalorder %s20, 0
        %s324 = scalar_select %p323, %s20, 0
        %s325 = scalar_lea.vmem %s2, %s324
        %s326 = smul.u32 16, %s19
        %p327 = scmp.lt.s32.totalorder %s326, 15
        %s328 = scalar_select %p327, %s326, 15
        %p329 = scmp.lt.s32.totalorder %s20, 0
        %s330 = scalar_select %p329, %s20, 0
        %s331 = sadd.s32 %s330, %s328
        %s332 = smul.addr %s331, 4
        %s333 = scalar_lea.vmem %s3, %s332
        %s334 = smul.u32 16, %s19
        %p336 = scmp.eq.s32.totalorder %s21, 0
        // Predicated region
        $region56: #{nlayer_discriminator.12} parent=50 // pred_check
          %p337 = pneg %p336
        $region57: #{nlayer_discriminator.12} parent=50 // pred_check_branch
          %339 = sbr.rel (%p337) target = $region59
        $region58: #{nlayer_discriminator.12} parent=50 // pred_region
          %340 = vst [vmem:[#allocation2] sm:$0xff] 0.0
          %341 = vst [vmem:[#allocation2 + $0x8] sm:$0xff] 0.0
          %342 = vst [vmem:[#allocation2 + $0x10] sm:$0xff] 0.0
          %343 = vst [vmem:[#allocation2 + $0x18] sm:$0xff] 0.0
          %344 = vst [vmem:[#allocation2 + $0x20] sm:$0xff] 0.0
          %345 = vst [vmem:[#allocation2 + $0x28] sm:$0xff] 0.0
          %346 = vst [vmem:[#allocation2 + $0x30] sm:$0xff] 0.0
          %347 = vst [vmem:[#allocation2 + $0x38] sm:$0xff] 0.0
          %348 = vst [vmem:[#allocation2 + $0x40] sm:$0xff] 0.0
          %349 = vst [vmem:[#allocation2 + $0x48] sm:$0xff] 0.0
          %350 = vst [vmem:[#allocation2 + $0x50] sm:$0xff] 0.0
          %351 = vst [vmem:[#allocation2 + $0x58] sm:$0xff] 0.0
          %352 = vst [vmem:[#allocation2 + $0x60] sm:$0xff] 0.0
          %353 = vst [vmem:[#allocation2 + $0x68] sm:$0xff] 0.0
          %354 = vst [vmem:[#allocation2 + $0x70] sm:$0xff] 0.0
          %355 = vst [vmem:[#allocation2 + $0x78] sm:$0xff] 0.0
        $region59: #{nlayer_discriminator.12} parent=50 // pred_fallthru
          _
        %v356 = vld [vmem:[#allocation2] sm:$0xff]
        %v357 = vld [vmem:[#allocation2 + $0x8] sm:$0xff]
        %v358 = vld [vmem:[#allocation2 + $0x10] sm:$0xff]
        %v359 = vld [vmem:[#allocation2 + $0x18] sm:$0xff]
        %v360 = vld [vmem:[#allocation2 + $0x20] sm:$0xff]
        %v361 = vld [vmem:[#allocation2 + $0x28] sm:$0xff]
        %v362 = vld [vmem:[#allocation2 + $0x30] sm:$0xff]
        %v363 = vld [vmem:[#allocation2 + $0x38] sm:$0xff]
        %v364 = vld [vmem:[#allocation2 + $0x40] sm:$0xff]
        %v365 = vld [vmem:[#allocation2 + $0x48] sm:$0xff]
        %v366 = vld [vmem:[#allocation2 + $0x50] sm:$0xff]
        %v367 = vld [vmem:[#allocation2 + $0x58] sm:$0xff]
        %v368 = vld [vmem:[#allocation2 + $0x60] sm:$0xff]
        %v369 = vld [vmem:[#allocation2 + $0x68] sm:$0xff]
        %v370 = vld [vmem:[#allocation2 + $0x70] sm:$0xff]
        %v371 = vld [vmem:[#allocation2 + $0x78] sm:$0xff]
        %v372 = vld [vmem:[%s277] sm:$0xff]
        %v373 = vld [vmem:[%s277 + $0x8] sm:$0xff]
        %v374 = vld [vmem:[%s277 + $0x10] sm:$0xff]
        %v375 = vld [vmem:[%s277 + $0x18] sm:$0xff]
        %v376 = vld [vmem:[%s277 + $0x20] sm:$0xff]
        %v377 = vld [vmem:[%s277 + $0x28] sm:$0xff]
        %v378 = vld [vmem:[%s277 + $0x30] sm:$0xff]
        %v379 = vld [vmem:[%s277 + $0x38] sm:$0xff]
        %v380 = vld [vmem:[%s277 + $0x40] sm:$0xff]
        %v381 = vld [vmem:[%s277 + $0x48] sm:$0xff]
        %v382 = vld [vmem:[%s277 + $0x50] sm:$0xff]
        %v383 = vld [vmem:[%s277 + $0x58] sm:$0xff]
        %v384 = vld [vmem:[%s277 + $0x60] sm:$0xff]
        %v385 = vld [vmem:[%s277 + $0x68] sm:$0xff]
        %v386 = vld [vmem:[%s277 + $0x70] sm:$0xff]
        %v387 = vld [vmem:[%s277 + $0x78] sm:$0xff]
        %v388 = vld [vmem:[%s277 + $0x80] sm:$0xff]
        %v389 = vld [vmem:[%s277 + $0x88] sm:$0xff]
        %v390 = vld [vmem:[%s277 + $0x90] sm:$0xff]
        %v391 = vld [vmem:[%s277 + $0x98] sm:$0xff]
        %v392 = vld [vmem:[%s277 + $0xa0] sm:$0xff]
        %v393 = vld [vmem:[%s277 + $0xa8] sm:$0xff]
        %v394 = vld [vmem:[%s277 + $0xb0] sm:$0xff]
        %v395 = vld [vmem:[%s277 + $0xb8] sm:$0xff]
        %v396 = vld [vmem:[%s277 + $0xc0] sm:$0xff]
        %v397 = vld [vmem:[%s277 + $0xc8] sm:$0xff]
        %v398 = vld [vmem:[%s277 + $0xd0] sm:$0xff]
        %v399 = vld [vmem:[%s277 + $0xd8] sm:$0xff]
        %v400 = vld [vmem:[%s277 + $0xe0] sm:$0xff]
        %v401 = vld [vmem:[%s277 + $0xe8] sm:$0xff]
        %v402 = vld [vmem:[%s277 + $0xf0] sm:$0xff]
        %v403 = vld [vmem:[%s277 + $0xf8] sm:$0xff]
        %v404 = vld [vmem:[%s321] sm:$0xf]
        %v405 = vld [vmem:[%s321 + $0x4] sm:$0xf]
        %v406 = vld [vmem:[%s321 + $0x8] sm:$0xf]
        %v407 = vld [vmem:[%s321 + $0xc] sm:$0xf]
        %v408 = vld [vmem:[%s321 + $0x10] sm:$0xf]
        %v409 = vld [vmem:[%s321 + $0x14] sm:$0xf]
        %v410 = vld [vmem:[%s321 + $0x18] sm:$0xf]
        %v411 = vld [vmem:[%s321 + $0x1c] sm:$0xf]
        %v412 = vld [vmem:[%s321 + $0x20] sm:$0xf]
        %v413 = vld [vmem:[%s321 + $0x24] sm:$0xf]
        %v414 = vld [vmem:[%s321 + $0x28] sm:$0xf]
        %v415 = vld [vmem:[%s321 + $0x2c] sm:$0xf]
        %v416 = vld [vmem:[%s321 + $0x30] sm:$0xf]
        %v417 = vld [vmem:[%s321 + $0x34] sm:$0xf]
        %v418 = vld [vmem:[%s321 + $0x38] sm:$0xf]
        %v419 = vld [vmem:[%s321 + $0x3c] sm:$0xf]
        %v420 = vld [vmem:[%s321 + $0x40] sm:$0xf]
        %v421 = vld [vmem:[%s321 + $0x44] sm:$0xf]
        %v422 = vld [vmem:[%s321 + $0x48] sm:$0xf]
        %v423 = vld [vmem:[%s321 + $0x4c] sm:$0xf]
        %v424 = vld [vmem:[%s321 + $0x50] sm:$0xf]
        %v425 = vld [vmem:[%s321 + $0x54] sm:$0xf]
        %v426 = vld [vmem:[%s321 + $0x58] sm:$0xf]
        %v427 = vld [vmem:[%s321 + $0x5c] sm:$0xf]
        %v428 = vld [vmem:[%s321 + $0x60] sm:$0xf]
        %v429 = vld [vmem:[%s321 + $0x64] sm:$0xf]
        %v430 = vld [vmem:[%s321 + $0x68] sm:$0xf]
        %v431 = vld [vmem:[%s321 + $0x6c] sm:$0xf]
        %v432 = vld [vmem:[%s321 + $0x70] sm:$0xf]
        %v433 = vld [vmem:[%s321 + $0x74] sm:$0xf]
        %v434 = vld [vmem:[%s321 + $0x78] sm:$0xf]
        %v435 = vld [vmem:[%s321 + $0x7c] sm:$0xf]
        %v436 = vld [vmem:[%s321 + $0x80] sm:$0xf]
        %v437 = vld [vmem:[%s321 + $0x84] sm:$0xf]
        %v438 = vld [vmem:[%s321 + $0x88] sm:$0xf]
        %v439 = vld [vmem:[%s321 + $0x8c] sm:$0xf]
        %v440 = vld [vmem:[%s321 + $0x90] sm:$0xf]
        %v441 = vld [vmem:[%s321 + $0x94] sm:$0xf]
        %v442 = vld [vmem:[%s321 + $0x98] sm:$0xf]
        %v443 = vld [vmem:[%s321 + $0x9c] sm:$0xf]
        %v444 = vld [vmem:[%s321 + $0xa0] sm:$0xf]
        %v445 = vld [vmem:[%s321 + $0xa4] sm:$0xf]
        %v446 = vld [vmem:[%s321 + $0xa8] sm:$0xf]
        %v447 = vld [vmem:[%s321 + $0xac] sm:$0xf]
        %v448 = vld [vmem:[%s321 + $0xb0] sm:$0xf]
        %v449 = vld [vmem:[%s321 + $0xb4] sm:$0xf]
        %v450 = vld [vmem:[%s321 + $0xb8] sm:$0xf]
        %v451 = vld [vmem:[%s321 + $0xbc] sm:$0xf]
        %v452 = vld [vmem:[%s321 + $0xc0] sm:$0xf]
        %v453 = vld [vmem:[%s321 + $0xc4] sm:$0xf]
        %v454 = vld [vmem:[%s321 + $0xc8] sm:$0xf]
        %v455 = vld [vmem:[%s321 + $0xcc] sm:$0xf]
        %v456 = vld [vmem:[%s321 + $0xd0] sm:$0xf]
        %v457 = vld [vmem:[%s321 + $0xd4] sm:$0xf]
        %v458 = vld [vmem:[%s321 + $0xd8] sm:$0xf]
        %v459 = vld [vmem:[%s321 + $0xdc] sm:$0xf]
        %v460 = vld [vmem:[%s321 + $0xe0] sm:$0xf]
        %v461 = vld [vmem:[%s321 + $0xe4] sm:$0xf]
        %v462 = vld [vmem:[%s321 + $0xe8] sm:$0xf]
        %v463 = vld [vmem:[%s321 + $0xec] sm:$0xf]
        %v464 = vld [vmem:[%s321 + $0xf0] sm:$0xf]
        %v465 = vld [vmem:[%s321 + $0xf4] sm:$0xf]
        %v466 = vld [vmem:[%s321 + $0xf8] sm:$0xf]
        %v467 = vld [vmem:[%s321 + $0xfc] sm:$0xf]
        %v500 = vunpack.c.l.b16 %v372
        %v501 = vunpack.c.h.b16 %v372
        %v502 = vunpack.c.l.b16 %v373
        %v503 = vunpack.c.h.b16 %v373
        %v504 = vunpack.c.l.b16 %v374
        %v505 = vunpack.c.h.b16 %v374
        %v506 = vunpack.c.l.b16 %v375
        %v507 = vunpack.c.h.b16 %v375
        %v508 = vunpack.c.l.b16 %v376
        %v509 = vunpack.c.h.b16 %v376
        %v510 = vunpack.c.l.b16 %v377
        %v511 = vunpack.c.h.b16 %v377
        %v512 = vunpack.c.l.b16 %v378
        %v513 = vunpack.c.h.b16 %v378
        %v514 = vunpack.c.l.b16 %v379
        %v515 = vunpack.c.h.b16 %v379
        %v516 = vunpack.c.l.b16 %v380
        %v517 = vunpack.c.h.b16 %v380
        %v518 = vunpack.c.l.b16 %v381
        %v519 = vunpack.c.h.b16 %v381
        %v520 = vunpack.c.l.b16 %v382
        %v521 = vunpack.c.h.b16 %v382
        %v522 = vunpack.c.l.b16 %v383
        %v523 = vunpack.c.h.b16 %v383
        %v524 = vunpack.c.l.b16 %v384
        %v525 = vunpack.c.h.b16 %v384
        %v526 = vunpack.c.l.b16 %v385
        %v527 = vunpack.c.h.b16 %v385
        %v528 = vunpack.c.l.b16 %v386
        %v529 = vunpack.c.h.b16 %v386
        %v530 = vunpack.c.l.b16 %v387
        %v531 = vunpack.c.h.b16 %v387
        %v532 = vunpack.c.l.b16 %v388
        %v533 = vunpack.c.h.b16 %v388
        %v534 = vunpack.c.l.b16 %v389
        %v535 = vunpack.c.h.b16 %v389
        %v536 = vunpack.c.l.b16 %v390
        %v537 = vunpack.c.h.b16 %v390
        %v538 = vunpack.c.l.b16 %v391
        %v539 = vunpack.c.h.b16 %v391
        %v540 = vunpack.c.l.b16 %v392
        %v541 = vunpack.c.h.b16 %v392
        %v542 = vunpack.c.l.b16 %v393
        %v543 = vunpack.c.h.b16 %v393
        %v544 = vunpack.c.l.b16 %v394
        %v545 = vunpack.c.h.b16 %v394
        %v546 = vunpack.c.l.b16 %v395
        %v547 = vunpack.c.h.b16 %v395
        %v548 = vunpack.c.l.b16 %v396
        %v549 = vunpack.c.h.b16 %v396
        %v550 = vunpack.c.l.b16 %v397
        %v551 = vunpack.c.h.b16 %v397
        %v552 = vunpack.c.l.b16 %v398
        %v553 = vunpack.c.h.b16 %v398
        %v554 = vunpack.c.l.b16 %v399
        %v555 = vunpack.c.h.b16 %v399
        %v556 = vunpack.c.l.b16 %v400
        %v557 = vunpack.c.h.b16 %v400
        %v558 = vunpack.c.l.b16 %v401
        %v559 = vunpack.c.h.b16 %v401
        %v560 = vunpack.c.l.b16 %v402
        %v561 = vunpack.c.h.b16 %v402
        %v562 = vunpack.c.l.b16 %v403
        %v563 = vunpack.c.h.b16 %v403
        %v564 = vpack.c.b16 %v504, %v500
        %v565 = vpack.c.b16 %v505, %v501
        %v566 = vpack.c.b16 %v506, %v502
        %v567 = vpack.c.b16 %v507, %v503
        %v568 = vpack.c.b16 %v512, %v508
        %v569 = vpack.c.b16 %v513, %v509
        %v570 = vpack.c.b16 %v514, %v510
        %v571 = vpack.c.b16 %v515, %v511
        %v572 = vpack.c.b16 %v520, %v516
        %v573 = vpack.c.b16 %v521, %v517
        %v574 = vpack.c.b16 %v522, %v518
        %v575 = vpack.c.b16 %v523, %v519
        %v576 = vpack.c.b16 %v528, %v524
        %v577 = vpack.c.b16 %v529, %v525
        %v578 = vpack.c.b16 %v530, %v526
        %v579 = vpack.c.b16 %v531, %v527
        %v580 = vpack.c.b16 %v536, %v532
        %v581 = vpack.c.b16 %v537, %v533
        %v582 = vpack.c.b16 %v538, %v534
        %v583 = vpack.c.b16 %v539, %v535
        %v584 = vpack.c.b16 %v544, %v540
        %v585 = vpack.c.b16 %v545, %v541
        %v586 = vpack.c.b16 %v546, %v542
        %v587 = vpack.c.b16 %v547, %v543
        %v588 = vpack.c.b16 %v552, %v548
        %v589 = vpack.c.b16 %v553, %v549
        %v590 = vpack.c.b16 %v554, %v550
        %v591 = vpack.c.b16 %v555, %v551
        %v592 = vpack.c.b16 %v560, %v556
        %v593 = vpack.c.b16 %v561, %v557
        %v594 = vpack.c.b16 %v562, %v558
        %v595 = vpack.c.b16 %v563, %v559
        %v692 = vunpack.c.l.b16 %v404
        %v693 = vunpack.c.l.b16 %v405
        %v694 = vunpack.c.l.b16 %v406
        %v695 = vunpack.c.l.b16 %v407
        %v696 = vunpack.c.l.b16 %v408
        %v697 = vunpack.c.l.b16 %v409
        %v698 = vunpack.c.l.b16 %v410
        %v699 = vunpack.c.l.b16 %v411
        %v700 = vunpack.c.l.b16 %v412
        %v701 = vunpack.c.l.b16 %v413
        %v702 = vunpack.c.l.b16 %v414
        %v703 = vunpack.c.l.b16 %v415
        %v704 = vunpack.c.l.b16 %v416
        %v705 = vunpack.c.l.b16 %v417
        %v706 = vunpack.c.l.b16 %v418
        %v707 = vunpack.c.l.b16 %v419
        %v708 = vunpack.c.l.b16 %v420
        %v709 = vunpack.c.l.b16 %v421
        %v710 = vunpack.c.l.b16 %v422
        %v711 = vunpack.c.l.b16 %v423
        %v712 = vunpack.c.l.b16 %v424
        %v713 = vunpack.c.l.b16 %v425
        %v714 = vunpack.c.l.b16 %v426
        %v715 = vunpack.c.l.b16 %v427
        %v716 = vunpack.c.l.b16 %v428
        %v717 = vunpack.c.l.b16 %v429
        %v718 = vunpack.c.l.b16 %v430
        %v719 = vunpack.c.l.b16 %v431
        %v720 = vunpack.c.l.b16 %v432
        %v721 = vunpack.c.l.b16 %v433
        %v722 = vunpack.c.l.b16 %v434
        %v723 = vunpack.c.l.b16 %v435
        %v724 = vunpack.c.l.b16 %v436
        %v725 = vunpack.c.l.b16 %v437
        %v726 = vunpack.c.l.b16 %v438
        %v727 = vunpack.c.l.b16 %v439
        %v728 = vunpack.c.l.b16 %v440
        %v729 = vunpack.c.l.b16 %v441
        %v730 = vunpack.c.l.b16 %v442
        %v731 = vunpack.c.l.b16 %v443
        %v732 = vunpack.c.l.b16 %v444
        %v733 = vunpack.c.l.b16 %v445
        %v734 = vunpack.c.l.b16 %v446
        %v735 = vunpack.c.l.b16 %v447
        %v736 = vunpack.c.l.b16 %v448
        %v737 = vunpack.c.l.b16 %v449
        %v738 = vunpack.c.l.b16 %v450
        %v739 = vunpack.c.l.b16 %v451
        %v740 = vunpack.c.l.b16 %v452
        %v741 = vunpack.c.l.b16 %v453
        %v742 = vunpack.c.l.b16 %v454
        %v743 = vunpack.c.l.b16 %v455
        %v744 = vunpack.c.l.b16 %v456
        %v745 = vunpack.c.l.b16 %v457
        %v746 = vunpack.c.l.b16 %v458
        %v747 = vunpack.c.l.b16 %v459
        %v748 = vunpack.c.l.b16 %v460
        %v749 = vunpack.c.l.b16 %v461
        %v750 = vunpack.c.l.b16 %v462
        %v751 = vunpack.c.l.b16 %v463
        %v752 = vunpack.c.l.b16 %v464
        %v753 = vunpack.c.l.b16 %v465
        %v754 = vunpack.c.l.b16 %v466
        %v755 = vunpack.c.l.b16 %v467
        %v756 = vpack.c.b16 %v693, %v692
        %v757 = vpack.c.b16 %v695, %v694
        %v758 = vpack.c.b16 %v697, %v696
        %v759 = vpack.c.b16 %v699, %v698
        %v760 = vpack.c.b16 %v701, %v700
        %v761 = vpack.c.b16 %v703, %v702
        %v762 = vpack.c.b16 %v705, %v704
        %v763 = vpack.c.b16 %v707, %v706
        %v764 = vpack.c.b16 %v709, %v708
        %v765 = vpack.c.b16 %v711, %v710
        %v766 = vpack.c.b16 %v713, %v712
        %v767 = vpack.c.b16 %v715, %v714
        %v768 = vpack.c.b16 %v717, %v716
        %v769 = vpack.c.b16 %v719, %v718
        %v770 = vpack.c.b16 %v721, %v720
        %v771 = vpack.c.b16 %v723, %v722
        %v772 = vpack.c.b16 %v725, %v724
        %v773 = vpack.c.b16 %v727, %v726
        %v774 = vpack.c.b16 %v729, %v728
        %v775 = vpack.c.b16 %v731, %v730
        %v776 = vpack.c.b16 %v733, %v732
        %v777 = vpack.c.b16 %v735, %v734
        %v778 = vpack.c.b16 %v737, %v736
        %v779 = vpack.c.b16 %v739, %v738
        %v780 = vpack.c.b16 %v741, %v740
        %v781 = vpack.c.b16 %v743, %v742
        %v782 = vpack.c.b16 %v745, %v744
        %v783 = vpack.c.b16 %v747, %v746
        %v784 = vpack.c.b16 %v749, %v748
        %v785 = vpack.c.b16 %v751, %v750
        %v786 = vpack.c.b16 %v753, %v752
        %v787 = vpack.c.b16 %v755, %v754
        %820 = vmatprep.subr.bf16.mxu0 0
        %821 = vmatpush1.bf16.msra.mxu0 %v763
        %822 = vmatprep.subr.bf16.mxu0 0
        %823 = vmatpush1.bf16.msra.mxu0 %v762
        %824 = vmatprep.subr.bf16.mxu0 0
        %825 = vmatpush1.bf16.msra.mxu0 %v761
        %826 = vmatprep.subr.bf16.mxu0 0
        %827 = vmatpush1.bf16.msra.mxu0 %v760
        %828 = vmatprep.subr.bf16.mxu0 0
        %829 = vmatpush1.bf16.msra.mxu0 %v759
        %830 = vmatprep.subr.bf16.mxu0 0
        %831 = vmatpush1.bf16.msra.mxu0 %v758
        %832 = vmatprep.subr.bf16.mxu0 0
        %833 = vmatpush1.bf16.msra.mxu0 %v757
        %834 = vmatprep.subr.bf16.mxu0 0
        %835 = vmatpush1.bf16.msra.mxu0 %v756
        %836 = vmatprep.subr.bf16.mxu0 0
        %837 = vmatpush2.bf16.msra.mxu0 %v771
        %838 = vmatprep.subr.bf16.mxu0 0
        %839 = vmatpush2.bf16.msra.mxu0 %v770
        %840 = vmatprep.subr.bf16.mxu0 0
        %841 = vmatpush2.bf16.msra.mxu0 %v769
        %842 = vmatprep.subr.bf16.mxu0 0
        %843 = vmatpush2.bf16.msra.mxu0 %v768
        %844 = vmatprep.subr.bf16.mxu0 0
        %845 = vmatpush2.bf16.msra.mxu0 %v767
        %846 = vmatprep.subr.bf16.mxu0 0
        %847 = vmatpush2.bf16.msra.mxu0 %v766
        %848 = vmatprep.subr.bf16.mxu0 0
        %849 = vmatpush2.bf16.msra.mxu0 %v765
        %850 = vmatprep.subr.bf16.mxu0 0
        %851 = vmatpush2.bf16.msra.mxu0 %v764
        %852 = vmatprep.mubr.bf16.mxu0 %v565
        %853 = vmatmul.mubr.bf16.gmra.mxu0 %v564
        %v854 = vpop.f32.mrf.mxu0
        %v855 = vadd.f32 0.0, %v854
        %v856 = vpop.f32.mrf.mxu0
        %v857 = vpop.f32.mrf.mxu0
        %v858 = vadd.f32 0.0, %v857
        %v859 = vpop.f32.mrf.mxu0
        %860 = vmatprep.mubr.bf16.mxu0 %v569
        %861 = vmatmul.mubr.bf16.gmra.mxu0 %v568
        %v862 = vpop.f32.mrf.mxu0
        %v863 = vadd.f32 0.0, %v862
        %v864 = vpop.f32.mrf.mxu0
        %v865 = vpop.f32.mrf.mxu0
        %v866 = vadd.f32 0.0, %v865
        %v867 = vpop.f32.mrf.mxu0
        %868 = vmatprep.mubr.bf16.mxu0 %v573
        %869 = vmatmul.mubr.bf16.gmra.mxu0 %v572
        %v870 = vpop.f32.mrf.mxu0
        %v871 = vadd.f32 0.0, %v870
        %v872 = vpop.f32.mrf.mxu0
        %v873 = vpop.f32.mrf.mxu0
        %v874 = vadd.f32 0.0, %v873
        %v875 = vpop.f32.mrf.mxu0
        %876 = vmatprep.mubr.bf16.mxu0 %v577
        %877 = vmatmul.mubr.bf16.gmra.mxu0 %v576
        %v878 = vpop.f32.mrf.mxu0
        %v879 = vadd.f32 0.0, %v878
        %v880 = vpop.f32.mrf.mxu0
        %v881 = vpop.f32.mrf.mxu0
        %v882 = vadd.f32 0.0, %v881
        %v883 = vpop.f32.mrf.mxu0
        %884 = vmatprep.mubr.bf16.mxu0 %v581
        %885 = vmatmul.mubr.bf16.gmra.mxu0 %v580
        %v886 = vpop.f32.mrf.mxu0
        %v887 = vadd.f32 0.0, %v886
        %v888 = vpop.f32.mrf.mxu0
        %v889 = vpop.f32.mrf.mxu0
        %v890 = vadd.f32 0.0, %v889
        %v891 = vpop.f32.mrf.mxu0
        %892 = vmatprep.mubr.bf16.mxu0 %v585
        %893 = vmatmul.mubr.bf16.gmra.mxu0 %v584
        %v894 = vpop.f32.mrf.mxu0
        %v895 = vadd.f32 0.0, %v894
        %v896 = vpop.f32.mrf.mxu0
        %v897 = vpop.f32.mrf.mxu0
        %v898 = vadd.f32 0.0, %v897
        %v899 = vpop.f32.mrf.mxu0
        %900 = vmatprep.mubr.bf16.mxu0 %v589
        %901 = vmatmul.mubr.bf16.gmra.mxu0 %v588
        %v902 = vpop.f32.mrf.mxu0
        %v903 = vadd.f32 0.0, %v902
        %v904 = vpop.f32.mrf.mxu0
        %v905 = vpop.f32.mrf.mxu0
        %v906 = vadd.f32 0.0, %v905
        %v907 = vpop.f32.mrf.mxu0
        %908 = vmatprep.mubr.bf16.mxu0 %v593
        %909 = vmatmul.mubr.bf16.gmra.mxu0 %v592
        %v910 = vpop.f32.mrf.mxu0
        %v911 = vadd.f32 0.0, %v910
        %v912 = vpop.f32.mrf.mxu0
        %v913 = vpop.f32.mrf.mxu0
        %v914 = vadd.f32 0.0, %v913
        %v915 = vpop.f32.mrf.mxu0
        %916 = vdwg.mxu0
        %917 = vmatprep.subr.bf16.mxu0 0
        %918 = vmatpush1.bf16.msra.mxu0 %v779
        %919 = vmatprep.subr.bf16.mxu0 0
        %920 = vmatpush1.bf16.msra.mxu0 %v778
        %921 = vmatprep.subr.bf16.mxu0 0
        %922 = vmatpush1.bf16.msra.mxu0 %v777
        %923 = vmatprep.subr.bf16.mxu0 0
        %924 = vmatpush1.bf16.msra.mxu0 %v776
        %925 = vmatprep.subr.bf16.mxu0 0
        %926 = vmatpush1.bf16.msra.mxu0 %v775
        %927 = vmatprep.subr.bf16.mxu0 0
        %928 = vmatpush1.bf16.msra.mxu0 %v774
        %929 = vmatprep.subr.bf16.mxu0 0
        %930 = vmatpush1.bf16.msra.mxu0 %v773
        %931 = vmatprep.subr.bf16.mxu0 0
        %932 = vmatpush1.bf16.msra.mxu0 %v772
        %933 = vmatprep.subr.bf16.mxu0 0
        %934 = vmatpush2.bf16.msra.mxu0 %v787
        %935 = vmatprep.subr.bf16.mxu0 0
        %936 = vmatpush2.bf16.msra.mxu0 %v786
        %937 = vmatprep.subr.bf16.mxu0 0
        %938 = vmatpush2.bf16.msra.mxu0 %v785
        %939 = vmatprep.subr.bf16.mxu0 0
        %940 = vmatpush2.bf16.msra.mxu0 %v784
        %941 = vmatprep.subr.bf16.mxu0 0
        %942 = vmatpush2.bf16.msra.mxu0 %v783
        %943 = vmatprep.subr.bf16.mxu0 0
        %944 = vmatpush2.bf16.msra.mxu0 %v782
        %945 = vmatprep.subr.bf16.mxu0 0
        %946 = vmatpush2.bf16.msra.mxu0 %v781
        %947 = vmatprep.subr.bf16.mxu0 0
        %948 = vmatpush2.bf16.msra.mxu0 %v780
        %949 = vmatprep.mubr.bf16.mxu0 %v567
        %950 = vmatmul.mubr.bf16.gmra.mxu0 %v566
        %v951 = vpop.f32.mrf.mxu0
        %v952 = vadd.f32 %v855, %v951
        %v953 = vpop.f32.mrf.mxu0
        %v954 = vpop.f32.mrf.mxu0
        %v955 = vadd.f32 %v858, %v954
        %v956 = vpop.f32.mrf.mxu0
        %957 = vmatprep.mubr.bf16.mxu0 %v571
        %958 = vmatmul.mubr.bf16.gmra.mxu0 %v570
        %v959 = vpop.f32.mrf.mxu0
        %v960 = vadd.f32 %v863, %v959
        %v961 = vpop.f32.mrf.mxu0
        %v962 = vpop.f32.mrf.mxu0
        %v963 = vadd.f32 %v866, %v962
        %v964 = vpop.f32.mrf.mxu0
        %965 = vmatprep.mubr.bf16.mxu0 %v575
        %966 = vmatmul.mubr.bf16.gmra.mxu0 %v574
        %v967 = vpop.f32.mrf.mxu0
        %v968 = vadd.f32 %v871, %v967
        %v969 = vpop.f32.mrf.mxu0
        %v970 = vpop.f32.mrf.mxu0
        %v971 = vadd.f32 %v874, %v970
        %v972 = vpop.f32.mrf.mxu0
        %973 = vmatprep.mubr.bf16.mxu0 %v579
        %974 = vmatmul.mubr.bf16.gmra.mxu0 %v578
        %v975 = vpop.f32.mrf.mxu0
        %v976 = vadd.f32 %v879, %v975
        %v977 = vpop.f32.mrf.mxu0
        %v978 = vpop.f32.mrf.mxu0
        %v979 = vadd.f32 %v882, %v978
        %v980 = vpop.f32.mrf.mxu0
        %981 = vmatprep.mubr.bf16.mxu0 %v583
        %982 = vmatmul.mubr.bf16.gmra.mxu0 %v582
        %v983 = vpop.f32.mrf.mxu0
        %v984 = vadd.f32 %v887, %v983
        %v985 = vpop.f32.mrf.mxu0
        %v986 = vpop.f32.mrf.mxu0
        %v987 = vadd.f32 %v890, %v986
        %v988 = vpop.f32.mrf.mxu0
        %989 = vmatprep.mubr.bf16.mxu0 %v587
        %990 = vmatmul.mubr.bf16.gmra.mxu0 %v586
        %v991 = vpop.f32.mrf.mxu0
        %v992 = vadd.f32 %v895, %v991
        %v993 = vpop.f32.mrf.mxu0
        %v994 = vpop.f32.mrf.mxu0
        %v995 = vadd.f32 %v898, %v994
        %v996 = vpop.f32.mrf.mxu0
        %997 = vmatprep.mubr.bf16.mxu0 %v591
        %998 = vmatmul.mubr.bf16.gmra.mxu0 %v590
        %v999 = vpop.f32.mrf.mxu0
        %v1000 = vadd.f32 %v903, %v999
        %v1001 = vpop.f32.mrf.mxu0
        %v1002 = vpop.f32.mrf.mxu0
        %v1003 = vadd.f32 %v906, %v1002
        %v1004 = vpop.f32.mrf.mxu0
        %1005 = vmatprep.mubr.bf16.mxu0 %v595
        %1006 = vmatmul.mubr.bf16.gmra.mxu0 %v594
        %v1007 = vpop.f32.mrf.mxu0
        %v1008 = vadd.f32 %v911, %v1007
        %v1009 = vpop.f32.mrf.mxu0
        %v1010 = vpop.f32.mrf.mxu0
        %v1011 = vadd.f32 %v914, %v1010
        %v1012 = vpop.f32.mrf.mxu0
        %1013 = vdwg.mxu0
        %v1014 = vadd.f32 %v356, %v952
        %v1015 = vadd.f32 %v357, %v955
        %v1016 = vadd.f32 %v358, %v960
        %v1017 = vadd.f32 %v359, %v963
        %v1018 = vadd.f32 %v360, %v968
        %v1019 = vadd.f32 %v361, %v971
        %v1020 = vadd.f32 %v362, %v976
        %v1021 = vadd.f32 %v363, %v979
        %v1022 = vadd.f32 %v364, %v984
        %v1023 = vadd.f32 %v365, %v987
        %v1024 = vadd.f32 %v366, %v992
        %v1025 = vadd.f32 %v367, %v995
        %v1026 = vadd.f32 %v368, %v1000
        %v1027 = vadd.f32 %v369, %v1003
        %v1028 = vadd.f32 %v370, %v1008
        %v1029 = vadd.f32 %v371, %v1011
        %1030 = vst [vmem:[#allocation2] sm:$0xff] %v1014
        %1031 = vst [vmem:[#allocation2 + $0x8] sm:$0xff] %v1015
        %1032 = vst [vmem:[#allocation2 + $0x10] sm:$0xff] %v1016
        %1033 = vst [vmem:[#allocation2 + $0x18] sm:$0xff] %v1017
        %1034 = vst [vmem:[#allocation2 + $0x20] sm:$0xff] %v1018
        %1035 = vst [vmem:[#allocation2 + $0x28] sm:$0xff] %v1019
        %1036 = vst [vmem:[#allocation2 + $0x30] sm:$0xff] %v1020
        %1037 = vst [vmem:[#allocation2 + $0x38] sm:$0xff] %v1021
        %1038 = vst [vmem:[#allocation2 + $0x40] sm:$0xff] %v1022
        %1039 = vst [vmem:[#allocation2 + $0x48] sm:$0xff] %v1023
        %1040 = vst [vmem:[#allocation2 + $0x50] sm:$0xff] %v1024
        %1041 = vst [vmem:[#allocation2 + $0x58] sm:$0xff] %v1025
        %1042 = vst [vmem:[#allocation2 + $0x60] sm:$0xff] %v1026
        %1043 = vst [vmem:[#allocation2 + $0x68] sm:$0xff] %v1027
        %1044 = vst [vmem:[#allocation2 + $0x70] sm:$0xff] %v1028
        %1045 = vst [vmem:[#allocation2 + $0x78] sm:$0xff] %v1029
        %p1046 = scmp.eq.s32.totalorder %s21, 1
        // Predicated region
        $region60: #{nlayer_discriminator.12} parent=50 // pred_check
          %p1047 = pneg %p1046
        $region61: #{nlayer_discriminator.12} parent=50 // pred_check_branch
          %1049 = sbr.rel (%p1047) target = $region63
        $region62: #{nlayer_discriminator.12} parent=50 // pred_region
          %v1050 = vld [vmem:[#allocation2] sm:$0xff]
          %v1051 = vld [vmem:[#allocation2 + $0x8] sm:$0xff]
          %v1052 = vld [vmem:[#allocation2 + $0x10] sm:$0xff]
          %v1053 = vld [vmem:[#allocation2 + $0x18] sm:$0xff]
          %v1054 = vld [vmem:[#allocation2 + $0x20] sm:$0xff]
          %v1055 = vld [vmem:[#allocation2 + $0x28] sm:$0xff]
          %v1056 = vld [vmem:[#allocation2 + $0x30] sm:$0xff]
          %v1057 = vld [vmem:[#allocation2 + $0x38] sm:$0xff]
          %v1058 = vld [vmem:[#allocation2 + $0x40] sm:$0xff]
          %v1059 = vld [vmem:[#allocation2 + $0x48] sm:$0xff]
          %v1060 = vld [vmem:[#allocation2 + $0x50] sm:$0xff]
          %v1061 = vld [vmem:[#allocation2 + $0x58] sm:$0xff]
          %v1062 = vld [vmem:[#allocation2 + $0x60] sm:$0xff]
          %v1063 = vld [vmem:[#allocation2 + $0x68] sm:$0xff]
          %v1064 = vld [vmem:[#allocation2 + $0x70] sm:$0xff]
          %v1065 = vld [vmem:[#allocation2 + $0x78] sm:$0xff]
          %v1066 = vld [vmem:[%s325] sm:$0x1]
          %v1068 = vlaneseq
          %v1069 = vshrl.u32 %v1068, 7
          %v1070 = vsub.s32 0, %v1069
          %v1071 = vrot.slane %v1066, %v1070
          %v1073 = vadd.f32 %v1050, %v1071
          %v1074 = vadd.f32 %v1051, %v1071
          %v1075 = vadd.f32 %v1052, %v1071
          %v1076 = vadd.f32 %v1053, %v1071
          %v1077 = vadd.f32 %v1054, %v1071
          %v1078 = vadd.f32 %v1055, %v1071
          %v1079 = vadd.f32 %v1056, %v1071
          %v1080 = vadd.f32 %v1057, %v1071
          %v1081 = vadd.f32 %v1058, %v1071
          %v1082 = vadd.f32 %v1059, %v1071
          %v1083 = vadd.f32 %v1060, %v1071
          %v1084 = vadd.f32 %v1061, %v1071
          %v1085 = vadd.f32 %v1062, %v1071
          %v1086 = vadd.f32 %v1063, %v1071
          %v1087 = vadd.f32 %v1064, %v1071
          %v1088 = vadd.f32 %v1065, %v1071
          %v1089 = vpack.c.bf16 %v1074, %v1073
          %v1090 = vpack.c.bf16 %v1076, %v1075
          %v1091 = vpack.c.bf16 %v1078, %v1077
          %v1092 = vpack.c.bf16 %v1080, %v1079
          %v1093 = vpack.c.bf16 %v1082, %v1081
          %v1094 = vpack.c.bf16 %v1084, %v1083
          %v1095 = vpack.c.bf16 %v1086, %v1085
          %v1096 = vpack.c.bf16 %v1088, %v1087
          %v1105 = vunpack.c.l.b16 %v1089
          %v1106 = vunpack.c.h.b16 %v1089
          %v1107 = vunpack.c.l.b16 %v1090
          %v1108 = vunpack.c.h.b16 %v1090
          %v1109 = vunpack.c.l.b16 %v1091
          %v1110 = vunpack.c.h.b16 %v1091
          %v1111 = vunpack.c.l.b16 %v1092
          %v1112 = vunpack.c.h.b16 %v1092
          %v1113 = vunpack.c.l.b16 %v1093
          %v1114 = vunpack.c.h.b16 %v1093
          %v1115 = vunpack.c.l.b16 %v1094
          %v1116 = vunpack.c.h.b16 %v1094
          %v1117 = vunpack.c.l.b16 %v1095
          %v1118 = vunpack.c.h.b16 %v1095
          %v1119 = vunpack.c.l.b16 %v1096
          %v1120 = vunpack.c.h.b16 %v1096
          %v1121 = vpack.c.b16 %v1105, %v1105
          %v1122 = vpack.c.b16 %v1106, %v1106
          %v1123 = vpack.c.b16 %v1107, %v1107
          %v1124 = vpack.c.b16 %v1108, %v1108
          %v1125 = vpack.c.b16 %v1109, %v1109
          %v1126 = vpack.c.b16 %v1110, %v1110
          %v1127 = vpack.c.b16 %v1111, %v1111
          %v1128 = vpack.c.b16 %v1112, %v1112
          %v1129 = vpack.c.b16 %v1113, %v1113
          %v1130 = vpack.c.b16 %v1114, %v1114
          %v1131 = vpack.c.b16 %v1115, %v1115
          %v1132 = vpack.c.b16 %v1116, %v1116
          %v1133 = vpack.c.b16 %v1117, %v1117
          %v1134 = vpack.c.b16 %v1118, %v1118
          %v1135 = vpack.c.b16 %v1119, %v1119
          %v1136 = vpack.c.b16 %v1120, %v1120
          %1153 = vst [vmem:[%s333] sm:$0xf] %v1121
          %1154 = vst [vmem:[%s333 + $0x4] sm:$0xf] %v1122
          %1155 = vst [vmem:[%s333 + $0x8] sm:$0xf] %v1123
          %1156 = vst [vmem:[%s333 + $0xc] sm:$0xf] %v1124
          %1157 = vst [vmem:[%s333 + $0x10] sm:$0xf] %v1125
          %1158 = vst [vmem:[%s333 + $0x14] sm:$0xf] %v1126
          %1159 = vst [vmem:[%s333 + $0x18] sm:$0xf] %v1127
          %1160 = vst [vmem:[%s333 + $0x1c] sm:$0xf] %v1128
          %1161 = vst [vmem:[%s333 + $0x20] sm:$0xf] %v1129
          %1162 = vst [vmem:[%s333 + $0x24] sm:$0xf] %v1130
          %1163 = vst [vmem:[%s333 + $0x28] sm:$0xf] %v1131
          %1164 = vst [vmem:[%s333 + $0x2c] sm:$0xf] %v1132
          %1165 = vst [vmem:[%s333 + $0x30] sm:$0xf] %v1133
          %1166 = vst [vmem:[%s333 + $0x34] sm:$0xf] %v1134
          %1167 = vst [vmem:[%s333 + $0x38] sm:$0xf] %v1135
          %1168 = vst [vmem:[%s333 + $0x3c] sm:$0xf] %v1136
        $region63: #{nlayer_discriminator.12} parent=50 // pred_fallthru
          _
        %s1169 = smul.u32 16, %s19
        %p1170 = scmp.lt.s32.totalorder %s1169, 15
        %s1171 = scalar_select %p1170, %s1169, 15
        %p1172 = scmp.lt.s32.totalorder %s20, 0
        %s1173 = scalar_select %p1172, %s20, 0
        %s1174 = sadd.s32 %s1173, %s1171
        %s1175 = smul.addr %s1174, 4
        %s1176 = scalar_lea.vmem %s3, %s1175
        // Predicated region
        $region64: #{nlayer_discriminator.12} parent=50 // pred_check
          %p1177 = pneg %p135
        $region65: #{nlayer_discriminator.12} parent=50 // pred_check_branch
          %1179 = sbr.rel (%p1177) target = $region67
        $region66: #{nlayer_discriminator.12} parent=50 // pred_region
          %s1180 = smul.u32 16, %s19
        $region67: #{nlayer_discriminator.12} parent=50 // pred_fallthru
          _
        // Predicated region
        $region68: #{nlayer_discriminator.12} parent=50 // pred_check
          %p1181 = pneg %p135
        $region69: #{nlayer_discriminator.12} parent=50 // pred_check_branch
          %1183 = sbr.rel (%p1181) target = $region71
        $region70: #{nlayer_discriminator.12} parent=50 // pred_region
          %s1184 = smul.u32 16, %s19
          %p1185 = scmp.lt.s32.totalorder %s1184, 15
          %s1186 = scalar_select %p1185, %s1184, 15
          %p1187 = scmp.lt.s32.totalorder %s20, 0
          %s1188 = scalar_select %p1187, %s20, 0
          %s1189 = sadd.s32 %s1188, %s1186
          %s1190 = smul.addr %s1189, 4
          %s1191 = scalar_lea.vmem %s3, %s1190
        $region71: #{nlayer_discriminator.12} parent=50 // pred_fallthru
          _
      $region51: #{nlayer_discriminator.12} parent=5 // pred_fallthru
        _
      %p1192 = scmp.le.s32.totalorder 2, %s9
      // Predicated region
      $region72: #{nlayer_discriminator.12} parent=5 // pred_check
        %p1193 = pneg %p1192
      $region73: #{nlayer_discriminator.12} parent=5 // pred_check_branch
        %1195 = sbr.rel (%p1193) target = $region75
      $region74: #{nlayer_discriminator.12} parent=5 // pred_region
        %s1196 = ssub.s32 %s9, 2
      $region75: #{nlayer_discriminator.12} parent=5 // pred_fallthru
        _
    $region6: #{nlayer_discriminator.12} parent=1 // loop_footer
      %s13 = sadd.s32 1, %s9
    $region7: #{nlayer_discriminator.12} parent=1 // loop_footer_branch
      %8 = sbr.rel target = $region3
    $region8: #{nlayer_discriminator.12} parent=1 // loop_exit
      _

// kernel: nlayer_discriminator.13
$region0: #{nlayer_discriminator.13}
  #allocation0 [shape = 'u32[]', space=smem, size = 0x4, offset = 0x4, fixed_abs, tag = 'smem constant byte address 0x4 - core index']
  #allocation1 [shape = 'u32[144,128]{1,0:T(1,128)}', space=vmem, size = 0x12000, scoped, tag = 'internal scratch']
  %s0 = inlined_call_operand.vmem [shape: bf16[128,128], index: 0, kind: input, shape index: {}]
  %s1 = inlined_call_operand.vmem [shape: f32[1,128], index: 1, kind: output, shape index: {0}]
  %s2 = inlined_call_operand.vmem [shape: f32[1,128], index: 2, kind: output, shape index: {1}]
  %3 = xla_tuple %s1, %s2
  %s4 = sld [smem:[#allocation0]]
  $region26: #{nlayer_discriminator.13} parent=0
    _
  %s6 = ssub.s32 1, %s4
  %s7 = scalar_select 0, %s6, %s4
  // Predicated region
  $region2: #{nlayer_discriminator.13} parent=0 // pred_check
    _
  $region3: #{nlayer_discriminator.13} parent=0 // pred_check_branch
    %9 = sbr.rel (0) target = $region5
  $region4: #{nlayer_discriminator.13} parent=0 // pred_region
    _
  $region5: #{nlayer_discriminator.13} parent=0 // pred_fallthru
    _
  %p10 = scmp.eq.s32.totalorder 0, 0
  // Predicated region
  $region6: #{nlayer_discriminator.13} parent=0 // pred_check
    %p11 = pneg %p10
  $region7: #{nlayer_discriminator.13} parent=0 // pred_check_branch
    %13 = sbr.rel (%p11) target = $region9
  $region8: #{nlayer_discriminator.13} parent=0 // pred_region
    %14 = vst [vmem:[%s1] sm:$0x1] 0.0
    %15 = vst [vmem:[%s2] sm:$0x1] 0.0
  $region9: #{nlayer_discriminator.13} parent=0 // pred_fallthru
    _
  %v16 = vld [vmem:[%s0] sm:$0xf]
  %v17 = vld [vmem:[%s0 + $0x4] sm:$0xf]
  %v18 = vld [vmem:[%s0 + $0x8] sm:$0xf]
  %v19 = vld [vmem:[%s0 + $0xc] sm:$0xf]
  %v20 = vld [vmem:[%s0 + $0x10] sm:$0xf]
  %v21 = vld [vmem:[%s0 + $0x14] sm:$0xf]
  %v22 = vld [vmem:[%s0 + $0x18] sm:$0xf]
  %v23 = vld [vmem:[%s0 + $0x1c] sm:$0xf]
  %v24 = vld [vmem:[%s0 + $0x20] sm:$0xf]
  %v25 = vld [vmem:[%s0 + $0x24] sm:$0xf]
  %v26 = vld [vmem:[%s0 + $0x28] sm:$0xf]
  %v27 = vld [vmem:[%s0 + $0x2c] sm:$0xf]
  %v28 = vld [vmem:[%s0 + $0x30] sm:$0xf]
  %v29 = vld [vmem:[%s0 + $0x34] sm:$0xf]
  %v30 = vld [vmem:[%s0 + $0x38] sm:$0xf]
  %v31 = vld [vmem:[%s0 + $0x3c] sm:$0xf]
  %v32 = vunpack.c.l.bf16 %v16
  %v33 = vunpack.c.l.bf16 %v17
  %v34 = vunpack.c.l.bf16 %v18
  %v35 = vunpack.c.l.bf16 %v19
  %v36 = vunpack.c.l.bf16 %v20
  %v37 = vunpack.c.l.bf16 %v21
  %v38 = vunpack.c.l.bf16 %v22
  %v39 = vunpack.c.l.bf16 %v23
  %v40 = vunpack.c.l.bf16 %v24
  %v41 = vunpack.c.l.bf16 %v25
  %v42 = vunpack.c.l.bf16 %v26
  %v43 = vunpack.c.l.bf16 %v27
  %v44 = vunpack.c.l.bf16 %v28
  %v45 = vunpack.c.l.bf16 %v29
  %v46 = vunpack.c.l.bf16 %v30
  %v47 = vunpack.c.l.bf16 %v31
  %v48 = vld [vmem:[%s1] sm:$0x1]
  %v49 = vadd.f32 %v32, %v33
  %v50 = vadd.f32 %v49, %v34
  %v51 = vadd.f32 %v50, %v35
  %v52 = vadd.f32 %v51, %v36
  %v53 = vadd.f32 %v52, %v37
  %v54 = vadd.f32 %v53, %v38
  %v55 = vadd.f32 %v54, %v39
  %v56 = vadd.f32 %v55, %v40
  %v57 = vadd.f32 %v56, %v41
  %v58 = vadd.f32 %v57, %v42
  %v59 = vadd.f32 %v58, %v43
  %v60 = vadd.f32 %v59, %v44
  %v61 = vadd.f32 %v60, %v45
  %v62 = vadd.f32 %v61, %v46
  %v63 = vadd.f32 %v62, %v47
  %v64 = vrot.slane %v63, 4
  %v65 = vadd.f32 %v63, %v64
  %v66 = vrot.slane %v65, 2
  %v67 = vadd.f32 %v65, %v66
  %v68 = vrot.slane %v67, 1
  %v69 = vadd.f32 %v67, %v68
  %v70 = vadd.f32 %v48, %v69
  %71 = vst [vmem:[%s1] sm:$0x1] %v70
  %v72 = vld [vmem:[%s2] sm:$0x1]
  %v73 = vmul.f32 %v32, %v32
  %v74 = vmul.f32 %v33, %v33
  %v75 = vmul.f32 %v34, %v34
  %v76 = vmul.f32 %v35, %v35
  %v77 = vmul.f32 %v36, %v36
  %v78 = vmul.f32 %v37, %v37
  %v79 = vmul.f32 %v38, %v38
  %v80 = vmul.f32 %v39, %v39
  %v81 = vmul.f32 %v40, %v40
  %v82 = vmul.f32 %v41, %v41
  %v83 = vmul.f32 %v42, %v42
  %v84 = vmul.f32 %v43, %v43
  %v85 = vmul.f32 %v44, %v44
  %v86 = vmul.f32 %v45, %v45
  %v87 = vmul.f32 %v46, %v46
  %v88 = vmul.f32 %v47, %v47
  %v89 = vadd.f32 %v73, %v74
  %v90 = vadd.f32 %v89, %v75
  %v91 = vadd.f32 %v90, %v76
  %v92 = vadd.f32 %v91, %v77
  %v93 = vadd.f32 %v92, %v78
  %v94 = vadd.f32 %v93, %v79
  %v95 = vadd.f32 %v94, %v80
  %v96 = vadd.f32 %v95, %v81
  %v97 = vadd.f32 %v96, %v82
  %v98 = vadd.f32 %v97, %v83
  %v99 = vadd.f32 %v98, %v84
  %v100 = vadd.f32 %v99, %v85
  %v101 = vadd.f32 %v100, %v86
  %v102 = vadd.f32 %v101, %v87
  %v103 = vadd.f32 %v102, %v88
  %v104 = vrot.slane %v103, 4
  %v105 = vadd.f32 %v103, %v104
  %v106 = vrot.slane %v105, 2
  %v107 = vadd.f32 %v105, %v106
  %v108 = vrot.slane %v107, 1
  %v109 = vadd.f32 %v107, %v108
  %v110 = vadd.f32 %v72, %v109
  %111 = vst [vmem:[%s2] sm:$0x1] %v110
  // Predicated region
  $region10: #{nlayer_discriminator.13} parent=0 // pred_check
    _
  $region11: #{nlayer_discriminator.13} parent=0 // pred_check_branch
    %113 = sbr.rel (0) target = $region13
  $region12: #{nlayer_discriminator.13} parent=0 // pred_region
    _
  $region13: #{nlayer_discriminator.13} parent=0 // pred_fallthru
    _
  // Predicated region
  $region14: #{nlayer_discriminator.13} parent=0 // pred_check
    _
  $region15: #{nlayer_discriminator.13} parent=0 // pred_check_branch
    %115 = sbr.rel (0) target = $region17
  $region16: #{nlayer_discriminator.13} parent=0 // pred_region
    _
  $region17: #{nlayer_discriminator.13} parent=0 // pred_fallthru
    _
  // Predicated region
  $region18: #{nlayer_discriminator.13} parent=0 // pred_check
    _
  $region19: #{nlayer_discriminator.13} parent=0 // pred_check_branch
    %117 = sbr.rel (0) target = $region21
  $region20: #{nlayer_discriminator.13} parent=0 // pred_region
    _
  $region21: #{nlayer_discriminator.13} parent=0 // pred_fallthru
    _
  // Predicated region
  $region22: #{nlayer_discriminator.13} parent=0 // pred_check
    _
  $region23: #{nlayer_discriminator.13} parent=0 // pred_check_branch
    %119 = sbr.rel (0) target = $region25
  $region24: #{nlayer_discriminator.13} parent=0 // pred_region
    _
  $region25: #{nlayer_discriminator.13} parent=0 // pred_fallthru
    _

// kernel: nlayer_discriminator.14
$region0: #{nlayer_discriminator.14}
  #allocation0 [shape = 'u32[]', space=smem, size = 0x4, offset = 0x4, fixed_abs, tag = 'smem constant byte address 0x4 - core index']
  #allocation1 [shape = 'u32[144,128]{1,0:T(1,128)}', space=vmem, size = 0x12000, scoped, tag = 'internal scratch']
  %s0 = inlined_call_operand.vmem [shape: bf16[128,128], index: 0, kind: input, shape index: {}]
  %s1 = inlined_call_operand.vmem [shape: f32[1,128], index: 1, kind: input, shape index: {}]
  %s2 = inlined_call_operand.vmem [shape: f32[1,128], index: 2, kind: input, shape index: {}]
  %s3 = inlined_call_operand.vmem [shape: bf16[128,128], index: 3, kind: output, shape index: {}]
  %s4 = sld [smem:[#allocation0]]
  $region22: #{nlayer_discriminator.14} parent=0
    _
  %s6 = ssub.s32 1, %s4
  %s7 = scalar_select 0, %s6, %s4
  // Predicated region
  $region2: #{nlayer_discriminator.14} parent=0 // pred_check
    _
  $region3: #{nlayer_discriminator.14} parent=0 // pred_check_branch
    %9 = sbr.rel (0) target = $region5
  $region4: #{nlayer_discriminator.14} parent=0 // pred_region
    _
  $region5: #{nlayer_discriminator.14} parent=0 // pred_fallthru
    _
  // Predicated region
  $region6: #{nlayer_discriminator.14} parent=0 // pred_check
    _
  $region7: #{nlayer_discriminator.14} parent=0 // pred_check_branch
    %11 = sbr.rel (0) target = $region9
  $region8: #{nlayer_discriminator.14} parent=0 // pred_region
    _
  $region9: #{nlayer_discriminator.14} parent=0 // pred_fallthru
    _
  // Predicated region
  $region10: #{nlayer_discriminator.14} parent=0 // pred_check
    _
  $region11: #{nlayer_discriminator.14} parent=0 // pred_check_branch
    %13 = sbr.rel (0) target = $region13
  $region12: #{nlayer_discriminator.14} parent=0 // pred_region
    _
  $region13: #{nlayer_discriminator.14} parent=0 // pred_fallthru
    _
  %v14 = vld [vmem:[%s0] sm:$0xf]
  %v15 = vld [vmem:[%s0 + $0x4] sm:$0xf]
  %v16 = vld [vmem:[%s0 + $0x8] sm:$0xf]
  %v17 = vld [vmem:[%s0 + $0xc] sm:$0xf]
  %v18 = vld [vmem:[%s0 + $0x10] sm:$0xf]
  %v19 = vld [vmem:[%s0 + $0x14] sm:$0xf]
  %v20 = vld [vmem:[%s0 + $0x18] sm:$0xf]
  %v21 = vld [vmem:[%s0 + $0x1c] sm:$0xf]
  %v22 = vld [vmem:[%s0 + $0x20] sm:$0xf]
  %v23 = vld [vmem:[%s0 + $0x24] sm:$0xf]
  %v24 = vld [vmem:[%s0 + $0x28] sm:$0xf]
  %v25 = vld [vmem:[%s0 + $0x2c] sm:$0xf]
  %v26 = vld [vmem:[%s0 + $0x30] sm:$0xf]
  %v27 = vld [vmem:[%s0 + $0x34] sm:$0xf]
  %v28 = vld [vmem:[%s0 + $0x38] sm:$0xf]
  %v29 = vld [vmem:[%s0 + $0x3c] sm:$0xf]
  %v30 = vunpack.c.l.bf16 %v14
  %v31 = vunpack.c.l.bf16 %v15
  %v32 = vunpack.c.l.bf16 %v16
  %v33 = vunpack.c.l.bf16 %v17
  %v34 = vunpack.c.l.bf16 %v18
  %v35 = vunpack.c.l.bf16 %v19
  %v36 = vunpack.c.l.bf16 %v20
  %v37 = vunpack.c.l.bf16 %v21
  %v38 = vunpack.c.l.bf16 %v22
  %v39 = vunpack.c.l.bf16 %v23
  %v40 = vunpack.c.l.bf16 %v24
  %v41 = vunpack.c.l.bf16 %v25
  %v42 = vunpack.c.l.bf16 %v26
  %v43 = vunpack.c.l.bf16 %v27
  %v44 = vunpack.c.l.bf16 %v28
  %v45 = vunpack.c.l.bf16 %v29
  %v46 = vld [vmem:[%s1] sm:$0x1]
  %v48 = vlaneseq
  %v49 = vshrl.u32 %v48, 7
  %v50 = vsub.s32 0, %v49
  %v51 = vrot.slane %v46, %v50
  %v53 = vmul.f32 %v30, %v51
  %v54 = vmul.f32 %v31, %v51
  %v55 = vmul.f32 %v32, %v51
  %v56 = vmul.f32 %v33, %v51
  %v57 = vmul.f32 %v34, %v51
  %v58 = vmul.f32 %v35, %v51
  %v59 = vmul.f32 %v36, %v51
  %v60 = vmul.f32 %v37, %v51
  %v61 = vmul.f32 %v38, %v51
  %v62 = vmul.f32 %v39, %v51
  %v63 = vmul.f32 %v40, %v51
  %v64 = vmul.f32 %v41, %v51
  %v65 = vmul.f32 %v42, %v51
  %v66 = vmul.f32 %v43, %v51
  %v67 = vmul.f32 %v44, %v51
  %v68 = vmul.f32 %v45, %v51
  %v69 = vld [vmem:[%s2] sm:$0x1]
  %v71 = vlaneseq
  %v72 = vshrl.u32 %v71, 7
  %v73 = vsub.s32 0, %v72
  %v74 = vrot.slane %v69, %v73
  %v76 = vadd.f32 %v53, %v74
  %v77 = vadd.f32 %v54, %v74
  %v78 = vadd.f32 %v55, %v74
  %v79 = vadd.f32 %v56, %v74
  %v80 = vadd.f32 %v57, %v74
  %v81 = vadd.f32 %v58, %v74
  %v82 = vadd.f32 %v59, %v74
  %v83 = vadd.f32 %v60, %v74
  %v84 = vadd.f32 %v61, %v74
  %v85 = vadd.f32 %v62, %v74
  %v86 = vadd.f32 %v63, %v74
  %v87 = vadd.f32 %v64, %v74
  %v88 = vadd.f32 %v65, %v74
  %v89 = vadd.f32 %v66, %v74
  %v90 = vadd.f32 %v67, %v74
  %v91 = vadd.f32 %v68, %v74
  %vm92 = vcmp.ge.f32.partialorder %v76, 0.0
  %vm93 = vcmp.ge.f32.partialorder %v77, 0.0
  %vm94 = vcmp.ge.f32.partialorder %v78, 0.0
  %vm95 = vcmp.ge.f32.partialorder %v79, 0.0
  %vm96 = vcmp.ge.f32.partialorder %v80, 0.0
  %vm97 = vcmp.ge.f32.partialorder %v81, 0.0
  %vm98 = vcmp.ge.f32.partialorder %v82, 0.0
  %vm99 = vcmp.ge.f32.partialorder %v83, 0.0
  %vm100 = vcmp.ge.f32.partialorder %v84, 0.0
  %vm101 = vcmp.ge.f32.partialorder %v85, 0.0
  %vm102 = vcmp.ge.f32.partialorder %v86, 0.0
  %vm103 = vcmp.ge.f32.partialorder %v87, 0.0
  %vm104 = vcmp.ge.f32.partialorder %v88, 0.0
  %vm105 = vcmp.ge.f32.partialorder %v89, 0.0
  %vm106 = vcmp.ge.f32.partialorder %v90, 0.0
  %vm107 = vcmp.ge.f32.partialorder %v91, 0.0
  %v108 = vmul.f32 %v76, 0.2
  %v109 = vmul.f32 %v77, 0.2
  %v110 = vmul.f32 %v78, 0.2
  %v111 = vmul.f32 %v79, 0.2
  %v112 = vmul.f32 %v80, 0.2
  %v113 = vmul.f32 %v81, 0.2
  %v114 = vmul.f32 %v82, 0.2
  %v115 = vmul.f32 %v83, 0.2
  %v116 = vmul.f32 %v84, 0.2
  %v117 = vmul.f32 %v85, 0.2
  %v118 = vmul.f32 %v86, 0.2
  %v119 = vmul.f32 %v87, 0.2
  %v120 = vmul.f32 %v88, 0.2
  %v121 = vmul.f32 %v89, 0.2
  %v122 = vmul.f32 %v90, 0.2
  %v123 = vmul.f32 %v91, 0.2
  %v124 = vsel %vm92, %v76, %v108
  %v125 = vsel %vm93, %v77, %v109
  %v126 = vsel %vm94, %v78, %v110
  %v127 = vsel %vm95, %v79, %v111
  %v128 = vsel %vm96, %v80, %v112
  %v129 = vsel %vm97, %v81, %v113
  %v130 = vsel %vm98, %v82, %v114
  %v131 = vsel %vm99, %v83, %v115
  %v132 = vsel %vm100, %v84, %v116
  %v133 = vsel %vm101, %v85, %v117
  %v134 = vsel %vm102, %v86, %v118
  %v135 = vsel %vm103, %v87, %v119
  %v136 = vsel %vm104, %v88, %v120
  %v137 = vsel %vm105, %v89, %v121
  %v138 = vsel %vm106, %v90, %v122
  %v139 = vsel %vm107, %v91, %v123
  %v140 = vpack.c.bf16 %v125, %v124
  %v141 = vpack.c.bf16 %v127, %v126
  %v142 = vpack.c.bf16 %v129, %v128
  %v143 = vpack.c.bf16 %v131, %v130
  %v144 = vpack.c.bf16 %v133, %v132
  %v145 = vpack.c.bf16 %v135, %v134
  %v146 = vpack.c.bf16 %v137, %v136
  %v147 = vpack.c.bf16 %v139, %v138
  %v156 = vunpack.c.l.b16 %v140
  %v157 = vunpack.c.h.b16 %v140
  %v158 = vunpack.c.l.b16 %v141
  %v159 = vunpack.c.h.b16 %v141
  %v160 = vunpack.c.l.b16 %v142
  %v161 = vunpack.c.h.b16 %v142
  %v162 = vunpack.c.l.b16 %v143
  %v163 = vunpack.c.h.b16 %v143
  %v164 = vunpack.c.l.b16 %v144
  %v165 = vunpack.c.h.b16 %v144
  %v166 = vunpack.c.l.b16 %v145
  %v167 = vunpack.c.h.b16 %v145
  %v168 = vunpack.c.l.b16 %v146
  %v169 = vunpack.c.h.b16 %v146
  %v170 = vunpack.c.l.b16 %v147
  %v171 = vunpack.c.h.b16 %v147
  %v172 = vpack.c.b16 %v156, %v156
  %v173 = vpack.c.b16 %v157, %v157
  %v174 = vpack.c.b16 %v158, %v158
  %v175 = vpack.c.b16 %v159, %v159
  %v176 = vpack.c.b16 %v160, %v160
  %v177 = vpack.c.b16 %v161, %v161
  %v178 = vpack.c.b16 %v162, %v162
  %v179 = vpack.c.b16 %v163, %v163
  %v180 = vpack.c.b16 %v164, %v164
  %v181 = vpack.c.b16 %v165, %v165
  %v182 = vpack.c.b16 %v166, %v166
  %v183 = vpack.c.b16 %v167, %v167
  %v184 = vpack.c.b16 %v168, %v168
  %v185 = vpack.c.b16 %v169, %v169
  %v186 = vpack.c.b16 %v170, %v170
  %v187 = vpack.c.b16 %v171, %v171
  %204 = vst [vmem:[%s3] sm:$0xf] %v172
  %205 = vst [vmem:[%s3 + $0x4] sm:$0xf] %v173
  %206 = vst [vmem:[%s3 + $0x8] sm:$0xf] %v174
  %207 = vst [vmem:[%s3 + $0xc] sm:$0xf] %v175
  %208 = vst [vmem:[%s3 + $0x10] sm:$0xf] %v176
  %209 = vst [vmem:[%s3 + $0x14] sm:$0xf] %v177
  %210 = vst [vmem:[%s3 + $0x18] sm:$0xf] %v178
  %211 = vst [vmem:[%s3 + $0x1c] sm:$0xf] %v179
  %212 = vst [vmem:[%s3 + $0x20] sm:$0xf] %v180
  %213 = vst [vmem:[%s3 + $0x24] sm:$0xf] %v181
  %214 = vst [vmem:[%s3 + $0x28] sm:$0xf] %v182
  %215 = vst [vmem:[%s3 + $0x2c] sm:$0xf] %v183
  %216 = vst [vmem:[%s3 + $0x30] sm:$0xf] %v184
  %217 = vst [vmem:[%s3 + $0x34] sm:$0xf] %v185
  %218 = vst [vmem:[%s3 + $0x38] sm:$0xf] %v186
  %219 = vst [vmem:[%s3 + $0x3c] sm:$0xf] %v187
  // Predicated region
  $region14: #{nlayer_discriminator.14} parent=0 // pred_check
    _
  $region15: #{nlayer_discriminator.14} parent=0 // pred_check_branch
    %221 = sbr.rel (0) target = $region17
  $region16: #{nlayer_discriminator.14} parent=0 // pred_region
    _
  $region17: #{nlayer_discriminator.14} parent=0 // pred_fallthru
    _
  // Predicated region
  $region18: #{nlayer_discriminator.14} parent=0 // pred_check
    _
  $region19: #{nlayer_discriminator.14} parent=0 // pred_check_branch
    %223 = sbr.rel (0) target = $region21
  $region20: #{nlayer_discriminator.14} parent=0 // pred_region
    _
  $region21: #{nlayer_discriminator.14} parent=0 // pred_fallthru
    _

// kernel: nlayer_discriminator.16
$region0: #{nlayer_discriminator.16}
  #allocation0 [shape = 'u32[]', space=smem, size = 0x4, offset = 0x4, fixed_abs, tag = 'smem constant byte address 0x4 - core index']
  #allocation1 [shape = 'u32[144,128]{1,0:T(1,128)}', space=vmem, size = 0x12000, scoped, tag = 'internal scratch']
  %s0 = inlined_call_operand.vmem [shape: bf16[32,256], index: 0, kind: input, shape index: {}]
  %s1 = inlined_call_operand.vmem [shape: f32[1,256], index: 1, kind: output, shape index: {0}]
  %s2 = inlined_call_operand.vmem [shape: f32[1,256], index: 2, kind: output, shape index: {1}]
  %3 = xla_tuple %s1, %s2
  %s4 = sld [smem:[#allocation0]]
  $region26: #{nlayer_discriminator.16} parent=0
    _
  %s6 = ssub.s32 1, %s4
  %s7 = scalar_select 0, %s6, %s4
  // Predicated region
  $region2: #{nlayer_discriminator.16} parent=0 // pred_check
    _
  $region3: #{nlayer_discriminator.16} parent=0 // pred_check_branch
    %9 = sbr.rel (0) target = $region5
  $region4: #{nlayer_discriminator.16} parent=0 // pred_region
    _
  $region5: #{nlayer_discriminator.16} parent=0 // pred_fallthru
    _
  %p10 = scmp.eq.s32.totalorder 0, 0
  // Predicated region
  $region6: #{nlayer_discriminator.16} parent=0 // pred_check
    %p11 = pneg %p10
  $region7: #{nlayer_discriminator.16} parent=0 // pred_check_branch
    %13 = sbr.rel (%p11) target = $region9
  $region8: #{nlayer_discriminator.16} parent=0 // pred_region
    %v14 = vlaneseq
    %vm15 = vcmp.ge.s32.totalorder %v14, 0
    %vm16 = vcmp.lt.s32.totalorder %v14, 256
    %vm17 = vmand %vm15, %vm16
    %18 = vst.msk [vmem:[%s1] sm:$0x3] %vm17, 0.0
    %19 = vst.msk [vmem:[%s2] sm:$0x3] %vm17, 0.0
  $region9: #{nlayer_discriminator.16} parent=0 // pred_fallthru
    _
  %v20 = vld [vmem:[%s0] sm:$0xff]
  %v21 = vld [vmem:[%s0 + $0x8] sm:$0xff]
  %v22 = vld [vmem:[%s0 + $0x10] sm:$0xff]
  %v23 = vld [vmem:[%s0 + $0x18] sm:$0xff]
  %v24 = vunpack.c.l.bf16 %v20
  %v25 = vunpack.c.h.bf16 %v20
  %v26 = vunpack.c.l.bf16 %v21
  %v27 = vunpack.c.h.bf16 %v21
  %v28 = vunpack.c.l.bf16 %v22
  %v29 = vunpack.c.h.bf16 %v22
  %v30 = vunpack.c.l.bf16 %v23
  %v31 = vunpack.c.h.bf16 %v23
  %v32 = vld [vmem:[%s1] sm:$0x3]
  %v33 = vadd.f32 %v24, %v26
  %v34 = vadd.f32 %v33, %v28
  %v35 = vadd.f32 %v34, %v30
  %v36 = vrot.slane %v35, 4
  %v37 = vadd.f32 %v35, %v36
  %v38 = vrot.slane %v37, 2
  %v39 = vadd.f32 %v37, %v38
  %v40 = vrot.slane %v39, 1
  %v41 = vadd.f32 %v39, %v40
  %v42 = vadd.f32 %v25, %v27
  %v43 = vadd.f32 %v42, %v29
  %v44 = vadd.f32 %v43, %v31
  %v45 = vrot.slane %v44, 4
  %v46 = vadd.f32 %v44, %v45
  %v47 = vrot.slane %v46, 2
  %v48 = vadd.f32 %v46, %v47
  %v49 = vrot.slane %v48, 1
  %v50 = vadd.f32 %v48, %v49
  %v53 = vcombine.low %v41, %v50
  %v55 = vunpack.c.l.s4 1966171168
  %v56 = vunpack.c.0.s8 %v55
  %v57 = vlaneseq
  %v58 = vshrl.u32 %v57, 7
  %v59 = vsub.s32 %v56, %v58
  %v60 = vrot.slane %v53, %v59
  %v62 = vunpack.c.l.s4 1966171168
  %v63 = vunpack.c.0.s8 %v62
  %v64 = vlaneseq
  %v65 = vshrl.u32 %v64, 7
  %v66 = vsub.s32 %v63, %v65
  %v67 = vrot.slane %v60, %v66
  %v69 = vadd.f32 %v32, %v67
  %v70 = vlaneseq
  %vm71 = vcmp.ge.s32.totalorder %v70, 0
  %vm72 = vcmp.lt.s32.totalorder %v70, 256
  %vm73 = vmand %vm71, %vm72
  %74 = vst.msk [vmem:[%s1] sm:$0x3] %vm73, %v69
  %v75 = vld [vmem:[%s2] sm:$0x3]
  %v76 = vmul.f32 %v24, %v24
  %v77 = vmul.f32 %v25, %v25
  %v78 = vmul.f32 %v26, %v26
  %v79 = vmul.f32 %v27, %v27
  %v80 = vmul.f32 %v28, %v28
  %v81 = vmul.f32 %v29, %v29
  %v82 = vmul.f32 %v30, %v30
  %v83 = vmul.f32 %v31, %v31
  %v84 = vadd.f32 %v76, %v78
  %v85 = vadd.f32 %v84, %v80
  %v86 = vadd.f32 %v85, %v82
  %v87 = vrot.slane %v86, 4
  %v88 = vadd.f32 %v86, %v87
  %v89 = vrot.slane %v88, 2
  %v90 = vadd.f32 %v88, %v89
  %v91 = vrot.slane %v90, 1
  %v92 = vadd.f32 %v90, %v91
  %v93 = vadd.f32 %v77, %v79
  %v94 = vadd.f32 %v93, %v81
  %v95 = vadd.f32 %v94, %v83
  %v96 = vrot.slane %v95, 4
  %v97 = vadd.f32 %v95, %v96
  %v98 = vrot.slane %v97, 2
  %v99 = vadd.f32 %v97, %v98
  %v100 = vrot.slane %v99, 1
  %v101 = vadd.f32 %v99, %v100
  %v104 = vcombine.low %v92, %v101
  %v106 = vunpack.c.l.s4 1966171168
  %v107 = vunpack.c.0.s8 %v106
  %v108 = vlaneseq
  %v109 = vshrl.u32 %v108, 7
  %v110 = vsub.s32 %v107, %v109
  %v111 = vrot.slane %v104, %v110
  %v113 = vunpack.c.l.s4 1966171168
  %v114 = vunpack.c.0.s8 %v113
  %v115 = vlaneseq
  %v116 = vshrl.u32 %v115, 7
  %v117 = vsub.s32 %v114, %v116
  %v118 = vrot.slane %v111, %v117
  %v120 = vadd.f32 %v75, %v118
  %121 = vst.msk [vmem:[%s2] sm:$0x3] %vm73, %v120
  // Predicated region
  $region10: #{nlayer_discriminator.16} parent=0 // pred_check
    _
  $region11: #{nlayer_discriminator.16} parent=0 // pred_check_branch
    %123 = sbr.rel (0) target = $region13
  $region12: #{nlayer_discriminator.16} parent=0 // pred_region
    _
  $region13: #{nlayer_discriminator.16} parent=0 // pred_fallthru
    _
  // Predicated region
  $region14: #{nlayer_discriminator.16} parent=0 // pred_check
    _
  $region15: #{nlayer_discriminator.16} parent=0 // pred_check_branch
    %125 = sbr.rel (0) target = $region17
  $region16: #{nlayer_discriminator.16} parent=0 // pred_region
    _
  $region17: #{nlayer_discriminator.16} parent=0 // pred_fallthru
    _
  // Predicated region
  $region18: #{nlayer_discriminator.16} parent=0 // pred_check
    _
  $region19: #{nlayer_discriminator.16} parent=0 // pred_check_branch
    %127 = sbr.rel (0) target = $region21
  $region20: #{nlayer_discriminator.16} parent=0 // pred_region
    _
  $region21: #{nlayer_discriminator.16} parent=0 // pred_fallthru
    _
  // Predicated region
  $region22: #{nlayer_discriminator.16} parent=0 // pred_check
    _
  $region23: #{nlayer_discriminator.16} parent=0 // pred_check_branch
    %129 = sbr.rel (0) target = $region25
  $region24: #{nlayer_discriminator.16} parent=0 // pred_region
    _
  $region25: #{nlayer_discriminator.16} parent=0 // pred_fallthru
    _

// kernel: nlayer_discriminator.15
$region0: #{nlayer_discriminator.15}
  #allocation0 [shape = 'u32[]', space=smem, size = 0x4, offset = 0x4, fixed_abs, tag = 'smem constant byte address 0x4 - core index']
  #allocation1 [shape = 'u32[144,128]{1,0:T(1,128)}', space=vmem, size = 0x12000, scoped, tag = 'internal scratch']
  #allocation2 [shape = 'f32[32,256]{1,0:T(8,128)}', space=vmem, size = 0x8000, scoped, tag = 'scratch operand']
  %s0 = inlined_call_operand.vmem [shape: bf16[32,2048], index: 0, kind: input, shape index: {}]
  %s1 = inlined_call_operand.vmem [shape: bf16[2048,256], index: 1, kind: input, shape index: {}]
  %s2 = inlined_call_operand.vmem [shape: f32[1,256], index: 2, kind: input, shape index: {}]
  %s3 = inlined_call_operand.vmem [shape: bf16[32,256], index: 3, kind: output, shape index: {}]
  %s4 = sld [smem:[#allocation0]]
  $region76: #{nlayer_discriminator.15} parent=0
    _
  %s6 = ssub.s32 1, %s4
  %s7 = scalar_select 0, %s6, %s4
  $region1: #{nlayer_discriminator.15} parent=0
    #allocation3 [shape = 'u8[65536]{0}', space=vmem, size = 0x10000, scoped, tag = 'input window, operand 0']
    loop: start=0, step=1, limit=6
    $region2: #{nlayer_discriminator.15} parent=1 // loop_pre_header
      _
    $region3: #{nlayer_discriminator.15} parent=1 // loop_header
      %s9 = sphi 0, %s13
      %p10 = scmp.ge.s32.totalorder %s9, 6
      %s16 = sphi 0, %s35
      %s17 = sphi 0, %s31
      %s18 = sphi 0, %s27
      %s19 = sphi 0, %s16
      %s20 = sphi 0, %s17
      %s21 = sphi 0, %s18
      %s22 = sphi 0, %s19
      %s23 = sphi 0, %s20
      %s24 = sphi 0, %s21
      %s40 = sphi 0, %s42
      %s43 = sphi 0, %s40
      %s44 = sphi 0, %s43
      %s60 = sphi 0, %s44
      %s68 = sphi 0, %s70
      %s71 = sphi 0, %s68
      %s72 = sphi 0, %s71
      %s88 = sphi 0, %s72
      %s94 = sphi 0, %s96
      %s97 = sphi 0, %s94
      %s98 = sphi 0, %s97
      %s114 = sphi 0, %s98
      %s122 = sphi 0, %s124
      %s125 = sphi 0, %s122
      %s126 = sphi 0, %s125
      %s142 = sphi 0, %s126
    $region4: #{nlayer_discriminator.15} parent=1 // loop_header_branch
      %12 = sbr.rel (%p10) target = $region8
    $region5: #{nlayer_discriminator.15} parent=1 // loop_body
      %s14 = ssub.s32 %s9, 1
      %s15 = ssub.s32 %s9, 2
      %s25 = sadd.s32 1, %s18
      %p26 = scmp.ge.s32.totalorder %s25, 4
      %s27 = scalar_select %p26, 0, %s25
      %s28 = sadd.s32 1, %s17
      %s29 = scalar_select %p26, %s28, %s17
      %p30 = scmp.ge.s32.totalorder %s29, 1
      %s31 = scalar_select %p30, 0, %s29
      %s32 = sadd.s32 1, %s16
      %s33 = scalar_select %p30, %s32, %s16
      %p34 = scmp.ge.s32.totalorder %s33, 1
      %s35 = scalar_select %p34, 0, %s33
      %s36 = ssub.s32 %s16, %s35
      %s37 = ssub.s32 %s18, %s27
      %s38 = sor.u32 %s36, %s37
      %p39 = scmp.eq.s32.totalorder %s38, 0
      %s41 = sadd.s32 %s40, 1
      %s42 = scalar_select %p39, %s40, %s41
      %p45 = pneg %p39
      %p46 = scmp.eq.s32.totalorder %s9, 3
      %p47 = por %p45, %p46
      %p48 = scmp.ne.s32.totalorder %s40, %s43
      %p49 = scmp.eq.s32.totalorder %s9, 0
      %p50 = por %p48, %p49
      %p51 = scmp.ne.s32.totalorder %s40, %s43
      %p52 = scmp.eq.s32.totalorder %s14, 3
      %p53 = por %p51, %p52
      %p54 = scmp.ne.s32.totalorder %s43, %s44
      %p55 = scmp.eq.s32.totalorder %s14, 0
      %p56 = por %p54, %p55
      %p57 = scmp.ne.s32.totalorder %s43, %s44
      %p58 = scmp.eq.s32.totalorder %s15, 3
      %p59 = por %p57, %p58
      %p61 = scmp.ne.s32.totalorder %s44, %s60
      %p62 = scmp.eq.s32.totalorder %s15, 0
      %p63 = por %p61, %p62
      %s64 = ssub.s32 %s18, %s27
      %s65 = ssub.s32 %s17, %s31
      %s66 = sor.u32 %s64, %s65
      %p67 = scmp.eq.s32.totalorder %s66, 0
      %s69 = sadd.s32 %s68, 1
      %s70 = scalar_select %p67, %s68, %s69
      %p73 = pneg %p67
      %p74 = scmp.eq.s32.totalorder %s9, 3
      %p75 = por %p73, %p74
      %p76 = scmp.ne.s32.totalorder %s68, %s71
      %p77 = scmp.eq.s32.totalorder %s9, 0
      %p78 = por %p76, %p77
      %p79 = scmp.ne.s32.totalorder %s68, %s71
      %p80 = scmp.eq.s32.totalorder %s14, 3
      %p81 = por %p79, %p80
      %p82 = scmp.ne.s32.totalorder %s71, %s72
      %p83 = scmp.eq.s32.totalorder %s14, 0
      %p84 = por %p82, %p83
      %p85 = scmp.ne.s32.totalorder %s71, %s72
      %p86 = scmp.eq.s32.totalorder %s15, 3
      %p87 = por %p85, %p86
      %p89 = scmp.ne.s32.totalorder %s72, %s88
      %p90 = scmp.eq.s32.totalorder %s15, 0
      %p91 = por %p89, %p90
      %s92 = ssub.s32 %s17, %s31
      %p93 = scmp.eq.s32.totalorder %s92, 0
      %s95 = sadd.s32 %s94, 1
      %s96 = scalar_select %p93, %s94, %s95
      %p99 = pneg %p93
      %p100 = scmp.eq.s32.totalorder %s9, 3
      %p101 = por %p99, %p100
      %p102 = scmp.ne.s32.totalorder %s94, %s97
      %p103 = scmp.eq.s32.totalorder %s9, 0
      %p104 = por %p102, %p103
      %p105 = scmp.ne.s32.totalorder %s94, %s97
      %p106 = scmp.eq.s32.totalorder %s14, 3
      %p107 = por %p105, %p106
      %p108 = scmp.ne.s32.totalorder %s97, %s98
      %p109 = scmp.eq.s32.totalorder %s14, 0
      %p110 = por %p108, %p109
      %p111 = scmp.ne.s32.totalorder %s97, %s98
      %p112 = scmp.eq.s32.totalorder %s15, 3
      %p113 = por %p111, %p112
      %p115 = scmp.ne.s32.totalorder %s98, %s114
      %p116 = scmp.eq.s32.totalorder %s15, 0
      %p117 = por %p115, %p116
      %s118 = ssub.s32 %s16, %s35
      %s119 = ssub.s32 %s17, %s31
      %s120 = sor.u32 %s118, %s119
      %p121 = scmp.eq.s32.totalorder %s120, 0
      %s123 = sadd.s32 %s122, 1
      %s124 = scalar_select %p121, %s122, %s123
      %p127 = pneg %p121
      %p128 = scmp.eq.s32.totalorder %s9, 3
      %p129 = por %p127, %p128
      %p130 = scmp.ne.s32.totalorder %s122, %s125
      %p131 = scmp.eq.s32.totalorder %s9, 0
      %p132 = por %p130, %p131
      %p133 = scmp.ne.s32.totalorder %s122, %s125
      %p134 = scmp.eq.s32.totalorder %s14, 3
      %p135 = por %p133, %p134
      %p136 = scmp.ne.s32.totalorder %s125, %s126
      %p137 = scmp.eq.s32.totalorder %s14, 0
      %p138 = por %p136, %p137
      %p139 = scmp.ne.s32.totalorder %s125, %s126
      %p140 = scmp.eq.s32.totalorder %s15, 3
      %p141 = por %p139, %p140
      %p143 = scmp.ne.s32.totalorder %s126, %s142
      %p144 = scmp.eq.s32.totalorder %s15, 0
      %p145 = por %p143, %p144
      %p146 = scmp.le.s32.totalorder 1, %s9
      %p147 = scmp.lt.s32.totalorder %s9, 5
      %p148 = pnand %p146, %p147
      %p149 = pneg %p148
      // Predicated region
      $region9: #{nlayer_discriminator.15} parent=5 // pred_check
        _
      $region10: #{nlayer_discriminator.15} parent=5 // pred_check_branch
        %151 = sbr.rel (%p148) target = $region12
      $region11: #{nlayer_discriminator.15} parent=5 // pred_region
        %s152 = ssub.s32 %s9, 1
        // Predicated region
        $region13: #{nlayer_discriminator.15} parent=11 // pred_check
          %p153 = pneg %p110
        $region14: #{nlayer_discriminator.15} parent=11 // pred_check_branch
          %155 = sbr.rel (%p153) target = $region16
        $region15: #{nlayer_discriminator.15} parent=11 // pred_region
          %s156 = smul.u32 2, %s20
          %p157 = scmp.lt.s32.totalorder %s156, 1
          %s158 = scalar_select %p157, %s156, 1
          %s159 = scalar_lea.vmem %s2, %s158
          %s160 = smul.u32 2, %s20
        $region16: #{nlayer_discriminator.15} parent=11 // pred_fallthru
          _
      $region12: #{nlayer_discriminator.15} parent=5 // pred_fallthru
        _
      %p161 = scmp.lt.s32.totalorder %s9, 4
      // Predicated region
      $region17: #{nlayer_discriminator.15} parent=5 // pred_check
        %p162 = pneg %p161
      $region18: #{nlayer_discriminator.15} parent=5 // pred_check_branch
        %164 = sbr.rel (%p162) target = $region20
      $region19: #{nlayer_discriminator.15} parent=5 // pred_region
        // Predicated region
        $region21: #{nlayer_discriminator.15} parent=19 // pred_check
          %p165 = pneg %p50
        $region22: #{nlayer_discriminator.15} parent=19 // pred_check_branch
          %167 = sbr.rel (%p165) target = $region24
        $region23: #{nlayer_discriminator.15} parent=19 // pred_region
          %s168 = sand.u32 %s40, 1
          %s169 = sand.u32 %s40, 1
          %s170 = smul.addr %s169, 64
          %s171 = scalar_lea.vmem [#allocation3], %s170
          %s172 = smul.u32 4, %s16
          %s173 = smul.u32 4, %s18
          %s174 = smul.addr %s172, 16
          %s175 = sadd.s32 %s173, %s174
          %s176 = smul.addr %s175, 4
          %s177 = scalar_lea.vmem %s0, %s176
          // Predicated region
          $region25: #{nlayer_discriminator.15} parent=23 // pred_check
            _
          $region26: #{nlayer_discriminator.15} parent=23 // pred_check_branch
            %179 = sbr.rel (0) target = $region28
          $region27: #{nlayer_discriminator.15} parent=23 // pred_region
            // Predicated region
            $region29: #{nlayer_discriminator.15} parent=27 // pred_check
              _
            $region30: #{nlayer_discriminator.15} parent=27 // pred_check_branch
              %181 = sbr.rel (0) target = $region32
            $region31: #{nlayer_discriminator.15} parent=27 // pred_region
              loop: start=0, step=1, limit=1
              $region33: #{nlayer_discriminator.15} parent=31 // loop_pre_header
                _
              $region34: #{nlayer_discriminator.15} parent=31 // loop_header
                %s183 = sphi 0, %s187
                %p184 = scmp.ge.s32.totalorder %s183, 1
                %s188 = sphi %s177, %s177
                %s189 = sphi %s171, %s171
              $region35: #{nlayer_discriminator.15} parent=31 // loop_header_branch
                %186 = sbr.rel (%p184) target = $region39
              $region36: #{nlayer_discriminator.15} parent=31 // loop_body
                %v190 = vld [vmem:[%s188] sm:$0xff]
                %191 = vst [vmem:[%s189] sm:$0xff] %v190
                %v192 = vld [vmem:[%s188 + $0x8] sm:$0xff]
                %193 = vst [vmem:[%s189 + $0x8] sm:$0xff] %v192
                %v194 = vld [vmem:[%s188 + $0x40] sm:$0xff]
                %195 = vst [vmem:[%s189 + $0x10] sm:$0xff] %v194
                %v196 = vld [vmem:[%s188 + $0x48] sm:$0xff]
                %197 = vst [vmem:[%s189 + $0x18] sm:$0xff] %v196
                %v198 = vld [vmem:[%s188 + $0x80] sm:$0xff]
                %199 = vst [vmem:[%s189 + $0x20] sm:$0xff] %v198
                %v200 = vld [vmem:[%s188 + $0x88] sm:$0xff]
                %201 = vst [vmem:[%s189 + $0x28] sm:$0xff] %v200
                %v202 = vld [vmem:[%s188 + $0xc0] sm:$0xff]
                %203 = vst [vmem:[%s189 + $0x30] sm:$0xff] %v202
                %v204 = vld [vmem:[%s188 + $0xc8] sm:$0xff]
                %205 = vst [vmem:[%s189 + $0x38] sm:$0xff] %v204
              $region37: #{nlayer_discriminator.15} parent=31 // loop_footer
                %s187 = sadd.s32 1, %s183
              $region38: #{nlayer_discriminator.15} parent=31 // loop_footer_branch
                %182 = sbr.rel target = $region34
              $region39: #{nlayer_discriminator.15} parent=31 // loop_exit
                _
            $region32: #{nlayer_discriminator.15} parent=27 // pred_fallthru
              _
            // Predicated region
            $region40: #{nlayer_discriminator.15} parent=27 // pred_check
              _
            $region41: #{nlayer_discriminator.15} parent=27 // pred_check_branch
              %207 = sbr.rel target = $region43
            $region42: #{nlayer_discriminator.15} parent=27 // pred_region
              _
            $region43: #{nlayer_discriminator.15} parent=27 // pred_fallthru
              _
          $region28: #{nlayer_discriminator.15} parent=23 // pred_fallthru
            _
          %208 = vnop
        $region24: #{nlayer_discriminator.15} parent=19 // pred_fallthru
          _
        // Predicated region
        $region44: #{nlayer_discriminator.15} parent=19 // pred_check
          %p209 = pneg %p78
        $region45: #{nlayer_discriminator.15} parent=19 // pred_check_branch
          %211 = sbr.rel (%p209) target = $region47
        $region46: #{nlayer_discriminator.15} parent=19 // pred_region
          %s212 = smul.u32 64, %s18
          %s213 = smul.u32 2, %s17
          %p214 = scmp.lt.s32.totalorder %s212, 255
          %s215 = scalar_select %p214, %s212, 255
          %p216 = scmp.lt.s32.totalorder %s213, 1
          %s217 = scalar_select %p216, %s213, 1
          %s218 = smul.addr %s215, 2
          %s219 = sadd.s32 %s217, %s218
          %s220 = smul.addr %s219, 4
          %s221 = scalar_lea.vmem %s1, %s220
          %s222 = smul.u32 64, %s18
          %s223 = smul.u32 2, %s17
        $region47: #{nlayer_discriminator.15} parent=19 // pred_fallthru
          _
      $region20: #{nlayer_discriminator.15} parent=5 // pred_fallthru
        _
      %p224 = scmp.le.s32.totalorder 1, %s9
      %p225 = scmp.lt.s32.totalorder %s9, 5
      %p226 = pnand %p224, %p225
      %p227 = pneg %p226
      // Predicated region
      $region48: #{nlayer_discriminator.15} parent=5 // pred_check
        _
      $region49: #{nlayer_discriminator.15} parent=5 // pred_check_branch
        %229 = sbr.rel (%p226) target = $region51
      $region50: #{nlayer_discriminator.15} parent=5 // pred_region
        %s230 = ssub.s32 %s9, 1
        %s231 = sand.u32 %s43, 1
        %s232 = sand.u32 %s43, 1
        %s233 = smul.addr %s232, 64
        %s234 = scalar_lea.vmem [#allocation3], %s233
        // Predicated region
        $region52: #{nlayer_discriminator.15} parent=50 // pred_check
          %p235 = pneg %p56
        $region53: #{nlayer_discriminator.15} parent=50 // pred_check_branch
          %237 = sbr.rel (%p235) target = $region55
        $region54: #{nlayer_discriminator.15} parent=50 // pred_region
          _
        $region55: #{nlayer_discriminator.15} parent=50 // pred_fallthru
          _
        %s238 = sand.u32 %s43, 1
        %s239 = sand.u32 %s43, 1
        %s240 = smul.addr %s239, 64
        %s241 = scalar_lea.vmem [#allocation3], %s240
        %p242 = pneg %p56
        %p243 = pneg %p53
        %s244 = smul.u32 64, %s21
        %s245 = smul.u32 2, %s20
        %p246 = scmp.lt.s32.totalorder %s244, 255
        %s247 = scalar_select %p246, %s244, 255
        %p248 = scmp.lt.s32.totalorder %s245, 1
        %s249 = scalar_select %p248, %s245, 1
        %s250 = smul.addr %s247, 2
        %s251 = sadd.s32 %s249, %s250
        %s252 = smul.addr %s251, 4
        %s253 = scalar_lea.vmem %s1, %s252
        %p254 = pneg %p84
        %p255 = pneg %p81
        %s256 = smul.u32 2, %s20
        %p257 = scmp.lt.s32.totalorder %s256, 1
        %s258 = scalar_select %p257, %s256, 1
        %s259 = scalar_lea.vmem %s2, %s258
        %p260 = pneg %p110
        %p261 = pneg %p107
        %p262 = pneg %p138
        %p263 = pneg %p135
        %s264 = smul.u32 4, %s19
        %s265 = smul.u32 2, %s20
        %p266 = scmp.lt.s32.totalorder %s264, 3
        %s267 = scalar_select %p266, %s264, 3
        %p268 = scmp.lt.s32.totalorder %s265, 1
        %s269 = scalar_select %p268, %s265, 1
        %s270 = smul.addr %s267, 2
        %s271 = sadd.s32 %s269, %s270
        %s272 = smul.addr %s271, 4
        %s273 = scalar_lea.vmem %s3, %s272
        %s274 = smul.u32 4, %s19
        %s275 = smul.u32 4, %s21
        %s276 = smul.u32 64, %s21
        %s277 = smul.u32 2, %s20
        %p278 = scmp.lt.s32.totalorder %s276, 255
        %s279 = scalar_select %p278, %s276, 255
        %p280 = scmp.lt.s32.totalorder %s277, 1
        %s281 = scalar_select %p280, %s277, 1
        %s282 = smul.addr %s279, 2
        %s283 = sadd.s32 %s281, %s282
        %s284 = smul.addr %s283, 4
        %s285 = scalar_lea.vmem %s1, %s284
        %s286 = smul.u32 64, %s21
        %s287 = smul.u32 2, %s20
        %s288 = smul.u32 2, %s20
        %p289 = scmp.lt.s32.totalorder %s288, 1
        %s290 = scalar_select %p289, %s288, 1
        %s291 = scalar_lea.vmem %s2, %s290
        %s292 = smul.u32 2, %s20
        %s293 = smul.u32 4, %s19
        %s294 = smul.u32 2, %s20
        %p295 = scmp.lt.s32.totalorder %s293, 3
        %s296 = scalar_select %p295, %s293, 3
        %p297 = scmp.lt.s32.totalorder %s294, 1
        %s298 = scalar_select %p297, %s294, 1
        %s299 = smul.addr %s296, 2
        %s300 = sadd.s32 %s298, %s299
        %s301 = smul.addr %s300, 4
        %s302 = scalar_lea.vmem %s3, %s301
        %s303 = smul.u32 4, %s19
        %s304 = smul.u32 2, %s20
        %p305 = scmp.eq.s32.totalorder %s21, 0
        // Predicated region
        $region56: #{nlayer_discriminator.15} parent=50 // pred_check
          %p306 = pneg %p305
        $region57: #{nlayer_discriminator.15} parent=50 // pred_check_branch
          %308 = sbr.rel (%p306) target = $region59
        $region58: #{nlayer_discriminator.15} parent=50 // pred_region
          %309 = vst [vmem:[#allocation2] sm:$0xff] 0.0
          %310 = vst [vmem:[#allocation2 + $0x8] sm:$0xff] 0.0
          %311 = vst [vmem:[#allocation2 + $0x10] sm:$0xff] 0.0
          %312 = vst [vmem:[#allocation2 + $0x18] sm:$0xff] 0.0
          %313 = vst [vmem:[#allocation2 + $0x20] sm:$0xff] 0.0
          %314 = vst [vmem:[#allocation2 + $0x28] sm:$0xff] 0.0
          %315 = vst [vmem:[#allocation2 + $0x30] sm:$0xff] 0.0
          %316 = vst [vmem:[#allocation2 + $0x38] sm:$0xff] 0.0
        $region59: #{nlayer_discriminator.15} parent=50 // pred_fallthru
          _
        %v317 = vld [vmem:[#allocation2] sm:$0xff]
        %v318 = vld [vmem:[#allocation2 + $0x8] sm:$0xff]
        %v319 = vld [vmem:[#allocation2 + $0x10] sm:$0xff]
        %v320 = vld [vmem:[#allocation2 + $0x18] sm:$0xff]
        %v321 = vld [vmem:[#allocation2 + $0x20] sm:$0xff]
        %v322 = vld [vmem:[#allocation2 + $0x28] sm:$0xff]
        %v323 = vld [vmem:[#allocation2 + $0x30] sm:$0xff]
        %v324 = vld [vmem:[#allocation2 + $0x38] sm:$0xff]
        %v325 = vld [vmem:[%s234] sm:$0xff]
        %v326 = vld [vmem:[%s234 + $0x8] sm:$0xff]
        %v327 = vld [vmem:[%s234 + $0x10] sm:$0xff]
        %v328 = vld [vmem:[%s234 + $0x18] sm:$0xff]
        %v329 = vld [vmem:[%s234 + $0x20] sm:$0xff]
        %v330 = vld [vmem:[%s234 + $0x28] sm:$0xff]
        %v331 = vld [vmem:[%s234 + $0x30] sm:$0xff]
        %v332 = vld [vmem:[%s234 + $0x38] sm:$0xff]
        %v333 = vld [vmem:[%s285] sm:$0xff]
        %v334 = vld [vmem:[%s285 + $0x8] sm:$0xff]
        %v335 = vld [vmem:[%s285 + $0x10] sm:$0xff]
        %v336 = vld [vmem:[%s285 + $0x18] sm:$0xff]
        %v337 = vld [vmem:[%s285 + $0x20] sm:$0xff]
        %v338 = vld [vmem:[%s285 + $0x28] sm:$0xff]
        %v339 = vld [vmem:[%s285 + $0x30] sm:$0xff]
        %v340 = vld [vmem:[%s285 + $0x38] sm:$0xff]
        %v341 = vld [vmem:[%s285 + $0x40] sm:$0xff]
        %v342 = vld [vmem:[%s285 + $0x48] sm:$0xff]
        %v343 = vld [vmem:[%s285 + $0x50] sm:$0xff]
        %v344 = vld [vmem:[%s285 + $0x58] sm:$0xff]
        %v345 = vld [vmem:[%s285 + $0x60] sm:$0xff]
        %v346 = vld [vmem:[%s285 + $0x68] sm:$0xff]
        %v347 = vld [vmem:[%s285 + $0x70] sm:$0xff]
        %v348 = vld [vmem:[%s285 + $0x78] sm:$0xff]
        %v349 = vld [vmem:[%s285 + $0x80] sm:$0xff]
        %v350 = vld [vmem:[%s285 + $0x88] sm:$0xff]
        %v351 = vld [vmem:[%s285 + $0x90] sm:$0xff]
        %v352 = vld [vmem:[%s285 + $0x98] sm:$0xff]
        %v353 = vld [vmem:[%s285 + $0xa0] sm:$0xff]
        %v354 = vld [vmem:[%s285 + $0xa8] sm:$0xff]
        %v355 = vld [vmem:[%s285 + $0xb0] sm:$0xff]
        %v356 = vld [vmem:[%s285 + $0xb8] sm:$0xff]
        %v357 = vld [vmem:[%s285 + $0xc0] sm:$0xff]
        %v358 = vld [vmem:[%s285 + $0xc8] sm:$0xff]
        %v359 = vld [vmem:[%s285 + $0xd0] sm:$0xff]
        %v360 = vld [vmem:[%s285 + $0xd8] sm:$0xff]
        %v361 = vld [vmem:[%s285 + $0xe0] sm:$0xff]
        %v362 = vld [vmem:[%s285 + $0xe8] sm:$0xff]
        %v363 = vld [vmem:[%s285 + $0xf0] sm:$0xff]
        %v364 = vld [vmem:[%s285 + $0xf8] sm:$0xff]
        %v365 = vld [vmem:[%s285 + $0x100] sm:$0xff]
        %v366 = vld [vmem:[%s285 + $0x108] sm:$0xff]
        %v367 = vld [vmem:[%s285 + $0x110] sm:$0xff]
        %v368 = vld [vmem:[%s285 + $0x118] sm:$0xff]
        %v369 = vld [vmem:[%s285 + $0x120] sm:$0xff]
        %v370 = vld [vmem:[%s285 + $0x128] sm:$0xff]
        %v371 = vld [vmem:[%s285 + $0x130] sm:$0xff]
        %v372 = vld [vmem:[%s285 + $0x138] sm:$0xff]
        %v373 = vld [vmem:[%s285 + $0x140] sm:$0xff]
        %v374 = vld [vmem:[%s285 + $0x148] sm:$0xff]
        %v375 = vld [vmem:[%s285 + $0x150] sm:$0xff]
        %v376 = vld [vmem:[%s285 + $0x158] sm:$0xff]
        %v377 = vld [vmem:[%s285 + $0x160] sm:$0xff]
        %v378 = vld [vmem:[%s285 + $0x168] sm:$0xff]
        %v379 = vld [vmem:[%s285 + $0x170] sm:$0xff]
        %v380 = vld [vmem:[%s285 + $0x178] sm:$0xff]
        %v381 = vld [vmem:[%s285 + $0x180] sm:$0xff]
        %v382 = vld [vmem:[%s285 + $0x188] sm:$0xff]
        %v383 = vld [vmem:[%s285 + $0x190] sm:$0xff]
        %v384 = vld [vmem:[%s285 + $0x198] sm:$0xff]
        %v385 = vld [vmem:[%s285 + $0x1a0] sm:$0xff]
        %v386 = vld [vmem:[%s285 + $0x1a8] sm:$0xff]
        %v387 = vld [vmem:[%s285 + $0x1b0] sm:$0xff]
        %v388 = vld [vmem:[%s285 + $0x1b8] sm:$0xff]
        %v389 = vld [vmem:[%s285 + $0x1c0] sm:$0xff]
        %v390 = vld [vmem:[%s285 + $0x1c8] sm:$0xff]
        %v391 = vld [vmem:[%s285 + $0x1d0] sm:$0xff]
        %v392 = vld [vmem:[%s285 + $0x1d8] sm:$0xff]
        %v393 = vld [vmem:[%s285 + $0x1e0] sm:$0xff]
        %v394 = vld [vmem:[%s285 + $0x1e8] sm:$0xff]
        %v395 = vld [vmem:[%s285 + $0x1f0] sm:$0xff]
        %v396 = vld [vmem:[%s285 + $0x1f8] sm:$0xff]
        %v405 = vunpack.c.l.b16 %v325
        %v406 = vunpack.c.h.b16 %v325
        %v407 = vunpack.c.l.b16 %v326
        %v408 = vunpack.c.h.b16 %v326
        %v409 = vunpack.c.l.b16 %v327
        %v410 = vunpack.c.h.b16 %v327
        %v411 = vunpack.c.l.b16 %v328
        %v412 = vunpack.c.h.b16 %v328
        %v413 = vunpack.c.l.b16 %v329
        %v414 = vunpack.c.h.b16 %v329
        %v415 = vunpack.c.l.b16 %v330
        %v416 = vunpack.c.h.b16 %v330
        %v417 = vunpack.c.l.b16 %v331
        %v418 = vunpack.c.h.b16 %v331
        %v419 = vunpack.c.l.b16 %v332
        %v420 = vunpack.c.h.b16 %v332
        %v421 = vpack.c.b16 %v409, %v405
        %v422 = vpack.c.b16 %v410, %v406
        %v423 = vpack.c.b16 %v411, %v407
        %v424 = vpack.c.b16 %v412, %v408
        %v425 = vpack.c.b16 %v417, %v413
        %v426 = vpack.c.b16 %v418, %v414
        %v427 = vpack.c.b16 %v419, %v415
        %v428 = vpack.c.b16 %v420, %v416
        %v501 = vunpack.c.l.b16 %v333
        %v502 = vunpack.c.h.b16 %v333
        %v503 = vunpack.c.l.b16 %v334
        %v504 = vunpack.c.h.b16 %v334
        %v505 = vunpack.c.l.b16 %v335
        %v506 = vunpack.c.h.b16 %v335
        %v507 = vunpack.c.l.b16 %v336
        %v508 = vunpack.c.h.b16 %v336
        %v509 = vunpack.c.l.b16 %v337
        %v510 = vunpack.c.h.b16 %v337
        %v511 = vunpack.c.l.b16 %v338
        %v512 = vunpack.c.h.b16 %v338
        %v513 = vunpack.c.l.b16 %v339
        %v514 = vunpack.c.h.b16 %v339
        %v515 = vunpack.c.l.b16 %v340
        %v516 = vunpack.c.h.b16 %v340
        %v517 = vunpack.c.l.b16 %v341
        %v518 = vunpack.c.h.b16 %v341
        %v519 = vunpack.c.l.b16 %v342
        %v520 = vunpack.c.h.b16 %v342
        %v521 = vunpack.c.l.b16 %v343
        %v522 = vunpack.c.h.b16 %v343
        %v523 = vunpack.c.l.b16 %v344
        %v524 = vunpack.c.h.b16 %v344
        %v525 = vunpack.c.l.b16 %v345
        %v526 = vunpack.c.h.b16 %v345
        %v527 = vunpack.c.l.b16 %v346
        %v528 = vunpack.c.h.b16 %v346
        %v529 = vunpack.c.l.b16 %v347
        %v530 = vunpack.c.h.b16 %v347
        %v531 = vunpack.c.l.b16 %v348
        %v532 = vunpack.c.h.b16 %v348
        %v533 = vunpack.c.l.b16 %v349
        %v534 = vunpack.c.h.b16 %v349
        %v535 = vunpack.c.l.b16 %v350
        %v536 = vunpack.c.h.b16 %v350
        %v537 = vunpack.c.l.b16 %v351
        %v538 = vunpack.c.h.b16 %v351
        %v539 = vunpack.c.l.b16 %v352
        %v540 = vunpack.c.h.b16 %v352
        %v541 = vunpack.c.l.b16 %v353
        %v542 = vunpack.c.h.b16 %v353
        %v543 = vunpack.c.l.b16 %v354
        %v544 = vunpack.c.h.b16 %v354
        %v545 = vunpack.c.l.b16 %v355
        %v546 = vunpack.c.h.b16 %v355
        %v547 = vunpack.c.l.b16 %v356
        %v548 = vunpack.c.h.b16 %v356
        %v549 = vunpack.c.l.b16 %v357
        %v550 = vunpack.c.h.b16 %v357
        %v551 = vunpack.c.l.b16 %v358
        %v552 = vunpack.c.h.b16 %v358
        %v553 = vunpack.c.l.b16 %v359
        %v554 = vunpack.c.h.b16 %v359
        %v555 = vunpack.c.l.b16 %v360
        %v556 = vunpack.c.h.b16 %v360
        %v557 = vunpack.c.l.b16 %v361
        %v558 = vunpack.c.h.b16 %v361
        %v559 = vunpack.c.l.b16 %v362
        %v560 = vunpack.c.h.b16 %v362
        %v561 = vunpack.c.l.b16 %v363
        %v562 = vunpack.c.h.b16 %v363
        %v563 = vunpack.c.l.b16 %v364
        %v564 = vunpack.c.h.b16 %v364
        %v565 = vunpack.c.l.b16 %v365
        %v566 = vunpack.c.h.b16 %v365
        %v567 = vunpack.c.l.b16 %v366
        %v568 = vunpack.c.h.b16 %v366
        %v569 = vunpack.c.l.b16 %v367
        %v570 = vunpack.c.h.b16 %v367
        %v571 = vunpack.c.l.b16 %v368
        %v572 = vunpack.c.h.b16 %v368
        %v573 = vunpack.c.l.b16 %v369
        %v574 = vunpack.c.h.b16 %v369
        %v575 = vunpack.c.l.b16 %v370
        %v576 = vunpack.c.h.b16 %v370
        %v577 = vunpack.c.l.b16 %v371
        %v578 = vunpack.c.h.b16 %v371
        %v579 = vunpack.c.l.b16 %v372
        %v580 = vunpack.c.h.b16 %v372
        %v581 = vunpack.c.l.b16 %v373
        %v582 = vunpack.c.h.b16 %v373
        %v583 = vunpack.c.l.b16 %v374
        %v584 = vunpack.c.h.b16 %v374
        %v585 = vunpack.c.l.b16 %v375
        %v586 = vunpack.c.h.b16 %v375
        %v587 = vunpack.c.l.b16 %v376
        %v588 = vunpack.c.h.b16 %v376
        %v589 = vunpack.c.l.b16 %v377
        %v590 = vunpack.c.h.b16 %v377
        %v591 = vunpack.c.l.b16 %v378
        %v592 = vunpack.c.h.b16 %v378
        %v593 = vunpack.c.l.b16 %v379
        %v594 = vunpack.c.h.b16 %v379
        %v595 = vunpack.c.l.b16 %v380
        %v596 = vunpack.c.h.b16 %v380
        %v597 = vunpack.c.l.b16 %v381
        %v598 = vunpack.c.h.b16 %v381
        %v599 = vunpack.c.l.b16 %v382
        %v600 = vunpack.c.h.b16 %v382
        %v601 = vunpack.c.l.b16 %v383
        %v602 = vunpack.c.h.b16 %v383
        %v603 = vunpack.c.l.b16 %v384
        %v604 = vunpack.c.h.b16 %v384
        %v605 = vunpack.c.l.b16 %v385
        %v606 = vunpack.c.h.b16 %v385
        %v607 = vunpack.c.l.b16 %v386
        %v608 = vunpack.c.h.b16 %v386
        %v609 = vunpack.c.l.b16 %v387
        %v610 = vunpack.c.h.b16 %v387
        %v611 = vunpack.c.l.b16 %v388
        %v612 = vunpack.c.h.b16 %v388
        %v613 = vunpack.c.l.b16 %v389
        %v614 = vunpack.c.h.b16 %v389
        %v615 = vunpack.c.l.b16 %v390
        %v616 = vunpack.c.h.b16 %v390
        %v617 = vunpack.c.l.b16 %v391
        %v618 = vunpack.c.h.b16 %v391
        %v619 = vunpack.c.l.b16 %v392
        %v620 = vunpack.c.h.b16 %v392
        %v621 = vunpack.c.l.b16 %v393
        %v622 = vunpack.c.h.b16 %v393
        %v623 = vunpack.c.l.b16 %v394
        %v624 = vunpack.c.h.b16 %v394
        %v625 = vunpack.c.l.b16 %v395
        %v626 = vunpack.c.h.b16 %v395
        %v627 = vunpack.c.l.b16 %v396
        %v628 = vunpack.c.h.b16 %v396
        %v629 = vpack.c.b16 %v503, %v501
        %v630 = vpack.c.b16 %v504, %v502
        %v631 = vpack.c.b16 %v507, %v505
        %v632 = vpack.c.b16 %v508, %v506
        %v633 = vpack.c.b16 %v511, %v509
        %v634 = vpack.c.b16 %v512, %v510
        %v635 = vpack.c.b16 %v515, %v513
        %v636 = vpack.c.b16 %v516, %v514
        %v637 = vpack.c.b16 %v519, %v517
        %v638 = vpack.c.b16 %v520, %v518
        %v639 = vpack.c.b16 %v523, %v521
        %v640 = vpack.c.b16 %v524, %v522
        %v641 = vpack.c.b16 %v527, %v525
        %v642 = vpack.c.b16 %v528, %v526
        %v643 = vpack.c.b16 %v531, %v529
        %v644 = vpack.c.b16 %v532, %v530
        %v645 = vpack.c.b16 %v535, %v533
        %v646 = vpack.c.b16 %v536, %v534
        %v647 = vpack.c.b16 %v539, %v537
        %v648 = vpack.c.b16 %v540, %v538
        %v649 = vpack.c.b16 %v543, %v541
        %v650 = vpack.c.b16 %v544, %v542
        %v651 = vpack.c.b16 %v547, %v545
        %v652 = vpack.c.b16 %v548, %v546
        %v653 = vpack.c.b16 %v551, %v549
        %v654 = vpack.c.b16 %v552, %v550
        %v655 = vpack.c.b16 %v555, %v553
        %v656 = vpack.c.b16 %v556, %v554
        %v657 = vpack.c.b16 %v559, %v557
        %v658 = vpack.c.b16 %v560, %v558
        %v659 = vpack.c.b16 %v563, %v561
        %v660 = vpack.c.b16 %v564, %v562
        %v661 = vpack.c.b16 %v567, %v565
        %v662 = vpack.c.b16 %v568, %v566
        %v663 = vpack.c.b16 %v571, %v569
        %v664 = vpack.c.b16 %v572, %v570
        %v665 = vpack.c.b16 %v575, %v573
        %v666 = vpack.c.b16 %v576, %v574
        %v667 = vpack.c.b16 %v579, %v577
        %v668 = vpack.c.b16 %v580, %v578
        %v669 = vpack.c.b16 %v583, %v581
        %v670 = vpack.c.b16 %v584, %v582
        %v671 = vpack.c.b16 %v587, %v585
        %v672 = vpack.c.b16 %v588, %v586
        %v673 = vpack.c.b16 %v591, %v589
        %v674 = vpack.c.b16 %v592, %v590
        %v675 = vpack.c.b16 %v595, %v593
        %v676 = vpack.c.b16 %v596, %v594
        %v677 = vpack.c.b16 %v599, %v597
        %v678 = vpack.c.b16 %v600, %v598
        %v679 = vpack.c.b16 %v603, %v601
        %v680 = vpack.c.b16 %v604, %v602
        %v681 = vpack.c.b16 %v607, %v605
        %v682 = vpack.c.b16 %v608, %v606
        %v683 = vpack.c.b16 %v611, %v609
        %v684 = vpack.c.b16 %v612, %v610
        %v685 = vpack.c.b16 %v615, %v613
        %v686 = vpack.c.b16 %v616, %v614
        %v687 = vpack.c.b16 %v619, %v617
        %v688 = vpack.c.b16 %v620, %v618
        %v689 = vpack.c.b16 %v623, %v621
        %v690 = vpack.c.b16 %v624, %v622
        %v691 = vpack.c.b16 %v627, %v625
        %v692 = vpack.c.b16 %v628, %v626
        %757 = vmatprep.subr.bf16.mxu0 %v644
        %758 = vmatpush1.bf16.msra.mxu0 %v643
        %759 = vmatprep.subr.bf16.mxu0 %v642
        %760 = vmatpush1.bf16.msra.mxu0 %v641
        %761 = vmatprep.subr.bf16.mxu0 %v640
        %762 = vmatpush1.bf16.msra.mxu0 %v639
        %763 = vmatprep.subr.bf16.mxu0 %v638
        %764 = vmatpush1.bf16.msra.mxu0 %v637
        %765 = vmatprep.subr.bf16.mxu0 %v636
        %766 = vmatpush1.bf16.msra.mxu0 %v635
        %767 = vmatprep.subr.bf16.mxu0 %v634
        %768 = vmatpush1.bf16.msra.mxu0 %v633
        %769 = vmatprep.subr.bf16.mxu0 %v632
        %770 = vmatpush1.bf16.msra.mxu0 %v631
        %771 = vmatprep.subr.bf16.mxu0 %v630
        %772 = vmatpush1.bf16.msra.mxu0 %v629
        %773 = vmatprep.subr.bf16.mxu0 %v660
        %774 = vmatpush2.bf16.msra.mxu0 %v659
        %775 = vmatprep.subr.bf16.mxu0 %v658
        %776 = vmatpush2.bf16.msra.mxu0 %v657
        %777 = vmatprep.subr.bf16.mxu0 %v656
        %778 = vmatpush2.bf16.msra.mxu0 %v655
        %779 = vmatprep.subr.bf16.mxu0 %v654
        %780 = vmatpush2.bf16.msra.mxu0 %v653
        %781 = vmatprep.subr.bf16.mxu0 %v652
        %782 = vmatpush2.bf16.msra.mxu0 %v651
        %783 = vmatprep.subr.bf16.mxu0 %v650
        %784 = vmatpush2.bf16.msra.mxu0 %v649
        %785 = vmatprep.subr.bf16.mxu0 %v648
        %786 = vmatpush2.bf16.msra.mxu0 %v647
        %787 = vmatprep.subr.bf16.mxu0 %v646
        %788 = vmatpush2.bf16.msra.mxu0 %v645
        %789 = vmatprep.mubr.bf16.mxu0 %v422
        %790 = vmatmul.mubr.bf16.gmra.mxu0 %v421
        %v791 = vpop.f32.mrf.mxu0
        %v792 = vadd.f32 0.0, %v791
        %v793 = vpop.f32.mrf.mxu0
        %v794 = vadd.f32 0.0, %v793
        %v795 = vpop.f32.mrf.mxu0
        %v796 = vadd.f32 0.0, %v795
        %v797 = vpop.f32.mrf.mxu0
        %v798 = vadd.f32 0.0, %v797
        %799 = vmatprep.mubr.bf16.mxu0 %v426
        %800 = vmatmul.mubr.bf16.gmra.mxu0 %v425
        %v801 = vpop.f32.mrf.mxu0
        %v802 = vadd.f32 0.0, %v801
        %v803 = vpop.f32.mrf.mxu0
        %v804 = vadd.f32 0.0, %v803
        %v805 = vpop.f32.mrf.mxu0
        %v806 = vadd.f32 0.0, %v805
        %v807 = vpop.f32.mrf.mxu0
        %v808 = vadd.f32 0.0, %v807
        %809 = vdwg.mxu0
        %810 = vmatprep.subr.bf16.mxu0 %v676
        %811 = vmatpush1.bf16.msra.mxu0 %v675
        %812 = vmatprep.subr.bf16.mxu0 %v674
        %813 = vmatpush1.bf16.msra.mxu0 %v673
        %814 = vmatprep.subr.bf16.mxu0 %v672
        %815 = vmatpush1.bf16.msra.mxu0 %v671
        %816 = vmatprep.subr.bf16.mxu0 %v670
        %817 = vmatpush1.bf16.msra.mxu0 %v669
        %818 = vmatprep.subr.bf16.mxu0 %v668
        %819 = vmatpush1.bf16.msra.mxu0 %v667
        %820 = vmatprep.subr.bf16.mxu0 %v666
        %821 = vmatpush1.bf16.msra.mxu0 %v665
        %822 = vmatprep.subr.bf16.mxu0 %v664
        %823 = vmatpush1.bf16.msra.mxu0 %v663
        %824 = vmatprep.subr.bf16.mxu0 %v662
        %825 = vmatpush1.bf16.msra.mxu0 %v661
        %826 = vmatprep.subr.bf16.mxu0 %v692
        %827 = vmatpush2.bf16.msra.mxu0 %v691
        %828 = vmatprep.subr.bf16.mxu0 %v690
        %829 = vmatpush2.bf16.msra.mxu0 %v689
        %830 = vmatprep.subr.bf16.mxu0 %v688
        %831 = vmatpush2.bf16.msra.mxu0 %v687
        %832 = vmatprep.subr.bf16.mxu0 %v686
        %833 = vmatpush2.bf16.msra.mxu0 %v685
        %834 = vmatprep.subr.bf16.mxu0 %v684
        %835 = vmatpush2.bf16.msra.mxu0 %v683
        %836 = vmatprep.subr.bf16.mxu0 %v682
        %837 = vmatpush2.bf16.msra.mxu0 %v681
        %838 = vmatprep.subr.bf16.mxu0 %v680
        %839 = vmatpush2.bf16.msra.mxu0 %v679
        %840 = vmatprep.subr.bf16.mxu0 %v678
        %841 = vmatpush2.bf16.msra.mxu0 %v677
        %842 = vmatprep.mubr.bf16.mxu0 %v424
        %843 = vmatmul.mubr.bf16.gmra.mxu0 %v423
        %v844 = vpop.f32.mrf.mxu0
        %v845 = vadd.f32 %v792, %v844
        %v846 = vpop.f32.mrf.mxu0
        %v847 = vadd.f32 %v794, %v846
        %v848 = vpop.f32.mrf.mxu0
        %v849 = vadd.f32 %v796, %v848
        %v850 = vpop.f32.mrf.mxu0
        %v851 = vadd.f32 %v798, %v850
        %852 = vmatprep.mubr.bf16.mxu0 %v428
        %853 = vmatmul.mubr.bf16.gmra.mxu0 %v427
        %v854 = vpop.f32.mrf.mxu0
        %v855 = vadd.f32 %v802, %v854
        %v856 = vpop.f32.mrf.mxu0
        %v857 = vadd.f32 %v804, %v856
        %v858 = vpop.f32.mrf.mxu0
        %v859 = vadd.f32 %v806, %v858
        %v860 = vpop.f32.mrf.mxu0
        %v861 = vadd.f32 %v808, %v860
        %862 = vdwg.mxu0
        %v863 = vadd.f32 %v317, %v845
        %v864 = vadd.f32 %v318, %v847
        %v865 = vadd.f32 %v319, %v849
        %v866 = vadd.f32 %v320, %v851
        %v867 = vadd.f32 %v321, %v855
        %v868 = vadd.f32 %v322, %v857
        %v869 = vadd.f32 %v323, %v859
        %v870 = vadd.f32 %v324, %v861
        %871 = vst [vmem:[#allocation2] sm:$0xff] %v863
        %872 = vst [vmem:[#allocation2 + $0x8] sm:$0xff] %v864
        %873 = vst [vmem:[#allocation2 + $0x10] sm:$0xff] %v865
        %874 = vst [vmem:[#allocation2 + $0x18] sm:$0xff] %v866
        %875 = vst [vmem:[#allocation2 + $0x20] sm:$0xff] %v867
        %876 = vst [vmem:[#allocation2 + $0x28] sm:$0xff] %v868
        %877 = vst [vmem:[#allocation2 + $0x30] sm:$0xff] %v869
        %878 = vst [vmem:[#allocation2 + $0x38] sm:$0xff] %v870
        %p879 = scmp.eq.s32.totalorder %s21, 3
        // Predicated region
        $region60: #{nlayer_discriminator.15} parent=50 // pred_check
          %p880 = pneg %p879
        $region61: #{nlayer_discriminator.15} parent=50 // pred_check_branch
          %882 = sbr.rel (%p880) target = $region63
        $region62: #{nlayer_discriminator.15} parent=50 // pred_region
          %v883 = vld [vmem:[#allocation2] sm:$0xff]
          %v884 = vld [vmem:[#allocation2 + $0x8] sm:$0xff]
          %v885 = vld [vmem:[#allocation2 + $0x10] sm:$0xff]
          %v886 = vld [vmem:[#allocation2 + $0x18] sm:$0xff]
          %v887 = vld [vmem:[#allocation2 + $0x20] sm:$0xff]
          %v888 = vld [vmem:[#allocation2 + $0x28] sm:$0xff]
          %v889 = vld [vmem:[#allocation2 + $0x30] sm:$0xff]
          %v890 = vld [vmem:[#allocation2 + $0x38] sm:$0xff]
          %v891 = vld [vmem:[%s291] sm:$0x3]
          %v893 = vlaneseq
          %v894 = vshrl.u32 %v893, 7
          %v895 = vsub.s32 0, %v894
          %v896 = vrot.slane %v891, %v895
          %v897 = vlaneseq
          %v898 = vshrl.u32 %v897, 7
          %v899 = vsub.s32 1, %v898
          %v900 = vrot.slane %v891, %v899
          %v903 = vadd.f32 %v883, %v896
          %v904 = vadd.f32 %v884, %v900
          %v905 = vadd.f32 %v885, %v896
          %v906 = vadd.f32 %v886, %v900
          %v907 = vadd.f32 %v887, %v896
          %v908 = vadd.f32 %v888, %v900
          %v909 = vadd.f32 %v889, %v896
          %v910 = vadd.f32 %v890, %v900
          %v911 = vpack.c.bf16 %v905, %v903
          %v912 = vpack.c.bf16 %v906, %v904
          %v913 = vpack.c.bf16 %v909, %v907
          %v914 = vpack.c.bf16 %v910, %v908
          %v919 = vunpack.c.l.b16 %v911
          %v920 = vunpack.c.l.b16 %v912
          %v921 = vunpack.c.h.b16 %v911
          %v922 = vunpack.c.h.b16 %v912
          %v923 = vunpack.c.l.b16 %v913
          %v924 = vunpack.c.l.b16 %v914
          %v925 = vunpack.c.h.b16 %v913
          %v926 = vunpack.c.h.b16 %v914
          %v927 = vpack.c.b16 %v920, %v919
          %v928 = vpack.c.b16 %v922, %v921
          %v929 = vpack.c.b16 %v924, %v923
          %v930 = vpack.c.b16 %v926, %v925
          %935 = vst [vmem:[%s302] sm:$0xff] %v927
          %936 = vst [vmem:[%s302 + $0x8] sm:$0xff] %v928
          %937 = vst [vmem:[%s302 + $0x10] sm:$0xff] %v929
          %938 = vst [vmem:[%s302 + $0x18] sm:$0xff] %v930
        $region63: #{nlayer_discriminator.15} parent=50 // pred_fallthru
          _
        %s939 = smul.u32 4, %s19
        %s940 = smul.u32 2, %s20
        %p941 = scmp.lt.s32.totalorder %s939, 3
        %s942 = scalar_select %p941, %s939, 3
        %p943 = scmp.lt.s32.totalorder %s940, 1
        %s944 = scalar_select %p943, %s940, 1
        %s945 = smul.addr %s942, 2
        %s946 = sadd.s32 %s944, %s945
        %s947 = smul.addr %s946, 4
        %s948 = scalar_lea.vmem %s3, %s947
        // Predicated region
        $region64: #{nlayer_discriminator.15} parent=50 // pred_check
          %p949 = pneg %p135
        $region65: #{nlayer_discriminator.15} parent=50 // pred_check_branch
          %951 = sbr.rel (%p949) target = $region67
        $region66: #{nlayer_discriminator.15} parent=50 // pred_region
          %s952 = smul.u32 4, %s19
          %s953 = smul.u32 2, %s20
        $region67: #{nlayer_discriminator.15} parent=50 // pred_fallthru
          _
        // Predicated region
        $region68: #{nlayer_discriminator.15} parent=50 // pred_check
          %p954 = pneg %p135
        $region69: #{nlayer_discriminator.15} parent=50 // pred_check_branch
          %956 = sbr.rel (%p954) target = $region71
        $region70: #{nlayer_discriminator.15} parent=50 // pred_region
          %s957 = smul.u32 4, %s19
          %s958 = smul.u32 2, %s20
          %p959 = scmp.lt.s32.totalorder %s957, 3
          %s960 = scalar_select %p959, %s957, 3
          %p961 = scmp.lt.s32.totalorder %s958, 1
          %s962 = scalar_select %p961, %s958, 1
          %s963 = smul.addr %s960, 2
          %s964 = sadd.s32 %s962, %s963
          %s965 = smul.addr %s964, 4
          %s966 = scalar_lea.vmem %s3, %s965
        $region71: #{nlayer_discriminator.15} parent=50 // pred_fallthru
          _
      $region51: #{nlayer_discriminator.15} parent=5 // pred_fallthru
        _
      %p967 = scmp.le.s32.totalorder 2, %s9
      // Predicated region
      $region72: #{nlayer_discriminator.15} parent=5 // pred_check
        %p968 = pneg %p967
      $region73: #{nlayer_discriminator.15} parent=5 // pred_check_branch
        %970 = sbr.rel (%p968) target = $region75
      $region74: #{nlayer_discriminator.15} parent=5 // pred_region
        %s971 = ssub.s32 %s9, 2
      $region75: #{nlayer_discriminator.15} parent=5 // pred_fallthru
        _
    $region6: #{nlayer_discriminator.15} parent=1 // loop_footer
      %s13 = sadd.s32 1, %s9
    $region7: #{nlayer_discriminator.15} parent=1 // loop_footer_branch
      %8 = sbr.rel target = $region3
    $region8: #{nlayer_discriminator.15} parent=1 // loop_exit
      _

// kernel: nlayer_discriminator.17
$region0: #{nlayer_discriminator.17}
  #allocation0 [shape = 'u32[]', space=smem, size = 0x4, offset = 0x4, fixed_abs, tag = 'smem constant byte address 0x4 - core index']
  #allocation1 [shape = 'u32[144,128]{1,0:T(1,128)}', space=vmem, size = 0x12000, scoped, tag = 'internal scratch']
  %s0 = inlined_call_operand.vmem [shape: bf16[32,256], index: 0, kind: input, shape index: {}]
  %s1 = inlined_call_operand.vmem [shape: f32[1,256], index: 1, kind: input, shape index: {}]
  %s2 = inlined_call_operand.vmem [shape: f32[1,256], index: 2, kind: input, shape index: {}]
  %s3 = inlined_call_operand.vmem [shape: bf16[32,256], index: 3, kind: output, shape index: {}]
  %s4 = sld [smem:[#allocation0]]
  $region22: #{nlayer_discriminator.17} parent=0
    _
  %s6 = ssub.s32 1, %s4
  %s7 = scalar_select 0, %s6, %s4
  // Predicated region
  $region2: #{nlayer_discriminator.17} parent=0 // pred_check
    _
  $region3: #{nlayer_discriminator.17} parent=0 // pred_check_branch
    %9 = sbr.rel (0) target = $region5
  $region4: #{nlayer_discriminator.17} parent=0 // pred_region
    _
  $region5: #{nlayer_discriminator.17} parent=0 // pred_fallthru
    _
  // Predicated region
  $region6: #{nlayer_discriminator.17} parent=0 // pred_check
    _
  $region7: #{nlayer_discriminator.17} parent=0 // pred_check_branch
    %11 = sbr.rel (0) target = $region9
  $region8: #{nlayer_discriminator.17} parent=0 // pred_region
    _
  $region9: #{nlayer_discriminator.17} parent=0 // pred_fallthru
    _
  // Predicated region
  $region10: #{nlayer_discriminator.17} parent=0 // pred_check
    _
  $region11: #{nlayer_discriminator.17} parent=0 // pred_check_branch
    %13 = sbr.rel (0) target = $region13
  $region12: #{nlayer_discriminator.17} parent=0 // pred_region
    _
  $region13: #{nlayer_discriminator.17} parent=0 // pred_fallthru
    _
  %v14 = vld [vmem:[%s0] sm:$0xff]
  %v15 = vld [vmem:[%s0 + $0x8] sm:$0xff]
  %v16 = vld [vmem:[%s0 + $0x10] sm:$0xff]
  %v17 = vld [vmem:[%s0 + $0x18] sm:$0xff]
  %v18 = vunpack.c.l.bf16 %v14
  %v19 = vunpack.c.h.bf16 %v14
  %v20 = vunpack.c.l.bf16 %v15
  %v21 = vunpack.c.h.bf16 %v15
  %v22 = vunpack.c.l.bf16 %v16
  %v23 = vunpack.c.h.bf16 %v16
  %v24 = vunpack.c.l.bf16 %v17
  %v25 = vunpack.c.h.bf16 %v17
  %v26 = vld [vmem:[%s1] sm:$0x3]
  %v28 = vlaneseq
  %v29 = vshrl.u32 %v28, 7
  %v30 = vsub.s32 0, %v29
  %v31 = vrot.slane %v26, %v30
  %v32 = vlaneseq
  %v33 = vshrl.u32 %v32, 7
  %v34 = vsub.s32 1, %v33
  %v35 = vrot.slane %v26, %v34
  %v38 = vmul.f32 %v18, %v31
  %v39 = vmul.f32 %v19, %v35
  %v40 = vmul.f32 %v20, %v31
  %v41 = vmul.f32 %v21, %v35
  %v42 = vmul.f32 %v22, %v31
  %v43 = vmul.f32 %v23, %v35
  %v44 = vmul.f32 %v24, %v31
  %v45 = vmul.f32 %v25, %v35
  %v46 = vld [vmem:[%s2] sm:$0x3]
  %v48 = vlaneseq
  %v49 = vshrl.u32 %v48, 7
  %v50 = vsub.s32 0, %v49
  %v51 = vrot.slane %v46, %v50
  %v52 = vlaneseq
  %v53 = vshrl.u32 %v52, 7
  %v54 = vsub.s32 1, %v53
  %v55 = vrot.slane %v46, %v54
  %v58 = vadd.f32 %v38, %v51
  %v59 = vadd.f32 %v39, %v55
  %v60 = vadd.f32 %v40, %v51
  %v61 = vadd.f32 %v41, %v55
  %v62 = vadd.f32 %v42, %v51
  %v63 = vadd.f32 %v43, %v55
  %v64 = vadd.f32 %v44, %v51
  %v65 = vadd.f32 %v45, %v55
  %vm66 = vcmp.ge.f32.partialorder %v58, 0.0
  %vm67 = vcmp.ge.f32.partialorder %v59, 0.0
  %vm68 = vcmp.ge.f32.partialorder %v60, 0.0
  %vm69 = vcmp.ge.f32.partialorder %v61, 0.0
  %vm70 = vcmp.ge.f32.partialorder %v62, 0.0
  %vm71 = vcmp.ge.f32.partialorder %v63, 0.0
  %vm72 = vcmp.ge.f32.partialorder %v64, 0.0
  %vm73 = vcmp.ge.f32.partialorder %v65, 0.0
  %v74 = vmul.f32 %v58, 0.2
  %v75 = vmul.f32 %v59, 0.2
  %v76 = vmul.f32 %v60, 0.2
  %v77 = vmul.f32 %v61, 0.2
  %v78 = vmul.f32 %v62, 0.2
  %v79 = vmul.f32 %v63, 0.2
  %v80 = vmul.f32 %v64, 0.2
  %v81 = vmul.f32 %v65, 0.2
  %v82 = vsel %vm66, %v58, %v74
  %v83 = vsel %vm67, %v59, %v75
  %v84 = vsel %vm68, %v60, %v76
  %v85 = vsel %vm69, %v61, %v77
  %v86 = vsel %vm70, %v62, %v78
  %v87 = vsel %vm71, %v63, %v79
  %v88 = vsel %vm72, %v64, %v80
  %v89 = vsel %vm73, %v65, %v81
  %v90 = vpack.c.bf16 %v84, %v82
  %v91 = vpack.c.bf16 %v85, %v83
  %v92 = vpack.c.bf16 %v88, %v86
  %v93 = vpack.c.bf16 %v89, %v87
  %v98 = vunpack.c.l.b16 %v90
  %v99 = vunpack.c.l.b16 %v91
  %v100 = vunpack.c.h.b16 %v90
  %v101 = vunpack.c.h.b16 %v91
  %v102 = vunpack.c.l.b16 %v92
  %v103 = vunpack.c.l.b16 %v93
  %v104 = vunpack.c.h.b16 %v92
  %v105 = vunpack.c.h.b16 %v93
  %v106 = vpack.c.b16 %v99, %v98
  %v107 = vpack.c.b16 %v101, %v100
  %v108 = vpack.c.b16 %v103, %v102
  %v109 = vpack.c.b16 %v105, %v104
  %114 = vst [vmem:[%s3] sm:$0xff] %v106
  %115 = vst [vmem:[%s3 + $0x8] sm:$0xff] %v107
  %116 = vst [vmem:[%s3 + $0x10] sm:$0xff] %v108
  %117 = vst [vmem:[%s3 + $0x18] sm:$0xff] %v109
  // Predicated region
  $region14: #{nlayer_discriminator.17} parent=0 // pred_check
    _
  $region15: #{nlayer_discriminator.17} parent=0 // pred_check_branch
    %119 = sbr.rel (0) target = $region17
  $region16: #{nlayer_discriminator.17} parent=0 // pred_region
    _
  $region17: #{nlayer_discriminator.17} parent=0 // pred_fallthru
    _
  // Predicated region
  $region18: #{nlayer_discriminator.17} parent=0 // pred_check
    _
  $region19: #{nlayer_discriminator.17} parent=0 // pred_check_branch
    %121 = sbr.rel (0) target = $region21
  $region20: #{nlayer_discriminator.17} parent=0 // pred_region
    _
  $region21: #{nlayer_discriminator.17} parent=0 // pred_fallthru
    _

// kernel: nlayer_discriminator.19
$region0: #{nlayer_discriminator.19}
  #allocation0 [shape = 'u32[]', space=smem, size = 0x4, offset = 0x4, fixed_abs, tag = 'smem constant byte address 0x4 - core index']
  #allocation1 [shape = 'u32[144,128]{1,0:T(1,128)}', space=vmem, size = 0x12000, scoped, tag = 'internal scratch']
  %s0 = inlined_call_operand.vmem [shape: bf16[8,512], index: 0, kind: input, shape index: {}]
  %s1 = inlined_call_operand.vmem [shape: f32[1,512], index: 1, kind: output, shape index: {0}]
  %s2 = inlined_call_operand.vmem [shape: f32[1,512], index: 2, kind: output, shape index: {1}]
  %3 = xla_tuple %s1, %s2
  %s4 = sld [smem:[#allocation0]]
  $region26: #{nlayer_discriminator.19} parent=0
    _
  %s6 = ssub.s32 1, %s4
  %s7 = scalar_select 0, %s6, %s4
  // Predicated region
  $region2: #{nlayer_discriminator.19} parent=0 // pred_check
    _
  $region3: #{nlayer_discriminator.19} parent=0 // pred_check_branch
    %9 = sbr.rel (0) target = $region5
  $region4: #{nlayer_discriminator.19} parent=0 // pred_region
    _
  $region5: #{nlayer_discriminator.19} parent=0 // pred_fallthru
    _
  %p10 = scmp.eq.s32.totalorder 0, 0
  // Predicated region
  $region6: #{nlayer_discriminator.19} parent=0 // pred_check
    %p11 = pneg %p10
  $region7: #{nlayer_discriminator.19} parent=0 // pred_check_branch
    %13 = sbr.rel (%p11) target = $region9
  $region8: #{nlayer_discriminator.19} parent=0 // pred_region
    %v14 = vlaneseq
    %vm15 = vcmp.ge.s32.totalorder %v14, 0
    %vm16 = vcmp.lt.s32.totalorder %v14, 512
    %vm17 = vmand %vm15, %vm16
    %18 = vst.msk [vmem:[%s1] sm:$0xf] %vm17, 0.0
    %19 = vst.msk [vmem:[%s2] sm:$0xf] %vm17, 0.0
  $region9: #{nlayer_discriminator.19} parent=0 // pred_fallthru
    _
  %v20 = vld [vmem:[%s0] sm:$0xff]
  %v21 = vld [vmem:[%s0 + $0x8] sm:$0xff]
  %v22 = vunpack.c.l.bf16 %v20
  %v23 = vunpack.c.h.bf16 %v20
  %v24 = vunpack.c.l.bf16 %v21
  %v25 = vunpack.c.h.bf16 %v21
  %v26 = vld [vmem:[%s1] sm:$0xf]
  %v27 = vrot.slane %v22, 4
  %v28 = vadd.f32 %v22, %v27
  %v29 = vrot.slane %v28, 2
  %v30 = vadd.f32 %v28, %v29
  %v31 = vrot.slane %v30, 1
  %v32 = vadd.f32 %v30, %v31
  %v33 = vrot.slane %v23, 4
  %v34 = vadd.f32 %v23, %v33
  %v35 = vrot.slane %v34, 2
  %v36 = vadd.f32 %v34, %v35
  %v37 = vrot.slane %v36, 1
  %v38 = vadd.f32 %v36, %v37
  %v39 = vrot.slane %v24, 4
  %v40 = vadd.f32 %v24, %v39
  %v41 = vrot.slane %v40, 2
  %v42 = vadd.f32 %v40, %v41
  %v43 = vrot.slane %v42, 1
  %v44 = vadd.f32 %v42, %v43
  %v45 = vrot.slane %v25, 4
  %v46 = vadd.f32 %v25, %v45
  %v47 = vrot.slane %v46, 2
  %v48 = vadd.f32 %v46, %v47
  %v49 = vrot.slane %v48, 1
  %v50 = vadd.f32 %v48, %v49
  %v55 = vcombine.low %v32, %v38
  %v56 = vcombine.low %v44, %v50
  %v58 = vunpack.c.l.s4 1966171168
  %v59 = vunpack.c.0.s8 %v58
  %v60 = vlaneseq
  %v61 = vshrl.u32 %v60, 7
  %v62 = vsub.s32 %v59, %v61
  %v63 = vrot.slane %v55, %v62
  %v65 = vunpack.c.l.s4 1966171168
  %v66 = vunpack.c.0.s8 %v65
  %v67 = vlaneseq
  %v68 = vshrl.u32 %v67, 7
  %v69 = vsub.s32 %v66, %v68
  %v70 = vrot.slane %v56, %v69
  %v71 = vcombine.low %v63, %v70
  %v73 = vunpack.c.l.s4 1966171168
  %v74 = vunpack.c.0.s8 %v73
  %v75 = vlaneseq
  %v76 = vshrl.u32 %v75, 7
  %v77 = vsub.s32 %v74, %v76
  %v78 = vrot.slane %v71, %v77
  %v80 = vadd.f32 %v26, %v78
  %v81 = vlaneseq
  %vm82 = vcmp.ge.s32.totalorder %v81, 0
  %vm83 = vcmp.lt.s32.totalorder %v81, 512
  %vm84 = vmand %vm82, %vm83
  %85 = vst.msk [vmem:[%s1] sm:$0xf] %vm84, %v80
  %v86 = vld [vmem:[%s2] sm:$0xf]
  %v87 = vmul.f32 %v22, %v22
  %v88 = vmul.f32 %v23, %v23
  %v89 = vmul.f32 %v24, %v24
  %v90 = vmul.f32 %v25, %v25
  %v91 = vrot.slane %v87, 4
  %v92 = vadd.f32 %v87, %v91
  %v93 = vrot.slane %v92, 2
  %v94 = vadd.f32 %v92, %v93
  %v95 = vrot.slane %v94, 1
  %v96 = vadd.f32 %v94, %v95
  %v97 = vrot.slane %v88, 4
  %v98 = vadd.f32 %v88, %v97
  %v99 = vrot.slane %v98, 2
  %v100 = vadd.f32 %v98, %v99
  %v101 = vrot.slane %v100, 1
  %v102 = vadd.f32 %v100, %v101
  %v103 = vrot.slane %v89, 4
  %v104 = vadd.f32 %v89, %v103
  %v105 = vrot.slane %v104, 2
  %v106 = vadd.f32 %v104, %v105
  %v107 = vrot.slane %v106, 1
  %v108 = vadd.f32 %v106, %v107
  %v109 = vrot.slane %v90, 4
  %v110 = vadd.f32 %v90, %v109
  %v111 = vrot.slane %v110, 2
  %v112 = vadd.f32 %v110, %v111
  %v113 = vrot.slane %v112, 1
  %v114 = vadd.f32 %v112, %v113
  %v119 = vcombine.low %v96, %v102
  %v120 = vcombine.low %v108, %v114
  %v122 = vunpack.c.l.s4 1966171168
  %v123 = vunpack.c.0.s8 %v122
  %v124 = vlaneseq
  %v125 = vshrl.u32 %v124, 7
  %v126 = vsub.s32 %v123, %v125
  %v127 = vrot.slane %v119, %v126
  %v129 = vunpack.c.l.s4 1966171168
  %v130 = vunpack.c.0.s8 %v129
  %v131 = vlaneseq
  %v132 = vshrl.u32 %v131, 7
  %v133 = vsub.s32 %v130, %v132
  %v134 = vrot.slane %v120, %v133
  %v135 = vcombine.low %v127, %v134
  %v137 = vunpack.c.l.s4 1966171168
  %v138 = vunpack.c.0.s8 %v137
  %v139 = vlaneseq
  %v140 = vshrl.u32 %v139, 7
  %v141 = vsub.s32 %v138, %v140
  %v142 = vrot.slane %v135, %v141
  %v144 = vadd.f32 %v86, %v142
  %145 = vst.msk [vmem:[%s2] sm:$0xf] %vm84, %v144
  // Predicated region
  $region10: #{nlayer_discriminator.19} parent=0 // pred_check
    _
  $region11: #{nlayer_discriminator.19} parent=0 // pred_check_branch
    %147 = sbr.rel (0) target = $region13
  $region12: #{nlayer_discriminator.19} parent=0 // pred_region
    _
  $region13: #{nlayer_discriminator.19} parent=0 // pred_fallthru
    _
  // Predicated region
  $region14: #{nlayer_discriminator.19} parent=0 // pred_check
    _
  $region15: #{nlayer_discriminator.19} parent=0 // pred_check_branch
    %149 = sbr.rel (0) target = $region17
  $region16: #{nlayer_discriminator.19} parent=0 // pred_region
    _
  $region17: #{nlayer_discriminator.19} parent=0 // pred_fallthru
    _
  // Predicated region
  $region18: #{nlayer_discriminator.19} parent=0 // pred_check
    _
  $region19: #{nlayer_discriminator.19} parent=0 // pred_check_branch
    %151 = sbr.rel (0) target = $region21
  $region20: #{nlayer_discriminator.19} parent=0 // pred_region
    _
  $region21: #{nlayer_discriminator.19} parent=0 // pred_fallthru
    _
  // Predicated region
  $region22: #{nlayer_discriminator.19} parent=0 // pred_check
    _
  $region23: #{nlayer_discriminator.19} parent=0 // pred_check_branch
    %153 = sbr.rel (0) target = $region25
  $region24: #{nlayer_discriminator.19} parent=0 // pred_region
    _
  $region25: #{nlayer_discriminator.19} parent=0 // pred_fallthru
    _

// kernel: nlayer_discriminator.20
$region0: #{nlayer_discriminator.20}
  #allocation0 [shape = 'u32[]', space=smem, size = 0x4, offset = 0x4, fixed_abs, tag = 'smem constant byte address 0x4 - core index']
  #allocation1 [shape = 'u32[144,128]{1,0:T(1,128)}', space=vmem, size = 0x12000, scoped, tag = 'internal scratch']
  %s0 = inlined_call_operand.vmem [shape: bf16[8,512], index: 0, kind: input, shape index: {}]
  %s1 = inlined_call_operand.vmem [shape: f32[1,512], index: 1, kind: input, shape index: {}]
  %s2 = inlined_call_operand.vmem [shape: f32[1,512], index: 2, kind: input, shape index: {}]
  %s3 = inlined_call_operand.vmem [shape: bf16[8,512], index: 3, kind: output, shape index: {}]
  %s4 = sld [smem:[#allocation0]]
  $region22: #{nlayer_discriminator.20} parent=0
    _
  %s6 = ssub.s32 1, %s4
  %s7 = scalar_select 0, %s6, %s4
  // Predicated region
  $region2: #{nlayer_discriminator.20} parent=0 // pred_check
    _
  $region3: #{nlayer_discriminator.20} parent=0 // pred_check_branch
    %9 = sbr.rel (0) target = $region5
  $region4: #{nlayer_discriminator.20} parent=0 // pred_region
    _
  $region5: #{nlayer_discriminator.20} parent=0 // pred_fallthru
    _
  // Predicated region
  $region6: #{nlayer_discriminator.20} parent=0 // pred_check
    _
  $region7: #{nlayer_discriminator.20} parent=0 // pred_check_branch
    %11 = sbr.rel (0) target = $region9
  $region8: #{nlayer_discriminator.20} parent=0 // pred_region
    _
  $region9: #{nlayer_discriminator.20} parent=0 // pred_fallthru
    _
  // Predicated region
  $region10: #{nlayer_discriminator.20} parent=0 // pred_check
    _
  $region11: #{nlayer_discriminator.20} parent=0 // pred_check_branch
    %13 = sbr.rel (0) target = $region13
  $region12: #{nlayer_discriminator.20} parent=0 // pred_region
    _
  $region13: #{nlayer_discriminator.20} parent=0 // pred_fallthru
    _
  %v14 = vld [vmem:[%s0] sm:$0xff]
  %v15 = vld [vmem:[%s0 + $0x8] sm:$0xff]
  %v16 = vunpack.c.l.bf16 %v14
  %v17 = vunpack.c.h.bf16 %v14
  %v18 = vunpack.c.l.bf16 %v15
  %v19 = vunpack.c.h.bf16 %v15
  %v20 = vld [vmem:[%s1] sm:$0xf]
  %v22 = vlaneseq
  %v23 = vshrl.u32 %v22, 7
  %v24 = vsub.s32 0, %v23
  %v25 = vrot.slane %v20, %v24
  %v26 = vlaneseq
  %v27 = vshrl.u32 %v26, 7
  %v28 = vsub.s32 1, %v27
  %v29 = vrot.slane %v20, %v28
  %v30 = vlaneseq
  %v31 = vshrl.u32 %v30, 7
  %v32 = vsub.s32 2, %v31
  %v33 = vrot.slane %v20, %v32
  %v34 = vlaneseq
  %v35 = vshrl.u32 %v34, 7
  %v36 = vsub.s32 3, %v35
  %v37 = vrot.slane %v20, %v36
  %v42 = vmul.f32 %v16, %v25
  %v43 = vmul.f32 %v17, %v29
  %v44 = vmul.f32 %v18, %v33
  %v45 = vmul.f32 %v19, %v37
  %v46 = vld [vmem:[%s2] sm:$0xf]
  %v48 = vlaneseq
  %v49 = vshrl.u32 %v48, 7
  %v50 = vsub.s32 0, %v49
  %v51 = vrot.slane %v46, %v50
  %v52 = vlaneseq
  %v53 = vshrl.u32 %v52, 7
  %v54 = vsub.s32 1, %v53
  %v55 = vrot.slane %v46, %v54
  %v56 = vlaneseq
  %v57 = vshrl.u32 %v56, 7
  %v58 = vsub.s32 2, %v57
  %v59 = vrot.slane %v46, %v58
  %v60 = vlaneseq
  %v61 = vshrl.u32 %v60, 7
  %v62 = vsub.s32 3, %v61
  %v63 = vrot.slane %v46, %v62
  %v68 = vadd.f32 %v42, %v51
  %v69 = vadd.f32 %v43, %v55
  %v70 = vadd.f32 %v44, %v59
  %v71 = vadd.f32 %v45, %v63
  %vm72 = vcmp.ge.f32.partialorder %v68, 0.0
  %vm73 = vcmp.ge.f32.partialorder %v69, 0.0
  %vm74 = vcmp.ge.f32.partialorder %v70, 0.0
  %vm75 = vcmp.ge.f32.partialorder %v71, 0.0
  %v76 = vmul.f32 %v68, 0.2
  %v77 = vmul.f32 %v69, 0.2
  %v78 = vmul.f32 %v70, 0.2
  %v79 = vmul.f32 %v71, 0.2
  %v80 = vsel %vm72, %v68, %v76
  %v81 = vsel %vm73, %v69, %v77
  %v82 = vsel %vm74, %v70, %v78
  %v83 = vsel %vm75, %v71, %v79
  %v84 = vpack.c.bf16 %v80, %v80
  %v85 = vpack.c.bf16 %v81, %v81
  %v86 = vpack.c.bf16 %v82, %v82
  %v87 = vpack.c.bf16 %v83, %v83
  %v92 = vunpack.c.l.b16 %v84
  %v93 = vunpack.c.l.b16 %v85
  %v94 = vunpack.c.l.b16 %v86
  %v95 = vunpack.c.l.b16 %v87
  %v96 = vpack.c.b16 %v93, %v92
  %v97 = vpack.c.b16 %v95, %v94
  %100 = vst [vmem:[%s3] sm:$0xff] %v96
  %101 = vst [vmem:[%s3 + $0x8] sm:$0xff] %v97
  // Predicated region
  $region14: #{nlayer_discriminator.20} parent=0 // pred_check
    _
  $region15: #{nlayer_discriminator.20} parent=0 // pred_check_branch
    %103 = sbr.rel (0) target = $region17
  $region16: #{nlayer_discriminator.20} parent=0 // pred_region
    _
  $region17: #{nlayer_discriminator.20} parent=0 // pred_fallthru
    _
  // Predicated region
  $region18: #{nlayer_discriminator.20} parent=0 // pred_check
    _
  $region19: #{nlayer_discriminator.20} parent=0 // pred_check_branch
    %105 = sbr.rel (0) target = $region21
  $region20: #{nlayer_discriminator.20} parent=0 // pred_region
    _
  $region21: #{nlayer_discriminator.20} parent=0 // pred_fallthru
    _

// kernel: nlayer_discriminator.18
$region0: #{nlayer_discriminator.18}
  #allocation0 [shape = 'u32[]', space=smem, size = 0x4, offset = 0x4, fixed_abs, tag = 'smem constant byte address 0x4 - core index']
  #allocation1 [shape = 'u32[144,128]{1,0:T(1,128)}', space=vmem, size = 0x12000, scoped, tag = 'internal scratch']
  #allocation2 [shape = 'f32[8,256]{1,0:T(8,128)}', space=vmem, size = 0x2000, scoped, tag = 'scratch operand']
  %s0 = inlined_call_operand.vmem [shape: bf16[8,4096], index: 0, kind: input, shape index: {}]
  %s1 = inlined_call_operand.vmem [shape: bf16[4096,512], index: 1, kind: input, shape index: {}]
  %s2 = inlined_call_operand.vmem [shape: f32[1,512], index: 2, kind: input, shape index: {}]
  %s3 = inlined_call_operand.vmem [shape: bf16[8,512], index: 3, kind: output, shape index: {}]
  %s4 = sld [smem:[#allocation0]]
  $region91: #{nlayer_discriminator.18} parent=0
    _
  %s6 = ssub.s32 1, %s4
  %s7 = scalar_select 0, %s6, %s4
  $region1: #{nlayer_discriminator.18} parent=0
    #allocation3 [shape = 'u8[524288]{0}', space=vmem, size = 0x80000, scoped, tag = 'input window, operand 1']
    loop: start=0, step=1, limit=18
    $region2: #{nlayer_discriminator.18} parent=1 // loop_pre_header
      _
    $region3: #{nlayer_discriminator.18} parent=1 // loop_header
      %s9 = sphi 0, %s13
      %p10 = scmp.ge.s32.totalorder %s9, 18
      %s16 = sphi 0, %s35
      %s17 = sphi 0, %s31
      %s18 = sphi 0, %s27
      %s19 = sphi 0, %s16
      %s20 = sphi 0, %s17
      %s21 = sphi 0, %s18
      %s22 = sphi 0, %s19
      %s23 = sphi 0, %s20
      %s24 = sphi 0, %s21
      %s40 = sphi 0, %s42
      %s43 = sphi 0, %s40
      %s44 = sphi 0, %s43
      %s60 = sphi 0, %s44
      %s68 = sphi 0, %s70
      %s71 = sphi 0, %s68
      %s72 = sphi 0, %s71
      %s88 = sphi 0, %s72
      %s94 = sphi 0, %s96
      %s97 = sphi 0, %s94
      %s98 = sphi 0, %s97
      %s114 = sphi 0, %s98
      %s122 = sphi 0, %s124
      %s125 = sphi 0, %s122
      %s126 = sphi 0, %s125
      %s142 = sphi 0, %s126
    $region4: #{nlayer_discriminator.18} parent=1 // loop_header_branch
      %12 = sbr.rel (%p10) target = $region8
    $region5: #{nlayer_discriminator.18} parent=1 // loop_body
      %s14 = ssub.s32 %s9, 1
      %s15 = ssub.s32 %s9, 2
      %s25 = sadd.s32 1, %s18
      %p26 = scmp.ge.s32.totalorder %s25, 8
      %s27 = scalar_select %p26, 0, %s25
      %s28 = sadd.s32 1, %s17
      %s29 = scalar_select %p26, %s28, %s17
      %p30 = scmp.ge.s32.totalorder %s29, 2
      %s31 = scalar_select %p30, 0, %s29
      %s32 = sadd.s32 1, %s16
      %s33 = scalar_select %p30, %s32, %s16
      %p34 = scmp.ge.s32.totalorder %s33, 1
      %s35 = scalar_select %p34, 0, %s33
      %s36 = ssub.s32 %s16, %s35
      %s37 = ssub.s32 %s18, %s27
      %s38 = sor.u32 %s36, %s37
      %p39 = scmp.eq.s32.totalorder %s38, 0
      %s41 = sadd.s32 %s40, 1
      %s42 = scalar_select %p39, %s40, %s41
      %p45 = pneg %p39
      %p46 = scmp.eq.s32.totalorder %s9, 15
      %p47 = por %p45, %p46
      %p48 = scmp.ne.s32.totalorder %s40, %s43
      %p49 = scmp.eq.s32.totalorder %s9, 0
      %p50 = por %p48, %p49
      %p51 = scmp.ne.s32.totalorder %s40, %s43
      %p52 = scmp.eq.s32.totalorder %s14, 15
      %p53 = por %p51, %p52
      %p54 = scmp.ne.s32.totalorder %s43, %s44
      %p55 = scmp.eq.s32.totalorder %s14, 0
      %p56 = por %p54, %p55
      %p57 = scmp.ne.s32.totalorder %s43, %s44
      %p58 = scmp.eq.s32.totalorder %s15, 15
      %p59 = por %p57, %p58
      %p61 = scmp.ne.s32.totalorder %s44, %s60
      %p62 = scmp.eq.s32.totalorder %s15, 0
      %p63 = por %p61, %p62
      %s64 = ssub.s32 %s18, %s27
      %s65 = ssub.s32 %s17, %s31
      %s66 = sor.u32 %s64, %s65
      %p67 = scmp.eq.s32.totalorder %s66, 0
      %s69 = sadd.s32 %s68, 1
      %s70 = scalar_select %p67, %s68, %s69
      %p73 = pneg %p67
      %p74 = scmp.eq.s32.totalorder %s9, 15
      %p75 = por %p73, %p74
      %p76 = scmp.ne.s32.totalorder %s68, %s71
      %p77 = scmp.eq.s32.totalorder %s9, 0
      %p78 = por %p76, %p77
      %p79 = scmp.ne.s32.totalorder %s68, %s71
      %p80 = scmp.eq.s32.totalorder %s14, 15
      %p81 = por %p79, %p80
      %p82 = scmp.ne.s32.totalorder %s71, %s72
      %p83 = scmp.eq.s32.totalorder %s14, 0
      %p84 = por %p82, %p83
      %p85 = scmp.ne.s32.totalorder %s71, %s72
      %p86 = scmp.eq.s32.totalorder %s15, 15
      %p87 = por %p85, %p86
      %p89 = scmp.ne.s32.totalorder %s72, %s88
      %p90 = scmp.eq.s32.totalorder %s15, 0
      %p91 = por %p89, %p90
      %s92 = ssub.s32 %s17, %s31
      %p93 = scmp.eq.s32.totalorder %s92, 0
      %s95 = sadd.s32 %s94, 1
      %s96 = scalar_select %p93, %s94, %s95
      %p99 = pneg %p93
      %p100 = scmp.eq.s32.totalorder %s9, 15
      %p101 = por %p99, %p100
      %p102 = scmp.ne.s32.totalorder %s94, %s97
      %p103 = scmp.eq.s32.totalorder %s9, 0
      %p104 = por %p102, %p103
      %p105 = scmp.ne.s32.totalorder %s94, %s97
      %p106 = scmp.eq.s32.totalorder %s14, 15
      %p107 = por %p105, %p106
      %p108 = scmp.ne.s32.totalorder %s97, %s98
      %p109 = scmp.eq.s32.totalorder %s14, 0
      %p110 = por %p108, %p109
      %p111 = scmp.ne.s32.totalorder %s97, %s98
      %p112 = scmp.eq.s32.totalorder %s15, 15
      %p113 = por %p111, %p112
      %p115 = scmp.ne.s32.totalorder %s98, %s114
      %p116 = scmp.eq.s32.totalorder %s15, 0
      %p117 = por %p115, %p116
      %s118 = ssub.s32 %s16, %s35
      %s119 = ssub.s32 %s17, %s31
      %s120 = sor.u32 %s118, %s119
      %p121 = scmp.eq.s32.totalorder %s120, 0
      %s123 = sadd.s32 %s122, 1
      %s124 = scalar_select %p121, %s122, %s123
      %p127 = pneg %p121
      %p128 = scmp.eq.s32.totalorder %s9, 15
      %p129 = por %p127, %p128
      %p130 = scmp.ne.s32.totalorder %s122, %s125
      %p131 = scmp.eq.s32.totalorder %s9, 0
      %p132 = por %p130, %p131
      %p133 = scmp.ne.s32.totalorder %s122, %s125
      %p134 = scmp.eq.s32.totalorder %s14, 15
      %p135 = por %p133, %p134
      %p136 = scmp.ne.s32.totalorder %s125, %s126
      %p137 = scmp.eq.s32.totalorder %s14, 0
      %p138 = por %p136, %p137
      %p139 = scmp.ne.s32.totalorder %s125, %s126
      %p140 = scmp.eq.s32.totalorder %s15, 15
      %p141 = por %p139, %p140
      %p143 = scmp.ne.s32.totalorder %s126, %s142
      %p144 = scmp.eq.s32.totalorder %s15, 0
      %p145 = por %p143, %p144
      %p146 = scmp.le.s32.totalorder 1, %s9
      %p147 = scmp.lt.s32.totalorder %s9, 17
      %p148 = pnand %p146, %p147
      %p149 = pneg %p148
      // Predicated region
      $region9: #{nlayer_discriminator.18} parent=5 // pred_check
        _
      $region10: #{nlayer_discriminator.18} parent=5 // pred_check_branch
        %151 = sbr.rel (%p148) target = $region12
      $region11: #{nlayer_discriminator.18} parent=5 // pred_region
        %s152 = ssub.s32 %s9, 1
      $region12: #{nlayer_discriminator.18} parent=5 // pred_fallthru
        _
      %p153 = scmp.lt.s32.totalorder %s9, 16
      // Predicated region
      $region13: #{nlayer_discriminator.18} parent=5 // pred_check
        %p154 = pneg %p153
      $region14: #{nlayer_discriminator.18} parent=5 // pred_check_branch
        %156 = sbr.rel (%p154) target = $region16
      $region15: #{nlayer_discriminator.18} parent=5 // pred_region
        // Predicated region
        $region17: #{nlayer_discriminator.18} parent=15 // pred_check
          %p157 = pneg %p50
        $region18: #{nlayer_discriminator.18} parent=15 // pred_check_branch
          %159 = sbr.rel (%p157) target = $region20
        $region19: #{nlayer_discriminator.18} parent=15 // pred_region
          %s160 = smul.u32 4, %s18
          %p161 = scmp.lt.s32.totalorder %s16, 0
          %s162 = scalar_select %p161, %s16, 0
          %p163 = scmp.lt.s32.totalorder %s160, 31
          %s164 = scalar_select %p163, %s160, 31
          %s165 = smul.addr %s162, 32
          %s166 = sadd.s32 %s164, %s165
          %s167 = smul.addr %s166, 4
          %s168 = scalar_lea.vmem %s0, %s167
          %s169 = smul.u32 4, %s18
        $region20: #{nlayer_discriminator.18} parent=15 // pred_fallthru
          _
        // Predicated region
        $region21: #{nlayer_discriminator.18} parent=15 // pred_check
          %p170 = pneg %p78
        $region22: #{nlayer_discriminator.18} parent=15 // pred_check_branch
          %172 = sbr.rel (%p170) target = $region24
        $region23: #{nlayer_discriminator.18} parent=15 // pred_region
          %s173 = sand.u32 %s68, 1
          %s174 = sand.u32 %s68, 1
          %s175 = smul.addr %s174, 512
          %s176 = scalar_lea.vmem [#allocation3], %s175
          %s177 = smul.u32 64, %s18
          %s178 = smul.u32 2, %s17
          %s179 = smul.addr %s177, 4
          %s180 = sadd.s32 %s178, %s179
          %s181 = smul.addr %s180, 4
          %s182 = scalar_lea.vmem %s1, %s181
          // Predicated region
          $region25: #{nlayer_discriminator.18} parent=23 // pred_check
            _
          $region26: #{nlayer_discriminator.18} parent=23 // pred_check_branch
            %184 = sbr.rel (0) target = $region28
          $region27: #{nlayer_discriminator.18} parent=23 // pred_region
            // Predicated region
            $region29: #{nlayer_discriminator.18} parent=27 // pred_check
              _
            $region30: #{nlayer_discriminator.18} parent=27 // pred_check_branch
              %186 = sbr.rel (0) target = $region32
            $region31: #{nlayer_discriminator.18} parent=27 // pred_region
              // Predicated region
              $region44: #{nlayer_discriminator.18} parent=31 // pred_check
                _
              $region45: #{nlayer_discriminator.18} parent=31 // pred_check_branch
                %328 = sbr.rel (0) target = $region47
              $region46: #{nlayer_discriminator.18} parent=31 // pred_region
                loop: start=0, step=1, limit=1
                $region48: #{nlayer_discriminator.18} parent=46 // loop_pre_header
                  _
                $region49: #{nlayer_discriminator.18} parent=46 // loop_header
                  %s330 = sphi 0, %s334
                  %p331 = scmp.ge.s32.totalorder %s330, 1
                  %s335 = sphi %s182, %s182
                  %s336 = sphi %s176, %s176
                $region50: #{nlayer_discriminator.18} parent=46 // loop_header_branch
                  %333 = sbr.rel (%p331) target = $region54
                $region51: #{nlayer_discriminator.18} parent=46 // loop_body
                  %v337 = vld [vmem:[%s335] sm:$0xff]
                  %338 = vst [vmem:[%s336] sm:$0xff] %v337
                  %v339 = vld [vmem:[%s335 + $0x10] sm:$0xff]
                  %340 = vst [vmem:[%s336 + $0x8] sm:$0xff] %v339
                  %v341 = vld [vmem:[%s335 + $0x20] sm:$0xff]
                  %342 = vst [vmem:[%s336 + $0x10] sm:$0xff] %v341
                  %v343 = vld [vmem:[%s335 + $0x30] sm:$0xff]
                  %344 = vst [vmem:[%s336 + $0x18] sm:$0xff] %v343
                  %v345 = vld [vmem:[%s335 + $0x40] sm:$0xff]
                  %346 = vst [vmem:[%s336 + $0x20] sm:$0xff] %v345
                  %v347 = vld [vmem:[%s335 + $0x50] sm:$0xff]
                  %348 = vst [vmem:[%s336 + $0x28] sm:$0xff] %v347
                  %v349 = vld [vmem:[%s335 + $0x60] sm:$0xff]
                  %350 = vst [vmem:[%s336 + $0x30] sm:$0xff] %v349
                  %v351 = vld [vmem:[%s335 + $0x70] sm:$0xff]
                  %352 = vst [vmem:[%s336 + $0x38] sm:$0xff] %v351
                  %v353 = vld [vmem:[%s335 + $0x80] sm:$0xff]
                  %354 = vst [vmem:[%s336 + $0x40] sm:$0xff] %v353
                  %v355 = vld [vmem:[%s335 + $0x90] sm:$0xff]
                  %356 = vst [vmem:[%s336 + $0x48] sm:$0xff] %v355
                  %v357 = vld [vmem:[%s335 + $0xa0] sm:$0xff]
                  %358 = vst [vmem:[%s336 + $0x50] sm:$0xff] %v357
                  %v359 = vld [vmem:[%s335 + $0xb0] sm:$0xff]
                  %360 = vst [vmem:[%s336 + $0x58] sm:$0xff] %v359
                  %v361 = vld [vmem:[%s335 + $0xc0] sm:$0xff]
                  %362 = vst [vmem:[%s336 + $0x60] sm:$0xff] %v361
                  %v363 = vld [vmem:[%s335 + $0xd0] sm:$0xff]
                  %364 = vst [vmem:[%s336 + $0x68] sm:$0xff] %v363
                  %v365 = vld [vmem:[%s335 + $0xe0] sm:$0xff]
                  %366 = vst [vmem:[%s336 + $0x70] sm:$0xff] %v365
                  %v367 = vld [vmem:[%s335 + $0xf0] sm:$0xff]
                  %368 = vst [vmem:[%s336 + $0x78] sm:$0xff] %v367
                  %v369 = vld [vmem:[%s335 + $0x100] sm:$0xff]
                  %370 = vst [vmem:[%s336 + $0x80] sm:$0xff] %v369
                  %v371 = vld [vmem:[%s335 + $0x110] sm:$0xff]
                  %372 = vst [vmem:[%s336 + $0x88] sm:$0xff] %v371
                  %v373 = vld [vmem:[%s335 + $0x120] sm:$0xff]
                  %374 = vst [vmem:[%s336 + $0x90] sm:$0xff] %v373
                  %v375 = vld [vmem:[%s335 + $0x130] sm:$0xff]
                  %376 = vst [vmem:[%s336 + $0x98] sm:$0xff] %v375
                  %v377 = vld [vmem:[%s335 + $0x140] sm:$0xff]
                  %378 = vst [vmem:[%s336 + $0xa0] sm:$0xff] %v377
                  %v379 = vld [vmem:[%s335 + $0x150] sm:$0xff]
                  %380 = vst [vmem:[%s336 + $0xa8] sm:$0xff] %v379
                  %v381 = vld [vmem:[%s335 + $0x160] sm:$0xff]
                  %382 = vst [vmem:[%s336 + $0xb0] sm:$0xff] %v381
                  %v383 = vld [vmem:[%s335 + $0x170] sm:$0xff]
                  %384 = vst [vmem:[%s336 + $0xb8] sm:$0xff] %v383
                  %v385 = vld [vmem:[%s335 + $0x180] sm:$0xff]
                  %386 = vst [vmem:[%s336 + $0xc0] sm:$0xff] %v385
                  %v387 = vld [vmem:[%s335 + $0x190] sm:$0xff]
                  %388 = vst [vmem:[%s336 + $0xc8] sm:$0xff] %v387
                  %v389 = vld [vmem:[%s335 + $0x1a0] sm:$0xff]
                  %390 = vst [vmem:[%s336 + $0xd0] sm:$0xff] %v389
                  %v391 = vld [vmem:[%s335 + $0x1b0] sm:$0xff]
                  %392 = vst [vmem:[%s336 + $0xd8] sm:$0xff] %v391
                  %v393 = vld [vmem:[%s335 + $0x1c0] sm:$0xff]
                  %394 = vst [vmem:[%s336 + $0xe0] sm:$0xff] %v393
                  %v395 = vld [vmem:[%s335 + $0x1d0] sm:$0xff]
                  %396 = vst [vmem:[%s336 + $0xe8] sm:$0xff] %v395
                  %v397 = vld [vmem:[%s335 + $0x1e0] sm:$0xff]
                  %398 = vst [vmem:[%s336 + $0xf0] sm:$0xff] %v397
                  %v399 = vld [vmem:[%s335 + $0x1f0] sm:$0xff]
                  %400 = vst [vmem:[%s336 + $0xf8] sm:$0xff] %v399
                  %v401 = vld [vmem:[%s335 + $0x200] sm:$0xff]
                  %402 = vst [vmem:[%s336 + $0x100] sm:$0xff] %v401
                  %v403 = vld [vmem:[%s335 + $0x210] sm:$0xff]
                  %404 = vst [vmem:[%s336 + $0x108] sm:$0xff] %v403
                  %v405 = vld [vmem:[%s335 + $0x220] sm:$0xff]
                  %406 = vst [vmem:[%s336 + $0x110] sm:$0xff] %v405
                  %v407 = vld [vmem:[%s335 + $0x230] sm:$0xff]
                  %408 = vst [vmem:[%s336 + $0x118] sm:$0xff] %v407
                  %v409 = vld [vmem:[%s335 + $0x240] sm:$0xff]
                  %410 = vst [vmem:[%s336 + $0x120] sm:$0xff] %v409
                  %v411 = vld [vmem:[%s335 + $0x250] sm:$0xff]
                  %412 = vst [vmem:[%s336 + $0x128] sm:$0xff] %v411
                  %v413 = vld [vmem:[%s335 + $0x260] sm:$0xff]
                  %414 = vst [vmem:[%s336 + $0x130] sm:$0xff] %v413
                  %v415 = vld [vmem:[%s335 + $0x270] sm:$0xff]
                  %416 = vst [vmem:[%s336 + $0x138] sm:$0xff] %v415
                  %v417 = vld [vmem:[%s335 + $0x280] sm:$0xff]
                  %418 = vst [vmem:[%s336 + $0x140] sm:$0xff] %v417
                  %v419 = vld [vmem:[%s335 + $0x290] sm:$0xff]
                  %420 = vst [vmem:[%s336 + $0x148] sm:$0xff] %v419
                  %v421 = vld [vmem:[%s335 + $0x2a0] sm:$0xff]
                  %422 = vst [vmem:[%s336 + $0x150] sm:$0xff] %v421
                  %v423 = vld [vmem:[%s335 + $0x2b0] sm:$0xff]
                  %424 = vst [vmem:[%s336 + $0x158] sm:$0xff] %v423
                  %v425 = vld [vmem:[%s335 + $0x2c0] sm:$0xff]
                  %426 = vst [vmem:[%s336 + $0x160] sm:$0xff] %v425
                  %v427 = vld [vmem:[%s335 + $0x2d0] sm:$0xff]
                  %428 = vst [vmem:[%s336 + $0x168] sm:$0xff] %v427
                  %v429 = vld [vmem:[%s335 + $0x2e0] sm:$0xff]
                  %430 = vst [vmem:[%s336 + $0x170] sm:$0xff] %v429
                  %v431 = vld [vmem:[%s335 + $0x2f0] sm:$0xff]
                  %432 = vst [vmem:[%s336 + $0x178] sm:$0xff] %v431
                  %v433 = vld [vmem:[%s335 + $0x300] sm:$0xff]
                  %434 = vst [vmem:[%s336 + $0x180] sm:$0xff] %v433
                  %v435 = vld [vmem:[%s335 + $0x310] sm:$0xff]
                  %436 = vst [vmem:[%s336 + $0x188] sm:$0xff] %v435
                  %v437 = vld [vmem:[%s335 + $0x320] sm:$0xff]
                  %438 = vst [vmem:[%s336 + $0x190] sm:$0xff] %v437
                  %v439 = vld [vmem:[%s335 + $0x330] sm:$0xff]
                  %440 = vst [vmem:[%s336 + $0x198] sm:$0xff] %v439
                  %v441 = vld [vmem:[%s335 + $0x340] sm:$0xff]
                  %442 = vst [vmem:[%s336 + $0x1a0] sm:$0xff] %v441
                  %v443 = vld [vmem:[%s335 + $0x350] sm:$0xff]
                  %444 = vst [vmem:[%s336 + $0x1a8] sm:$0xff] %v443
                  %v445 = vld [vmem:[%s335 + $0x360] sm:$0xff]
                  %446 = vst [vmem:[%s336 + $0x1b0] sm:$0xff] %v445
                  %v447 = vld [vmem:[%s335 + $0x370] sm:$0xff]
                  %448 = vst [vmem:[%s336 + $0x1b8] sm:$0xff] %v447
                  %v449 = vld [vmem:[%s335 + $0x380] sm:$0xff]
                  %450 = vst [vmem:[%s336 + $0x1c0] sm:$0xff] %v449
                  %v451 = vld [vmem:[%s335 + $0x390] sm:$0xff]
                  %452 = vst [vmem:[%s336 + $0x1c8] sm:$0xff] %v451
                  %v453 = vld [vmem:[%s335 + $0x3a0] sm:$0xff]
                  %454 = vst [vmem:[%s336 + $0x1d0] sm:$0xff] %v453
                  %v455 = vld [vmem:[%s335 + $0x3b0] sm:$0xff]
                  %456 = vst [vmem:[%s336 + $0x1d8] sm:$0xff] %v455
                  %v457 = vld [vmem:[%s335 + $0x3c0] sm:$0xff]
                  %458 = vst [vmem:[%s336 + $0x1e0] sm:$0xff] %v457
                  %v459 = vld [vmem:[%s335 + $0x3d0] sm:$0xff]
                  %460 = vst [vmem:[%s336 + $0x1e8] sm:$0xff] %v459
                  %v461 = vld [vmem:[%s335 + $0x3e0] sm:$0xff]
                  %462 = vst [vmem:[%s336 + $0x1f0] sm:$0xff] %v461
                  %v463 = vld [vmem:[%s335 + $0x3f0] sm:$0xff]
                  %464 = vst [vmem:[%s336 + $0x1f8] sm:$0xff] %v463
                $region52: #{nlayer_discriminator.18} parent=46 // loop_footer
                  %s334 = sadd.s32 1, %s330
                $region53: #{nlayer_discriminator.18} parent=46 // loop_footer_branch
                  %329 = sbr.rel target = $region49
                $region54: #{nlayer_discriminator.18} parent=46 // loop_exit
                  _
              $region47: #{nlayer_discriminator.18} parent=31 // pred_fallthru
                _
              // Predicated region
              $region55: #{nlayer_discriminator.18} parent=31 // pred_check
                _
              $region56: #{nlayer_discriminator.18} parent=31 // pred_check_branch
                %466 = sbr.rel target = $region58
              $region57: #{nlayer_discriminator.18} parent=31 // pred_region
                _
              $region58: #{nlayer_discriminator.18} parent=31 // pred_fallthru
                _
            $region32: #{nlayer_discriminator.18} parent=27 // pred_fallthru
              _
            // Predicated region
            $region33: #{nlayer_discriminator.18} parent=27 // pred_check
              _
            $region34: #{nlayer_discriminator.18} parent=27 // pred_check_branch
              %188 = sbr.rel target = $region36
            $region35: #{nlayer_discriminator.18} parent=27 // pred_region
              %s190 = ssub.s32 256, 1
              loop: start=0, step=1, limit=1
              $region37: #{nlayer_discriminator.18} parent=35 // loop_pre_header
                _
              $region38: #{nlayer_discriminator.18} parent=35 // loop_header
                %s192 = sphi 0, %s196
                %p193 = scmp.ge.s32.totalorder %s192, 1
                %s197 = sphi %s182, %s182
                %s198 = sphi %s176, %s176
              $region39: #{nlayer_discriminator.18} parent=35 // loop_header_branch
                %195 = sbr.rel (%p193) target = $region43
              $region40: #{nlayer_discriminator.18} parent=35 // loop_body
                %v199 = vld [vmem:[%s197] sm:%s190]
                %200 = vst [vmem:[%s198] sm:%s190] %v199
                %v201 = vld [vmem:[%s197 + $0x10] sm:%s190]
                %202 = vst [vmem:[%s198 + $0x8] sm:%s190] %v201
                %v203 = vld [vmem:[%s197 + $0x20] sm:%s190]
                %204 = vst [vmem:[%s198 + $0x10] sm:%s190] %v203
                %v205 = vld [vmem:[%s197 + $0x30] sm:%s190]
                %206 = vst [vmem:[%s198 + $0x18] sm:%s190] %v205
                %v207 = vld [vmem:[%s197 + $0x40] sm:%s190]
                %208 = vst [vmem:[%s198 + $0x20] sm:%s190] %v207
                %v209 = vld [vmem:[%s197 + $0x50] sm:%s190]
                %210 = vst [vmem:[%s198 + $0x28] sm:%s190] %v209
                %v211 = vld [vmem:[%s197 + $0x60] sm:%s190]
                %212 = vst [vmem:[%s198 + $0x30] sm:%s190] %v211
                %v213 = vld [vmem:[%s197 + $0x70] sm:%s190]
                %214 = vst [vmem:[%s198 + $0x38] sm:%s190] %v213
                %v215 = vld [vmem:[%s197 + $0x80] sm:%s190]
                %216 = vst [vmem:[%s198 + $0x40] sm:%s190] %v215
                %v217 = vld [vmem:[%s197 + $0x90] sm:%s190]
                %218 = vst [vmem:[%s198 + $0x48] sm:%s190] %v217
                %v219 = vld [vmem:[%s197 + $0xa0] sm:%s190]
                %220 = vst [vmem:[%s198 + $0x50] sm:%s190] %v219
                %v221 = vld [vmem:[%s197 + $0xb0] sm:%s190]
                %222 = vst [vmem:[%s198 + $0x58] sm:%s190] %v221
                %v223 = vld [vmem:[%s197 + $0xc0] sm:%s190]
                %224 = vst [vmem:[%s198 + $0x60] sm:%s190] %v223
                %v225 = vld [vmem:[%s197 + $0xd0] sm:%s190]
                %226 = vst [vmem:[%s198 + $0x68] sm:%s190] %v225
                %v227 = vld [vmem:[%s197 + $0xe0] sm:%s190]
                %228 = vst [vmem:[%s198 + $0x70] sm:%s190] %v227
                %v229 = vld [vmem:[%s197 + $0xf0] sm:%s190]
                %230 = vst [vmem:[%s198 + $0x78] sm:%s190] %v229
                %v231 = vld [vmem:[%s197 + $0x100] sm:%s190]
                %232 = vst [vmem:[%s198 + $0x80] sm:%s190] %v231
                %v233 = vld [vmem:[%s197 + $0x110] sm:%s190]
                %234 = vst [vmem:[%s198 + $0x88] sm:%s190] %v233
                %v235 = vld [vmem:[%s197 + $0x120] sm:%s190]
                %236 = vst [vmem:[%s198 + $0x90] sm:%s190] %v235
                %v237 = vld [vmem:[%s197 + $0x130] sm:%s190]
                %238 = vst [vmem:[%s198 + $0x98] sm:%s190] %v237
                %v239 = vld [vmem:[%s197 + $0x140] sm:%s190]
                %240 = vst [vmem:[%s198 + $0xa0] sm:%s190] %v239
                %v241 = vld [vmem:[%s197 + $0x150] sm:%s190]
                %242 = vst [vmem:[%s198 + $0xa8] sm:%s190] %v241
                %v243 = vld [vmem:[%s197 + $0x160] sm:%s190]
                %244 = vst [vmem:[%s198 + $0xb0] sm:%s190] %v243
                %v245 = vld [vmem:[%s197 + $0x170] sm:%s190]
                %246 = vst [vmem:[%s198 + $0xb8] sm:%s190] %v245
                %v247 = vld [vmem:[%s197 + $0x180] sm:%s190]
                %248 = vst [vmem:[%s198 + $0xc0] sm:%s190] %v247
                %v249 = vld [vmem:[%s197 + $0x190] sm:%s190]
                %250 = vst [vmem:[%s198 + $0xc8] sm:%s190] %v249
                %v251 = vld [vmem:[%s197 + $0x1a0] sm:%s190]
                %252 = vst [vmem:[%s198 + $0xd0] sm:%s190] %v251
                %v253 = vld [vmem:[%s197 + $0x1b0] sm:%s190]
                %254 = vst [vmem:[%s198 + $0xd8] sm:%s190] %v253
                %v255 = vld [vmem:[%s197 + $0x1c0] sm:%s190]
                %256 = vst [vmem:[%s198 + $0xe0] sm:%s190] %v255
                %v257 = vld [vmem:[%s197 + $0x1d0] sm:%s190]
                %258 = vst [vmem:[%s198 + $0xe8] sm:%s190] %v257
                %v259 = vld [vmem:[%s197 + $0x1e0] sm:%s190]
                %260 = vst [vmem:[%s198 + $0xf0] sm:%s190] %v259
                %v261 = vld [vmem:[%s197 + $0x1f0] sm:%s190]
                %262 = vst [vmem:[%s198 + $0xf8] sm:%s190] %v261
                %v263 = vld [vmem:[%s197 + $0x200] sm:%s190]
                %264 = vst [vmem:[%s198 + $0x100] sm:%s190] %v263
                %v265 = vld [vmem:[%s197 + $0x210] sm:%s190]
                %266 = vst [vmem:[%s198 + $0x108] sm:%s190] %v265
                %v267 = vld [vmem:[%s197 + $0x220] sm:%s190]
                %268 = vst [vmem:[%s198 + $0x110] sm:%s190] %v267
                %v269 = vld [vmem:[%s197 + $0x230] sm:%s190]
                %270 = vst [vmem:[%s198 + $0x118] sm:%s190] %v269
                %v271 = vld [vmem:[%s197 + $0x240] sm:%s190]
                %272 = vst [vmem:[%s198 + $0x120] sm:%s190] %v271
                %v273 = vld [vmem:[%s197 + $0x250] sm:%s190]
                %274 = vst [vmem:[%s198 + $0x128] sm:%s190] %v273
                %v275 = vld [vmem:[%s197 + $0x260] sm:%s190]
                %276 = vst [vmem:[%s198 + $0x130] sm:%s190] %v275
                %v277 = vld [vmem:[%s197 + $0x270] sm:%s190]
                %278 = vst [vmem:[%s198 + $0x138] sm:%s190] %v277
                %v279 = vld [vmem:[%s197 + $0x280] sm:%s190]
                %280 = vst [vmem:[%s198 + $0x140] sm:%s190] %v279
                %v281 = vld [vmem:[%s197 + $0x290] sm:%s190]
                %282 = vst [vmem:[%s198 + $0x148] sm:%s190] %v281
                %v283 = vld [vmem:[%s197 + $0x2a0] sm:%s190]
                %284 = vst [vmem:[%s198 + $0x150] sm:%s190] %v283
                %v285 = vld [vmem:[%s197 + $0x2b0] sm:%s190]
                %286 = vst [vmem:[%s198 + $0x158] sm:%s190] %v285
                %v287 = vld [vmem:[%s197 + $0x2c0] sm:%s190]
                %288 = vst [vmem:[%s198 + $0x160] sm:%s190] %v287
                %v289 = vld [vmem:[%s197 + $0x2d0] sm:%s190]
                %290 = vst [vmem:[%s198 + $0x168] sm:%s190] %v289
                %v291 = vld [vmem:[%s197 + $0x2e0] sm:%s190]
                %292 = vst [vmem:[%s198 + $0x170] sm:%s190] %v291
                %v293 = vld [vmem:[%s197 + $0x2f0] sm:%s190]
                %294 = vst [vmem:[%s198 + $0x178] sm:%s190] %v293
                %v295 = vld [vmem:[%s197 + $0x300] sm:%s190]
                %296 = vst [vmem:[%s198 + $0x180] sm:%s190] %v295
                %v297 = vld [vmem:[%s197 + $0x310] sm:%s190]
                %298 = vst [vmem:[%s198 + $0x188] sm:%s190] %v297
                %v299 = vld [vmem:[%s197 + $0x320] sm:%s190]
                %300 = vst [vmem:[%s198 + $0x190] sm:%s190] %v299
                %v301 = vld [vmem:[%s197 + $0x330] sm:%s190]
                %302 = vst [vmem:[%s198 + $0x198] sm:%s190] %v301
                %v303 = vld [vmem:[%s197 + $0x340] sm:%s190]
                %304 = vst [vmem:[%s198 + $0x1a0] sm:%s190] %v303
                %v305 = vld [vmem:[%s197 + $0x350] sm:%s190]
                %306 = vst [vmem:[%s198 + $0x1a8] sm:%s190] %v305
                %v307 = vld [vmem:[%s197 + $0x360] sm:%s190]
                %308 = vst [vmem:[%s198 + $0x1b0] sm:%s190] %v307
                %v309 = vld [vmem:[%s197 + $0x370] sm:%s190]
                %310 = vst [vmem:[%s198 + $0x1b8] sm:%s190] %v309
                %v311 = vld [vmem:[%s197 + $0x380] sm:%s190]
                %312 = vst [vmem:[%s198 + $0x1c0] sm:%s190] %v311
                %v313 = vld [vmem:[%s197 + $0x390] sm:%s190]
                %314 = vst [vmem:[%s198 + $0x1c8] sm:%s190] %v313
                %v315 = vld [vmem:[%s197 + $0x3a0] sm:%s190]
                %316 = vst [vmem:[%s198 + $0x1d0] sm:%s190] %v315
                %v317 = vld [vmem:[%s197 + $0x3b0] sm:%s190]
                %318 = vst [vmem:[%s198 + $0x1d8] sm:%s190] %v317
                %v319 = vld [vmem:[%s197 + $0x3c0] sm:%s190]
                %320 = vst [vmem:[%s198 + $0x1e0] sm:%s190] %v319
                %v321 = vld [vmem:[%s197 + $0x3d0] sm:%s190]
                %322 = vst [vmem:[%s198 + $0x1e8] sm:%s190] %v321
                %v323 = vld [vmem:[%s197 + $0x3e0] sm:%s190]
                %324 = vst [vmem:[%s198 + $0x1f0] sm:%s190] %v323
                %v325 = vld [vmem:[%s197 + $0x3f0] sm:%s190]
                %326 = vst [vmem:[%s198 + $0x1f8] sm:%s190] %v325
              $region41: #{nlayer_discriminator.18} parent=35 // loop_footer
                %s196 = sadd.s32 1, %s192
              $region42: #{nlayer_discriminator.18} parent=35 // loop_footer_branch
                %191 = sbr.rel target = $region38
              $region43: #{nlayer_discriminator.18} parent=35 // loop_exit
                _
            $region36: #{nlayer_discriminator.18} parent=27 // pred_fallthru
              _
          $region28: #{nlayer_discriminator.18} parent=23 // pred_fallthru
            _
          %467 = vnop
        $region24: #{nlayer_discriminator.18} parent=15 // pred_fallthru
          _
        // Predicated region
        $region59: #{nlayer_discriminator.18} parent=15 // pred_check
          %p468 = pneg %p104
        $region60: #{nlayer_discriminator.18} parent=15 // pred_check_branch
          %470 = sbr.rel (%p468) target = $region62
        $region61: #{nlayer_discriminator.18} parent=15 // pred_region
          %s471 = smul.u32 2, %s17
          %p472 = scmp.lt.s32.totalorder %s471, 3
          %s473 = scalar_select %p472, %s471, 3
          %s474 = scalar_lea.vmem %s2, %s473
          %s475 = smul.u32 2, %s17
        $region62: #{nlayer_discriminator.18} parent=15 // pred_fallthru
          _
      $region16: #{nlayer_discriminator.18} parent=5 // pred_fallthru
        _
      %p476 = scmp.le.s32.totalorder 1, %s9
      %p477 = scmp.lt.s32.totalorder %s9, 17
      %p478 = pnand %p476, %p477
      %p479 = pneg %p478
      // Predicated region
      $region63: #{nlayer_discriminator.18} parent=5 // pred_check
        _
      $region64: #{nlayer_discriminator.18} parent=5 // pred_check_branch
        %481 = sbr.rel (%p478) target = $region66
      $region65: #{nlayer_discriminator.18} parent=5 // pred_region
        %s482 = ssub.s32 %s9, 1
        %s483 = sand.u32 %s71, 1
        %s484 = sand.u32 %s71, 1
        %s485 = smul.addr %s484, 512
        %s486 = scalar_lea.vmem [#allocation3], %s485
        // Predicated region
        $region67: #{nlayer_discriminator.18} parent=65 // pred_check
          %p487 = pneg %p84
        $region68: #{nlayer_discriminator.18} parent=65 // pred_check_branch
          %489 = sbr.rel (%p487) target = $region70
        $region69: #{nlayer_discriminator.18} parent=65 // pred_region
          _
        $region70: #{nlayer_discriminator.18} parent=65 // pred_fallthru
          _
        %s490 = smul.u32 4, %s21
        %p491 = scmp.lt.s32.totalorder %s19, 0
        %s492 = scalar_select %p491, %s19, 0
        %p493 = scmp.lt.s32.totalorder %s490, 31
        %s494 = scalar_select %p493, %s490, 31
        %s495 = smul.addr %s492, 32
        %s496 = sadd.s32 %s494, %s495
        %s497 = smul.addr %s496, 4
        %s498 = scalar_lea.vmem %s0, %s497
        %p499 = pneg %p56
        %p500 = pneg %p53
        %s501 = sand.u32 %s71, 1
        %s502 = sand.u32 %s71, 1
        %s503 = smul.addr %s502, 512
        %s504 = scalar_lea.vmem [#allocation3], %s503
        %p505 = pneg %p84
        %p506 = pneg %p81
        %s507 = smul.u32 2, %s20
        %p508 = scmp.lt.s32.totalorder %s507, 3
        %s509 = scalar_select %p508, %s507, 3
        %s510 = scalar_lea.vmem %s2, %s509
        %p511 = pneg %p110
        %p512 = pneg %p107
        %p513 = pneg %p138
        %p514 = pneg %p135
        %s515 = smul.u32 2, %s20
        %p516 = scmp.lt.s32.totalorder %s19, 0
        %s517 = scalar_select %p516, %s19, 0
        %p518 = scmp.lt.s32.totalorder %s515, 3
        %s519 = scalar_select %p518, %s515, 3
        %s520 = smul.addr %s517, 4
        %s521 = sadd.s32 %s519, %s520
        %s522 = smul.addr %s521, 4
        %s523 = scalar_lea.vmem %s3, %s522
        %s524 = smul.u32 4, %s21
        %p525 = scmp.lt.s32.totalorder %s19, 0
        %s526 = scalar_select %p525, %s19, 0
        %p527 = scmp.lt.s32.totalorder %s524, 31
        %s528 = scalar_select %p527, %s524, 31
        %s529 = smul.addr %s526, 32
        %s530 = sadd.s32 %s528, %s529
        %s531 = smul.addr %s530, 4
        %s532 = scalar_lea.vmem %s0, %s531
        %s533 = smul.u32 4, %s21
        %s534 = smul.u32 64, %s21
        %s535 = smul.u32 2, %s20
        %s536 = smul.u32 2, %s20
        %p537 = scmp.lt.s32.totalorder %s536, 3
        %s538 = scalar_select %p537, %s536, 3
        %s539 = scalar_lea.vmem %s2, %s538
        %s540 = smul.u32 2, %s20
        %s541 = smul.u32 2, %s20
        %p542 = scmp.lt.s32.totalorder %s19, 0
        %s543 = scalar_select %p542, %s19, 0
        %p544 = scmp.lt.s32.totalorder %s541, 3
        %s545 = scalar_select %p544, %s541, 3
        %s546 = smul.addr %s543, 4
        %s547 = sadd.s32 %s545, %s546
        %s548 = smul.addr %s547, 4
        %s549 = scalar_lea.vmem %s3, %s548
        %s550 = smul.u32 2, %s20
        %p551 = scmp.eq.s32.totalorder %s21, 0
        // Predicated region
        $region71: #{nlayer_discriminator.18} parent=65 // pred_check
          %p552 = pneg %p551
        $region72: #{nlayer_discriminator.18} parent=65 // pred_check_branch
          %554 = sbr.rel (%p552) target = $region74
        $region73: #{nlayer_discriminator.18} parent=65 // pred_region
          %555 = vst [vmem:[#allocation2] sm:$0xff] 0.0
          %556 = vst [vmem:[#allocation2 + $0x8] sm:$0xff] 0.0
        $region74: #{nlayer_discriminator.18} parent=65 // pred_fallthru
          _
        %v557 = vld [vmem:[#allocation2] sm:$0xff]
        %v558 = vld [vmem:[#allocation2 + $0x8] sm:$0xff]
        %v559 = vld [vmem:[%s532] sm:$0xff]
        %v560 = vld [vmem:[%s532 + $0x8] sm:$0xff]
        %v561 = vld [vmem:[%s486] sm:$0xff]
        %v562 = vld [vmem:[%s486 + $0x8] sm:$0xff]
        %v563 = vld [vmem:[%s486 + $0x10] sm:$0xff]
        %v564 = vld [vmem:[%s486 + $0x18] sm:$0xff]
        %v565 = vld [vmem:[%s486 + $0x20] sm:$0xff]
        %v566 = vld [vmem:[%s486 + $0x28] sm:$0xff]
        %v567 = vld [vmem:[%s486 + $0x30] sm:$0xff]
        %v568 = vld [vmem:[%s486 + $0x38] sm:$0xff]
        %v569 = vld [vmem:[%s486 + $0x40] sm:$0xff]
        %v570 = vld [vmem:[%s486 + $0x48] sm:$0xff]
        %v571 = vld [vmem:[%s486 + $0x50] sm:$0xff]
        %v572 = vld [vmem:[%s486 + $0x58] sm:$0xff]
        %v573 = vld [vmem:[%s486 + $0x60] sm:$0xff]
        %v574 = vld [vmem:[%s486 + $0x68] sm:$0xff]
        %v575 = vld [vmem:[%s486 + $0x70] sm:$0xff]
        %v576 = vld [vmem:[%s486 + $0x78] sm:$0xff]
        %v577 = vld [vmem:[%s486 + $0x80] sm:$0xff]
        %v578 = vld [vmem:[%s486 + $0x88] sm:$0xff]
        %v579 = vld [vmem:[%s486 + $0x90] sm:$0xff]
        %v580 = vld [vmem:[%s486 + $0x98] sm:$0xff]
        %v581 = vld [vmem:[%s486 + $0xa0] sm:$0xff]
        %v582 = vld [vmem:[%s486 + $0xa8] sm:$0xff]
        %v583 = vld [vmem:[%s486 + $0xb0] sm:$0xff]
        %v584 = vld [vmem:[%s486 + $0xb8] sm:$0xff]
        %v585 = vld [vmem:[%s486 + $0xc0] sm:$0xff]
        %v586 = vld [vmem:[%s486 + $0xc8] sm:$0xff]
        %v587 = vld [vmem:[%s486 + $0xd0] sm:$0xff]
        %v588 = vld [vmem:[%s486 + $0xd8] sm:$0xff]
        %v589 = vld [vmem:[%s486 + $0xe0] sm:$0xff]
        %v590 = vld [vmem:[%s486 + $0xe8] sm:$0xff]
        %v591 = vld [vmem:[%s486 + $0xf0] sm:$0xff]
        %v592 = vld [vmem:[%s486 + $0xf8] sm:$0xff]
        %v593 = vld [vmem:[%s486 + $0x100] sm:$0xff]
        %v594 = vld [vmem:[%s486 + $0x108] sm:$0xff]
        %v595 = vld [vmem:[%s486 + $0x110] sm:$0xff]
        %v596 = vld [vmem:[%s486 + $0x118] sm:$0xff]
        %v597 = vld [vmem:[%s486 + $0x120] sm:$0xff]
        %v598 = vld [vmem:[%s486 + $0x128] sm:$0xff]
        %v599 = vld [vmem:[%s486 + $0x130] sm:$0xff]
        %v600 = vld [vmem:[%s486 + $0x138] sm:$0xff]
        %v601 = vld [vmem:[%s486 + $0x140] sm:$0xff]
        %v602 = vld [vmem:[%s486 + $0x148] sm:$0xff]
        %v603 = vld [vmem:[%s486 + $0x150] sm:$0xff]
        %v604 = vld [vmem:[%s486 + $0x158] sm:$0xff]
        %v605 = vld [vmem:[%s486 + $0x160] sm:$0xff]
        %v606 = vld [vmem:[%s486 + $0x168] sm:$0xff]
        %v607 = vld [vmem:[%s486 + $0x170] sm:$0xff]
        %v608 = vld [vmem:[%s486 + $0x178] sm:$0xff]
        %v609 = vld [vmem:[%s486 + $0x180] sm:$0xff]
        %v610 = vld [vmem:[%s486 + $0x188] sm:$0xff]
        %v611 = vld [vmem:[%s486 + $0x190] sm:$0xff]
        %v612 = vld [vmem:[%s486 + $0x198] sm:$0xff]
        %v613 = vld [vmem:[%s486 + $0x1a0] sm:$0xff]
        %v614 = vld [vmem:[%s486 + $0x1a8] sm:$0xff]
        %v615 = vld [vmem:[%s486 + $0x1b0] sm:$0xff]
        %v616 = vld [vmem:[%s486 + $0x1b8] sm:$0xff]
        %v617 = vld [vmem:[%s486 + $0x1c0] sm:$0xff]
        %v618 = vld [vmem:[%s486 + $0x1c8] sm:$0xff]
        %v619 = vld [vmem:[%s486 + $0x1d0] sm:$0xff]
        %v620 = vld [vmem:[%s486 + $0x1d8] sm:$0xff]
        %v621 = vld [vmem:[%s486 + $0x1e0] sm:$0xff]
        %v622 = vld [vmem:[%s486 + $0x1e8] sm:$0xff]
        %v623 = vld [vmem:[%s486 + $0x1f0] sm:$0xff]
        %v624 = vld [vmem:[%s486 + $0x1f8] sm:$0xff]
        %v627 = vunpack.c.l.b16 %v559
        %v628 = vunpack.c.h.b16 %v559
        %v629 = vunpack.c.l.b16 %v560
        %v630 = vunpack.c.h.b16 %v560
        %v631 = vpack.c.b16 %v627, %v627
        %v632 = vpack.c.b16 %v628, %v628
        %v633 = vpack.c.b16 %v629, %v629
        %v634 = vpack.c.b16 %v630, %v630
        %v703 = vunpack.c.l.b16 %v561
        %v704 = vunpack.c.h.b16 %v561
        %v705 = vunpack.c.l.b16 %v562
        %v706 = vunpack.c.h.b16 %v562
        %v707 = vunpack.c.l.b16 %v563
        %v708 = vunpack.c.h.b16 %v563
        %v709 = vunpack.c.l.b16 %v564
        %v710 = vunpack.c.h.b16 %v564
        %v711 = vunpack.c.l.b16 %v565
        %v712 = vunpack.c.h.b16 %v565
        %v713 = vunpack.c.l.b16 %v566
        %v714 = vunpack.c.h.b16 %v566
        %v715 = vunpack.c.l.b16 %v567
        %v716 = vunpack.c.h.b16 %v567
        %v717 = vunpack.c.l.b16 %v568
        %v718 = vunpack.c.h.b16 %v568
        %v719 = vunpack.c.l.b16 %v569
        %v720 = vunpack.c.h.b16 %v569
        %v721 = vunpack.c.l.b16 %v570
        %v722 = vunpack.c.h.b16 %v570
        %v723 = vunpack.c.l.b16 %v571
        %v724 = vunpack.c.h.b16 %v571
        %v725 = vunpack.c.l.b16 %v572
        %v726 = vunpack.c.h.b16 %v572
        %v727 = vunpack.c.l.b16 %v573
        %v728 = vunpack.c.h.b16 %v573
        %v729 = vunpack.c.l.b16 %v574
        %v730 = vunpack.c.h.b16 %v574
        %v731 = vunpack.c.l.b16 %v575
        %v732 = vunpack.c.h.b16 %v575
        %v733 = vunpack.c.l.b16 %v576
        %v734 = vunpack.c.h.b16 %v576
        %v735 = vunpack.c.l.b16 %v577
        %v736 = vunpack.c.h.b16 %v577
        %v737 = vunpack.c.l.b16 %v578
        %v738 = vunpack.c.h.b16 %v578
        %v739 = vunpack.c.l.b16 %v579
        %v740 = vunpack.c.h.b16 %v579
        %v741 = vunpack.c.l.b16 %v580
        %v742 = vunpack.c.h.b16 %v580
        %v743 = vunpack.c.l.b16 %v581
        %v744 = vunpack.c.h.b16 %v581
        %v745 = vunpack.c.l.b16 %v582
        %v746 = vunpack.c.h.b16 %v582
        %v747 = vunpack.c.l.b16 %v583
        %v748 = vunpack.c.h.b16 %v583
        %v749 = vunpack.c.l.b16 %v584
        %v750 = vunpack.c.h.b16 %v584
        %v751 = vunpack.c.l.b16 %v585
        %v752 = vunpack.c.h.b16 %v585
        %v753 = vunpack.c.l.b16 %v586
        %v754 = vunpack.c.h.b16 %v586
        %v755 = vunpack.c.l.b16 %v587
        %v756 = vunpack.c.h.b16 %v587
        %v757 = vunpack.c.l.b16 %v588
        %v758 = vunpack.c.h.b16 %v588
        %v759 = vunpack.c.l.b16 %v589
        %v760 = vunpack.c.h.b16 %v589
        %v761 = vunpack.c.l.b16 %v590
        %v762 = vunpack.c.h.b16 %v590
        %v763 = vunpack.c.l.b16 %v591
        %v764 = vunpack.c.h.b16 %v591
        %v765 = vunpack.c.l.b16 %v592
        %v766 = vunpack.c.h.b16 %v592
        %v767 = vunpack.c.l.b16 %v593
        %v768 = vunpack.c.h.b16 %v593
        %v769 = vunpack.c.l.b16 %v594
        %v770 = vunpack.c.h.b16 %v594
        %v771 = vunpack.c.l.b16 %v595
        %v772 = vunpack.c.h.b16 %v595
        %v773 = vunpack.c.l.b16 %v596
        %v774 = vunpack.c.h.b16 %v596
        %v775 = vunpack.c.l.b16 %v597
        %v776 = vunpack.c.h.b16 %v597
        %v777 = vunpack.c.l.b16 %v598
        %v778 = vunpack.c.h.b16 %v598
        %v779 = vunpack.c.l.b16 %v599
        %v780 = vunpack.c.h.b16 %v599
        %v781 = vunpack.c.l.b16 %v600
        %v782 = vunpack.c.h.b16 %v600
        %v783 = vunpack.c.l.b16 %v601
        %v784 = vunpack.c.h.b16 %v601
        %v785 = vunpack.c.l.b16 %v602
        %v786 = vunpack.c.h.b16 %v602
        %v787 = vunpack.c.l.b16 %v603
        %v788 = vunpack.c.h.b16 %v603
        %v789 = vunpack.c.l.b16 %v604
        %v790 = vunpack.c.h.b16 %v604
        %v791 = vunpack.c.l.b16 %v605
        %v792 = vunpack.c.h.b16 %v605
        %v793 = vunpack.c.l.b16 %v606
        %v794 = vunpack.c.h.b16 %v606
        %v795 = vunpack.c.l.b16 %v607
        %v796 = vunpack.c.h.b16 %v607
        %v797 = vunpack.c.l.b16 %v608
        %v798 = vunpack.c.h.b16 %v608
        %v799 = vunpack.c.l.b16 %v609
        %v800 = vunpack.c.h.b16 %v609
        %v801 = vunpack.c.l.b16 %v610
        %v802 = vunpack.c.h.b16 %v610
        %v803 = vunpack.c.l.b16 %v611
        %v804 = vunpack.c.h.b16 %v611
        %v805 = vunpack.c.l.b16 %v612
        %v806 = vunpack.c.h.b16 %v612
        %v807 = vunpack.c.l.b16 %v613
        %v808 = vunpack.c.h.b16 %v613
        %v809 = vunpack.c.l.b16 %v614
        %v810 = vunpack.c.h.b16 %v614
        %v811 = vunpack.c.l.b16 %v615
        %v812 = vunpack.c.h.b16 %v615
        %v813 = vunpack.c.l.b16 %v616
        %v814 = vunpack.c.h.b16 %v616
        %v815 = vunpack.c.l.b16 %v617
        %v816 = vunpack.c.h.b16 %v617
        %v817 = vunpack.c.l.b16 %v618
        %v818 = vunpack.c.h.b16 %v618
        %v819 = vunpack.c.l.b16 %v619
        %v820 = vunpack.c.h.b16 %v619
        %v821 = vunpack.c.l.b16 %v620
        %v822 = vunpack.c.h.b16 %v620
        %v823 = vunpack.c.l.b16 %v621
        %v824 = vunpack.c.h.b16 %v621
        %v825 = vunpack.c.l.b16 %v622
        %v826 = vunpack.c.h.b16 %v622
        %v827 = vunpack.c.l.b16 %v623
        %v828 = vunpack.c.h.b16 %v623
        %v829 = vunpack.c.l.b16 %v624
        %v830 = vunpack.c.h.b16 %v624
        %v831 = vpack.c.b16 %v705, %v703
        %v832 = vpack.c.b16 %v706, %v704
        %v833 = vpack.c.b16 %v709, %v707
        %v834 = vpack.c.b16 %v710, %v708
        %v835 = vpack.c.b16 %v713, %v711
        %v836 = vpack.c.b16 %v714, %v712
        %v837 = vpack.c.b16 %v717, %v715
        %v838 = vpack.c.b16 %v718, %v716
        %v839 = vpack.c.b16 %v721, %v719
        %v840 = vpack.c.b16 %v722, %v720
        %v841 = vpack.c.b16 %v725, %v723
        %v842 = vpack.c.b16 %v726, %v724
        %v843 = vpack.c.b16 %v729, %v727
        %v844 = vpack.c.b16 %v730, %v728
        %v845 = vpack.c.b16 %v733, %v731
        %v846 = vpack.c.b16 %v734, %v732
        %v847 = vpack.c.b16 %v737, %v735
        %v848 = vpack.c.b16 %v738, %v736
        %v849 = vpack.c.b16 %v741, %v739
        %v850 = vpack.c.b16 %v742, %v740
        %v851 = vpack.c.b16 %v745, %v743
        %v852 = vpack.c.b16 %v746, %v744
        %v853 = vpack.c.b16 %v749, %v747
        %v854 = vpack.c.b16 %v750, %v748
        %v855 = vpack.c.b16 %v753, %v751
        %v856 = vpack.c.b16 %v754, %v752
        %v857 = vpack.c.b16 %v757, %v755
        %v858 = vpack.c.b16 %v758, %v756
        %v859 = vpack.c.b16 %v761, %v759
        %v860 = vpack.c.b16 %v762, %v760
        %v861 = vpack.c.b16 %v765, %v763
        %v862 = vpack.c.b16 %v766, %v764
        %v863 = vpack.c.b16 %v769, %v767
        %v864 = vpack.c.b16 %v770, %v768
        %v865 = vpack.c.b16 %v773, %v771
        %v866 = vpack.c.b16 %v774, %v772
        %v867 = vpack.c.b16 %v777, %v775
        %v868 = vpack.c.b16 %v778, %v776
        %v869 = vpack.c.b16 %v781, %v779
        %v870 = vpack.c.b16 %v782, %v780
        %v871 = vpack.c.b16 %v785, %v783
        %v872 = vpack.c.b16 %v786, %v784
        %v873 = vpack.c.b16 %v789, %v787
        %v874 = vpack.c.b16 %v790, %v788
        %v875 = vpack.c.b16 %v793, %v791
        %v876 = vpack.c.b16 %v794, %v792
        %v877 = vpack.c.b16 %v797, %v795
        %v878 = vpack.c.b16 %v798, %v796
        %v879 = vpack.c.b16 %v801, %v799
        %v880 = vpack.c.b16 %v802, %v800
        %v881 = vpack.c.b16 %v805, %v803
        %v882 = vpack.c.b16 %v806, %v804
        %v883 = vpack.c.b16 %v809, %v807
        %v884 = vpack.c.b16 %v810, %v808
        %v885 = vpack.c.b16 %v813, %v811
        %v886 = vpack.c.b16 %v814, %v812
        %v887 = vpack.c.b16 %v817, %v815
        %v888 = vpack.c.b16 %v818, %v816
        %v889 = vpack.c.b16 %v821, %v819
        %v890 = vpack.c.b16 %v822, %v820
        %v891 = vpack.c.b16 %v825, %v823
        %v892 = vpack.c.b16 %v826, %v824
        %v893 = vpack.c.b16 %v829, %v827
        %v894 = vpack.c.b16 %v830, %v828
        %959 = vmatprep.subr.bf16.mxu0 %v846
        %960 = vmatpush1.bf16.msra.mxu0 %v845
        %961 = vmatprep.subr.bf16.mxu0 %v844
        %962 = vmatpush1.bf16.msra.mxu0 %v843
        %963 = vmatprep.subr.bf16.mxu0 %v842
        %964 = vmatpush1.bf16.msra.mxu0 %v841
        %965 = vmatprep.subr.bf16.mxu0 %v840
        %966 = vmatpush1.bf16.msra.mxu0 %v839
        %967 = vmatprep.subr.bf16.mxu0 %v838
        %968 = vmatpush1.bf16.msra.mxu0 %v837
        %969 = vmatprep.subr.bf16.mxu0 %v836
        %970 = vmatpush1.bf16.msra.mxu0 %v835
        %971 = vmatprep.subr.bf16.mxu0 %v834
        %972 = vmatpush1.bf16.msra.mxu0 %v833
        %973 = vmatprep.subr.bf16.mxu0 %v832
        %974 = vmatpush1.bf16.msra.mxu0 %v831
        %975 = vmatprep.subr.bf16.mxu0 %v862
        %976 = vmatpush2.bf16.msra.mxu0 %v861
        %977 = vmatprep.subr.bf16.mxu0 %v860
        %978 = vmatpush2.bf16.msra.mxu0 %v859
        %979 = vmatprep.subr.bf16.mxu0 %v858
        %980 = vmatpush2.bf16.msra.mxu0 %v857
        %981 = vmatprep.subr.bf16.mxu0 %v856
        %982 = vmatpush2.bf16.msra.mxu0 %v855
        %983 = vmatprep.subr.bf16.mxu0 %v854
        %984 = vmatpush2.bf16.msra.mxu0 %v853
        %985 = vmatprep.subr.bf16.mxu0 %v852
        %986 = vmatpush2.bf16.msra.mxu0 %v851
        %987 = vmatprep.subr.bf16.mxu0 %v850
        %988 = vmatpush2.bf16.msra.mxu0 %v849
        %989 = vmatprep.subr.bf16.mxu0 %v848
        %990 = vmatpush2.bf16.msra.mxu0 %v847
        %991 = vmatprep.mubr.bf16.mxu0 %v632
        %992 = vmatmul.mubr.bf16.gmra.mxu0 %v631
        %v993 = vpop.f32.mrf.mxu0
        %v994 = vadd.f32 0.0, %v993
        %v995 = vpop.f32.mrf.mxu0
        %v996 = vadd.f32 0.0, %v995
        %v997 = vpop.f32.mrf.mxu0
        %v998 = vpop.f32.mrf.mxu0
        %999 = vdwg.mxu0
        %1000 = vmatprep.subr.bf16.mxu0 %v878
        %1001 = vmatpush1.bf16.msra.mxu0 %v877
        %1002 = vmatprep.subr.bf16.mxu0 %v876
        %1003 = vmatpush1.bf16.msra.mxu0 %v875
        %1004 = vmatprep.subr.bf16.mxu0 %v874
        %1005 = vmatpush1.bf16.msra.mxu0 %v873
        %1006 = vmatprep.subr.bf16.mxu0 %v872
        %1007 = vmatpush1.bf16.msra.mxu0 %v871
        %1008 = vmatprep.subr.bf16.mxu0 %v870
        %1009 = vmatpush1.bf16.msra.mxu0 %v869
        %1010 = vmatprep.subr.bf16.mxu0 %v868
        %1011 = vmatpush1.bf16.msra.mxu0 %v867
        %1012 = vmatprep.subr.bf16.mxu0 %v866
        %1013 = vmatpush1.bf16.msra.mxu0 %v865
        %1014 = vmatprep.subr.bf16.mxu0 %v864
        %1015 = vmatpush1.bf16.msra.mxu0 %v863
        %1016 = vmatprep.subr.bf16.mxu0 %v894
        %1017 = vmatpush2.bf16.msra.mxu0 %v893
        %1018 = vmatprep.subr.bf16.mxu0 %v892
        %1019 = vmatpush2.bf16.msra.mxu0 %v891
        %1020 = vmatprep.subr.bf16.mxu0 %v890
        %1021 = vmatpush2.bf16.msra.mxu0 %v889
        %1022 = vmatprep.subr.bf16.mxu0 %v888
        %1023 = vmatpush2.bf16.msra.mxu0 %v887
        %1024 = vmatprep.subr.bf16.mxu0 %v886
        %1025 = vmatpush2.bf16.msra.mxu0 %v885
        %1026 = vmatprep.subr.bf16.mxu0 %v884
        %1027 = vmatpush2.bf16.msra.mxu0 %v883
        %1028 = vmatprep.subr.bf16.mxu0 %v882
        %1029 = vmatpush2.bf16.msra.mxu0 %v881
        %1030 = vmatprep.subr.bf16.mxu0 %v880
        %1031 = vmatpush2.bf16.msra.mxu0 %v879
        %1032 = vmatprep.mubr.bf16.mxu0 %v634
        %1033 = vmatmul.mubr.bf16.gmra.mxu0 %v633
        %v1034 = vpop.f32.mrf.mxu0
        %v1035 = vadd.f32 %v994, %v1034
        %v1036 = vpop.f32.mrf.mxu0
        %v1037 = vadd.f32 %v996, %v1036
        %v1038 = vpop.f32.mrf.mxu0
        %v1039 = vpop.f32.mrf.mxu0
        %1040 = vdwg.mxu0
        %v1041 = vadd.f32 %v557, %v1035
        %v1042 = vadd.f32 %v558, %v1037
        %1043 = vst [vmem:[#allocation2] sm:$0xff] %v1041
        %1044 = vst [vmem:[#allocation2 + $0x8] sm:$0xff] %v1042
        %p1045 = scmp.eq.s32.totalorder %s21, 7
        // Predicated region
        $region75: #{nlayer_discriminator.18} parent=65 // pred_check
          %p1046 = pneg %p1045
        $region76: #{nlayer_discriminator.18} parent=65 // pred_check_branch
          %1048 = sbr.rel (%p1046) target = $region78
        $region77: #{nlayer_discriminator.18} parent=65 // pred_region
          %v1049 = vld [vmem:[#allocation2] sm:$0xff]
          %v1050 = vld [vmem:[#allocation2 + $0x8] sm:$0xff]
          %v1051 = vld [vmem:[%s539] sm:$0x3]
          %v1053 = vlaneseq
          %v1054 = vshrl.u32 %v1053, 7
          %v1055 = vsub.s32 0, %v1054
          %v1056 = vrot.slane %v1051, %v1055
          %v1057 = vlaneseq
          %v1058 = vshrl.u32 %v1057, 7
          %v1059 = vsub.s32 1, %v1058
          %v1060 = vrot.slane %v1051, %v1059
          %v1063 = vadd.f32 %v1049, %v1056
          %v1064 = vadd.f32 %v1050, %v1060
          %v1065 = vpack.c.bf16 %v1063, %v1063
          %v1066 = vpack.c.bf16 %v1064, %v1064
          %v1069 = vunpack.c.l.b16 %v1065
          %v1070 = vunpack.c.l.b16 %v1066
          %v1071 = vpack.c.b16 %v1070, %v1069
          %1073 = vst [vmem:[%s549] sm:$0xff] %v1071
        $region78: #{nlayer_discriminator.18} parent=65 // pred_fallthru
          _
        %s1074 = smul.u32 2, %s20
        %p1075 = scmp.lt.s32.totalorder %s19, 0
        %s1076 = scalar_select %p1075, %s19, 0
        %p1077 = scmp.lt.s32.totalorder %s1074, 3
        %s1078 = scalar_select %p1077, %s1074, 3
        %s1079 = smul.addr %s1076, 4
        %s1080 = sadd.s32 %s1078, %s1079
        %s1081 = smul.addr %s1080, 4
        %s1082 = scalar_lea.vmem %s3, %s1081
        // Predicated region
        $region79: #{nlayer_discriminator.18} parent=65 // pred_check
          %p1083 = pneg %p135
        $region80: #{nlayer_discriminator.18} parent=65 // pred_check_branch
          %1085 = sbr.rel (%p1083) target = $region82
        $region81: #{nlayer_discriminator.18} parent=65 // pred_region
          %s1086 = smul.u32 2, %s20
        $region82: #{nlayer_discriminator.18} parent=65 // pred_fallthru
          _
      $region66: #{nlayer_discriminator.18} parent=5 // pred_fallthru
        _
      %p1087 = scmp.le.s32.totalorder 2, %s9
      // Predicated region
      $region83: #{nlayer_discriminator.18} parent=5 // pred_check
        %p1088 = pneg %p1087
      $region84: #{nlayer_discriminator.18} parent=5 // pred_check_branch
        %1090 = sbr.rel (%p1088) target = $region86
      $region85: #{nlayer_discriminator.18} parent=5 // pred_region
        %s1091 = ssub.s32 %s9, 2
        // Predicated region
        $region87: #{nlayer_discriminator.18} parent=85 // pred_check
          %p1092 = pneg %p141
        $region88: #{nlayer_discriminator.18} parent=85 // pred_check_branch
          %1094 = sbr.rel (%p1092) target = $region90
        $region89: #{nlayer_discriminator.18} parent=85 // pred_region
          %s1095 = smul.u32 2, %s23
          %p1096 = scmp.lt.s32.totalorder %s22, 0
          %s1097 = scalar_select %p1096, %s22, 0
          %p1098 = scmp.lt.s32.totalorder %s1095, 3
          %s1099 = scalar_select %p1098, %s1095, 3
          %s1100 = smul.addr %s1097, 4
          %s1101 = sadd.s32 %s1099, %s1100
          %s1102 = smul.addr %s1101, 4
          %s1103 = scalar_lea.vmem %s3, %s1102
        $region90: #{nlayer_discriminator.18} parent=85 // pred_fallthru
          _
      $region86: #{nlayer_discriminator.18} parent=5 // pred_fallthru
        _
    $region6: #{nlayer_discriminator.18} parent=1 // loop_footer
      %s13 = sadd.s32 1, %s9
    $region7: #{nlayer_discriminator.18} parent=1 // loop_footer_branch
      %8 = sbr.rel target = $region3
    $region8: #{nlayer_discriminator.18} parent=1 // loop_exit
      _

// kernel: nlayer_discriminator.21
$region0: #{nlayer_discriminator.21}
  #allocation0 [shape = 'u32[]', space=smem, size = 0x4, offset = 0x4, fixed_abs, tag = 'smem constant byte address 0x4 - core index']
  #allocation1 [shape = 'u32[144,128]{1,0:T(1,128)}', space=vmem, size = 0x12000, scoped, tag = 'internal scratch']
  #allocation2 [shape = 'f32[8,128]{1,0:T(8,128)}', space=vmem, size = 0x1000, scoped, tag = 'scratch operand']
  %s0 = inlined_call_operand.vmem [shape: bf16[8,8192], index: 0, kind: input, shape index: {}]
  %s1 = inlined_call_operand.vmem [shape: bf16[8192,128], index: 1, kind: input, shape index: {}]
  %s2 = inlined_call_operand.vmem [shape: f32[1,128], index: 2, kind: input, shape index: {}]
  %s3 = inlined_call_operand.vmem [shape: f32[8,128], index: 3, kind: output, shape index: {}]
  %s4 = sld [smem:[#allocation0]]
  $region53: #{nlayer_discriminator.21} parent=0
    _
  %s6 = ssub.s32 1, %s4
  %s7 = scalar_select 0, %s6, %s4
  loop: start=0, step=1, limit=18
  $region2: #{nlayer_discriminator.21} parent=0 // loop_pre_header
    _
  $region3: #{nlayer_discriminator.21} parent=0 // loop_header
    %s9 = sphi 0, %s13
    %p10 = scmp.ge.s32.totalorder %s9, 18
    %s16 = sphi 0, %s35
    %s17 = sphi 0, %s31
    %s18 = sphi 0, %s27
    %s19 = sphi 0, %s16
    %s20 = sphi 0, %s17
    %s21 = sphi 0, %s18
    %s22 = sphi 0, %s19
    %s23 = sphi 0, %s20
    %s24 = sphi 0, %s21
    %s40 = sphi 0, %s42
    %s43 = sphi 0, %s40
    %s44 = sphi 0, %s43
    %s60 = sphi 0, %s44
    %s68 = sphi 0, %s70
    %s71 = sphi 0, %s68
    %s72 = sphi 0, %s71
    %s88 = sphi 0, %s72
    %s94 = sphi 0, %s96
    %s97 = sphi 0, %s94
    %s98 = sphi 0, %s97
    %s114 = sphi 0, %s98
    %s122 = sphi 0, %s124
    %s125 = sphi 0, %s122
    %s126 = sphi 0, %s125
    %s142 = sphi 0, %s126
  $region4: #{nlayer_discriminator.21} parent=0 // loop_header_branch
    %12 = sbr.rel (%p10) target = $region8
  $region5: #{nlayer_discriminator.21} parent=0 // loop_body
    %s14 = ssub.s32 %s9, 1
    %s15 = ssub.s32 %s9, 2
    %s25 = sadd.s32 1, %s18
    %p26 = scmp.ge.s32.totalorder %s25, 16
    %s27 = scalar_select %p26, 0, %s25
    %s28 = sadd.s32 1, %s17
    %s29 = scalar_select %p26, %s28, %s17
    %p30 = scmp.ge.s32.totalorder %s29, 1
    %s31 = scalar_select %p30, 0, %s29
    %s32 = sadd.s32 1, %s16
    %s33 = scalar_select %p30, %s32, %s16
    %p34 = scmp.ge.s32.totalorder %s33, 1
    %s35 = scalar_select %p34, 0, %s33
    %s36 = ssub.s32 %s16, %s35
    %s37 = ssub.s32 %s18, %s27
    %s38 = sor.u32 %s36, %s37
    %p39 = scmp.eq.s32.totalorder %s38, 0
    %s41 = sadd.s32 %s40, 1
    %s42 = scalar_select %p39, %s40, %s41
    %p45 = pneg %p39
    %p46 = scmp.eq.s32.totalorder %s9, 15
    %p47 = por %p45, %p46
    %p48 = scmp.ne.s32.totalorder %s40, %s43
    %p49 = scmp.eq.s32.totalorder %s9, 0
    %p50 = por %p48, %p49
    %p51 = scmp.ne.s32.totalorder %s40, %s43
    %p52 = scmp.eq.s32.totalorder %s14, 15
    %p53 = por %p51, %p52
    %p54 = scmp.ne.s32.totalorder %s43, %s44
    %p55 = scmp.eq.s32.totalorder %s14, 0
    %p56 = por %p54, %p55
    %p57 = scmp.ne.s32.totalorder %s43, %s44
    %p58 = scmp.eq.s32.totalorder %s15, 15
    %p59 = por %p57, %p58
    %p61 = scmp.ne.s32.totalorder %s44, %s60
    %p62 = scmp.eq.s32.totalorder %s15, 0
    %p63 = por %p61, %p62
    %s64 = ssub.s32 %s18, %s27
    %s65 = ssub.s32 %s17, %s31
    %s66 = sor.u32 %s64, %s65
    %p67 = scmp.eq.s32.totalorder %s66, 0
    %s69 = sadd.s32 %s68, 1
    %s70 = scalar_select %p67, %s68, %s69
    %p73 = pneg %p67
    %p74 = scmp.eq.s32.totalorder %s9, 15
    %p75 = por %p73, %p74
    %p76 = scmp.ne.s32.totalorder %s68, %s71
    %p77 = scmp.eq.s32.totalorder %s9, 0
    %p78 = por %p76, %p77
    %p79 = scmp.ne.s32.totalorder %s68, %s71
    %p80 = scmp.eq.s32.totalorder %s14, 15
    %p81 = por %p79, %p80
    %p82 = scmp.ne.s32.totalorder %s71, %s72
    %p83 = scmp.eq.s32.totalorder %s14, 0
    %p84 = por %p82, %p83
    %p85 = scmp.ne.s32.totalorder %s71, %s72
    %p86 = scmp.eq.s32.totalorder %s15, 15
    %p87 = por %p85, %p86
    %p89 = scmp.ne.s32.totalorder %s72, %s88
    %p90 = scmp.eq.s32.totalorder %s15, 0
    %p91 = por %p89, %p90
    %s92 = ssub.s32 %s17, %s31
    %p93 = scmp.eq.s32.totalorder %s92, 0
    %s95 = sadd.s32 %s94, 1
    %s96 = scalar_select %p93, %s94, %s95
    %p99 = pneg %p93
    %p100 = scmp.eq.s32.totalorder %s9, 15
    %p101 = por %p99, %p100
    %p102 = scmp.ne.s32.totalorder %s94, %s97
    %p103 = scmp.eq.s32.totalorder %s9, 0
    %p104 = por %p102, %p103
    %p105 = scmp.ne.s32.totalorder %s94, %s97
    %p106 = scmp.eq.s32.totalorder %s14, 15
    %p107 = por %p105, %p106
    %p108 = scmp.ne.s32.totalorder %s97, %s98
    %p109 = scmp.eq.s32.totalorder %s14, 0
    %p110 = por %p108, %p109
    %p111 = scmp.ne.s32.totalorder %s97, %s98
    %p112 = scmp.eq.s32.totalorder %s15, 15
    %p113 = por %p111, %p112
    %p115 = scmp.ne.s32.totalorder %s98, %s114
    %p116 = scmp.eq.s32.totalorder %s15, 0
    %p117 = por %p115, %p116
    %s118 = ssub.s32 %s16, %s35
    %s119 = ssub.s32 %s17, %s31
    %s120 = sor.u32 %s118, %s119
    %p121 = scmp.eq.s32.totalorder %s120, 0
    %s123 = sadd.s32 %s122, 1
    %s124 = scalar_select %p121, %s122, %s123
    %p127 = pneg %p121
    %p128 = scmp.eq.s32.totalorder %s9, 15
    %p129 = por %p127, %p128
    %p130 = scmp.ne.s32.totalorder %s122, %s125
    %p131 = scmp.eq.s32.totalorder %s9, 0
    %p132 = por %p130, %p131
    %p133 = scmp.ne.s32.totalorder %s122, %s125
    %p134 = scmp.eq.s32.totalorder %s14, 15
    %p135 = por %p133, %p134
    %p136 = scmp.ne.s32.totalorder %s125, %s126
    %p137 = scmp.eq.s32.totalorder %s14, 0
    %p138 = por %p136, %p137
    %p139 = scmp.ne.s32.totalorder %s125, %s126
    %p140 = scmp.eq.s32.totalorder %s15, 15
    %p141 = por %p139, %p140
    %p143 = scmp.ne.s32.totalorder %s126, %s142
    %p144 = scmp.eq.s32.totalorder %s15, 0
    %p145 = por %p143, %p144
    %p146 = scmp.le.s32.totalorder 1, %s9
    %p147 = scmp.lt.s32.totalorder %s9, 17
    %p148 = pnand %p146, %p147
    %p149 = pneg %p148
    // Predicated region
    $region9: #{nlayer_discriminator.21} parent=5 // pred_check
      _
    $region10: #{nlayer_discriminator.21} parent=5 // pred_check_branch
      %151 = sbr.rel (%p148) target = $region12
    $region11: #{nlayer_discriminator.21} parent=5 // pred_region
      %s152 = ssub.s32 %s9, 1
      // Predicated region
      $region13: #{nlayer_discriminator.21} parent=11 // pred_check
        %p153 = pneg %p110
      $region14: #{nlayer_discriminator.21} parent=11 // pred_check_branch
        %155 = sbr.rel (%p153) target = $region16
      $region15: #{nlayer_discriminator.21} parent=11 // pred_region
        %p156 = scmp.lt.s32.totalorder %s20, 0
        %s157 = scalar_select %p156, %s20, 0
        %s158 = scalar_lea.vmem %s2, %s157
      $region16: #{nlayer_discriminator.21} parent=11 // pred_fallthru
        _
    $region12: #{nlayer_discriminator.21} parent=5 // pred_fallthru
      _
    %p159 = scmp.lt.s32.totalorder %s9, 16
    // Predicated region
    $region17: #{nlayer_discriminator.21} parent=5 // pred_check
      %p160 = pneg %p159
    $region18: #{nlayer_discriminator.21} parent=5 // pred_check_branch
      %162 = sbr.rel (%p160) target = $region20
    $region19: #{nlayer_discriminator.21} parent=5 // pred_region
      // Predicated region
      $region21: #{nlayer_discriminator.21} parent=19 // pred_check
        %p163 = pneg %p50
      $region22: #{nlayer_discriminator.21} parent=19 // pred_check_branch
        %165 = sbr.rel (%p163) target = $region24
      $region23: #{nlayer_discriminator.21} parent=19 // pred_region
        %s166 = smul.u32 4, %s18
        %p167 = scmp.lt.s32.totalorder %s16, 0
        %s168 = scalar_select %p167, %s16, 0
        %p169 = scmp.lt.s32.totalorder %s166, 63
        %s170 = scalar_select %p169, %s166, 63
        %s171 = smul.addr %s168, 64
        %s172 = sadd.s32 %s170, %s171
        %s173 = smul.addr %s172, 4
        %s174 = scalar_lea.vmem %s0, %s173
        %s175 = smul.u32 4, %s18
      $region24: #{nlayer_discriminator.21} parent=19 // pred_fallthru
        _
      // Predicated region
      $region25: #{nlayer_discriminator.21} parent=19 // pred_check
        %p176 = pneg %p78
      $region26: #{nlayer_discriminator.21} parent=19 // pred_check_branch
        %178 = sbr.rel (%p176) target = $region28
      $region27: #{nlayer_discriminator.21} parent=19 // pred_region
        %s179 = smul.u32 64, %s18
        %p180 = scmp.lt.s32.totalorder %s179, 1023
        %s181 = scalar_select %p180, %s179, 1023
        %p182 = scmp.lt.s32.totalorder %s17, 0
        %s183 = scalar_select %p182, %s17, 0
        %s184 = sadd.s32 %s183, %s181
        %s185 = smul.addr %s184, 4
        %s186 = scalar_lea.vmem %s1, %s185
        %s187 = smul.u32 64, %s18
      $region28: #{nlayer_discriminator.21} parent=19 // pred_fallthru
        _
    $region20: #{nlayer_discriminator.21} parent=5 // pred_fallthru
      _
    %p188 = scmp.le.s32.totalorder 1, %s9
    %p189 = scmp.lt.s32.totalorder %s9, 17
    %p190 = pnand %p188, %p189
    %p191 = pneg %p190
    // Predicated region
    $region29: #{nlayer_discriminator.21} parent=5 // pred_check
      _
    $region30: #{nlayer_discriminator.21} parent=5 // pred_check_branch
      %193 = sbr.rel (%p190) target = $region32
    $region31: #{nlayer_discriminator.21} parent=5 // pred_region
      %s194 = ssub.s32 %s9, 1
      %s195 = smul.u32 4, %s21
      %p196 = scmp.lt.s32.totalorder %s19, 0
      %s197 = scalar_select %p196, %s19, 0
      %p198 = scmp.lt.s32.totalorder %s195, 63
      %s199 = scalar_select %p198, %s195, 63
      %s200 = smul.addr %s197, 64
      %s201 = sadd.s32 %s199, %s200
      %s202 = smul.addr %s201, 4
      %s203 = scalar_lea.vmem %s0, %s202
      %p204 = pneg %p56
      %p205 = pneg %p53
      %s206 = smul.u32 64, %s21
      %p207 = scmp.lt.s32.totalorder %s206, 1023
      %s208 = scalar_select %p207, %s206, 1023
      %p209 = scmp.lt.s32.totalorder %s20, 0
      %s210 = scalar_select %p209, %s20, 0
      %s211 = sadd.s32 %s210, %s208
      %s212 = smul.addr %s211, 4
      %s213 = scalar_lea.vmem %s1, %s212
      %p214 = pneg %p84
      %p215 = pneg %p81
      %p216 = scmp.lt.s32.totalorder %s20, 0
      %s217 = scalar_select %p216, %s20, 0
      %s218 = scalar_lea.vmem %s2, %s217
      %p219 = pneg %p110
      %p220 = pneg %p107
      %p221 = pneg %p138
      %p222 = pneg %p135
      %p223 = scmp.lt.s32.totalorder %s19, 0
      %s224 = scalar_select %p223, %s19, 0
      %p225 = scmp.lt.s32.totalorder %s20, 0
      %s226 = scalar_select %p225, %s20, 0
      %s227 = sadd.s32 %s226, %s224
      %s228 = smul.addr %s227, 8
      %s229 = scalar_lea.vmem %s3, %s228
      %s230 = smul.u32 4, %s21
      %p231 = scmp.lt.s32.totalorder %s19, 0
      %s232 = scalar_select %p231, %s19, 0
      %p233 = scmp.lt.s32.totalorder %s230, 63
      %s234 = scalar_select %p233, %s230, 63
      %s235 = smul.addr %s232, 64
      %s236 = sadd.s32 %s234, %s235
      %s237 = smul.addr %s236, 4
      %s238 = scalar_lea.vmem %s0, %s237
      %s239 = smul.u32 4, %s21
      %s240 = smul.u32 64, %s21
      %p241 = scmp.lt.s32.totalorder %s240, 1023
      %s242 = scalar_select %p241, %s240, 1023
      %p243 = scmp.lt.s32.totalorder %s20, 0
      %s244 = scalar_select %p243, %s20, 0
      %s245 = sadd.s32 %s244, %s242
      %s246 = smul.addr %s245, 4
      %s247 = scalar_lea.vmem %s1, %s246
      %s248 = smul.u32 64, %s21
      %p249 = scmp.lt.s32.totalorder %s20, 0
      %s250 = scalar_select %p249, %s20, 0
      %s251 = scalar_lea.vmem %s2, %s250
      %p252 = scmp.lt.s32.totalorder %s19, 0
      %s253 = scalar_select %p252, %s19, 0
      %p254 = scmp.lt.s32.totalorder %s20, 0
      %s255 = scalar_select %p254, %s20, 0
      %s256 = sadd.s32 %s255, %s253
      %s257 = smul.addr %s256, 8
      %s258 = scalar_lea.vmem %s3, %s257
      %p260 = scmp.eq.s32.totalorder %s21, 0
      // Predicated region
      $region33: #{nlayer_discriminator.21} parent=31 // pred_check
        %p261 = pneg %p260
      $region34: #{nlayer_discriminator.21} parent=31 // pred_check_branch
        %263 = sbr.rel (%p261) target = $region36
      $region35: #{nlayer_discriminator.21} parent=31 // pred_region
        %264 = vst [vmem:[#allocation2] sm:$0xff] 0.0
      $region36: #{nlayer_discriminator.21} parent=31 // pred_fallthru
        _
      %v265 = vld [vmem:[#allocation2] sm:$0xff]
      %v266 = vld [vmem:[%s238] sm:$0xff]
      %v267 = vld [vmem:[%s238 + $0x8] sm:$0xff]
      %v268 = vld [vmem:[%s247] sm:$0xf]
      %v269 = vld [vmem:[%s247 + $0x4] sm:$0xf]
      %v270 = vld [vmem:[%s247 + $0x8] sm:$0xf]
      %v271 = vld [vmem:[%s247 + $0xc] sm:$0xf]
      %v272 = vld [vmem:[%s247 + $0x10] sm:$0xf]
      %v273 = vld [vmem:[%s247 + $0x14] sm:$0xf]
      %v274 = vld [vmem:[%s247 + $0x18] sm:$0xf]
      %v275 = vld [vmem:[%s247 + $0x1c] sm:$0xf]
      %v276 = vld [vmem:[%s247 + $0x20] sm:$0xf]
      %v277 = vld [vmem:[%s247 + $0x24] sm:$0xf]
      %v278 = vld [vmem:[%s247 + $0x28] sm:$0xf]
      %v279 = vld [vmem:[%s247 + $0x2c] sm:$0xf]
      %v280 = vld [vmem:[%s247 + $0x30] sm:$0xf]
      %v281 = vld [vmem:[%s247 + $0x34] sm:$0xf]
      %v282 = vld [vmem:[%s247 + $0x38] sm:$0xf]
      %v283 = vld [vmem:[%s247 + $0x3c] sm:$0xf]
      %v284 = vld [vmem:[%s247 + $0x40] sm:$0xf]
      %v285 = vld [vmem:[%s247 + $0x44] sm:$0xf]
      %v286 = vld [vmem:[%s247 + $0x48] sm:$0xf]
      %v287 = vld [vmem:[%s247 + $0x4c] sm:$0xf]
      %v288 = vld [vmem:[%s247 + $0x50] sm:$0xf]
      %v289 = vld [vmem:[%s247 + $0x54] sm:$0xf]
      %v290 = vld [vmem:[%s247 + $0x58] sm:$0xf]
      %v291 = vld [vmem:[%s247 + $0x5c] sm:$0xf]
      %v292 = vld [vmem:[%s247 + $0x60] sm:$0xf]
      %v293 = vld [vmem:[%s247 + $0x64] sm:$0xf]
      %v294 = vld [vmem:[%s247 + $0x68] sm:$0xf]
      %v295 = vld [vmem:[%s247 + $0x6c] sm:$0xf]
      %v296 = vld [vmem:[%s247 + $0x70] sm:$0xf]
      %v297 = vld [vmem:[%s247 + $0x74] sm:$0xf]
      %v298 = vld [vmem:[%s247 + $0x78] sm:$0xf]
      %v299 = vld [vmem:[%s247 + $0x7c] sm:$0xf]
      %v300 = vld [vmem:[%s247 + $0x80] sm:$0xf]
      %v301 = vld [vmem:[%s247 + $0x84] sm:$0xf]
      %v302 = vld [vmem:[%s247 + $0x88] sm:$0xf]
      %v303 = vld [vmem:[%s247 + $0x8c] sm:$0xf]
      %v304 = vld [vmem:[%s247 + $0x90] sm:$0xf]
      %v305 = vld [vmem:[%s247 + $0x94] sm:$0xf]
      %v306 = vld [vmem:[%s247 + $0x98] sm:$0xf]
      %v307 = vld [vmem:[%s247 + $0x9c] sm:$0xf]
      %v308 = vld [vmem:[%s247 + $0xa0] sm:$0xf]
      %v309 = vld [vmem:[%s247 + $0xa4] sm:$0xf]
      %v310 = vld [vmem:[%s247 + $0xa8] sm:$0xf]
      %v311 = vld [vmem:[%s247 + $0xac] sm:$0xf]
      %v312 = vld [vmem:[%s247 + $0xb0] sm:$0xf]
      %v313 = vld [vmem:[%s247 + $0xb4] sm:$0xf]
      %v314 = vld [vmem:[%s247 + $0xb8] sm:$0xf]
      %v315 = vld [vmem:[%s247 + $0xbc] sm:$0xf]
      %v316 = vld [vmem:[%s247 + $0xc0] sm:$0xf]
      %v317 = vld [vmem:[%s247 + $0xc4] sm:$0xf]
      %v318 = vld [vmem:[%s247 + $0xc8] sm:$0xf]
      %v319 = vld [vmem:[%s247 + $0xcc] sm:$0xf]
      %v320 = vld [vmem:[%s247 + $0xd0] sm:$0xf]
      %v321 = vld [vmem:[%s247 + $0xd4] sm:$0xf]
      %v322 = vld [vmem:[%s247 + $0xd8] sm:$0xf]
      %v323 = vld [vmem:[%s247 + $0xdc] sm:$0xf]
      %v324 = vld [vmem:[%s247 + $0xe0] sm:$0xf]
      %v325 = vld [vmem:[%s247 + $0xe4] sm:$0xf]
      %v326 = vld [vmem:[%s247 + $0xe8] sm:$0xf]
      %v327 = vld [vmem:[%s247 + $0xec] sm:$0xf]
      %v328 = vld [vmem:[%s247 + $0xf0] sm:$0xf]
      %v329 = vld [vmem:[%s247 + $0xf4] sm:$0xf]
      %v330 = vld [vmem:[%s247 + $0xf8] sm:$0xf]
      %v331 = vld [vmem:[%s247 + $0xfc] sm:$0xf]
      %v334 = vunpack.c.l.b16 %v266
      %v335 = vunpack.c.h.b16 %v266
      %v336 = vunpack.c.l.b16 %v267
      %v337 = vunpack.c.h.b16 %v267
      %v338 = vpack.c.b16 %v334, %v334
      %v339 = vpack.c.b16 %v335, %v335
      %v340 = vpack.c.b16 %v336, %v336
      %v341 = vpack.c.b16 %v337, %v337
      %v410 = vunpack.c.l.b16 %v268
      %v411 = vunpack.c.l.b16 %v269
      %v412 = vunpack.c.l.b16 %v270
      %v413 = vunpack.c.l.b16 %v271
      %v414 = vunpack.c.l.b16 %v272
      %v415 = vunpack.c.l.b16 %v273
      %v416 = vunpack.c.l.b16 %v274
      %v417 = vunpack.c.l.b16 %v275
      %v418 = vunpack.c.l.b16 %v276
      %v419 = vunpack.c.l.b16 %v277
      %v420 = vunpack.c.l.b16 %v278
      %v421 = vunpack.c.l.b16 %v279
      %v422 = vunpack.c.l.b16 %v280
      %v423 = vunpack.c.l.b16 %v281
      %v424 = vunpack.c.l.b16 %v282
      %v425 = vunpack.c.l.b16 %v283
      %v426 = vunpack.c.l.b16 %v284
      %v427 = vunpack.c.l.b16 %v285
      %v428 = vunpack.c.l.b16 %v286
      %v429 = vunpack.c.l.b16 %v287
      %v430 = vunpack.c.l.b16 %v288
      %v431 = vunpack.c.l.b16 %v289
      %v432 = vunpack.c.l.b16 %v290
      %v433 = vunpack.c.l.b16 %v291
      %v434 = vunpack.c.l.b16 %v292
      %v435 = vunpack.c.l.b16 %v293
      %v436 = vunpack.c.l.b16 %v294
      %v437 = vunpack.c.l.b16 %v295
      %v438 = vunpack.c.l.b16 %v296
      %v439 = vunpack.c.l.b16 %v297
      %v440 = vunpack.c.l.b16 %v298
      %v441 = vunpack.c.l.b16 %v299
      %v442 = vunpack.c.l.b16 %v300
      %v443 = vunpack.c.l.b16 %v301
      %v444 = vunpack.c.l.b16 %v302
      %v445 = vunpack.c.l.b16 %v303
      %v446 = vunpack.c.l.b16 %v304
      %v447 = vunpack.c.l.b16 %v305
      %v448 = vunpack.c.l.b16 %v306
      %v449 = vunpack.c.l.b16 %v307
      %v450 = vunpack.c.l.b16 %v308
      %v451 = vunpack.c.l.b16 %v309
      %v452 = vunpack.c.l.b16 %v310
      %v453 = vunpack.c.l.b16 %v311
      %v454 = vunpack.c.l.b16 %v312
      %v455 = vunpack.c.l.b16 %v313
      %v456 = vunpack.c.l.b16 %v314
      %v457 = vunpack.c.l.b16 %v315
      %v458 = vunpack.c.l.b16 %v316
      %v459 = vunpack.c.l.b16 %v317
      %v460 = vunpack.c.l.b16 %v318
      %v461 = vunpack.c.l.b16 %v319
      %v462 = vunpack.c.l.b16 %v320
      %v463 = vunpack.c.l.b16 %v321
      %v464 = vunpack.c.l.b16 %v322
      %v465 = vunpack.c.l.b16 %v323
      %v466 = vunpack.c.l.b16 %v324
      %v467 = vunpack.c.l.b16 %v325
      %v468 = vunpack.c.l.b16 %v326
      %v469 = vunpack.c.l.b16 %v327
      %v470 = vunpack.c.l.b16 %v328
      %v471 = vunpack.c.l.b16 %v329
      %v472 = vunpack.c.l.b16 %v330
      %v473 = vunpack.c.l.b16 %v331
      %v474 = vpack.c.b16 %v411, %v410
      %v475 = vpack.c.b16 %v413, %v412
      %v476 = vpack.c.b16 %v415, %v414
      %v477 = vpack.c.b16 %v417, %v416
      %v478 = vpack.c.b16 %v419, %v418
      %v479 = vpack.c.b16 %v421, %v420
      %v480 = vpack.c.b16 %v423, %v422
      %v481 = vpack.c.b16 %v425, %v424
      %v482 = vpack.c.b16 %v427, %v426
      %v483 = vpack.c.b16 %v429, %v428
      %v484 = vpack.c.b16 %v431, %v430
      %v485 = vpack.c.b16 %v433, %v432
      %v486 = vpack.c.b16 %v435, %v434
      %v487 = vpack.c.b16 %v437, %v436
      %v488 = vpack.c.b16 %v439, %v438
      %v489 = vpack.c.b16 %v441, %v440
      %v490 = vpack.c.b16 %v443, %v442
      %v491 = vpack.c.b16 %v445, %v444
      %v492 = vpack.c.b16 %v447, %v446
      %v493 = vpack.c.b16 %v449, %v448
      %v494 = vpack.c.b16 %v451, %v450
      %v495 = vpack.c.b16 %v453, %v452
      %v496 = vpack.c.b16 %v455, %v454
      %v497 = vpack.c.b16 %v457, %v456
      %v498 = vpack.c.b16 %v459, %v458
      %v499 = vpack.c.b16 %v461, %v460
      %v500 = vpack.c.b16 %v463, %v462
      %v501 = vpack.c.b16 %v465, %v464
      %v502 = vpack.c.b16 %v467, %v466
      %v503 = vpack.c.b16 %v469, %v468
      %v504 = vpack.c.b16 %v471, %v470
      %v505 = vpack.c.b16 %v473, %v472
      %538 = vmatprep.subr.bf16.mxu0 0
      %539 = vmatpush1.bf16.msra.mxu0 %v481
      %540 = vmatprep.subr.bf16.mxu0 0
      %541 = vmatpush1.bf16.msra.mxu0 %v480
      %542 = vmatprep.subr.bf16.mxu0 0
      %543 = vmatpush1.bf16.msra.mxu0 %v479
      %544 = vmatprep.subr.bf16.mxu0 0
      %545 = vmatpush1.bf16.msra.mxu0 %v478
      %546 = vmatprep.subr.bf16.mxu0 0
      %547 = vmatpush1.bf16.msra.mxu0 %v477
      %548 = vmatprep.subr.bf16.mxu0 0
      %549 = vmatpush1.bf16.msra.mxu0 %v476
      %550 = vmatprep.subr.bf16.mxu0 0
      %551 = vmatpush1.bf16.msra.mxu0 %v475
      %552 = vmatprep.subr.bf16.mxu0 0
      %553 = vmatpush1.bf16.msra.mxu0 %v474
      %554 = vmatprep.subr.bf16.mxu0 0
      %555 = vmatpush2.bf16.msra.mxu0 %v489
      %556 = vmatprep.subr.bf16.mxu0 0
      %557 = vmatpush2.bf16.msra.mxu0 %v488
      %558 = vmatprep.subr.bf16.mxu0 0
      %559 = vmatpush2.bf16.msra.mxu0 %v487
      %560 = vmatprep.subr.bf16.mxu0 0
      %561 = vmatpush2.bf16.msra.mxu0 %v486
      %562 = vmatprep.subr.bf16.mxu0 0
      %563 = vmatpush2.bf16.msra.mxu0 %v485
      %564 = vmatprep.subr.bf16.mxu0 0
      %565 = vmatpush2.bf16.msra.mxu0 %v484
      %566 = vmatprep.subr.bf16.mxu0 0
      %567 = vmatpush2.bf16.msra.mxu0 %v483
      %568 = vmatprep.subr.bf16.mxu0 0
      %569 = vmatpush2.bf16.msra.mxu0 %v482
      %570 = vmatprep.mubr.bf16.mxu0 %v339
      %571 = vmatmul.mubr.bf16.gmra.mxu0 %v338
      %v572 = vpop.f32.mrf.mxu0
      %v573 = vadd.f32 0.0, %v572
      %v574 = vpop.f32.mrf.mxu0
      %v575 = vpop.f32.mrf.mxu0
      %v576 = vpop.f32.mrf.mxu0
      %577 = vdwg.mxu0
      %578 = vmatprep.subr.bf16.mxu0 0
      %579 = vmatpush1.bf16.msra.mxu0 %v497
      %580 = vmatprep.subr.bf16.mxu0 0
      %581 = vmatpush1.bf16.msra.mxu0 %v496
      %582 = vmatprep.subr.bf16.mxu0 0
      %583 = vmatpush1.bf16.msra.mxu0 %v495
      %584 = vmatprep.subr.bf16.mxu0 0
      %585 = vmatpush1.bf16.msra.mxu0 %v494
      %586 = vmatprep.subr.bf16.mxu0 0
      %587 = vmatpush1.bf16.msra.mxu0 %v493
      %588 = vmatprep.subr.bf16.mxu0 0
      %589 = vmatpush1.bf16.msra.mxu0 %v492
      %590 = vmatprep.subr.bf16.mxu0 0
      %591 = vmatpush1.bf16.msra.mxu0 %v491
      %592 = vmatprep.subr.bf16.mxu0 0
      %593 = vmatpush1.bf16.msra.mxu0 %v490
      %594 = vmatprep.subr.bf16.mxu0 0
      %595 = vmatpush2.bf16.msra.mxu0 %v505
      %596 = vmatprep.subr.bf16.mxu0 0
      %597 = vmatpush2.bf16.msra.mxu0 %v504
      %598 = vmatprep.subr.bf16.mxu0 0
      %599 = vmatpush2.bf16.msra.mxu0 %v503
      %600 = vmatprep.subr.bf16.mxu0 0
      %601 = vmatpush2.bf16.msra.mxu0 %v502
      %602 = vmatprep.subr.bf16.mxu0 0
      %603 = vmatpush2.bf16.msra.mxu0 %v501
      %604 = vmatprep.subr.bf16.mxu0 0
      %605 = vmatpush2.bf16.msra.mxu0 %v500
      %606 = vmatprep.subr.bf16.mxu0 0
      %607 = vmatpush2.bf16.msra.mxu0 %v499
      %608 = vmatprep.subr.bf16.mxu0 0
      %609 = vmatpush2.bf16.msra.mxu0 %v498
      %610 = vmatprep.mubr.bf16.mxu0 %v341
      %611 = vmatmul.mubr.bf16.gmra.mxu0 %v340
      %v612 = vpop.f32.mrf.mxu0
      %v613 = vadd.f32 %v573, %v612
      %v614 = vpop.f32.mrf.mxu0
      %v615 = vpop.f32.mrf.mxu0
      %v616 = vpop.f32.mrf.mxu0
      %617 = vdwg.mxu0
      %v618 = vadd.f32 %v265, %v613
      %619 = vst [vmem:[#allocation2] sm:$0xff] %v618
      %p620 = scmp.eq.s32.totalorder %s21, 15
      // Predicated region
      $region37: #{nlayer_discriminator.21} parent=31 // pred_check
        %p621 = pneg %p620
      $region38: #{nlayer_discriminator.21} parent=31 // pred_check_branch
        %623 = sbr.rel (%p621) target = $region40
      $region39: #{nlayer_discriminator.21} parent=31 // pred_region
        %v624 = vld [vmem:[#allocation2] sm:$0xff]
        %v625 = vld [vmem:[%s251] sm:$0x1]
        %v627 = vlaneseq
        %v628 = vshrl.u32 %v627, 7
        %v629 = vsub.s32 0, %v628
        %v630 = vrot.slane %v625, %v629
        %v632 = vadd.f32 %v624, %v630
        %633 = vst [vmem:[%s258] sm:$0xff] %v632
      $region40: #{nlayer_discriminator.21} parent=31 // pred_fallthru
        _
      %p634 = scmp.lt.s32.totalorder %s19, 0
      %s635 = scalar_select %p634, %s19, 0
      %p636 = scmp.lt.s32.totalorder %s20, 0
      %s637 = scalar_select %p636, %s20, 0
      %s638 = sadd.s32 %s637, %s635
      %s639 = smul.addr %s638, 8
      %s640 = scalar_lea.vmem %s3, %s639
      // Predicated region
      $region41: #{nlayer_discriminator.21} parent=31 // pred_check
        %p641 = pneg %p135
      $region42: #{nlayer_discriminator.21} parent=31 // pred_check_branch
        %643 = sbr.rel (%p641) target = $region44
      $region43: #{nlayer_discriminator.21} parent=31 // pred_region
        _
      $region44: #{nlayer_discriminator.21} parent=31 // pred_fallthru
        _
      // Predicated region
      $region45: #{nlayer_discriminator.21} parent=31 // pred_check
        %p644 = pneg %p135
      $region46: #{nlayer_discriminator.21} parent=31 // pred_check_branch
        %646 = sbr.rel (%p644) target = $region48
      $region47: #{nlayer_discriminator.21} parent=31 // pred_region
        %p647 = scmp.lt.s32.totalorder %s19, 0
        %s648 = scalar_select %p647, %s19, 0
        %p649 = scmp.lt.s32.totalorder %s20, 0
        %s650 = scalar_select %p649, %s20, 0
        %s651 = sadd.s32 %s650, %s648
        %s652 = smul.addr %s651, 8
        %s653 = scalar_lea.vmem %s3, %s652
      $region48: #{nlayer_discriminator.21} parent=31 // pred_fallthru
        _
    $region32: #{nlayer_discriminator.21} parent=5 // pred_fallthru
      _
    %p654 = scmp.le.s32.totalorder 2, %s9
    // Predicated region
    $region49: #{nlayer_discriminator.21} parent=5 // pred_check
      %p655 = pneg %p654
    $region50: #{nlayer_discriminator.21} parent=5 // pred_check_branch
      %657 = sbr.rel (%p655) target = $region52
    $region51: #{nlayer_discriminator.21} parent=5 // pred_region
      %s658 = ssub.s32 %s9, 2
    $region52: #{nlayer_discriminator.21} parent=5 // pred_fallthru
      _
  $region6: #{nlayer_discriminator.21} parent=0 // loop_footer
    %s13 = sadd.s32 1, %s9
  $region7: #{nlayer_discriminator.21} parent=0 // loop_footer_branch
    %8 = sbr.rel target = $region3
  $region8: #{nlayer_discriminator.21} parent=0 // loop_exit
    _

</llo_original>
